<compile_context>
chip_gen: v6e
topology: v6e:2x2x1
jax: 0.10.0
libtpu: 0.0.40
codegen_flags: <defaults>
</compile_context>

<pallas_src>
import functools

import jax
import jax.numpy as jnp
from jax.experimental import pallas as pl
from jax.experimental.pallas import tpu as pltpu  # noqa: F401  (kept for parity / future tiling)


# ----------------------------------------------------------------------------
# In-kernel helpers
# ----------------------------------------------------------------------------

def _ln(x, eps=1e-5):
    # TODO(synk): no learnable gamma/beta (torch.nn.LayerNorm has them).
    mu = jnp.mean(x, axis=-1, keepdims=True)
    var = jnp.mean((x - mu) ** 2, axis=-1, keepdims=True)
    return (x - mu) * jax.lax.rsqrt(var + eps)


def _bf16(x):
    return x.astype(jnp.bfloat16)


def _mm(a, b):
    # bf16 MXU matmul, f32 accumulation; standard (M,K)x(K,N).
    return jnp.dot(_bf16(a), _bf16(b), preferred_element_type=jnp.float32)


def _mm_kt(a, b):
    # Contraction on the LAST dims of both operands (A @ B^T) without an
    # explicit transpose — MXU consumes k-major contractions natively.
    return jax.lax.dot_general(_bf16(a), _bf16(b), (((1,), (1,)), ((), ())),
                               preferred_element_type=jnp.float32)


def _softmax_attn(s, v):
    # plain (non-flash) softmax attention; whole KV is resident in VMEM.
    s = s - jnp.max(s, axis=-1, keepdims=True)
    p = jnp.exp(s)
    out = _mm(p, v)
    return out * pl.reciprocal(jnp.sum(p, axis=-1, keepdims=True), approx=True)


# ----------------------------------------------------------------------------
# Kernel 1: encoder (embed + pre-LN self-attention + FFN), single step
# ----------------------------------------------------------------------------

def _encoder_kernel(x_ref, win_ref, bin_ref, wqkv_ref, bqkv_ref,
                    wo_ref, bo_ref, wf1_ref, bf1_ref, wf2_ref, bf2_ref,
                    enc_ref, *, d_model, scale):
    # fused feature + positional projection (single (C_in+3, D) weight)
    h = _mm(x_ref[...], win_ref[...]) + bin_ref[...]

    # pre-LN single-head self-attention, fused QKV projection
    hn = _ln(h)
    qkv = _mm(hn, wqkv_ref[...]) + bqkv_ref[...]
    q = qkv[:, :d_model]
    k = qkv[:, d_model:2 * d_model]
    v = qkv[:, 2 * d_model:]
    s = _mm_kt(q, k) * scale
    attn = _softmax_attn(s, v)
    h = h + _mm(attn, wo_ref[...]) + bo_ref[...]

    # pre-LN MLP block
    hn = _ln(h)
    # TODO(synk): torch nn.GELU defaults to exact erf; tanh approximation used.
    ff = jax.nn.gelu(_mm(hn, wf1_ref[...]) + bf1_ref[...], approximate=True)
    h = h + _mm(ff, wf2_ref[...]) + bf2_ref[...]

    enc_ref[...] = h


def encoder_forward(p, points, feats):
    n = feats.shape[0]
    d = p["enc_in_w"].shape[1]
    x = jnp.concatenate([feats, points], axis=1)      # (N, C_in + 3)
    kern = functools.partial(_encoder_kernel, d_model=d, scale=1.0 / d ** 0.5)
    return pl.pallas_call(
        kern,
        out_shape=jax.ShapeDtypeStruct((n, d), jnp.float32),
    )(x, p["enc_in_w"], p["enc_in_b"], p["enc_qkv_w"], p["enc_qkv_b"],
      p["enc_o_w"], p["enc_o_b"], p["enc_ff1_w"], p["enc_ff1_b"],
      p["enc_ff2_w"], p["enc_ff2_b"])


# ----------------------------------------------------------------------------
# Kernel 2: decoder (point cross-attn + text cross-attn + MLP) and all heads
#           (pred_logits / pred_boxes / pred_masks folded in), single step
# ----------------------------------------------------------------------------

def _decoder_kernel(enc_ref, qemb_ref, txtin_ref,
                    wtxt_ref, btxt_ref,
                    wptq_ref, bptq_ref, wptkv_ref, bptkv_ref,
                    wpto_ref, bpto_ref,
                    wtxq_ref, btxq_ref, wtxkv_ref, btxkv_ref,
                    wtxo_ref, btxo_ref,
                    wf1_ref, bf1_ref, wf2_ref, bf2_ref,
                    wlog_ref, blog_ref, wmask_ref, bmask_ref,
                    wbox_ref, bbox_ref,
                    logits_ref, boxes_ref, masks_ref, *, d_model, scale):
    enc = enc_ref[...]
    queries = qemb_ref[...]

    # cross-attention: object queries -> encoded points (whole N in VMEM)
    qn = _ln(queries)
    qpt = _mm(qn, wptq_ref[...]) + bptq_ref[...]
    en = _ln(enc)
    kv = _mm(en, wptkv_ref[...]) + bptkv_ref[...]
    k, v = kv[:, :d_model], kv[:, d_model:]
    s = _mm_kt(qpt, k) * scale
    attn = _softmax_attn(s, v)
    queries = queries + _mm(attn, wpto_ref[...]) + bpto_ref[...]

    # cross-attention: queries -> projected text tokens (small, in-VMEM)
    txt = _mm(txtin_ref[...], wtxt_ref[...]) + btxt_ref[...]
    qn = _ln(queries)
    tn = _ln(txt)
    qx = _mm(qn, wtxq_ref[...]) + btxq_ref[...]
    kvx = _mm(tn, wtxkv_ref[...]) + btxkv_ref[...]
    kx, vx = kvx[:, :d_model], kvx[:, d_model:]
    sx = _mm_kt(qx, kx) * scale
    ax = _softmax_attn(sx, vx)
    queries = queries + _mm(ax, wtxo_ref[...]) + btxo_ref[...]

    # MLP block
    qn = _ln(queries)
    ff = jax.nn.gelu(_mm(qn, wf1_ref[...]) + bf1_ref[...], approximate=True)
    queries = queries + _mm(ff, wf2_ref[...]) + bf2_ref[...]

    # prediction heads
    logit_emb = _mm(queries, wlog_ref[...]) + blog_ref[...]
    logits_ref[...] = _mm_kt(logit_emb, txt)                       # (M, T)
    mask_emb = _mm(queries, wmask_ref[...]) + bmask_ref[...]
    masks_ref[...] = _mm_kt(mask_emb, enc)                         # (M, N)
    boxes_ref[...] = jax.nn.sigmoid(
        _mm(queries, wbox_ref[...]) + bbox_ref[...])               # (M, 6)


def decoder_forward(p, encoded, text_emb):
    n, d = encoded.shape
    m = p["query_emb"].shape[0]
    t = text_emb.shape[0]
    kern = functools.partial(_decoder_kernel, d_model=d, scale=1.0 / d ** 0.5)
    return pl.pallas_call(
        kern,
        out_shape=(jax.ShapeDtypeStruct((m, t), jnp.float32),   # pred_logits
                   jax.ShapeDtypeStruct((m, 6), jnp.float32),   # pred_boxes
                   jax.ShapeDtypeStruct((m, n), jnp.float32)),  # pred_masks
    )(encoded, p["query_emb"], text_emb,
      p["txt_w"], p["txt_b"],
      p["dpt_q_w"], p["dpt_q_b"], p["dpt_kv_w"], p["dpt_kv_b"],
      p["dpt_o_w"], p["dpt_o_b"],
      p["dtx_q_w"], p["dtx_q_b"], p["dtx_kv_w"], p["dtx_kv_b"],
      p["dtx_o_w"], p["dtx_o_b"],
      p["dec_ff1_w"], p["dec_ff1_b"], p["dec_ff2_w"], p["dec_ff2_b"],
      p["logit_w"], p["logit_b"], p["mask_w"], p["mask_b"],
      p["box_w"], p["box_b"])


# ----------------------------------------------------------------------------
# Parameters (synthetic; bf16 weights for MXU, f32 biases / norms)
# ----------------------------------------------------------------------------

def _init_linear(key, fan_in, fan_out):
    w = (jax.random.normal(key, (fan_in, fan_out), jnp.float32)
         * (fan_in ** -0.5)).astype(jnp.bfloat16)
    b = jnp.zeros((1, fan_out), jnp.float32)
    return w, b


def init_params(key, c_in=32, d_model=128, d_text=32, d_ff=256, num_queries=8):
    keys = iter(jax.random.split(key, 32))
    p = {}
    # ----- encoder -----
    # fused feature + positional projection: one (c_in + 3, d_model) weight
    p["enc_in_w"], p["enc_in_b"] = _init_linear(next(keys), c_in + 3, d_model)
    p["enc_qkv_w"], p["enc_qkv_b"] = _init_linear(next(keys), d_model, 3 * d_model)
    p["enc_o_w"], p["enc_o_b"] = _init_linear(next(keys), d_model, d_model)
    p["enc_ff1_w"], p["enc_ff1_b"] = _init_linear(next(keys), d_model, d_ff)
    p["enc_ff2_w"], p["enc_ff2_b"] = _init_linear(next(keys), d_ff, d_model)
    # ----- decoder -----
    p["query_emb"] = jax.random.normal(next(keys), (num_queries, d_model),
                                       jnp.float32) * 0.02
    p["txt_w"], p["txt_b"] = _init_linear(next(keys), d_text, d_model)
    p["dpt_q_w"], p["dpt_q_b"] = _init_linear(next(keys), d_model, d_model)
    p["dpt_kv_w"], p["dpt_kv_b"] = _init_linear(next(keys), d_model, 2 * d_model)
    p["dpt_o_w"], p["dpt_o_b"] = _init_linear(next(keys), d_model, d_model)
    p["dtx_q_w"], p["dtx_q_b"] = _init_linear(next(keys), d_model, d_model)
    p["dtx_kv_w"], p["dtx_kv_b"] = _init_linear(next(keys), d_model, 2 * d_model)
    p["dtx_o_w"], p["dtx_o_b"] = _init_linear(next(keys), d_model, d_model)
    p["dec_ff1_w"], p["dec_ff1_b"] = _init_linear(next(keys), d_model, d_ff)
    p["dec_ff2_w"], p["dec_ff2_b"] = _init_linear(next(keys), d_ff, d_model)
    p["logit_w"], p["logit_b"] = _init_linear(next(keys), d_model, d_model)
    p["mask_w"], p["mask_b"] = _init_linear(next(keys), d_model, d_model)
    p["box_w"], p["box_b"] = _init_linear(next(keys), d_model, 6)
    return p


# ----------------------------------------------------------------------------
# Model forward (Encoder3DJEPA + Locate3DDecoder, synthetic)
# ----------------------------------------------------------------------------

def locate3d_forward(params, featurized_scene_dict, query_token_emb):
    points = featurized_scene_dict["points"]
    feats = featurized_scene_dict["features"]
    encoded = encoder_forward(params, points, feats)
    pred_logits, pred_boxes, pred_masks = decoder_forward(params, encoded,
                                                          query_token_emb)
    return {
        "pred_logits": pred_logits[None],   # (1, M, T)
        "pred_masks": pred_masks[None],     # (1, M, N)
        "pred_boxes": pred_boxes[None],     # (1, M, 6)
    }


# ----------------------------------------------------------------------------
# Main
# ----------------------------------------------------------------------------

if __name__ == "__main__":
    key = jax.random.PRNGKey(0)
    k_pts, k_feat, k_txt, k_par = jax.random.split(key, 4)

    N_POINTS, C_IN, D_MODEL, D_TEXT, T_TOK, M_QUERIES = 512, 32, 128, 32, 16, 8

    featurized_scene = {
        "points": jax.random.uniform(k_pts, (N_POINTS, 3), jnp.float32),
        "features": jax.random.normal(k_feat, (N_POINTS, C_IN), jnp.float32),
    }
    # "query" stands in for tokenizer output: pre-embedded text tokens.
    # TODO(synk): HF tokenizer not reproducible in-script.
    query_tokens = jax.random.normal(k_txt, (T_TOK, D_TEXT), jnp.float32)

    params = init_params(k_par, c_in=C_IN, d_model=D_MODEL, d_text=D_TEXT,
                         d_ff=256, num_queries=M_QUERIES)

    fwd = jax.jit(locate3d_forward)
    out = fwd(params, featurized_scene, query_tokens)
    out = jax.block_until_ready(out)

    assert out["pred_logits"].shape == (1, M_QUERIES, T_TOK)
    assert out["pred_masks"].shape == (1, M_QUERIES, N_POINTS)
    assert out["pred_boxes"].shape == (1, M_QUERIES, 6)
    assert all(bool(jnp.isfinite(v).all()) for v in out.values())

    print("KERNEL_OK")
</pallas_src>

<mosaic_0001>
module attributes {stable_mosaic.version = 11 : i64} {
  func.func @_encoder_kernel(%arg0: memref<512x35xf32, #tpu.memory_space<vmem>>, %arg1: memref<35x128xbf16, #tpu.memory_space<vmem>>, %arg2: memref<1x128xf32, #tpu.memory_space<vmem>>, %arg3: memref<128x384xbf16, #tpu.memory_space<vmem>>, %arg4: memref<1x384xf32, #tpu.memory_space<vmem>>, %arg5: memref<128x128xbf16, #tpu.memory_space<vmem>>, %arg6: memref<1x128xf32, #tpu.memory_space<vmem>>, %arg7: memref<128x256xbf16, #tpu.memory_space<vmem>>, %arg8: memref<1x256xf32, #tpu.memory_space<vmem>>, %arg9: memref<256x128xbf16, #tpu.memory_space<vmem>>, %arg10: memref<1x128xf32, #tpu.memory_space<vmem>>, %arg11: memref<512x128xf32, #tpu.memory_space<vmem>>) attributes {dimension_semantics = [], scalar_prefetch = 0 : i64, scratch_operands = 0 : i64, tpu.core_type = #tpu.core_type<tc>} {
    %c0 = arith.constant 0 : index
    %c0_0 = arith.constant 0 : index
    %0 = vector.load %arg0[%c0, %c0_0] : memref<512x35xf32, #tpu.memory_space<vmem>>, vector<512x35xf32>
    %c0_1 = arith.constant 0 : index
    %c0_2 = arith.constant 0 : index
    %1 = vector.load %arg1[%c0_1, %c0_2] : memref<35x128xbf16, #tpu.memory_space<vmem>>, vector<35x128xbf16>
    %2 = arith.truncf %0 : vector<512x35xf32> to vector<512x35xbf16>
    %cst = arith.constant dense<0.000000e+00> : vector<512x128xf32>
    %3 = tpu.matmul %2, %1, %cst {dimension_numbers = #tpu.dot_dimension_numbers<[1], [0], [0], [1], [0, 0, 1, 1], [], []>} : vector<512x35xbf16>, vector<35x128xbf16>, vector<512x128xf32> -> vector<512x128xf32>
    %c0_3 = arith.constant 0 : index
    %c0_4 = arith.constant 0 : index
    %4 = vector.load %arg2[%c0_3, %c0_4] : memref<1x128xf32, #tpu.memory_space<vmem>>, vector<1x128xf32>
    %5 = vector.broadcast %4 : vector<1x128xf32> to vector<512x128xf32>
    %6 = arith.addf %3, %5 : vector<512x128xf32>
    %cst_5 = arith.constant dense<0.000000e+00> : vector<512xf32>
    %7 = vector.multi_reduction <add>, %6, %cst_5 [1] : vector<512x128xf32> to vector<512xf32>
    %8 = vector.shape_cast %7 : vector<512xf32> to vector<512x1xf32>
    %cst_6 = arith.constant 1.280000e+02 : f32
    %9 = vector.broadcast %cst_6 : f32 to vector<512x1xf32>
    %10 = arith.divf %8, %9 : vector<512x1xf32>
    %11 = vector.broadcast %10 : vector<512x1xf32> to vector<512x128xf32>
    %12 = arith.subf %6, %11 : vector<512x128xf32>
    %13 = arith.mulf %12, %12 : vector<512x128xf32>
    %cst_7 = arith.constant dense<0.000000e+00> : vector<512xf32>
    %14 = vector.multi_reduction <add>, %13, %cst_7 [1] : vector<512x128xf32> to vector<512xf32>
    %15 = vector.shape_cast %14 : vector<512xf32> to vector<512x1xf32>
    %cst_8 = arith.constant 1.280000e+02 : f32
    %16 = vector.broadcast %cst_8 : f32 to vector<512x1xf32>
    %17 = arith.divf %15, %16 : vector<512x1xf32>
    %18 = vector.broadcast %10 : vector<512x1xf32> to vector<512x128xf32>
    %19 = arith.subf %6, %18 : vector<512x128xf32>
    %cst_9 = arith.constant 9.99999974E-6 : f32
    %20 = vector.broadcast %cst_9 : f32 to vector<512x1xf32>
    %21 = arith.addf %17, %20 : vector<512x1xf32>
    %22 = math.rsqrt %21 : vector<512x1xf32>
    %23 = vector.broadcast %22 : vector<512x1xf32> to vector<512x128xf32>
    %24 = arith.mulf %19, %23 : vector<512x128xf32>
    %c0_10 = arith.constant 0 : index
    %c0_11 = arith.constant 0 : index
    %25 = vector.load %arg3[%c0_10, %c0_11] : memref<128x384xbf16, #tpu.memory_space<vmem>>, vector<128x384xbf16>
    %26 = arith.truncf %24 : vector<512x128xf32> to vector<512x128xbf16>
    %cst_12 = arith.constant dense<0.000000e+00> : vector<512x384xf32>
    %27 = tpu.matmul %26, %25, %cst_12 {dimension_numbers = #tpu.dot_dimension_numbers<[1], [0], [0], [1], [0, 0, 1, 1], [], []>} : vector<512x128xbf16>, vector<128x384xbf16>, vector<512x384xf32> -> vector<512x384xf32>
    %c0_13 = arith.constant 0 : index
    %c0_14 = arith.constant 0 : index
    %28 = vector.load %arg4[%c0_13, %c0_14] : memref<1x384xf32, #tpu.memory_space<vmem>>, vector<1x384xf32>
    %29 = vector.broadcast %28 : vector<1x384xf32> to vector<512x384xf32>
    %30 = arith.addf %27, %29 : vector<512x384xf32>
    %31 = vector.extract_strided_slice %30 {offsets = [0, 0], sizes = [512, 128], strides = [1, 1]} : vector<512x384xf32> to vector<512x128xf32>
    %32 = vector.extract_strided_slice %30 {offsets = [0, 128], sizes = [512, 128], strides = [1, 1]} : vector<512x384xf32> to vector<512x128xf32>
    %33 = vector.extract_strided_slice %30 {offsets = [0, 256], sizes = [512, 128], strides = [1, 1]} : vector<512x384xf32> to vector<512x128xf32>
    %34 = arith.truncf %31 : vector<512x128xf32> to vector<512x128xbf16>
    %35 = arith.truncf %32 : vector<512x128xf32> to vector<512x128xbf16>
    %cst_15 = arith.constant dense<0.000000e+00> : vector<512x512xf32>
    %36 = tpu.matmul %34, %35, %cst_15 {dimension_numbers = #tpu.dot_dimension_numbers<[1], [1], [0], [0], [0, 0, 1, 0], [], []>} : vector<512x128xbf16>, vector<512x128xbf16>, vector<512x512xf32> -> vector<512x512xf32>
    %cst_16 = arith.constant 0.0883883461 : f32
    %37 = vector.broadcast %cst_16 : f32 to vector<512x512xf32>
    %38 = arith.mulf %36, %37 : vector<512x512xf32>
    %cst_17 = arith.constant dense<0xFF800000> : vector<512xf32>
    %39 = vector.multi_reduction <maximumf>, %38, %cst_17 [1] : vector<512x512xf32> to vector<512xf32>
    %40 = vector.shape_cast %39 : vector<512xf32> to vector<512x1xf32>
    %41 = vector.broadcast %40 : vector<512x1xf32> to vector<512x512xf32>
    %42 = arith.subf %38, %41 : vector<512x512xf32>
    %43 = math.exp %42 : vector<512x512xf32>
    %44 = arith.truncf %43 : vector<512x512xf32> to vector<512x512xbf16>
    %45 = arith.truncf %33 : vector<512x128xf32> to vector<512x128xbf16>
    %cst_18 = arith.constant dense<0.000000e+00> : vector<512x128xf32>
    %46 = tpu.matmul %44, %45, %cst_18 {dimension_numbers = #tpu.dot_dimension_numbers<[1], [0], [0], [1], [0, 0, 1, 1], [], []>} : vector<512x512xbf16>, vector<512x128xbf16>, vector<512x128xf32> -> vector<512x128xf32>
    %cst_19 = arith.constant dense<0.000000e+00> : vector<512xf32>
    %47 = vector.multi_reduction <add>, %43, %cst_19 [1] : vector<512x512xf32> to vector<512xf32>
    %48 = vector.shape_cast %47 : vector<512xf32> to vector<512x1xf32>
    %49 = tpu.reciprocal %48 {approx = true} : vector<512x1xf32> -> vector<512x1xf32>
    %50 = vector.broadcast %49 : vector<512x1xf32> to vector<512x128xf32>
    %51 = arith.mulf %46, %50 : vector<512x128xf32>
    %c0_20 = arith.constant 0 : index
    %c0_21 = arith.constant 0 : index
    %52 = vector.load %arg5[%c0_20, %c0_21] : memref<128x128xbf16, #tpu.memory_space<vmem>>, vector<128x128xbf16>
    %53 = arith.truncf %51 : vector<512x128xf32> to vector<512x128xbf16>
    %cst_22 = arith.constant dense<0.000000e+00> : vector<512x128xf32>
    %54 = tpu.matmul %53, %52, %cst_22 {dimension_numbers = #tpu.dot_dimension_numbers<[1], [0], [0], [1], [0, 0, 1, 1], [], []>} : vector<512x128xbf16>, vector<128x128xbf16>, vector<512x128xf32> -> vector<512x128xf32>
    %55 = arith.addf %6, %54 : vector<512x128xf32>
    %c0_23 = arith.constant 0 : index
    %c0_24 = arith.constant 0 : index
    %56 = vector.load %arg6[%c0_23, %c0_24] : memref<1x128xf32, #tpu.memory_space<vmem>>, vector<1x128xf32>
    %57 = vector.broadcast %56 : vector<1x128xf32> to vector<512x128xf32>
    %58 = arith.addf %55, %57 : vector<512x128xf32>
    %cst_25 = arith.constant dense<0.000000e+00> : vector<512xf32>
    %59 = vector.multi_reduction <add>, %58, %cst_25 [1] : vector<512x128xf32> to vector<512xf32>
    %60 = vector.shape_cast %59 : vector<512xf32> to vector<512x1xf32>
    %cst_26 = arith.constant 1.280000e+02 : f32
    %61 = vector.broadcast %cst_26 : f32 to vector<512x1xf32>
    %62 = arith.divf %60, %61 : vector<512x1xf32>
    %63 = vector.broadcast %62 : vector<512x1xf32> to vector<512x128xf32>
    %64 = arith.subf %58, %63 : vector<512x128xf32>
    %65 = arith.mulf %64, %64 : vector<512x128xf32>
    %cst_27 = arith.constant dense<0.000000e+00> : vector<512xf32>
    %66 = vector.multi_reduction <add>, %65, %cst_27 [1] : vector<512x128xf32> to vector<512xf32>
    %67 = vector.shape_cast %66 : vector<512xf32> to vector<512x1xf32>
    %cst_28 = arith.constant 1.280000e+02 : f32
    %68 = vector.broadcast %cst_28 : f32 to vector<512x1xf32>
    %69 = arith.divf %67, %68 : vector<512x1xf32>
    %70 = vector.broadcast %62 : vector<512x1xf32> to vector<512x128xf32>
    %71 = arith.subf %58, %70 : vector<512x128xf32>
    %cst_29 = arith.constant 9.99999974E-6 : f32
    %72 = vector.broadcast %cst_29 : f32 to vector<512x1xf32>
    %73 = arith.addf %69, %72 : vector<512x1xf32>
    %74 = math.rsqrt %73 : vector<512x1xf32>
    %75 = vector.broadcast %74 : vector<512x1xf32> to vector<512x128xf32>
    %76 = arith.mulf %71, %75 : vector<512x128xf32>
    %c0_30 = arith.constant 0 : index
    %c0_31 = arith.constant 0 : index
    %77 = vector.load %arg7[%c0_30, %c0_31] : memref<128x256xbf16, #tpu.memory_space<vmem>>, vector<128x256xbf16>
    %78 = arith.truncf %76 : vector<512x128xf32> to vector<512x128xbf16>
    %cst_32 = arith.constant dense<0.000000e+00> : vector<512x256xf32>
    %79 = tpu.matmul %78, %77, %cst_32 {dimension_numbers = #tpu.dot_dimension_numbers<[1], [0], [0], [1], [0, 0, 1, 1], [], []>} : vector<512x128xbf16>, vector<128x256xbf16>, vector<512x256xf32> -> vector<512x256xf32>
    %c0_33 = arith.constant 0 : index
    %c0_34 = arith.constant 0 : index
    %80 = vector.load %arg8[%c0_33, %c0_34] : memref<1x256xf32, #tpu.memory_space<vmem>>, vector<1x256xf32>
    %81 = vector.broadcast %80 : vector<1x256xf32> to vector<512x256xf32>
    %82 = arith.addf %79, %81 : vector<512x256xf32>
    %83 = arith.mulf %82, %82 : vector<512x256xf32>
    %84 = arith.mulf %82, %83 : vector<512x256xf32>
    %cst_35 = arith.constant 4.471500e-02 : f32
    %85 = vector.broadcast %cst_35 : f32 to vector<512x256xf32>
    %86 = arith.mulf %85, %84 : vector<512x256xf32>
    %87 = arith.addf %82, %86 : vector<512x256xf32>
    %cst_36 = arith.constant 0.797884583 : f32
    %88 = vector.broadcast %cst_36 : f32 to vector<512x256xf32>
    %89 = arith.mulf %88, %87 : vector<512x256xf32>
    %90 = math.tanh %89 : vector<512x256xf32>
    %cst_37 = arith.constant 1.000000e+00 : f32
    %91 = vector.broadcast %cst_37 : f32 to vector<512x256xf32>
    %92 = arith.addf %91, %90 : vector<512x256xf32>
    %cst_38 = arith.constant 5.000000e-01 : f32
    %93 = vector.broadcast %cst_38 : f32 to vector<512x256xf32>
    %94 = arith.mulf %93, %92 : vector<512x256xf32>
    %95 = arith.mulf %82, %94 : vector<512x256xf32>
    %c0_39 = arith.constant 0 : index
    %c0_40 = arith.constant 0 : index
    %96 = vector.load %arg9[%c0_39, %c0_40] : memref<256x128xbf16, #tpu.memory_space<vmem>>, vector<256x128xbf16>
    %97 = arith.truncf %95 : vector<512x256xf32> to vector<512x256xbf16>
    %cst_41 = arith.constant dense<0.000000e+00> : vector<512x128xf32>
    %98 = tpu.matmul %97, %96, %cst_41 {dimension_numbers = #tpu.dot_dimension_numbers<[1], [0], [0], [1], [0, 0, 1, 1], [], []>} : vector<512x256xbf16>, vector<256x128xbf16>, vector<512x128xf32> -> vector<512x128xf32>
    %99 = arith.addf %58, %98 : vector<512x128xf32>
    %c0_42 = arith.constant 0 : index
    %c0_43 = arith.constant 0 : index
    %100 = vector.load %arg10[%c0_42, %c0_43] : memref<1x128xf32, #tpu.memory_space<vmem>>, vector<1x128xf32>
    %101 = vector.broadcast %100 : vector<1x128xf32> to vector<512x128xf32>
    %102 = arith.addf %99, %101 : vector<512x128xf32>
    %c0_44 = arith.constant 0 : index
    %c0_45 = arith.constant 0 : index
    %103 = vector.load %arg11[%c0_44, %c0_45] : memref<512x128xf32, #tpu.memory_space<vmem>>, vector<512x128xf32>
    tpu.vector_store %arg11[%c0_44, %c0_45], %102 {strides = array<i32>} : memref<512x128xf32, #tpu.memory_space<vmem>>, vector<512x128xf32>,
    return
  }
}

module attributes {stable_mosaic.version = 11 : i64} {
  func.func @_decoder_kernel(%arg0: memref<512x128xf32, #tpu.memory_space<vmem>>, %arg1: memref<8x128xf32, #tpu.memory_space<vmem>>, %arg2: memref<16x32xf32, #tpu.memory_space<vmem>>, %arg3: memref<32x128xbf16, #tpu.memory_space<vmem>>, %arg4: memref<1x128xf32, #tpu.memory_space<vmem>>, %arg5: memref<128x128xbf16, #tpu.memory_space<vmem>>, %arg6: memref<1x128xf32, #tpu.memory_space<vmem>>, %arg7: memref<128x256xbf16, #tpu.memory_space<vmem>>, %arg8: memref<1x256xf32, #tpu.memory_space<vmem>>, %arg9: memref<128x128xbf16, #tpu.memory_space<vmem>>, %arg10: memref<1x128xf32, #tpu.memory_space<vmem>>, %arg11: memref<128x128xbf16, #tpu.memory_space<vmem>>, %arg12: memref<1x128xf32, #tpu.memory_space<vmem>>, %arg13: memref<128x256xbf16, #tpu.memory_space<vmem>>, %arg14: memref<1x256xf32, #tpu.memory_space<vmem>>, %arg15: memref<128x128xbf16, #tpu.memory_space<vmem>>, %arg16: memref<1x128xf32, #tpu.memory_space<vmem>>, %arg17: memref<128x256xbf16, #tpu.memory_space<vmem>>, %arg18: memref<1x256xf32, #tpu.memory_space<vmem>>, %arg19: memref<256x128xbf16, #tpu.memory_space<vmem>>, %arg20: memref<1x128xf32, #tpu.memory_space<vmem>>, %arg21: memref<128x128xbf16, #tpu.memory_space<vmem>>, %arg22: memref<1x128xf32, #tpu.memory_space<vmem>>, %arg23: memref<128x128xbf16, #tpu.memory_space<vmem>>, %arg24: memref<1x128xf32, #tpu.memory_space<vmem>>, %arg25: memref<128x6xbf16, #tpu.memory_space<vmem>>, %arg26: memref<1x6xf32, #tpu.memory_space<vmem>>, %arg27: memref<8x16xf32, #tpu.memory_space<vmem>>, %arg28: memref<8x6xf32, #tpu.memory_space<vmem>>, %arg29: memref<8x512xf32, #tpu.memory_space<vmem>>) attributes {dimension_semantics = [], scalar_prefetch = 0 : i64, scratch_operands = 0 : i64, tpu.core_type = #tpu.core_type<tc>} {
    %c0 = arith.constant 0 : index
    %c0_0 = arith.constant 0 : index
    %0 = vector.load %arg0[%c0, %c0_0] : memref<512x128xf32, #tpu.memory_space<vmem>>, vector<512x128xf32>
    %c0_1 = arith.constant 0 : index
    %c0_2 = arith.constant 0 : index
    %1 = vector.load %arg1[%c0_1, %c0_2] : memref<8x128xf32, #tpu.memory_space<vmem>>, vector<8x128xf32>
    %cst = arith.constant dense<0.000000e+00> : vector<8xf32>
    %2 = vector.multi_reduction <add>, %1, %cst [1] : vector<8x128xf32> to vector<8xf32>
    %3 = vector.shape_cast %2 : vector<8xf32> to vector<8x1xf32>
    %cst_3 = arith.constant 1.280000e+02 : f32
    %4 = vector.broadcast %cst_3 : f32 to vector<8x1xf32>
    %5 = arith.divf %3, %4 : vector<8x1xf32>
    %6 = vector.broadcast %5 : vector<8x1xf32> to vector<8x128xf32>
    %7 = arith.subf %1, %6 : vector<8x128xf32>
    %8 = arith.mulf %7, %7 : vector<8x128xf32>
    %cst_4 = arith.constant dense<0.000000e+00> : vector<8xf32>
    %9 = vector.multi_reduction <add>, %8, %cst_4 [1] : vector<8x128xf32> to vector<8xf32>
    %10 = vector.shape_cast %9 : vector<8xf32> to vector<8x1xf32>
    %cst_5 = arith.constant 1.280000e+02 : f32
    %11 = vector.broadcast %cst_5 : f32 to vector<8x1xf32>
    %12 = arith.divf %10, %11 : vector<8x1xf32>
    %13 = vector.broadcast %5 : vector<8x1xf32> to vector<8x128xf32>
    %14 = arith.subf %1, %13 : vector<8x128xf32>
    %cst_6 = arith.constant 9.99999974E-6 : f32
    %15 = vector.broadcast %cst_6 : f32 to vector<8x1xf32>
    %16 = arith.addf %12, %15 : vector<8x1xf32>
    %17 = math.rsqrt %16 : vector<8x1xf32>
    %18 = vector.broadcast %17 : vector<8x1xf32> to vector<8x128xf32>
    %19 = arith.mulf %14, %18 : vector<8x128xf32>
    %c0_7 = arith.constant 0 : index
    %c0_8 = arith.constant 0 : index
    %20 = vector.load %arg5[%c0_7, %c0_8] : memref<128x128xbf16, #tpu.memory_space<vmem>>, vector<128x128xbf16>
    %21 = arith.truncf %19 : vector<8x128xf32> to vector<8x128xbf16>
    %cst_9 = arith.constant dense<0.000000e+00> : vector<8x128xf32>
    %22 = tpu.matmul %21, %20, %cst_9 {dimension_numbers = #tpu.dot_dimension_numbers<[1], [0], [0], [1], [0, 0, 1, 1], [], []>} : vector<8x128xbf16>, vector<128x128xbf16>, vector<8x128xf32> -> vector<8x128xf32>
    %c0_10 = arith.constant 0 : index
    %c0_11 = arith.constant 0 : index
    %23 = vector.load %arg6[%c0_10, %c0_11] : memref<1x128xf32, #tpu.memory_space<vmem>>, vector<1x128xf32>
    %24 = vector.broadcast %23 : vector<1x128xf32> to vector<8x128xf32>
    %25 = arith.addf %22, %24 : vector<8x128xf32>
    %cst_12 = arith.constant dense<0.000000e+00> : vector<512xf32>
    %26 = vector.multi_reduction <add>, %0, %cst_12 [1] : vector<512x128xf32> to vector<512xf32>
    %27 = vector.shape_cast %26 : vector<512xf32> to vector<512x1xf32>
    %cst_13 = arith.constant 1.280000e+02 : f32
    %28 = vector.broadcast %cst_13 : f32 to vector<512x1xf32>
    %29 = arith.divf %27, %28 : vector<512x1xf32>
    %30 = vector.broadcast %29 : vector<512x1xf32> to vector<512x128xf32>
    %31 = arith.subf %0, %30 : vector<512x128xf32>
    %32 = arith.mulf %31, %31 : vector<512x128xf32>
    %cst_14 = arith.constant dense<0.000000e+00> : vector<512xf32>
    %33 = vector.multi_reduction <add>, %32, %cst_14 [1] : vector<512x128xf32> to vector<512xf32>
    %34 = vector.shape_cast %33 : vector<512xf32> to vector<512x1xf32>
    %cst_15 = arith.constant 1.280000e+02 : f32
    %35 = vector.broadcast %cst_15 : f32 to vector<512x1xf32>
    %36 = arith.divf %34, %35 : vector<512x1xf32>
    %37 = vector.broadcast %29 : vector<512x1xf32> to vector<512x128xf32>
    %38 = arith.subf %0, %37 : vector<512x128xf32>
    %cst_16 = arith.constant 9.99999974E-6 : f32
    %39 = vector.broadcast %cst_16 : f32 to vector<512x1xf32>
    %40 = arith.addf %36, %39 : vector<512x1xf32>
    %41 = math.rsqrt %40 : vector<512x1xf32>
    %42 = vector.broadcast %41 : vector<512x1xf32> to vector<512x128xf32>
    %43 = arith.mulf %38, %42 : vector<512x128xf32>
    %c0_17 = arith.constant 0 : index
    %c0_18 = arith.constant 0 : index
    %44 = vector.load %arg7[%c0_17, %c0_18] : memref<128x256xbf16, #tpu.memory_space<vmem>>, vector<128x256xbf16>
    %45 = arith.truncf %43 : vector<512x128xf32> to vector<512x128xbf16>
    %cst_19 = arith.constant dense<0.000000e+00> : vector<512x256xf32>
    %46 = tpu.matmul %45, %44, %cst_19 {dimension_numbers = #tpu.dot_dimension_numbers<[1], [0], [0], [1], [0, 0, 1, 1], [], []>} : vector<512x128xbf16>, vector<128x256xbf16>, vector<512x256xf32> -> vector<512x256xf32>
    %c0_20 = arith.constant 0 : index
    %c0_21 = arith.constant 0 : index
    %47 = vector.load %arg8[%c0_20, %c0_21] : memref<1x256xf32, #tpu.memory_space<vmem>>, vector<1x256xf32>
    %48 = vector.broadcast %47 : vector<1x256xf32> to vector<512x256xf32>
    %49 = arith.addf %46, %48 : vector<512x256xf32>
    %50 = vector.extract_strided_slice %49 {offsets = [0, 0], sizes = [512, 128], strides = [1, 1]} : vector<512x256xf32> to vector<512x128xf32>
    %51 = vector.extract_strided_slice %49 {offsets = [0, 128], sizes = [512, 128], strides = [1, 1]} : vector<512x256xf32> to vector<512x128xf32>
    %52 = arith.truncf %25 : vector<8x128xf32> to vector<8x128xbf16>
    %53 = arith.truncf %50 : vector<512x128xf32> to vector<512x128xbf16>
    %cst_22 = arith.constant dense<0.000000e+00> : vector<8x512xf32>
    %54 = tpu.matmul %52, %53, %cst_22 {dimension_numbers = #tpu.dot_dimension_numbers<[1], [1], [0], [0], [0, 0, 1, 0], [], []>} : vector<8x128xbf16>, vector<512x128xbf16>, vector<8x512xf32> -> vector<8x512xf32>
    %cst_23 = arith.constant 0.0883883461 : f32
    %55 = vector.broadcast %cst_23 : f32 to vector<8x512xf32>
    %56 = arith.mulf %54, %55 : vector<8x512xf32>
    %cst_24 = arith.constant dense<0xFF800000> : vector<8xf32>
    %57 = vector.multi_reduction <maximumf>, %56, %cst_24 [1] : vector<8x512xf32> to vector<8xf32>
    %58 = vector.shape_cast %57 : vector<8xf32> to vector<8x1xf32>
    %59 = vector.broadcast %58 : vector<8x1xf32> to vector<8x512xf32>
    %60 = arith.subf %56, %59 : vector<8x512xf32>
    %61 = math.exp %60 : vector<8x512xf32>
    %62 = arith.truncf %61 : vector<8x512xf32> to vector<8x512xbf16>
    %63 = arith.truncf %51 : vector<512x128xf32> to vector<512x128xbf16>
    %cst_25 = arith.constant dense<0.000000e+00> : vector<8x128xf32>
    %64 = tpu.matmul %62, %63, %cst_25 {dimension_numbers = #tpu.dot_dimension_numbers<[1], [0], [0], [1], [0, 0, 1, 1], [], []>} : vector<8x512xbf16>, vector<512x128xbf16>, vector<8x128xf32> -> vector<8x128xf32>
    %cst_26 = arith.constant dense<0.000000e+00> : vector<8xf32>
    %65 = vector.multi_reduction <add>, %61, %cst_26 [1] : vector<8x512xf32> to vector<8xf32>
    %66 = vector.shape_cast %65 : vector<8xf32> to vector<8x1xf32>
    %67 = tpu.reciprocal %66 {approx = true} : vector<8x1xf32> -> vector<8x1xf32>
    %68 = vector.broadcast %67 : vector<8x1xf32> to vector<8x128xf32>
    %69 = arith.mulf %64, %68 : vector<8x128xf32>
    %c0_27 = arith.constant 0 : index
    %c0_28 = arith.constant 0 : index
    %70 = vector.load %arg9[%c0_27, %c0_28] : memref<128x128xbf16, #tpu.memory_space<vmem>>, vector<128x128xbf16>
    %71 = arith.truncf %69 : vector<8x128xf32> to vector<8x128xbf16>
    %cst_29 = arith.constant dense<0.000000e+00> : vector<8x128xf32>
    %72 = tpu.matmul %71, %70, %cst_29 {dimension_numbers = #tpu.dot_dimension_numbers<[1], [0], [0], [1], [0, 0, 1, 1], [], []>} : vector<8x128xbf16>, vector<128x128xbf16>, vector<8x128xf32> -> vector<8x128xf32>
    %73 = arith.addf %1, %72 : vector<8x128xf32>
    %c0_30 = arith.constant 0 : index
    %c0_31 = arith.constant 0 : index
    %74 = vector.load %arg10[%c0_30, %c0_31] : memref<1x128xf32, #tpu.memory_space<vmem>>, vector<1x128xf32>
    %75 = vector.broadcast %74 : vector<1x128xf32> to vector<8x128xf32>
    %76 = arith.addf %73, %75 : vector<8x128xf32>
    %c0_32 = arith.constant 0 : index
    %c0_33 = arith.constant 0 : index
    %77 = vector.load %arg2[%c0_32, %c0_33] : memref<16x32xf32, #tpu.memory_space<vmem>>, vector<16x32xf32>
    %c0_34 = arith.constant 0 : index
    %c0_35 = arith.constant 0 : index
    %78 = vector.load %arg3[%c0_34, %c0_35] : memref<32x128xbf16, #tpu.memory_space<vmem>>, vector<32x128xbf16>
    %79 = arith.truncf %77 : vector<16x32xf32> to vector<16x32xbf16>
    %cst_36 = arith.constant dense<0.000000e+00> : vector<16x128xf32>
    %80 = tpu.matmul %79, %78, %cst_36 {dimension_numbers = #tpu.dot_dimension_numbers<[1], [0], [0], [1], [0, 0, 1, 1], [], []>} : vector<16x32xbf16>, vector<32x128xbf16>, vector<16x128xf32> -> vector<16x128xf32>
    %c0_37 = arith.constant 0 : index
    %c0_38 = arith.constant 0 : index
    %81 = vector.load %arg4[%c0_37, %c0_38] : memref<1x128xf32, #tpu.memory_space<vmem>>, vector<1x128xf32>
    %82 = vector.broadcast %81 : vector<1x128xf32> to vector<16x128xf32>
    %83 = arith.addf %80, %82 : vector<16x128xf32>
    %cst_39 = arith.constant dense<0.000000e+00> : vector<8xf32>
    %84 = vector.multi_reduction <add>, %76, %cst_39 [1] : vector<8x128xf32> to vector<8xf32>
    %85 = vector.shape_cast %84 : vector<8xf32> to vector<8x1xf32>
    %cst_40 = arith.constant 1.280000e+02 : f32
    %86 = vector.broadcast %cst_40 : f32 to vector<8x1xf32>
    %87 = arith.divf %85, %86 : vector<8x1xf32>
    %88 = vector.broadcast %87 : vector<8x1xf32> to vector<8x128xf32>
    %89 = arith.subf %76, %88 : vector<8x128xf32>
    %90 = arith.mulf %89, %89 : vector<8x128xf32>
    %cst_41 = arith.constant dense<0.000000e+00> : vector<8xf32>
    %91 = vector.multi_reduction <add>, %90, %cst_41 [1] : vector<8x128xf32> to vector<8xf32>
    %92 = vector.shape_cast %91 : vector<8xf32> to vector<8x1xf32>
    %cst_42 = arith.constant 1.280000e+02 : f32
    %93 = vector.broadcast %cst_42 : f32 to vector<8x1xf32>
    %94 = arith.divf %92, %93 : vector<8x1xf32>
    %95 = vector.broadcast %87 : vector<8x1xf32> to vector<8x128xf32>
    %96 = arith.subf %76, %95 : vector<8x128xf32>
    %cst_43 = arith.constant 9.99999974E-6 : f32
    %97 = vector.broadcast %cst_43 : f32 to vector<8x1xf32>
    %98 = arith.addf %94, %97 : vector<8x1xf32>
    %99 = math.rsqrt %98 : vector<8x1xf32>
    %100 = vector.broadcast %99 : vector<8x1xf32> to vector<8x128xf32>
    %101 = arith.mulf %96, %100 : vector<8x128xf32>
    %cst_44 = arith.constant dense<0.000000e+00> : vector<16xf32>
    %102 = vector.multi_reduction <add>, %83, %cst_44 [1] : vector<16x128xf32> to vector<16xf32>
    %103 = vector.shape_cast %102 : vector<16xf32> to vector<16x1xf32>
    %cst_45 = arith.constant 1.280000e+02 : f32
    %104 = vector.broadcast %cst_45 : f32 to vector<16x1xf32>
    %105 = arith.divf %103, %104 : vector<16x1xf32>
    %106 = vector.broadcast %105 : vector<16x1xf32> to vector<16x128xf32>
    %107 = arith.subf %83, %106 : vector<16x128xf32>
    %108 = arith.mulf %107, %107 : vector<16x128xf32>
    %cst_46 = arith.constant dense<0.000000e+00> : vector<16xf32>
    %109 = vector.multi_reduction <add>, %108, %cst_46 [1] : vector<16x128xf32> to vector<16xf32>
    %110 = vector.shape_cast %109 : vector<16xf32> to vector<16x1xf32>
    %cst_47 = arith.constant 1.280000e+02 : f32
    %111 = vector.broadcast %cst_47 : f32 to vector<16x1xf32>
    %112 = arith.divf %110, %111 : vector<16x1xf32>
    %113 = vector.broadcast %105 : vector<16x1xf32> to vector<16x128xf32>
    %114 = arith.subf %83, %113 : vector<16x128xf32>
    %cst_48 = arith.constant 9.99999974E-6 : f32
    %115 = vector.broadcast %cst_48 : f32 to vector<16x1xf32>
    %116 = arith.addf %112, %115 : vector<16x1xf32>
    %117 = math.rsqrt %116 : vector<16x1xf32>
    %118 = vector.broadcast %117 : vector<16x1xf32> to vector<16x128xf32>
    %119 = arith.mulf %114, %118 : vector<16x128xf32>
    %c0_49 = arith.constant 0 : index
    %c0_50 = arith.constant 0 : index
    %120 = vector.load %arg11[%c0_49, %c0_50] : memref<128x128xbf16, #tpu.memory_space<vmem>>, vector<128x128xbf16>
    %121 = arith.truncf %101 : vector<8x128xf32> to vector<8x128xbf16>
    %cst_51 = arith.constant dense<0.000000e+00> : vector<8x128xf32>
    %122 = tpu.matmul %121, %120, %cst_51 {dimension_numbers = #tpu.dot_dimension_numbers<[1], [0], [0], [1], [0, 0, 1, 1], [], []>} : vector<8x128xbf16>, vector<128x128xbf16>, vector<8x128xf32> -> vector<8x128xf32>
    %c0_52 = arith.constant 0 : index
    %c0_53 = arith.constant 0 : index
    %123 = vector.load %arg12[%c0_52, %c0_53] : memref<1x128xf32, #tpu.memory_space<vmem>>, vector<1x128xf32>
    %124 = vector.broadcast %123 : vector<1x128xf32> to vector<8x128xf32>
    %125 = arith.addf %122, %124 : vector<8x128xf32>
    %c0_54 = arith.constant 0 : index
    %c0_55 = arith.constant 0 : index
    %126 = vector.load %arg13[%c0_54, %c0_55] : memref<128x256xbf16, #tpu.memory_space<vmem>>, vector<128x256xbf16>
    %127 = arith.truncf %119 : vector<16x128xf32> to vector<16x128xbf16>
    %cst_56 = arith.constant dense<0.000000e+00> : vector<16x256xf32>
    %128 = tpu.matmul %127, %126, %cst_56 {dimension_numbers = #tpu.dot_dimension_numbers<[1], [0], [0], [1], [0, 0, 1, 1], [], []>} : vector<16x128xbf16>, vector<128x256xbf16>, vector<16x256xf32> -> vector<16x256xf32>
    %c0_57 = arith.constant 0 : index
    %c0_58 = arith.constant 0 : index
    %129 = vector.load %arg14[%c0_57, %c0_58] : memref<1x256xf32, #tpu.memory_space<vmem>>, vector<1x256xf32>
    %130 = vector.broadcast %129 : vector<1x256xf32> to vector<16x256xf32>
    %131 = arith.addf %128, %130 : vector<16x256xf32>
    %132 = vector.extract_strided_slice %131 {offsets = [0, 0], sizes = [16, 128], strides = [1, 1]} : vector<16x256xf32> to vector<16x128xf32>
    %133 = vector.extract_strided_slice %131 {offsets = [0, 128], sizes = [16, 128], strides = [1, 1]} : vector<16x256xf32> to vector<16x128xf32>
    %134 = arith.truncf %125 : vector<8x128xf32> to vector<8x128xbf16>
    %135 = arith.truncf %132 : vector<16x128xf32> to vector<16x128xbf16>
    %cst_59 = arith.constant dense<0.000000e+00> : vector<8x16xf32>
    %136 = tpu.matmul %134, %135, %cst_59 {dimension_numbers = #tpu.dot_dimension_numbers<[1], [1], [0], [0], [0, 0, 1, 0], [], []>} : vector<8x128xbf16>, vector<16x128xbf16>, vector<8x16xf32> -> vector<8x16xf32>
    %cst_60 = arith.constant 0.0883883461 : f32
    %137 = vector.broadcast %cst_60 : f32 to vector<8x16xf32>
    %138 = arith.mulf %136, %137 : vector<8x16xf32>
    %cst_61 = arith.constant dense<0xFF800000> : vector<8xf32>
    %139 = vector.multi_reduction <maximumf>, %138, %cst_61 [1] : vector<8x16xf32> to vector<8xf32>
    %140 = vector.shape_cast %139 : vector<8xf32> to vector<8x1xf32>
    %141 = vector.broadcast %140 : vector<8x1xf32> to vector<8x16xf32>
    %142 = arith.subf %138, %141 : vector<8x16xf32>
    %143 = math.exp %142 : vector<8x16xf32>
    %144 = arith.truncf %143 : vector<8x16xf32> to vector<8x16xbf16>
    %145 = arith.truncf %133 : vector<16x128xf32> to vector<16x128xbf16>
    %cst_62 = arith.constant dense<0.000000e+00> : vector<8x128xf32>
    %146 = tpu.matmul %144, %145, %cst_62 {dimension_numbers = #tpu.dot_dimension_numbers<[1], [0], [0], [1], [0, 0, 1, 1], [], []>} : vector<8x16xbf16>, vector<16x128xbf16>, vector<8x128xf32> -> vector<8x128xf32>
    %cst_63 = arith.constant dense<0.000000e+00> : vector<8xf32>
    %147 = vector.multi_reduction <add>, %143, %cst_63 [1] : vector<8x16xf32> to vector<8xf32>
    %148 = vector.shape_cast %147 : vector<8xf32> to vector<8x1xf32>
    %149 = tpu.reciprocal %148 {approx = true} : vector<8x1xf32> -> vector<8x1xf32>
    %150 = vector.broadcast %149 : vector<8x1xf32> to vector<8x128xf32>
    %151 = arith.mulf %146, %150 : vector<8x128xf32>
    %c0_64 = arith.constant 0 : index
    %c0_65 = arith.constant 0 : index
    %152 = vector.load %arg15[%c0_64, %c0_65] : memref<128x128xbf16, #tpu.memory_space<vmem>>, vector<128x128xbf16>
    %153 = arith.truncf %151 : vector<8x128xf32> to vector<8x128xbf16>
    %cst_66 = arith.constant dense<0.000000e+00> : vector<8x128xf32>
    %154 = tpu.matmul %153, %152, %cst_66 {dimension_numbers = #tpu.dot_dimension_numbers<[1], [0], [0], [1], [0, 0, 1, 1], [], []>} : vector<8x128xbf16>, vector<128x128xbf16>, vector<8x128xf32> -> vector<8x128xf32>
    %155 = arith.addf %76, %154 : vector<8x128xf32>
    %c0_67 = arith.constant 0 : index
    %c0_68 = arith.constant 0 : index
    %156 = vector.load %arg16[%c0_67, %c0_68] : memref<1x128xf32, #tpu.memory_space<vmem>>, vector<1x128xf32>
    %157 = vector.broadcast %156 : vector<1x128xf32> to vector<8x128xf32>
    %158 = arith.addf %155, %157 : vector<8x128xf32>
    %cst_69 = arith.constant dense<0.000000e+00> : vector<8xf32>
    %159 = vector.multi_reduction <add>, %158, %cst_69 [1] : vector<8x128xf32> to vector<8xf32>
    %160 = vector.shape_cast %159 : vector<8xf32> to vector<8x1xf32>
    %cst_70 = arith.constant 1.280000e+02 : f32
    %161 = vector.broadcast %cst_70 : f32 to vector<8x1xf32>
    %162 = arith.divf %160, %161 : vector<8x1xf32>
    %163 = vector.broadcast %162 : vector<8x1xf32> to vector<8x128xf32>
    %164 = arith.subf %158, %163 : vector<8x128xf32>
    %165 = arith.mulf %164, %164 : vector<8x128xf32>
    %cst_71 = arith.constant dense<0.000000e+00> : vector<8xf32>
    %166 = vector.multi_reduction <add>, %165, %cst_71 [1] : vector<8x128xf32> to vector<8xf32>
    %167 = vector.shape_cast %166 : vector<8xf32> to vector<8x1xf32>
    %cst_72 = arith.constant 1.280000e+02 : f32
    %168 = vector.broadcast %cst_72 : f32 to vector<8x1xf32>
    %169 = arith.divf %167, %168 : vector<8x1xf32>
    %170 = vector.broadcast %162 : vector<8x1xf32> to vector<8x128xf32>
    %171 = arith.subf %158, %170 : vector<8x128xf32>
    %cst_73 = arith.constant 9.99999974E-6 : f32
    %172 = vector.broadcast %cst_73 : f32 to vector<8x1xf32>
    %173 = arith.addf %169, %172 : vector<8x1xf32>
    %174 = math.rsqrt %173 : vector<8x1xf32>
    %175 = vector.broadcast %174 : vector<8x1xf32> to vector<8x128xf32>
    %176 = arith.mulf %171, %175 : vector<8x128xf32>
    %c0_74 = arith.constant 0 : index
    %c0_75 = arith.constant 0 : index
    %177 = vector.load %arg17[%c0_74, %c0_75] : memref<128x256xbf16, #tpu.memory_space<vmem>>, vector<128x256xbf16>
    %178 = arith.truncf %176 : vector<8x128xf32> to vector<8x128xbf16>
    %cst_76 = arith.constant dense<0.000000e+00> : vector<8x256xf32>
    %179 = tpu.matmul %178, %177, %cst_76 {dimension_numbers = #tpu.dot_dimension_numbers<[1], [0], [0], [1], [0, 0, 1, 1], [], []>} : vector<8x128xbf16>, vector<128x256xbf16>, vector<8x256xf32> -> vector<8x256xf32>
    %c0_77 = arith.constant 0 : index
    %c0_78 = arith.constant 0 : index
    %180 = vector.load %arg18[%c0_77, %c0_78] : memref<1x256xf32, #tpu.memory_space<vmem>>, vector<1x256xf32>
    %181 = vector.broadcast %180 : vector<1x256xf32> to vector<8x256xf32>
    %182 = arith.addf %179, %181 : vector<8x256xf32>
    %183 = arith.mulf %182, %182 : vector<8x256xf32>
    %184 = arith.mulf %182, %183 : vector<8x256xf32>
    %cst_79 = arith.constant 4.471500e-02 : f32
    %185 = vector.broadcast %cst_79 : f32 to vector<8x256xf32>
    %186 = arith.mulf %185, %184 : vector<8x256xf32>
    %187 = arith.addf %182, %186 : vector<8x256xf32>
    %cst_80 = arith.constant 0.797884583 : f32
    %188 = vector.broadcast %cst_80 : f32 to vector<8x256xf32>
    %189 = arith.mulf %188, %187 : vector<8x256xf32>
    %190 = math.tanh %189 : vector<8x256xf32>
    %cst_81 = arith.constant 1.000000e+00 : f32
    %191 = vector.broadcast %cst_81 : f32 to vector<8x256xf32>
    %192 = arith.addf %191, %190 : vector<8x256xf32>
    %cst_82 = arith.constant 5.000000e-01 : f32
    %193 = vector.broadcast %cst_82 : f32 to vector<8x256xf32>
    %194 = arith.mulf %193, %192 : vector<8x256xf32>
    %195 = arith.mulf %182, %194 : vector<8x256xf32>
    %c0_83 = arith.constant 0 : index
    %c0_84 = arith.constant 0 : index
    %196 = vector.load %arg19[%c0_83, %c0_84] : memref<256x128xbf16, #tpu.memory_space<vmem>>, vector<256x128xbf16>
    %197 = arith.truncf %195 : vector<8x256xf32> to vector<8x256xbf16>
    %cst_85 = arith.constant dense<0.000000e+00> : vector<8x128xf32>
    %198 = tpu.matmul %197, %196, %cst_85 {dimension_numbers = #tpu.dot_dimension_numbers<[1], [0], [0], [1], [0, 0, 1, 1], [], []>} : vector<8x256xbf16>, vector<256x128xbf16>, vector<8x128xf32> -> vector<8x128xf32>
    %199 = arith.addf %158, %198 : vector<8x128xf32>
    %c0_86 = arith.constant 0 : index
    %c0_87 = arith.constant 0 : index
    %200 = vector.load %arg20[%c0_86, %c0_87] : memref<1x128xf32, #tpu.memory_space<vmem>>, vector<1x128xf32>
    %201 = vector.broadcast %200 : vector<1x128xf32> to vector<8x128xf32>
    %202 = arith.addf %199, %201 : vector<8x128xf32>
    %c0_88 = arith.constant 0 : index
    %c0_89 = arith.constant 0 : index
    %203 = vector.load %arg21[%c0_88, %c0_89] : memref<128x128xbf16, #tpu.memory_space<vmem>>, vector<128x128xbf16>
    %204 = arith.truncf %202 : vector<8x128xf32> to vector<8x128xbf16>
    %cst_90 = arith.constant dense<0.000000e+00> : vector<8x128xf32>
    %205 = tpu.matmul %204, %203, %cst_90 {dimension_numbers = #tpu.dot_dimension_numbers<[1], [0], [0], [1], [0, 0, 1, 1], [], []>} : vector<8x128xbf16>, vector<128x128xbf16>, vector<8x128xf32> -> vector<8x128xf32>
    %c0_91 = arith.constant 0 : index
    %c0_92 = arith.constant 0 : index
    %206 = vector.load %arg22[%c0_91, %c0_92] : memref<1x128xf32, #tpu.memory_space<vmem>>, vector<1x128xf32>
    %207 = vector.broadcast %206 : vector<1x128xf32> to vector<8x128xf32>
    %208 = arith.addf %205, %207 : vector<8x128xf32>
    %209 = arith.truncf %208 : vector<8x128xf32> to vector<8x128xbf16>
    %210 = arith.truncf %83 : vector<16x128xf32> to vector<16x128xbf16>
    %cst_93 = arith.constant dense<0.000000e+00> : vector<8x16xf32>
    %211 = tpu.matmul %209, %210, %cst_93 {dimension_numbers = #tpu.dot_dimension_numbers<[1], [1], [0], [0], [0, 0, 1, 0], [], []>} : vector<8x128xbf16>, vector<16x128xbf16>, vector<8x16xf32> -> vector<8x16xf32>
    %c0_94 = arith.constant 0 : index
    %c0_95 = arith.constant 0 : index
    %212 = vector.load %arg27[%c0_94, %c0_95] : memref<8x16xf32, #tpu.memory_space<vmem>>, vector<8x16xf32>
    tpu.vector_store %arg27[%c0_94, %c0_95], %211 {strides = array<i32>} : memref<8x16xf32, #tpu.memory_space<vmem>>, vector<8x16xf32>,
    %c0_96 = arith.constant 0 : index
    %c0_97 = arith.constant 0 : index
    %213 = vector.load %arg23[%c0_96, %c0_97] : memref<128x128xbf16, #tpu.memory_space<vmem>>, vector<128x128xbf16>
    %214 = arith.truncf %202 : vector<8x128xf32> to vector<8x128xbf16>
    %cst_98 = arith.constant dense<0.000000e+00> : vector<8x128xf32>
    %215 = tpu.matmul %214, %213, %cst_98 {dimension_numbers = #tpu.dot_dimension_numbers<[1], [0], [0], [1], [0, 0, 1, 1], [], []>} : vector<8x128xbf16>, vector<128x128xbf16>, vector<8x128xf32> -> vector<8x128xf32>
    %c0_99 = arith.constant 0 : index
    %c0_100 = arith.constant 0 : index
    %216 = vector.load %arg24[%c0_99, %c0_100] : memref<1x128xf32, #tpu.memory_space<vmem>>, vector<1x128xf32>
    %217 = vector.broadcast %216 : vector<1x128xf32> to vector<8x128xf32>
    %218 = arith.addf %215, %217 : vector<8x128xf32>
    %219 = arith.truncf %218 : vector<8x128xf32> to vector<8x128xbf16>
    %220 = arith.truncf %0 : vector<512x128xf32> to vector<512x128xbf16>
    %cst_101 = arith.constant dense<0.000000e+00> : vector<8x512xf32>
    %221 = tpu.matmul %219, %220, %cst_101 {dimension_numbers = #tpu.dot_dimension_numbers<[1], [1], [0], [0], [0, 0, 1, 0], [], []>} : vector<8x128xbf16>, vector<512x128xbf16>, vector<8x512xf32> -> vector<8x512xf32>
    %c0_102 = arith.constant 0 : index
    %c0_103 = arith.constant 0 : index
    %222 = vector.load %arg29[%c0_102, %c0_103] : memref<8x512xf32, #tpu.memory_space<vmem>>, vector<8x512xf32>
    tpu.vector_store %arg29[%c0_102, %c0_103], %221 {strides = array<i32>} : memref<8x512xf32, #tpu.memory_space<vmem>>, vector<8x512xf32>,
    %c0_104 = arith.constant 0 : index
    %c0_105 = arith.constant 0 : index
    %223 = vector.load %arg25[%c0_104, %c0_105] : memref<128x6xbf16, #tpu.memory_space<vmem>>, vector<128x6xbf16>
    %224 = arith.truncf %202 : vector<8x128xf32> to vector<8x128xbf16>
    %cst_106 = arith.constant dense<0.000000e+00> : vector<8x6xf32>
    %225 = tpu.matmul %224, %223, %cst_106 {dimension_numbers = #tpu.dot_dimension_numbers<[1], [0], [0], [1], [0, 0, 1, 1], [], []>} : vector<8x128xbf16>, vector<128x6xbf16>, vector<8x6xf32> -> vector<8x6xf32>
    %c0_107 = arith.constant 0 : index
    %c0_108 = arith.constant 0 : index
    %226 = vector.load %arg26[%c0_107, %c0_108] : memref<1x6xf32, #tpu.memory_space<vmem>>, vector<1x6xf32>
    %227 = vector.broadcast %226 : vector<1x6xf32> to vector<8x6xf32>
    %228 = arith.addf %225, %227 : vector<8x6xf32>
    %229 = arith.negf %228 : vector<8x6xf32>
    %230 = math.exp %229 : vector<8x6xf32>
    %cst_109 = arith.constant 1.000000e+00 : f32
    %231 = vector.broadcast %cst_109 : f32 to vector<8x6xf32>
    %232 = arith.addf %231, %230 : vector<8x6xf32>
    %233 = arith.divf %231, %232 : vector<8x6xf32>
    %c0_110 = arith.constant 0 : index
    %c0_111 = arith.constant 0 : index
    %234 = vector.load %arg28[%c0_110, %c0_111] : memref<8x6xf32, #tpu.memory_space<vmem>>, vector<8x6xf32>
    tpu.vector_store %arg28[%c0_110, %c0_111], %233 {strides = array<i32>} : memref<8x6xf32, #tpu.memory_space<vmem>>, vector<8x6xf32>,
    return
  }
}

</mosaic_0001>

<llo_original>
// kernel: locate3d_forward.3
$region0: #{locate3d_forward.3}
  #allocation0 [shape = 'u32[]', space=smem, size = 0x4, offset = 0x4, fixed_abs, tag = 'smem constant byte address 0x4 - core index']
  #allocation1 [shape = 'u32[144,128]{1,0:T(1,128)}', space=vmem, size = 0x12000, scoped, tag = 'internal scratch']
  %s0 = inlined_call_operand.smem [shape: u32[30], index: -1, kind: input, shape index: {}]
  %s1 = sld [smem:[%s0]]
  %s2 = scalar_lea.smem %s0, 1
  %s3 = sld [smem:[%s2]]
  %s4 = scalar_lea.smem %s0, 2
  %s5 = sld [smem:[%s4]]
  %s6 = scalar_lea.smem %s0, 3
  %s7 = sld [smem:[%s6]]
  %s8 = scalar_lea.smem %s0, 4
  %s9 = sld [smem:[%s8]]
  %s10 = scalar_lea.smem %s0, 5
  %s11 = sld [smem:[%s10]]
  %s12 = scalar_lea.smem %s0, 6
  %s13 = sld [smem:[%s12]]
  %s14 = scalar_lea.smem %s0, 7
  %s15 = sld [smem:[%s14]]
  %s16 = scalar_lea.smem %s0, 8
  %s17 = sld [smem:[%s16]]
  %s18 = scalar_lea.smem %s0, 9
  %s19 = sld [smem:[%s18]]
  %s20 = scalar_lea.smem %s0, 10
  %s21 = sld [smem:[%s20]]
  %s22 = scalar_lea.smem %s0, 11
  %s23 = sld [smem:[%s22]]
  %s24 = scalar_lea.smem %s0, 12
  %s25 = sld [smem:[%s24]]
  %s26 = scalar_lea.smem %s0, 13
  %s27 = sld [smem:[%s26]]
  %s28 = scalar_lea.smem %s0, 14
  %s29 = sld [smem:[%s28]]
  %s30 = scalar_lea.smem %s0, 15
  %s31 = sld [smem:[%s30]]
  %s32 = scalar_lea.smem %s0, 16
  %s33 = sld [smem:[%s32]]
  %s34 = scalar_lea.smem %s0, 17
  %s35 = sld [smem:[%s34]]
  %s36 = scalar_lea.smem %s0, 18
  %s37 = sld [smem:[%s36]]
  %s38 = scalar_lea.smem %s0, 19
  %s39 = sld [smem:[%s38]]
  %s40 = scalar_lea.smem %s0, 20
  %s41 = sld [smem:[%s40]]
  %s42 = scalar_lea.smem %s0, 21
  %s43 = sld [smem:[%s42]]
  %s44 = scalar_lea.smem %s0, 22
  %s45 = sld [smem:[%s44]]
  %s46 = scalar_lea.smem %s0, 23
  %s47 = sld [smem:[%s46]]
  %s48 = scalar_lea.smem %s0, 24
  %s49 = sld [smem:[%s48]]
  %s50 = scalar_lea.smem %s0, 25
  %s51 = sld [smem:[%s50]]
  %s52 = scalar_lea.smem %s0, 26
  %s53 = sld [smem:[%s52]]
  %s54 = scalar_lea.smem %s0, 27
  %s55 = sld [smem:[%s54]]
  %s56 = scalar_lea.smem %s0, 28
  %s57 = sld [smem:[%s56]]
  %s58 = scalar_lea.smem %s0, 29
  %s59 = sld [smem:[%s58]]
  %60 = xla_tuple %s55, %s57, %s59
  %s61 = sld [smem:[#allocation0]]
  $region134: #{locate3d_forward.3} parent=0
    _
  %s63 = ssub.s32 1, %s61
  %s64 = scalar_select 0, %s63, %s61
  $region1: #{locate3d_forward.3} parent=0
    #allocation2 [shape = 'u8[4096]{0}', space=vmem, size = 0x1000, scoped, tag = 'output window, operand 0, single buffered']
    #allocation3 [shape = 's32[1]{0}', space=sflag, size = 0x4, scoped, tag = 'scoped memory for locate3d_forward.3']
    #allocation4 [shape = 'u8[16384]{0}', space=vmem, size = 0x4000, scoped, tag = 'output window, operand 2, single buffered']
    #allocation5 [shape = 's32[1]{0}', space=sflag, size = 0x4, scoped, tag = 'scoped memory for locate3d_forward.3']
    %65 = vsyncpa [#allocation3], 0
    %66 = vsyncpa [#allocation5], 0
    // Predicated region
    $region2: #{locate3d_forward.3} parent=1 // pred_check
      _
    $region3: #{locate3d_forward.3} parent=1 // pred_check_branch
      %68 = sbr.rel (0) target = $region5
    $region4: #{locate3d_forward.3} parent=1 // pred_region
      _
    $region5: #{locate3d_forward.3} parent=1 // pred_fallthru
      _
    // Predicated region
    $region6: #{locate3d_forward.3} parent=1 // pred_check
      _
    $region7: #{locate3d_forward.3} parent=1 // pred_check_branch
      %70 = sbr.rel (0) target = $region9
    $region8: #{locate3d_forward.3} parent=1 // pred_region
      _
    $region9: #{locate3d_forward.3} parent=1 // pred_fallthru
      _
    // Predicated region
    $region10: #{locate3d_forward.3} parent=1 // pred_check
      _
    $region11: #{locate3d_forward.3} parent=1 // pred_check_branch
      %72 = sbr.rel (0) target = $region13
    $region12: #{locate3d_forward.3} parent=1 // pred_region
      _
    $region13: #{locate3d_forward.3} parent=1 // pred_fallthru
      _
    // Predicated region
    $region14: #{locate3d_forward.3} parent=1 // pred_check
      _
    $region15: #{locate3d_forward.3} parent=1 // pred_check_branch
      %74 = sbr.rel (0) target = $region17
    $region16: #{locate3d_forward.3} parent=1 // pred_region
      _
    $region17: #{locate3d_forward.3} parent=1 // pred_fallthru
      _
    // Predicated region
    $region18: #{locate3d_forward.3} parent=1 // pred_check
      _
    $region19: #{locate3d_forward.3} parent=1 // pred_check_branch
      %76 = sbr.rel (0) target = $region21
    $region20: #{locate3d_forward.3} parent=1 // pred_region
      _
    $region21: #{locate3d_forward.3} parent=1 // pred_fallthru
      _
    // Predicated region
    $region22: #{locate3d_forward.3} parent=1 // pred_check
      _
    $region23: #{locate3d_forward.3} parent=1 // pred_check_branch
      %78 = sbr.rel (0) target = $region25
    $region24: #{locate3d_forward.3} parent=1 // pred_region
      _
    $region25: #{locate3d_forward.3} parent=1 // pred_fallthru
      _
    // Predicated region
    $region26: #{locate3d_forward.3} parent=1 // pred_check
      _
    $region27: #{locate3d_forward.3} parent=1 // pred_check_branch
      %80 = sbr.rel (0) target = $region29
    $region28: #{locate3d_forward.3} parent=1 // pred_region
      _
    $region29: #{locate3d_forward.3} parent=1 // pred_fallthru
      _
    // Predicated region
    $region30: #{locate3d_forward.3} parent=1 // pred_check
      _
    $region31: #{locate3d_forward.3} parent=1 // pred_check_branch
      %82 = sbr.rel (0) target = $region33
    $region32: #{locate3d_forward.3} parent=1 // pred_region
      _
    $region33: #{locate3d_forward.3} parent=1 // pred_fallthru
      _
    // Predicated region
    $region34: #{locate3d_forward.3} parent=1 // pred_check
      _
    $region35: #{locate3d_forward.3} parent=1 // pred_check_branch
      %84 = sbr.rel (0) target = $region37
    $region36: #{locate3d_forward.3} parent=1 // pred_region
      _
    $region37: #{locate3d_forward.3} parent=1 // pred_fallthru
      _
    // Predicated region
    $region38: #{locate3d_forward.3} parent=1 // pred_check
      _
    $region39: #{locate3d_forward.3} parent=1 // pred_check_branch
      %86 = sbr.rel (0) target = $region41
    $region40: #{locate3d_forward.3} parent=1 // pred_region
      _
    $region41: #{locate3d_forward.3} parent=1 // pred_fallthru
      _
    // Predicated region
    $region42: #{locate3d_forward.3} parent=1 // pred_check
      _
    $region43: #{locate3d_forward.3} parent=1 // pred_check_branch
      %88 = sbr.rel (0) target = $region45
    $region44: #{locate3d_forward.3} parent=1 // pred_region
      _
    $region45: #{locate3d_forward.3} parent=1 // pred_fallthru
      _
    // Predicated region
    $region46: #{locate3d_forward.3} parent=1 // pred_check
      _
    $region47: #{locate3d_forward.3} parent=1 // pred_check_branch
      %90 = sbr.rel (0) target = $region49
    $region48: #{locate3d_forward.3} parent=1 // pred_region
      _
    $region49: #{locate3d_forward.3} parent=1 // pred_fallthru
      _
    // Predicated region
    $region50: #{locate3d_forward.3} parent=1 // pred_check
      _
    $region51: #{locate3d_forward.3} parent=1 // pred_check_branch
      %92 = sbr.rel (0) target = $region53
    $region52: #{locate3d_forward.3} parent=1 // pred_region
      _
    $region53: #{locate3d_forward.3} parent=1 // pred_fallthru
      _
    // Predicated region
    $region54: #{locate3d_forward.3} parent=1 // pred_check
      _
    $region55: #{locate3d_forward.3} parent=1 // pred_check_branch
      %94 = sbr.rel (0) target = $region57
    $region56: #{locate3d_forward.3} parent=1 // pred_region
      _
    $region57: #{locate3d_forward.3} parent=1 // pred_fallthru
      _
    // Predicated region
    $region58: #{locate3d_forward.3} parent=1 // pred_check
      _
    $region59: #{locate3d_forward.3} parent=1 // pred_check_branch
      %96 = sbr.rel (0) target = $region61
    $region60: #{locate3d_forward.3} parent=1 // pred_region
      _
    $region61: #{locate3d_forward.3} parent=1 // pred_fallthru
      _
    // Predicated region
    $region62: #{locate3d_forward.3} parent=1 // pred_check
      _
    $region63: #{locate3d_forward.3} parent=1 // pred_check_branch
      %98 = sbr.rel (0) target = $region65
    $region64: #{locate3d_forward.3} parent=1 // pred_region
      _
    $region65: #{locate3d_forward.3} parent=1 // pred_fallthru
      _
    // Predicated region
    $region66: #{locate3d_forward.3} parent=1 // pred_check
      _
    $region67: #{locate3d_forward.3} parent=1 // pred_check_branch
      %100 = sbr.rel (0) target = $region69
    $region68: #{locate3d_forward.3} parent=1 // pred_region
      _
    $region69: #{locate3d_forward.3} parent=1 // pred_fallthru
      _
    // Predicated region
    $region70: #{locate3d_forward.3} parent=1 // pred_check
      _
    $region71: #{locate3d_forward.3} parent=1 // pred_check_branch
      %102 = sbr.rel (0) target = $region73
    $region72: #{locate3d_forward.3} parent=1 // pred_region
      _
    $region73: #{locate3d_forward.3} parent=1 // pred_fallthru
      _
    // Predicated region
    $region74: #{locate3d_forward.3} parent=1 // pred_check
      _
    $region75: #{locate3d_forward.3} parent=1 // pred_check_branch
      %104 = sbr.rel (0) target = $region77
    $region76: #{locate3d_forward.3} parent=1 // pred_region
      _
    $region77: #{locate3d_forward.3} parent=1 // pred_fallthru
      _
    // Predicated region
    $region78: #{locate3d_forward.3} parent=1 // pred_check
      _
    $region79: #{locate3d_forward.3} parent=1 // pred_check_branch
      %106 = sbr.rel (0) target = $region81
    $region80: #{locate3d_forward.3} parent=1 // pred_region
      _
    $region81: #{locate3d_forward.3} parent=1 // pred_fallthru
      _
    // Predicated region
    $region82: #{locate3d_forward.3} parent=1 // pred_check
      _
    $region83: #{locate3d_forward.3} parent=1 // pred_check_branch
      %108 = sbr.rel (0) target = $region85
    $region84: #{locate3d_forward.3} parent=1 // pred_region
      _
    $region85: #{locate3d_forward.3} parent=1 // pred_fallthru
      _
    // Predicated region
    $region86: #{locate3d_forward.3} parent=1 // pred_check
      _
    $region87: #{locate3d_forward.3} parent=1 // pred_check_branch
      %110 = sbr.rel (0) target = $region89
    $region88: #{locate3d_forward.3} parent=1 // pred_region
      _
    $region89: #{locate3d_forward.3} parent=1 // pred_fallthru
      _
    // Predicated region
    $region90: #{locate3d_forward.3} parent=1 // pred_check
      _
    $region91: #{locate3d_forward.3} parent=1 // pred_check_branch
      %112 = sbr.rel (0) target = $region93
    $region92: #{locate3d_forward.3} parent=1 // pred_region
      _
    $region93: #{locate3d_forward.3} parent=1 // pred_fallthru
      _
    // Predicated region
    $region94: #{locate3d_forward.3} parent=1 // pred_check
      _
    $region95: #{locate3d_forward.3} parent=1 // pred_check_branch
      %114 = sbr.rel (0) target = $region97
    $region96: #{locate3d_forward.3} parent=1 // pred_region
      _
    $region97: #{locate3d_forward.3} parent=1 // pred_fallthru
      _
    // Predicated region
    $region98: #{locate3d_forward.3} parent=1 // pred_check
      _
    $region99: #{locate3d_forward.3} parent=1 // pred_check_branch
      %116 = sbr.rel (0) target = $region101
    $region100: #{locate3d_forward.3} parent=1 // pred_region
      _
    $region101: #{locate3d_forward.3} parent=1 // pred_fallthru
      _
    // Predicated region
    $region102: #{locate3d_forward.3} parent=1 // pred_check
      _
    $region103: #{locate3d_forward.3} parent=1 // pred_check_branch
      %118 = sbr.rel (0) target = $region105
    $region104: #{locate3d_forward.3} parent=1 // pred_region
      _
    $region105: #{locate3d_forward.3} parent=1 // pred_fallthru
      _
    // Predicated region
    $region106: #{locate3d_forward.3} parent=1 // pred_check
      _
    $region107: #{locate3d_forward.3} parent=1 // pred_check_branch
      %120 = sbr.rel (0) target = $region109
    $region108: #{locate3d_forward.3} parent=1 // pred_region
      _
    $region109: #{locate3d_forward.3} parent=1 // pred_fallthru
      _
    %v122 = vld [vmem:[%s1] sm:$0xff]
    %v123 = vld [vmem:[%s1 + $0x8] sm:$0xff]
    %v124 = vld [vmem:[%s1 + $0x10] sm:$0xff]
    %v125 = vld [vmem:[%s1 + $0x18] sm:$0xff]
    %v126 = vld [vmem:[%s1 + $0x20] sm:$0xff]
    %v127 = vld [vmem:[%s1 + $0x28] sm:$0xff]
    %v128 = vld [vmem:[%s1 + $0x30] sm:$0xff]
    %v129 = vld [vmem:[%s1 + $0x38] sm:$0xff]
    %v130 = vld [vmem:[%s1 + $0x40] sm:$0xff]
    %v131 = vld [vmem:[%s1 + $0x48] sm:$0xff]
    %v132 = vld [vmem:[%s1 + $0x50] sm:$0xff]
    %v133 = vld [vmem:[%s1 + $0x58] sm:$0xff]
    %v134 = vld [vmem:[%s1 + $0x60] sm:$0xff]
    %v135 = vld [vmem:[%s1 + $0x68] sm:$0xff]
    %v136 = vld [vmem:[%s1 + $0x70] sm:$0xff]
    %v137 = vld [vmem:[%s1 + $0x78] sm:$0xff]
    %v138 = vld [vmem:[%s1 + $0x80] sm:$0xff]
    %v139 = vld [vmem:[%s1 + $0x88] sm:$0xff]
    %v140 = vld [vmem:[%s1 + $0x90] sm:$0xff]
    %v141 = vld [vmem:[%s1 + $0x98] sm:$0xff]
    %v142 = vld [vmem:[%s1 + $0xa0] sm:$0xff]
    %v143 = vld [vmem:[%s1 + $0xa8] sm:$0xff]
    %v144 = vld [vmem:[%s1 + $0xb0] sm:$0xff]
    %v145 = vld [vmem:[%s1 + $0xb8] sm:$0xff]
    %v146 = vld [vmem:[%s1 + $0xc0] sm:$0xff]
    %v147 = vld [vmem:[%s1 + $0xc8] sm:$0xff]
    %v148 = vld [vmem:[%s1 + $0xd0] sm:$0xff]
    %v149 = vld [vmem:[%s1 + $0xd8] sm:$0xff]
    %v150 = vld [vmem:[%s1 + $0xe0] sm:$0xff]
    %v151 = vld [vmem:[%s1 + $0xe8] sm:$0xff]
    %v152 = vld [vmem:[%s1 + $0xf0] sm:$0xff]
    %v153 = vld [vmem:[%s1 + $0xf8] sm:$0xff]
    %v154 = vld [vmem:[%s1 + $0x100] sm:$0xff]
    %v155 = vld [vmem:[%s1 + $0x108] sm:$0xff]
    %v156 = vld [vmem:[%s1 + $0x110] sm:$0xff]
    %v157 = vld [vmem:[%s1 + $0x118] sm:$0xff]
    %v158 = vld [vmem:[%s1 + $0x120] sm:$0xff]
    %v159 = vld [vmem:[%s1 + $0x128] sm:$0xff]
    %v160 = vld [vmem:[%s1 + $0x130] sm:$0xff]
    %v161 = vld [vmem:[%s1 + $0x138] sm:$0xff]
    %v162 = vld [vmem:[%s1 + $0x140] sm:$0xff]
    %v163 = vld [vmem:[%s1 + $0x148] sm:$0xff]
    %v164 = vld [vmem:[%s1 + $0x150] sm:$0xff]
    %v165 = vld [vmem:[%s1 + $0x158] sm:$0xff]
    %v166 = vld [vmem:[%s1 + $0x160] sm:$0xff]
    %v167 = vld [vmem:[%s1 + $0x168] sm:$0xff]
    %v168 = vld [vmem:[%s1 + $0x170] sm:$0xff]
    %v169 = vld [vmem:[%s1 + $0x178] sm:$0xff]
    %v170 = vld [vmem:[%s1 + $0x180] sm:$0xff]
    %v171 = vld [vmem:[%s1 + $0x188] sm:$0xff]
    %v172 = vld [vmem:[%s1 + $0x190] sm:$0xff]
    %v173 = vld [vmem:[%s1 + $0x198] sm:$0xff]
    %v174 = vld [vmem:[%s1 + $0x1a0] sm:$0xff]
    %v175 = vld [vmem:[%s1 + $0x1a8] sm:$0xff]
    %v176 = vld [vmem:[%s1 + $0x1b0] sm:$0xff]
    %v177 = vld [vmem:[%s1 + $0x1b8] sm:$0xff]
    %v178 = vld [vmem:[%s1 + $0x1c0] sm:$0xff]
    %v179 = vld [vmem:[%s1 + $0x1c8] sm:$0xff]
    %v180 = vld [vmem:[%s1 + $0x1d0] sm:$0xff]
    %v181 = vld [vmem:[%s1 + $0x1d8] sm:$0xff]
    %v182 = vld [vmem:[%s1 + $0x1e0] sm:$0xff]
    %v183 = vld [vmem:[%s1 + $0x1e8] sm:$0xff]
    %v184 = vld [vmem:[%s1 + $0x1f0] sm:$0xff]
    %v185 = vld [vmem:[%s1 + $0x1f8] sm:$0xff]
    %v186 = vld [vmem:[%s3] sm:$0xff]
    %187 = vadd.xlane.f32.xlu0 %v186
    %v188 = vpop.xlane.xlu0 %187
    %v189 = vrcp.pop 128.0
    %v190 = vmul.f32 %v188, %v189
    %v191 = vsub.f32 %v186, %v190
    %v192 = vmul.f32 %v191, %v191
    %193 = vadd.xlane.f32.xlu0 %v192
    %v194 = vpop.xlane.xlu0 %193
    %v195 = vmul.f32 %v194, %v189
    %v196 = vadd.f32 %v195, 1e-05
    %v197 = vrsqrt.pop %v196
    %v198 = vmul.f32 %v191, %v197
    %v199 = vld [vmem:[%s11] sm:$0xf]
    %v200 = vld [vmem:[%s11 + $0x4] sm:$0xf]
    %v201 = vld [vmem:[%s11 + $0x8] sm:$0xf]
    %v202 = vld [vmem:[%s11 + $0xc] sm:$0xf]
    %v203 = vld [vmem:[%s11 + $0x10] sm:$0xf]
    %v204 = vld [vmem:[%s11 + $0x14] sm:$0xf]
    %v205 = vld [vmem:[%s11 + $0x18] sm:$0xf]
    %v206 = vld [vmem:[%s11 + $0x1c] sm:$0xf]
    %v207 = vld [vmem:[%s11 + $0x20] sm:$0xf]
    %v208 = vld [vmem:[%s11 + $0x24] sm:$0xf]
    %v209 = vld [vmem:[%s11 + $0x28] sm:$0xf]
    %v210 = vld [vmem:[%s11 + $0x2c] sm:$0xf]
    %v211 = vld [vmem:[%s11 + $0x30] sm:$0xf]
    %v212 = vld [vmem:[%s11 + $0x34] sm:$0xf]
    %v213 = vld [vmem:[%s11 + $0x38] sm:$0xf]
    %v214 = vld [vmem:[%s11 + $0x3c] sm:$0xf]
    %v215 = vpack.c.bf16 %v198, %v198
    %v216 = vld [vmem:[%s13] sm:$0x1]
    %v218 = vlaneseq
    %v219 = vshrl.u32 %v218, 7
    %v220 = vsub.s32 0, %v219
    %v221 = vrot.slane %v216, %v220
    %v239 = vunpack.c.l.b16 %v199
    %v240 = vunpack.c.l.b16 %v200
    %v241 = vunpack.c.l.b16 %v201
    %v242 = vunpack.c.l.b16 %v202
    %v243 = vunpack.c.l.b16 %v203
    %v244 = vunpack.c.l.b16 %v204
    %v245 = vunpack.c.l.b16 %v205
    %v246 = vunpack.c.l.b16 %v206
    %v247 = vunpack.c.l.b16 %v207
    %v248 = vunpack.c.l.b16 %v208
    %v249 = vunpack.c.l.b16 %v209
    %v250 = vunpack.c.l.b16 %v210
    %v251 = vunpack.c.l.b16 %v211
    %v252 = vunpack.c.l.b16 %v212
    %v253 = vunpack.c.l.b16 %v213
    %v254 = vunpack.c.l.b16 %v214
    %v255 = vpack.c.b16 %v240, %v239
    %v256 = vpack.c.b16 %v242, %v241
    %v257 = vpack.c.b16 %v244, %v243
    %v258 = vpack.c.b16 %v246, %v245
    %v259 = vpack.c.b16 %v248, %v247
    %v260 = vpack.c.b16 %v250, %v249
    %v261 = vpack.c.b16 %v252, %v251
    %v262 = vpack.c.b16 %v254, %v253
    %271 = vmatprep.subr.bf16.mxu0 0
    %272 = vmatpush1.bf16.msra.mxu0 %v262
    %273 = vmatprep.subr.bf16.mxu0 0
    %274 = vmatpush1.bf16.msra.mxu0 %v261
    %275 = vmatprep.subr.bf16.mxu0 0
    %276 = vmatpush1.bf16.msra.mxu0 %v260
    %277 = vmatprep.subr.bf16.mxu0 0
    %278 = vmatpush1.bf16.msra.mxu0 %v259
    %279 = vmatprep.subr.bf16.mxu0 0
    %280 = vmatpush1.bf16.msra.mxu0 %v258
    %281 = vmatprep.subr.bf16.mxu0 0
    %282 = vmatpush1.bf16.msra.mxu0 %v257
    %283 = vmatprep.subr.bf16.mxu0 0
    %284 = vmatpush1.bf16.msra.mxu0 %v256
    %285 = vmatprep.subr.bf16.mxu0 0
    %286 = vmatpush1.bf16.msra.mxu0 %v255
    %287 = vmatprep.subr.bf16.mxu0 0
    %288 = vmatpush2.bf16.msra.mxu0 0
    %289 = vmatprep.subr.bf16.mxu0 0
    %290 = vmatpush2.bf16.msra.mxu0 0
    %291 = vmatprep.subr.bf16.mxu0 0
    %292 = vmatpush2.bf16.msra.mxu0 0
    %293 = vmatprep.subr.bf16.mxu0 0
    %294 = vmatpush2.bf16.msra.mxu0 0
    %295 = vmatprep.subr.bf16.mxu0 0
    %296 = vmatpush2.bf16.msra.mxu0 0
    %297 = vmatprep.subr.bf16.mxu0 0
    %298 = vmatpush2.bf16.msra.mxu0 0
    %299 = vmatprep.subr.bf16.mxu0 0
    %300 = vmatpush2.bf16.msra.mxu0 0
    %301 = vmatprep.subr.bf16.mxu0 0
    %302 = vmatpush2.bf16.msra.mxu0 0
    %303 = vmatprep.mubr.bf16.mxu0 0
    %304 = vmatmul.mubr.bf16.gmra.mxu0 %v215
    %v305 = vpop.f32.mrf.mxu0
    %v306 = vadd.f32 %v221, %v305
    %v307 = vpop.f32.mrf.mxu0
    %v308 = vpop.f32.mrf.mxu0
    %v309 = vpop.f32.mrf.mxu0
    %310 = vdwg.mxu0
    %311 = vadd.xlane.f32.xlu0 %v122
    %v312 = vpop.xlane.xlu0 %311
    %313 = vadd.xlane.f32.xlu0 %v123
    %v314 = vpop.xlane.xlu0 %313
    %315 = vadd.xlane.f32.xlu0 %v124
    %v316 = vpop.xlane.xlu0 %315
    %317 = vadd.xlane.f32.xlu0 %v125
    %v318 = vpop.xlane.xlu0 %317
    %319 = vadd.xlane.f32.xlu0 %v126
    %v320 = vpop.xlane.xlu0 %319
    %321 = vadd.xlane.f32.xlu0 %v127
    %v322 = vpop.xlane.xlu0 %321
    %323 = vadd.xlane.f32.xlu0 %v128
    %v324 = vpop.xlane.xlu0 %323
    %325 = vadd.xlane.f32.xlu0 %v129
    %v326 = vpop.xlane.xlu0 %325
    %327 = vadd.xlane.f32.xlu0 %v130
    %v328 = vpop.xlane.xlu0 %327
    %329 = vadd.xlane.f32.xlu0 %v131
    %v330 = vpop.xlane.xlu0 %329
    %331 = vadd.xlane.f32.xlu0 %v132
    %v332 = vpop.xlane.xlu0 %331
    %333 = vadd.xlane.f32.xlu0 %v133
    %v334 = vpop.xlane.xlu0 %333
    %335 = vadd.xlane.f32.xlu0 %v134
    %v336 = vpop.xlane.xlu0 %335
    %337 = vadd.xlane.f32.xlu0 %v135
    %v338 = vpop.xlane.xlu0 %337
    %339 = vadd.xlane.f32.xlu0 %v136
    %v340 = vpop.xlane.xlu0 %339
    %341 = vadd.xlane.f32.xlu0 %v137
    %v342 = vpop.xlane.xlu0 %341
    %343 = vadd.xlane.f32.xlu0 %v138
    %v344 = vpop.xlane.xlu0 %343
    %345 = vadd.xlane.f32.xlu0 %v139
    %v346 = vpop.xlane.xlu0 %345
    %347 = vadd.xlane.f32.xlu0 %v140
    %v348 = vpop.xlane.xlu0 %347
    %349 = vadd.xlane.f32.xlu0 %v141
    %v350 = vpop.xlane.xlu0 %349
    %351 = vadd.xlane.f32.xlu0 %v142
    %v352 = vpop.xlane.xlu0 %351
    %353 = vadd.xlane.f32.xlu0 %v143
    %v354 = vpop.xlane.xlu0 %353
    %355 = vadd.xlane.f32.xlu0 %v144
    %v356 = vpop.xlane.xlu0 %355
    %357 = vadd.xlane.f32.xlu0 %v145
    %v358 = vpop.xlane.xlu0 %357
    %359 = vadd.xlane.f32.xlu0 %v146
    %v360 = vpop.xlane.xlu0 %359
    %361 = vadd.xlane.f32.xlu0 %v147
    %v362 = vpop.xlane.xlu0 %361
    %363 = vadd.xlane.f32.xlu0 %v148
    %v364 = vpop.xlane.xlu0 %363
    %365 = vadd.xlane.f32.xlu0 %v149
    %v366 = vpop.xlane.xlu0 %365
    %367 = vadd.xlane.f32.xlu0 %v150
    %v368 = vpop.xlane.xlu0 %367
    %369 = vadd.xlane.f32.xlu0 %v151
    %v370 = vpop.xlane.xlu0 %369
    %371 = vadd.xlane.f32.xlu0 %v152
    %v372 = vpop.xlane.xlu0 %371
    %373 = vadd.xlane.f32.xlu0 %v153
    %v374 = vpop.xlane.xlu0 %373
    %375 = vadd.xlane.f32.xlu0 %v154
    %v376 = vpop.xlane.xlu0 %375
    %377 = vadd.xlane.f32.xlu0 %v155
    %v378 = vpop.xlane.xlu0 %377
    %379 = vadd.xlane.f32.xlu0 %v156
    %v380 = vpop.xlane.xlu0 %379
    %381 = vadd.xlane.f32.xlu0 %v157
    %v382 = vpop.xlane.xlu0 %381
    %383 = vadd.xlane.f32.xlu0 %v158
    %v384 = vpop.xlane.xlu0 %383
    %385 = vadd.xlane.f32.xlu0 %v159
    %v386 = vpop.xlane.xlu0 %385
    %387 = vadd.xlane.f32.xlu0 %v160
    %v388 = vpop.xlane.xlu0 %387
    %389 = vadd.xlane.f32.xlu0 %v161
    %v390 = vpop.xlane.xlu0 %389
    %391 = vadd.xlane.f32.xlu0 %v162
    %v392 = vpop.xlane.xlu0 %391
    %393 = vadd.xlane.f32.xlu0 %v163
    %v394 = vpop.xlane.xlu0 %393
    %395 = vadd.xlane.f32.xlu0 %v164
    %v396 = vpop.xlane.xlu0 %395
    %397 = vadd.xlane.f32.xlu0 %v165
    %v398 = vpop.xlane.xlu0 %397
    %399 = vadd.xlane.f32.xlu0 %v166
    %v400 = vpop.xlane.xlu0 %399
    %401 = vadd.xlane.f32.xlu0 %v167
    %v402 = vpop.xlane.xlu0 %401
    %403 = vadd.xlane.f32.xlu0 %v168
    %v404 = vpop.xlane.xlu0 %403
    %405 = vadd.xlane.f32.xlu0 %v169
    %v406 = vpop.xlane.xlu0 %405
    %407 = vadd.xlane.f32.xlu0 %v170
    %v408 = vpop.xlane.xlu0 %407
    %409 = vadd.xlane.f32.xlu0 %v171
    %v410 = vpop.xlane.xlu0 %409
    %411 = vadd.xlane.f32.xlu0 %v172
    %v412 = vpop.xlane.xlu0 %411
    %413 = vadd.xlane.f32.xlu0 %v173
    %v414 = vpop.xlane.xlu0 %413
    %415 = vadd.xlane.f32.xlu0 %v174
    %v416 = vpop.xlane.xlu0 %415
    %417 = vadd.xlane.f32.xlu0 %v175
    %v418 = vpop.xlane.xlu0 %417
    %419 = vadd.xlane.f32.xlu0 %v176
    %v420 = vpop.xlane.xlu0 %419
    %421 = vadd.xlane.f32.xlu0 %v177
    %v422 = vpop.xlane.xlu0 %421
    %423 = vadd.xlane.f32.xlu0 %v178
    %v424 = vpop.xlane.xlu0 %423
    %425 = vadd.xlane.f32.xlu0 %v179
    %v426 = vpop.xlane.xlu0 %425
    %427 = vadd.xlane.f32.xlu0 %v180
    %v428 = vpop.xlane.xlu0 %427
    %429 = vadd.xlane.f32.xlu0 %v181
    %v430 = vpop.xlane.xlu0 %429
    %431 = vadd.xlane.f32.xlu0 %v182
    %v432 = vpop.xlane.xlu0 %431
    %433 = vadd.xlane.f32.xlu0 %v183
    %v434 = vpop.xlane.xlu0 %433
    %435 = vadd.xlane.f32.xlu0 %v184
    %v436 = vpop.xlane.xlu0 %435
    %437 = vadd.xlane.f32.xlu0 %v185
    %v438 = vpop.xlane.xlu0 %437
    %v439 = vmul.f32 %v312, %v189
    %v440 = vmul.f32 %v314, %v189
    %v441 = vmul.f32 %v316, %v189
    %v442 = vmul.f32 %v318, %v189
    %v443 = vmul.f32 %v320, %v189
    %v444 = vmul.f32 %v322, %v189
    %v445 = vmul.f32 %v324, %v189
    %v446 = vmul.f32 %v326, %v189
    %v447 = vmul.f32 %v328, %v189
    %v448 = vmul.f32 %v330, %v189
    %v449 = vmul.f32 %v332, %v189
    %v450 = vmul.f32 %v334, %v189
    %v451 = vmul.f32 %v336, %v189
    %v452 = vmul.f32 %v338, %v189
    %v453 = vmul.f32 %v340, %v189
    %v454 = vmul.f32 %v342, %v189
    %v455 = vmul.f32 %v344, %v189
    %v456 = vmul.f32 %v346, %v189
    %v457 = vmul.f32 %v348, %v189
    %v458 = vmul.f32 %v350, %v189
    %v459 = vmul.f32 %v352, %v189
    %v460 = vmul.f32 %v354, %v189
    %v461 = vmul.f32 %v356, %v189
    %v462 = vmul.f32 %v358, %v189
    %v463 = vmul.f32 %v360, %v189
    %v464 = vmul.f32 %v362, %v189
    %v465 = vmul.f32 %v364, %v189
    %v466 = vmul.f32 %v366, %v189
    %v467 = vmul.f32 %v368, %v189
    %v468 = vmul.f32 %v370, %v189
    %v469 = vmul.f32 %v372, %v189
    %v470 = vmul.f32 %v374, %v189
    %v471 = vmul.f32 %v376, %v189
    %v472 = vmul.f32 %v378, %v189
    %v473 = vmul.f32 %v380, %v189
    %v474 = vmul.f32 %v382, %v189
    %v475 = vmul.f32 %v384, %v189
    %v476 = vmul.f32 %v386, %v189
    %v477 = vmul.f32 %v388, %v189
    %v478 = vmul.f32 %v390, %v189
    %v479 = vmul.f32 %v392, %v189
    %v480 = vmul.f32 %v394, %v189
    %v481 = vmul.f32 %v396, %v189
    %v482 = vmul.f32 %v398, %v189
    %v483 = vmul.f32 %v400, %v189
    %v484 = vmul.f32 %v402, %v189
    %v485 = vmul.f32 %v404, %v189
    %v486 = vmul.f32 %v406, %v189
    %v487 = vmul.f32 %v408, %v189
    %v488 = vmul.f32 %v410, %v189
    %v489 = vmul.f32 %v412, %v189
    %v490 = vmul.f32 %v414, %v189
    %v491 = vmul.f32 %v416, %v189
    %v492 = vmul.f32 %v418, %v189
    %v493 = vmul.f32 %v420, %v189
    %v494 = vmul.f32 %v422, %v189
    %v495 = vmul.f32 %v424, %v189
    %v496 = vmul.f32 %v426, %v189
    %v497 = vmul.f32 %v428, %v189
    %v498 = vmul.f32 %v430, %v189
    %v499 = vmul.f32 %v432, %v189
    %v500 = vmul.f32 %v434, %v189
    %v501 = vmul.f32 %v436, %v189
    %v502 = vmul.f32 %v438, %v189
    %v503 = vsub.f32 %v122, %v439
    %v504 = vsub.f32 %v123, %v440
    %v505 = vsub.f32 %v124, %v441
    %v506 = vsub.f32 %v125, %v442
    %v507 = vsub.f32 %v126, %v443
    %v508 = vsub.f32 %v127, %v444
    %v509 = vsub.f32 %v128, %v445
    %v510 = vsub.f32 %v129, %v446
    %v511 = vsub.f32 %v130, %v447
    %v512 = vsub.f32 %v131, %v448
    %v513 = vsub.f32 %v132, %v449
    %v514 = vsub.f32 %v133, %v450
    %v515 = vsub.f32 %v134, %v451
    %v516 = vsub.f32 %v135, %v452
    %v517 = vsub.f32 %v136, %v453
    %v518 = vsub.f32 %v137, %v454
    %v519 = vsub.f32 %v138, %v455
    %v520 = vsub.f32 %v139, %v456
    %v521 = vsub.f32 %v140, %v457
    %v522 = vsub.f32 %v141, %v458
    %v523 = vsub.f32 %v142, %v459
    %v524 = vsub.f32 %v143, %v460
    %v525 = vsub.f32 %v144, %v461
    %v526 = vsub.f32 %v145, %v462
    %v527 = vsub.f32 %v146, %v463
    %v528 = vsub.f32 %v147, %v464
    %v529 = vsub.f32 %v148, %v465
    %v530 = vsub.f32 %v149, %v466
    %v531 = vsub.f32 %v150, %v467
    %v532 = vsub.f32 %v151, %v468
    %v533 = vsub.f32 %v152, %v469
    %v534 = vsub.f32 %v153, %v470
    %v535 = vsub.f32 %v154, %v471
    %v536 = vsub.f32 %v155, %v472
    %v537 = vsub.f32 %v156, %v473
    %v538 = vsub.f32 %v157, %v474
    %v539 = vsub.f32 %v158, %v475
    %v540 = vsub.f32 %v159, %v476
    %v541 = vsub.f32 %v160, %v477
    %v542 = vsub.f32 %v161, %v478
    %v543 = vsub.f32 %v162, %v479
    %v544 = vsub.f32 %v163, %v480
    %v545 = vsub.f32 %v164, %v481
    %v546 = vsub.f32 %v165, %v482
    %v547 = vsub.f32 %v166, %v483
    %v548 = vsub.f32 %v167, %v484
    %v549 = vsub.f32 %v168, %v485
    %v550 = vsub.f32 %v169, %v486
    %v551 = vsub.f32 %v170, %v487
    %v552 = vsub.f32 %v171, %v488
    %v553 = vsub.f32 %v172, %v489
    %v554 = vsub.f32 %v173, %v490
    %v555 = vsub.f32 %v174, %v491
    %v556 = vsub.f32 %v175, %v492
    %v557 = vsub.f32 %v176, %v493
    %v558 = vsub.f32 %v177, %v494
    %v559 = vsub.f32 %v178, %v495
    %v560 = vsub.f32 %v179, %v496
    %v561 = vsub.f32 %v180, %v497
    %v562 = vsub.f32 %v181, %v498
    %v563 = vsub.f32 %v182, %v499
    %v564 = vsub.f32 %v183, %v500
    %v565 = vsub.f32 %v184, %v501
    %v566 = vsub.f32 %v185, %v502
    %v567 = vmul.f32 %v503, %v503
    %v568 = vmul.f32 %v504, %v504
    %v569 = vmul.f32 %v505, %v505
    %v570 = vmul.f32 %v506, %v506
    %v571 = vmul.f32 %v507, %v507
    %v572 = vmul.f32 %v508, %v508
    %v573 = vmul.f32 %v509, %v509
    %v574 = vmul.f32 %v510, %v510
    %v575 = vmul.f32 %v511, %v511
    %v576 = vmul.f32 %v512, %v512
    %v577 = vmul.f32 %v513, %v513
    %v578 = vmul.f32 %v514, %v514
    %v579 = vmul.f32 %v515, %v515
    %v580 = vmul.f32 %v516, %v516
    %v581 = vmul.f32 %v517, %v517
    %v582 = vmul.f32 %v518, %v518
    %v583 = vmul.f32 %v519, %v519
    %v584 = vmul.f32 %v520, %v520
    %v585 = vmul.f32 %v521, %v521
    %v586 = vmul.f32 %v522, %v522
    %v587 = vmul.f32 %v523, %v523
    %v588 = vmul.f32 %v524, %v524
    %v589 = vmul.f32 %v525, %v525
    %v590 = vmul.f32 %v526, %v526
    %v591 = vmul.f32 %v527, %v527
    %v592 = vmul.f32 %v528, %v528
    %v593 = vmul.f32 %v529, %v529
    %v594 = vmul.f32 %v530, %v530
    %v595 = vmul.f32 %v531, %v531
    %v596 = vmul.f32 %v532, %v532
    %v597 = vmul.f32 %v533, %v533
    %v598 = vmul.f32 %v534, %v534
    %v599 = vmul.f32 %v535, %v535
    %v600 = vmul.f32 %v536, %v536
    %v601 = vmul.f32 %v537, %v537
    %v602 = vmul.f32 %v538, %v538
    %v603 = vmul.f32 %v539, %v539
    %v604 = vmul.f32 %v540, %v540
    %v605 = vmul.f32 %v541, %v541
    %v606 = vmul.f32 %v542, %v542
    %v607 = vmul.f32 %v543, %v543
    %v608 = vmul.f32 %v544, %v544
    %v609 = vmul.f32 %v545, %v545
    %v610 = vmul.f32 %v546, %v546
    %v611 = vmul.f32 %v547, %v547
    %v612 = vmul.f32 %v548, %v548
    %v613 = vmul.f32 %v549, %v549
    %v614 = vmul.f32 %v550, %v550
    %v615 = vmul.f32 %v551, %v551
    %v616 = vmul.f32 %v552, %v552
    %v617 = vmul.f32 %v553, %v553
    %v618 = vmul.f32 %v554, %v554
    %v619 = vmul.f32 %v555, %v555
    %v620 = vmul.f32 %v556, %v556
    %v621 = vmul.f32 %v557, %v557
    %v622 = vmul.f32 %v558, %v558
    %v623 = vmul.f32 %v559, %v559
    %v624 = vmul.f32 %v560, %v560
    %v625 = vmul.f32 %v561, %v561
    %v626 = vmul.f32 %v562, %v562
    %v627 = vmul.f32 %v563, %v563
    %v628 = vmul.f32 %v564, %v564
    %v629 = vmul.f32 %v565, %v565
    %v630 = vmul.f32 %v566, %v566
    %631 = vadd.xlane.f32.xlu0 %v567
    %v632 = vpop.xlane.xlu0 %631
    %633 = vadd.xlane.f32.xlu0 %v568
    %v634 = vpop.xlane.xlu0 %633
    %635 = vadd.xlane.f32.xlu0 %v569
    %v636 = vpop.xlane.xlu0 %635
    %637 = vadd.xlane.f32.xlu0 %v570
    %v638 = vpop.xlane.xlu0 %637
    %639 = vadd.xlane.f32.xlu0 %v571
    %v640 = vpop.xlane.xlu0 %639
    %641 = vadd.xlane.f32.xlu0 %v572
    %v642 = vpop.xlane.xlu0 %641
    %643 = vadd.xlane.f32.xlu0 %v573
    %v644 = vpop.xlane.xlu0 %643
    %645 = vadd.xlane.f32.xlu0 %v574
    %v646 = vpop.xlane.xlu0 %645
    %647 = vadd.xlane.f32.xlu0 %v575
    %v648 = vpop.xlane.xlu0 %647
    %649 = vadd.xlane.f32.xlu0 %v576
    %v650 = vpop.xlane.xlu0 %649
    %651 = vadd.xlane.f32.xlu0 %v577
    %v652 = vpop.xlane.xlu0 %651
    %653 = vadd.xlane.f32.xlu0 %v578
    %v654 = vpop.xlane.xlu0 %653
    %655 = vadd.xlane.f32.xlu0 %v579
    %v656 = vpop.xlane.xlu0 %655
    %657 = vadd.xlane.f32.xlu0 %v580
    %v658 = vpop.xlane.xlu0 %657
    %659 = vadd.xlane.f32.xlu0 %v581
    %v660 = vpop.xlane.xlu0 %659
    %661 = vadd.xlane.f32.xlu0 %v582
    %v662 = vpop.xlane.xlu0 %661
    %663 = vadd.xlane.f32.xlu0 %v583
    %v664 = vpop.xlane.xlu0 %663
    %665 = vadd.xlane.f32.xlu0 %v584
    %v666 = vpop.xlane.xlu0 %665
    %667 = vadd.xlane.f32.xlu0 %v585
    %v668 = vpop.xlane.xlu0 %667
    %669 = vadd.xlane.f32.xlu0 %v586
    %v670 = vpop.xlane.xlu0 %669
    %671 = vadd.xlane.f32.xlu0 %v587
    %v672 = vpop.xlane.xlu0 %671
    %673 = vadd.xlane.f32.xlu0 %v588
    %v674 = vpop.xlane.xlu0 %673
    %675 = vadd.xlane.f32.xlu0 %v589
    %v676 = vpop.xlane.xlu0 %675
    %677 = vadd.xlane.f32.xlu0 %v590
    %v678 = vpop.xlane.xlu0 %677
    %679 = vadd.xlane.f32.xlu0 %v591
    %v680 = vpop.xlane.xlu0 %679
    %681 = vadd.xlane.f32.xlu0 %v592
    %v682 = vpop.xlane.xlu0 %681
    %683 = vadd.xlane.f32.xlu0 %v593
    %v684 = vpop.xlane.xlu0 %683
    %685 = vadd.xlane.f32.xlu0 %v594
    %v686 = vpop.xlane.xlu0 %685
    %687 = vadd.xlane.f32.xlu0 %v595
    %v688 = vpop.xlane.xlu0 %687
    %689 = vadd.xlane.f32.xlu0 %v596
    %v690 = vpop.xlane.xlu0 %689
    %691 = vadd.xlane.f32.xlu0 %v597
    %v692 = vpop.xlane.xlu0 %691
    %693 = vadd.xlane.f32.xlu0 %v598
    %v694 = vpop.xlane.xlu0 %693
    %695 = vadd.xlane.f32.xlu0 %v599
    %v696 = vpop.xlane.xlu0 %695
    %697 = vadd.xlane.f32.xlu0 %v600
    %v698 = vpop.xlane.xlu0 %697
    %699 = vadd.xlane.f32.xlu0 %v601
    %v700 = vpop.xlane.xlu0 %699
    %701 = vadd.xlane.f32.xlu0 %v602
    %v702 = vpop.xlane.xlu0 %701
    %703 = vadd.xlane.f32.xlu0 %v603
    %v704 = vpop.xlane.xlu0 %703
    %705 = vadd.xlane.f32.xlu0 %v604
    %v706 = vpop.xlane.xlu0 %705
    %707 = vadd.xlane.f32.xlu0 %v605
    %v708 = vpop.xlane.xlu0 %707
    %709 = vadd.xlane.f32.xlu0 %v606
    %v710 = vpop.xlane.xlu0 %709
    %711 = vadd.xlane.f32.xlu0 %v607
    %v712 = vpop.xlane.xlu0 %711
    %713 = vadd.xlane.f32.xlu0 %v608
    %v714 = vpop.xlane.xlu0 %713
    %715 = vadd.xlane.f32.xlu0 %v609
    %v716 = vpop.xlane.xlu0 %715
    %717 = vadd.xlane.f32.xlu0 %v610
    %v718 = vpop.xlane.xlu0 %717
    %719 = vadd.xlane.f32.xlu0 %v611
    %v720 = vpop.xlane.xlu0 %719
    %721 = vadd.xlane.f32.xlu0 %v612
    %v722 = vpop.xlane.xlu0 %721
    %723 = vadd.xlane.f32.xlu0 %v613
    %v724 = vpop.xlane.xlu0 %723
    %725 = vadd.xlane.f32.xlu0 %v614
    %v726 = vpop.xlane.xlu0 %725
    %727 = vadd.xlane.f32.xlu0 %v615
    %v728 = vpop.xlane.xlu0 %727
    %729 = vadd.xlane.f32.xlu0 %v616
    %v730 = vpop.xlane.xlu0 %729
    %731 = vadd.xlane.f32.xlu0 %v617
    %v732 = vpop.xlane.xlu0 %731
    %733 = vadd.xlane.f32.xlu0 %v618
    %v734 = vpop.xlane.xlu0 %733
    %735 = vadd.xlane.f32.xlu0 %v619
    %v736 = vpop.xlane.xlu0 %735
    %737 = vadd.xlane.f32.xlu0 %v620
    %v738 = vpop.xlane.xlu0 %737
    %739 = vadd.xlane.f32.xlu0 %v621
    %v740 = vpop.xlane.xlu0 %739
    %741 = vadd.xlane.f32.xlu0 %v622
    %v742 = vpop.xlane.xlu0 %741
    %743 = vadd.xlane.f32.xlu0 %v623
    %v744 = vpop.xlane.xlu0 %743
    %745 = vadd.xlane.f32.xlu0 %v624
    %v746 = vpop.xlane.xlu0 %745
    %747 = vadd.xlane.f32.xlu0 %v625
    %v748 = vpop.xlane.xlu0 %747
    %749 = vadd.xlane.f32.xlu0 %v626
    %v750 = vpop.xlane.xlu0 %749
    %751 = vadd.xlane.f32.xlu0 %v627
    %v752 = vpop.xlane.xlu0 %751
    %753 = vadd.xlane.f32.xlu0 %v628
    %v754 = vpop.xlane.xlu0 %753
    %755 = vadd.xlane.f32.xlu0 %v629
    %v756 = vpop.xlane.xlu0 %755
    %757 = vadd.xlane.f32.xlu0 %v630
    %v758 = vpop.xlane.xlu0 %757
    %v759 = vmul.f32 %v632, %v189
    %v760 = vmul.f32 %v634, %v189
    %v761 = vmul.f32 %v636, %v189
    %v762 = vmul.f32 %v638, %v189
    %v763 = vmul.f32 %v640, %v189
    %v764 = vmul.f32 %v642, %v189
    %v765 = vmul.f32 %v644, %v189
    %v766 = vmul.f32 %v646, %v189
    %v767 = vmul.f32 %v648, %v189
    %v768 = vmul.f32 %v650, %v189
    %v769 = vmul.f32 %v652, %v189
    %v770 = vmul.f32 %v654, %v189
    %v771 = vmul.f32 %v656, %v189
    %v772 = vmul.f32 %v658, %v189
    %v773 = vmul.f32 %v660, %v189
    %v774 = vmul.f32 %v662, %v189
    %v775 = vmul.f32 %v664, %v189
    %v776 = vmul.f32 %v666, %v189
    %v777 = vmul.f32 %v668, %v189
    %v778 = vmul.f32 %v670, %v189
    %v779 = vmul.f32 %v672, %v189
    %v780 = vmul.f32 %v674, %v189
    %v781 = vmul.f32 %v676, %v189
    %v782 = vmul.f32 %v678, %v189
    %v783 = vmul.f32 %v680, %v189
    %v784 = vmul.f32 %v682, %v189
    %v785 = vmul.f32 %v684, %v189
    %v786 = vmul.f32 %v686, %v189
    %v787 = vmul.f32 %v688, %v189
    %v788 = vmul.f32 %v690, %v189
    %v789 = vmul.f32 %v692, %v189
    %v790 = vmul.f32 %v694, %v189
    %v791 = vmul.f32 %v696, %v189
    %v792 = vmul.f32 %v698, %v189
    %v793 = vmul.f32 %v700, %v189
    %v794 = vmul.f32 %v702, %v189
    %v795 = vmul.f32 %v704, %v189
    %v796 = vmul.f32 %v706, %v189
    %v797 = vmul.f32 %v708, %v189
    %v798 = vmul.f32 %v710, %v189
    %v799 = vmul.f32 %v712, %v189
    %v800 = vmul.f32 %v714, %v189
    %v801 = vmul.f32 %v716, %v189
    %v802 = vmul.f32 %v718, %v189
    %v803 = vmul.f32 %v720, %v189
    %v804 = vmul.f32 %v722, %v189
    %v805 = vmul.f32 %v724, %v189
    %v806 = vmul.f32 %v726, %v189
    %v807 = vmul.f32 %v728, %v189
    %v808 = vmul.f32 %v730, %v189
    %v809 = vmul.f32 %v732, %v189
    %v810 = vmul.f32 %v734, %v189
    %v811 = vmul.f32 %v736, %v189
    %v812 = vmul.f32 %v738, %v189
    %v813 = vmul.f32 %v740, %v189
    %v814 = vmul.f32 %v742, %v189
    %v815 = vmul.f32 %v744, %v189
    %v816 = vmul.f32 %v746, %v189
    %v817 = vmul.f32 %v748, %v189
    %v818 = vmul.f32 %v750, %v189
    %v819 = vmul.f32 %v752, %v189
    %v820 = vmul.f32 %v754, %v189
    %v821 = vmul.f32 %v756, %v189
    %v822 = vmul.f32 %v758, %v189
    %v823 = vadd.f32 %v759, 1e-05
    %v824 = vadd.f32 %v760, 1e-05
    %v825 = vadd.f32 %v761, 1e-05
    %v826 = vadd.f32 %v762, 1e-05
    %v827 = vadd.f32 %v763, 1e-05
    %v828 = vadd.f32 %v764, 1e-05
    %v829 = vadd.f32 %v765, 1e-05
    %v830 = vadd.f32 %v766, 1e-05
    %v831 = vadd.f32 %v767, 1e-05
    %v832 = vadd.f32 %v768, 1e-05
    %v833 = vadd.f32 %v769, 1e-05
    %v834 = vadd.f32 %v770, 1e-05
    %v835 = vadd.f32 %v771, 1e-05
    %v836 = vadd.f32 %v772, 1e-05
    %v837 = vadd.f32 %v773, 1e-05
    %v838 = vadd.f32 %v774, 1e-05
    %v839 = vadd.f32 %v775, 1e-05
    %v840 = vadd.f32 %v776, 1e-05
    %v841 = vadd.f32 %v777, 1e-05
    %v842 = vadd.f32 %v778, 1e-05
    %v843 = vadd.f32 %v779, 1e-05
    %v844 = vadd.f32 %v780, 1e-05
    %v845 = vadd.f32 %v781, 1e-05
    %v846 = vadd.f32 %v782, 1e-05
    %v847 = vadd.f32 %v783, 1e-05
    %v848 = vadd.f32 %v784, 1e-05
    %v849 = vadd.f32 %v785, 1e-05
    %v850 = vadd.f32 %v786, 1e-05
    %v851 = vadd.f32 %v787, 1e-05
    %v852 = vadd.f32 %v788, 1e-05
    %v853 = vadd.f32 %v789, 1e-05
    %v854 = vadd.f32 %v790, 1e-05
    %v855 = vadd.f32 %v791, 1e-05
    %v856 = vadd.f32 %v792, 1e-05
    %v857 = vadd.f32 %v793, 1e-05
    %v858 = vadd.f32 %v794, 1e-05
    %v859 = vadd.f32 %v795, 1e-05
    %v860 = vadd.f32 %v796, 1e-05
    %v861 = vadd.f32 %v797, 1e-05
    %v862 = vadd.f32 %v798, 1e-05
    %v863 = vadd.f32 %v799, 1e-05
    %v864 = vadd.f32 %v800, 1e-05
    %v865 = vadd.f32 %v801, 1e-05
    %v866 = vadd.f32 %v802, 1e-05
    %v867 = vadd.f32 %v803, 1e-05
    %v868 = vadd.f32 %v804, 1e-05
    %v869 = vadd.f32 %v805, 1e-05
    %v870 = vadd.f32 %v806, 1e-05
    %v871 = vadd.f32 %v807, 1e-05
    %v872 = vadd.f32 %v808, 1e-05
    %v873 = vadd.f32 %v809, 1e-05
    %v874 = vadd.f32 %v810, 1e-05
    %v875 = vadd.f32 %v811, 1e-05
    %v876 = vadd.f32 %v812, 1e-05
    %v877 = vadd.f32 %v813, 1e-05
    %v878 = vadd.f32 %v814, 1e-05
    %v879 = vadd.f32 %v815, 1e-05
    %v880 = vadd.f32 %v816, 1e-05
    %v881 = vadd.f32 %v817, 1e-05
    %v882 = vadd.f32 %v818, 1e-05
    %v883 = vadd.f32 %v819, 1e-05
    %v884 = vadd.f32 %v820, 1e-05
    %v885 = vadd.f32 %v821, 1e-05
    %v886 = vadd.f32 %v822, 1e-05
    %v887 = vrsqrt.pop %v823
    %v888 = vrsqrt.pop %v824
    %v889 = vrsqrt.pop %v825
    %v890 = vrsqrt.pop %v826
    %v891 = vrsqrt.pop %v827
    %v892 = vrsqrt.pop %v828
    %v893 = vrsqrt.pop %v829
    %v894 = vrsqrt.pop %v830
    %v895 = vrsqrt.pop %v831
    %v896 = vrsqrt.pop %v832
    %v897 = vrsqrt.pop %v833
    %v898 = vrsqrt.pop %v834
    %v899 = vrsqrt.pop %v835
    %v900 = vrsqrt.pop %v836
    %v901 = vrsqrt.pop %v837
    %v902 = vrsqrt.pop %v838
    %v903 = vrsqrt.pop %v839
    %v904 = vrsqrt.pop %v840
    %v905 = vrsqrt.pop %v841
    %v906 = vrsqrt.pop %v842
    %v907 = vrsqrt.pop %v843
    %v908 = vrsqrt.pop %v844
    %v909 = vrsqrt.pop %v845
    %v910 = vrsqrt.pop %v846
    %v911 = vrsqrt.pop %v847
    %v912 = vrsqrt.pop %v848
    %v913 = vrsqrt.pop %v849
    %v914 = vrsqrt.pop %v850
    %v915 = vrsqrt.pop %v851
    %v916 = vrsqrt.pop %v852
    %v917 = vrsqrt.pop %v853
    %v918 = vrsqrt.pop %v854
    %v919 = vrsqrt.pop %v855
    %v920 = vrsqrt.pop %v856
    %v921 = vrsqrt.pop %v857
    %v922 = vrsqrt.pop %v858
    %v923 = vrsqrt.pop %v859
    %v924 = vrsqrt.pop %v860
    %v925 = vrsqrt.pop %v861
    %v926 = vrsqrt.pop %v862
    %v927 = vrsqrt.pop %v863
    %v928 = vrsqrt.pop %v864
    %v929 = vrsqrt.pop %v865
    %v930 = vrsqrt.pop %v866
    %v931 = vrsqrt.pop %v867
    %v932 = vrsqrt.pop %v868
    %v933 = vrsqrt.pop %v869
    %v934 = vrsqrt.pop %v870
    %v935 = vrsqrt.pop %v871
    %v936 = vrsqrt.pop %v872
    %v937 = vrsqrt.pop %v873
    %v938 = vrsqrt.pop %v874
    %v939 = vrsqrt.pop %v875
    %v940 = vrsqrt.pop %v876
    %v941 = vrsqrt.pop %v877
    %v942 = vrsqrt.pop %v878
    %v943 = vrsqrt.pop %v879
    %v944 = vrsqrt.pop %v880
    %v945 = vrsqrt.pop %v881
    %v946 = vrsqrt.pop %v882
    %v947 = vrsqrt.pop %v883
    %v948 = vrsqrt.pop %v884
    %v949 = vrsqrt.pop %v885
    %v950 = vrsqrt.pop %v886
    %v951 = vmul.f32 %v503, %v887
    %v952 = vmul.f32 %v504, %v888
    %v953 = vmul.f32 %v505, %v889
    %v954 = vmul.f32 %v506, %v890
    %v955 = vmul.f32 %v507, %v891
    %v956 = vmul.f32 %v508, %v892
    %v957 = vmul.f32 %v509, %v893
    %v958 = vmul.f32 %v510, %v894
    %v959 = vmul.f32 %v511, %v895
    %v960 = vmul.f32 %v512, %v896
    %v961 = vmul.f32 %v513, %v897
    %v962 = vmul.f32 %v514, %v898
    %v963 = vmul.f32 %v515, %v899
    %v964 = vmul.f32 %v516, %v900
    %v965 = vmul.f32 %v517, %v901
    %v966 = vmul.f32 %v518, %v902
    %v967 = vmul.f32 %v519, %v903
    %v968 = vmul.f32 %v520, %v904
    %v969 = vmul.f32 %v521, %v905
    %v970 = vmul.f32 %v522, %v906
    %v971 = vmul.f32 %v523, %v907
    %v972 = vmul.f32 %v524, %v908
    %v973 = vmul.f32 %v525, %v909
    %v974 = vmul.f32 %v526, %v910
    %v975 = vmul.f32 %v527, %v911
    %v976 = vmul.f32 %v528, %v912
    %v977 = vmul.f32 %v529, %v913
    %v978 = vmul.f32 %v530, %v914
    %v979 = vmul.f32 %v531, %v915
    %v980 = vmul.f32 %v532, %v916
    %v981 = vmul.f32 %v533, %v917
    %v982 = vmul.f32 %v534, %v918
    %v983 = vmul.f32 %v535, %v919
    %v984 = vmul.f32 %v536, %v920
    %v985 = vmul.f32 %v537, %v921
    %v986 = vmul.f32 %v538, %v922
    %v987 = vmul.f32 %v539, %v923
    %v988 = vmul.f32 %v540, %v924
    %v989 = vmul.f32 %v541, %v925
    %v990 = vmul.f32 %v542, %v926
    %v991 = vmul.f32 %v543, %v927
    %v992 = vmul.f32 %v544, %v928
    %v993 = vmul.f32 %v545, %v929
    %v994 = vmul.f32 %v546, %v930
    %v995 = vmul.f32 %v547, %v931
    %v996 = vmul.f32 %v548, %v932
    %v997 = vmul.f32 %v549, %v933
    %v998 = vmul.f32 %v550, %v934
    %v999 = vmul.f32 %v551, %v935
    %v1000 = vmul.f32 %v552, %v936
    %v1001 = vmul.f32 %v553, %v937
    %v1002 = vmul.f32 %v554, %v938
    %v1003 = vmul.f32 %v555, %v939
    %v1004 = vmul.f32 %v556, %v940
    %v1005 = vmul.f32 %v557, %v941
    %v1006 = vmul.f32 %v558, %v942
    %v1007 = vmul.f32 %v559, %v943
    %v1008 = vmul.f32 %v560, %v944
    %v1009 = vmul.f32 %v561, %v945
    %v1010 = vmul.f32 %v562, %v946
    %v1011 = vmul.f32 %v563, %v947
    %v1012 = vmul.f32 %v564, %v948
    %v1013 = vmul.f32 %v565, %v949
    %v1014 = vmul.f32 %v566, %v950
    %v1015 = vld [vmem:[%s15] sm:$0xff]
    %v1016 = vld [vmem:[%s15 + $0x8] sm:$0xff]
    %v1017 = vld [vmem:[%s15 + $0x10] sm:$0xff]
    %v1018 = vld [vmem:[%s15 + $0x18] sm:$0xff]
    %v1019 = vld [vmem:[%s15 + $0x20] sm:$0xff]
    %v1020 = vld [vmem:[%s15 + $0x28] sm:$0xff]
    %v1021 = vld [vmem:[%s15 + $0x30] sm:$0xff]
    %v1022 = vld [vmem:[%s15 + $0x38] sm:$0xff]
    %v1023 = vld [vmem:[%s15 + $0x40] sm:$0xff]
    %v1024 = vld [vmem:[%s15 + $0x48] sm:$0xff]
    %v1025 = vld [vmem:[%s15 + $0x50] sm:$0xff]
    %v1026 = vld [vmem:[%s15 + $0x58] sm:$0xff]
    %v1027 = vld [vmem:[%s15 + $0x60] sm:$0xff]
    %v1028 = vld [vmem:[%s15 + $0x68] sm:$0xff]
    %v1029 = vld [vmem:[%s15 + $0x70] sm:$0xff]
    %v1030 = vld [vmem:[%s15 + $0x78] sm:$0xff]
    %v1031 = vpack.c.bf16 %v952, %v951
    %v1032 = vpack.c.bf16 %v954, %v953
    %v1033 = vpack.c.bf16 %v956, %v955
    %v1034 = vpack.c.bf16 %v958, %v957
    %v1035 = vpack.c.bf16 %v960, %v959
    %v1036 = vpack.c.bf16 %v962, %v961
    %v1037 = vpack.c.bf16 %v964, %v963
    %v1038 = vpack.c.bf16 %v966, %v965
    %v1039 = vpack.c.bf16 %v968, %v967
    %v1040 = vpack.c.bf16 %v970, %v969
    %v1041 = vpack.c.bf16 %v972, %v971
    %v1042 = vpack.c.bf16 %v974, %v973
    %v1043 = vpack.c.bf16 %v976, %v975
    %v1044 = vpack.c.bf16 %v978, %v977
    %v1045 = vpack.c.bf16 %v980, %v979
    %v1046 = vpack.c.bf16 %v982, %v981
    %v1047 = vpack.c.bf16 %v984, %v983
    %v1048 = vpack.c.bf16 %v986, %v985
    %v1049 = vpack.c.bf16 %v988, %v987
    %v1050 = vpack.c.bf16 %v990, %v989
    %v1051 = vpack.c.bf16 %v992, %v991
    %v1052 = vpack.c.bf16 %v994, %v993
    %v1053 = vpack.c.bf16 %v996, %v995
    %v1054 = vpack.c.bf16 %v998, %v997
    %v1055 = vpack.c.bf16 %v1000, %v999
    %v1056 = vpack.c.bf16 %v1002, %v1001
    %v1057 = vpack.c.bf16 %v1004, %v1003
    %v1058 = vpack.c.bf16 %v1006, %v1005
    %v1059 = vpack.c.bf16 %v1008, %v1007
    %v1060 = vpack.c.bf16 %v1010, %v1009
    %v1061 = vpack.c.bf16 %v1012, %v1011
    %v1062 = vpack.c.bf16 %v1014, %v1013
    %v1063 = vld [vmem:[%s17] sm:$0x3]
    %v1065 = vlaneseq
    %v1066 = vshrl.u32 %v1065, 7
    %v1067 = vsub.s32 0, %v1066
    %v1068 = vrot.slane %v1063, %v1067
    %v1069 = vlaneseq
    %v1070 = vshrl.u32 %v1069, 7
    %v1071 = vsub.s32 1, %v1070
    %v1072 = vrot.slane %v1063, %v1071
    %v1091 = vunpack.c.l.b16 %v1015
    %v1092 = vunpack.c.h.b16 %v1015
    %v1093 = vunpack.c.l.b16 %v1016
    %v1094 = vunpack.c.h.b16 %v1016
    %v1095 = vunpack.c.l.b16 %v1017
    %v1096 = vunpack.c.h.b16 %v1017
    %v1097 = vunpack.c.l.b16 %v1018
    %v1098 = vunpack.c.h.b16 %v1018
    %v1099 = vunpack.c.l.b16 %v1019
    %v1100 = vunpack.c.h.b16 %v1019
    %v1101 = vunpack.c.l.b16 %v1020
    %v1102 = vunpack.c.h.b16 %v1020
    %v1103 = vunpack.c.l.b16 %v1021
    %v1104 = vunpack.c.h.b16 %v1021
    %v1105 = vunpack.c.l.b16 %v1022
    %v1106 = vunpack.c.h.b16 %v1022
    %v1107 = vunpack.c.l.b16 %v1023
    %v1108 = vunpack.c.h.b16 %v1023
    %v1109 = vunpack.c.l.b16 %v1024
    %v1110 = vunpack.c.h.b16 %v1024
    %v1111 = vunpack.c.l.b16 %v1025
    %v1112 = vunpack.c.h.b16 %v1025
    %v1113 = vunpack.c.l.b16 %v1026
    %v1114 = vunpack.c.h.b16 %v1026
    %v1115 = vunpack.c.l.b16 %v1027
    %v1116 = vunpack.c.h.b16 %v1027
    %v1117 = vunpack.c.l.b16 %v1028
    %v1118 = vunpack.c.h.b16 %v1028
    %v1119 = vunpack.c.l.b16 %v1029
    %v1120 = vunpack.c.h.b16 %v1029
    %v1121 = vunpack.c.l.b16 %v1030
    %v1122 = vunpack.c.h.b16 %v1030
    %v1123 = vpack.c.b16 %v1093, %v1091
    %v1124 = vpack.c.b16 %v1094, %v1092
    %v1125 = vpack.c.b16 %v1097, %v1095
    %v1126 = vpack.c.b16 %v1098, %v1096
    %v1127 = vpack.c.b16 %v1101, %v1099
    %v1128 = vpack.c.b16 %v1102, %v1100
    %v1129 = vpack.c.b16 %v1105, %v1103
    %v1130 = vpack.c.b16 %v1106, %v1104
    %v1131 = vpack.c.b16 %v1109, %v1107
    %v1132 = vpack.c.b16 %v1110, %v1108
    %v1133 = vpack.c.b16 %v1113, %v1111
    %v1134 = vpack.c.b16 %v1114, %v1112
    %v1135 = vpack.c.b16 %v1117, %v1115
    %v1136 = vpack.c.b16 %v1118, %v1116
    %v1137 = vpack.c.b16 %v1121, %v1119
    %v1138 = vpack.c.b16 %v1122, %v1120
    %1155 = vmatprep.subr.bf16.mxu0 %v1138
    %1156 = vmatpush1.bf16.msra.mxu0 %v1137
    %1157 = vmatprep.subr.bf16.mxu0 %v1136
    %1158 = vmatpush1.bf16.msra.mxu0 %v1135
    %1159 = vmatprep.subr.bf16.mxu0 %v1134
    %1160 = vmatpush1.bf16.msra.mxu0 %v1133
    %1161 = vmatprep.subr.bf16.mxu0 %v1132
    %1162 = vmatpush1.bf16.msra.mxu0 %v1131
    %1163 = vmatprep.subr.bf16.mxu0 %v1130
    %1164 = vmatpush1.bf16.msra.mxu0 %v1129
    %1165 = vmatprep.subr.bf16.mxu0 %v1128
    %1166 = vmatpush1.bf16.msra.mxu0 %v1127
    %1167 = vmatprep.subr.bf16.mxu0 %v1126
    %1168 = vmatpush1.bf16.msra.mxu0 %v1125
    %1169 = vmatprep.subr.bf16.mxu0 %v1124
    %1170 = vmatpush1.bf16.msra.mxu0 %v1123
    %1171 = vmatprep.subr.bf16.mxu0 0
    %1172 = vmatpush2.bf16.msra.mxu0 0
    %1173 = vmatprep.subr.bf16.mxu0 0
    %1174 = vmatpush2.bf16.msra.mxu0 0
    %1175 = vmatprep.subr.bf16.mxu0 0
    %1176 = vmatpush2.bf16.msra.mxu0 0
    %1177 = vmatprep.subr.bf16.mxu0 0
    %1178 = vmatpush2.bf16.msra.mxu0 0
    %1179 = vmatprep.subr.bf16.mxu0 0
    %1180 = vmatpush2.bf16.msra.mxu0 0
    %1181 = vmatprep.subr.bf16.mxu0 0
    %1182 = vmatpush2.bf16.msra.mxu0 0
    %1183 = vmatprep.subr.bf16.mxu0 0
    %1184 = vmatpush2.bf16.msra.mxu0 0
    %1185 = vmatprep.subr.bf16.mxu0 0
    %1186 = vmatpush2.bf16.msra.mxu0 0
    %1187 = vmatprep.mubr.bf16.mxu0 0
    %1188 = vmatmul.mubr.bf16.gmra.mxu0 %v1031
    %v1189 = vpop.f32.mrf.mxu0
    %v1190 = vadd.f32 %v1068, %v1189
    %v1191 = vpop.f32.mrf.mxu0
    %v1192 = vadd.f32 %v1072, %v1191
    %v1193 = vpop.f32.mrf.mxu0
    %v1194 = vadd.f32 %v1068, %v1193
    %v1195 = vpop.f32.mrf.mxu0
    %v1196 = vadd.f32 %v1072, %v1195
    %1197 = vmatprep.mubr.bf16.mxu0 0
    %1198 = vmatmul.mubr.bf16.gmra.mxu0 %v1032
    %v1199 = vpop.f32.mrf.mxu0
    %v1200 = vadd.f32 %v1068, %v1199
    %v1201 = vpop.f32.mrf.mxu0
    %v1202 = vadd.f32 %v1072, %v1201
    %v1203 = vpop.f32.mrf.mxu0
    %v1204 = vadd.f32 %v1068, %v1203
    %v1205 = vpop.f32.mrf.mxu0
    %v1206 = vadd.f32 %v1072, %v1205
    %1207 = vmatprep.mubr.bf16.mxu0 0
    %1208 = vmatmul.mubr.bf16.gmra.mxu0 %v1033
    %v1209 = vpop.f32.mrf.mxu0
    %v1210 = vadd.f32 %v1068, %v1209
    %v1211 = vpop.f32.mrf.mxu0
    %v1212 = vadd.f32 %v1072, %v1211
    %v1213 = vpop.f32.mrf.mxu0
    %v1214 = vadd.f32 %v1068, %v1213
    %v1215 = vpop.f32.mrf.mxu0
    %v1216 = vadd.f32 %v1072, %v1215
    %1217 = vmatprep.mubr.bf16.mxu0 0
    %1218 = vmatmul.mubr.bf16.gmra.mxu0 %v1034
    %v1219 = vpop.f32.mrf.mxu0
    %v1220 = vadd.f32 %v1068, %v1219
    %v1221 = vpop.f32.mrf.mxu0
    %v1222 = vadd.f32 %v1072, %v1221
    %v1223 = vpop.f32.mrf.mxu0
    %v1224 = vadd.f32 %v1068, %v1223
    %v1225 = vpop.f32.mrf.mxu0
    %v1226 = vadd.f32 %v1072, %v1225
    %1227 = vmatprep.mubr.bf16.mxu0 0
    %1228 = vmatmul.mubr.bf16.gmra.mxu0 %v1035
    %v1229 = vpop.f32.mrf.mxu0
    %v1230 = vadd.f32 %v1068, %v1229
    %v1231 = vpop.f32.mrf.mxu0
    %v1232 = vadd.f32 %v1072, %v1231
    %v1233 = vpop.f32.mrf.mxu0
    %v1234 = vadd.f32 %v1068, %v1233
    %v1235 = vpop.f32.mrf.mxu0
    %v1236 = vadd.f32 %v1072, %v1235
    %1237 = vmatprep.mubr.bf16.mxu0 0
    %1238 = vmatmul.mubr.bf16.gmra.mxu0 %v1036
    %v1239 = vpop.f32.mrf.mxu0
    %v1240 = vadd.f32 %v1068, %v1239
    %v1241 = vpop.f32.mrf.mxu0
    %v1242 = vadd.f32 %v1072, %v1241
    %v1243 = vpop.f32.mrf.mxu0
    %v1244 = vadd.f32 %v1068, %v1243
    %v1245 = vpop.f32.mrf.mxu0
    %v1246 = vadd.f32 %v1072, %v1245
    %1247 = vmatprep.mubr.bf16.mxu0 0
    %1248 = vmatmul.mubr.bf16.gmra.mxu0 %v1037
    %v1249 = vpop.f32.mrf.mxu0
    %v1250 = vadd.f32 %v1068, %v1249
    %v1251 = vpop.f32.mrf.mxu0
    %v1252 = vadd.f32 %v1072, %v1251
    %v1253 = vpop.f32.mrf.mxu0
    %v1254 = vadd.f32 %v1068, %v1253
    %v1255 = vpop.f32.mrf.mxu0
    %v1256 = vadd.f32 %v1072, %v1255
    %1257 = vmatprep.mubr.bf16.mxu0 0
    %1258 = vmatmul.mubr.bf16.gmra.mxu0 %v1038
    %v1259 = vpop.f32.mrf.mxu0
    %v1260 = vadd.f32 %v1068, %v1259
    %v1261 = vpop.f32.mrf.mxu0
    %v1262 = vadd.f32 %v1072, %v1261
    %v1263 = vpop.f32.mrf.mxu0
    %v1264 = vadd.f32 %v1068, %v1263
    %v1265 = vpop.f32.mrf.mxu0
    %v1266 = vadd.f32 %v1072, %v1265
    %1267 = vmatprep.mubr.bf16.mxu0 0
    %1268 = vmatmul.mubr.bf16.gmra.mxu0 %v1039
    %v1269 = vpop.f32.mrf.mxu0
    %v1270 = vadd.f32 %v1068, %v1269
    %v1271 = vpop.f32.mrf.mxu0
    %v1272 = vadd.f32 %v1072, %v1271
    %v1273 = vpop.f32.mrf.mxu0
    %v1274 = vadd.f32 %v1068, %v1273
    %v1275 = vpop.f32.mrf.mxu0
    %v1276 = vadd.f32 %v1072, %v1275
    %1277 = vmatprep.mubr.bf16.mxu0 0
    %1278 = vmatmul.mubr.bf16.gmra.mxu0 %v1040
    %v1279 = vpop.f32.mrf.mxu0
    %v1280 = vadd.f32 %v1068, %v1279
    %v1281 = vpop.f32.mrf.mxu0
    %v1282 = vadd.f32 %v1072, %v1281
    %v1283 = vpop.f32.mrf.mxu0
    %v1284 = vadd.f32 %v1068, %v1283
    %v1285 = vpop.f32.mrf.mxu0
    %v1286 = vadd.f32 %v1072, %v1285
    %1287 = vmatprep.mubr.bf16.mxu0 0
    %1288 = vmatmul.mubr.bf16.gmra.mxu0 %v1041
    %v1289 = vpop.f32.mrf.mxu0
    %v1290 = vadd.f32 %v1068, %v1289
    %v1291 = vpop.f32.mrf.mxu0
    %v1292 = vadd.f32 %v1072, %v1291
    %v1293 = vpop.f32.mrf.mxu0
    %v1294 = vadd.f32 %v1068, %v1293
    %v1295 = vpop.f32.mrf.mxu0
    %v1296 = vadd.f32 %v1072, %v1295
    %1297 = vmatprep.mubr.bf16.mxu0 0
    %1298 = vmatmul.mubr.bf16.gmra.mxu0 %v1042
    %v1299 = vpop.f32.mrf.mxu0
    %v1300 = vadd.f32 %v1068, %v1299
    %v1301 = vpop.f32.mrf.mxu0
    %v1302 = vadd.f32 %v1072, %v1301
    %v1303 = vpop.f32.mrf.mxu0
    %v1304 = vadd.f32 %v1068, %v1303
    %v1305 = vpop.f32.mrf.mxu0
    %v1306 = vadd.f32 %v1072, %v1305
    %1307 = vmatprep.mubr.bf16.mxu0 0
    %1308 = vmatmul.mubr.bf16.gmra.mxu0 %v1043
    %v1309 = vpop.f32.mrf.mxu0
    %v1310 = vadd.f32 %v1068, %v1309
    %v1311 = vpop.f32.mrf.mxu0
    %v1312 = vadd.f32 %v1072, %v1311
    %v1313 = vpop.f32.mrf.mxu0
    %v1314 = vadd.f32 %v1068, %v1313
    %v1315 = vpop.f32.mrf.mxu0
    %v1316 = vadd.f32 %v1072, %v1315
    %1317 = vmatprep.mubr.bf16.mxu0 0
    %1318 = vmatmul.mubr.bf16.gmra.mxu0 %v1044
    %v1319 = vpop.f32.mrf.mxu0
    %v1320 = vadd.f32 %v1068, %v1319
    %v1321 = vpop.f32.mrf.mxu0
    %v1322 = vadd.f32 %v1072, %v1321
    %v1323 = vpop.f32.mrf.mxu0
    %v1324 = vadd.f32 %v1068, %v1323
    %v1325 = vpop.f32.mrf.mxu0
    %v1326 = vadd.f32 %v1072, %v1325
    %1327 = vmatprep.mubr.bf16.mxu0 0
    %1328 = vmatmul.mubr.bf16.gmra.mxu0 %v1045
    %v1329 = vpop.f32.mrf.mxu0
    %v1330 = vadd.f32 %v1068, %v1329
    %v1331 = vpop.f32.mrf.mxu0
    %v1332 = vadd.f32 %v1072, %v1331
    %v1333 = vpop.f32.mrf.mxu0
    %v1334 = vadd.f32 %v1068, %v1333
    %v1335 = vpop.f32.mrf.mxu0
    %v1336 = vadd.f32 %v1072, %v1335
    %1337 = vmatprep.mubr.bf16.mxu0 0
    %1338 = vmatmul.mubr.bf16.gmra.mxu0 %v1046
    %v1339 = vpop.f32.mrf.mxu0
    %v1340 = vadd.f32 %v1068, %v1339
    %v1341 = vpop.f32.mrf.mxu0
    %v1342 = vadd.f32 %v1072, %v1341
    %v1343 = vpop.f32.mrf.mxu0
    %v1344 = vadd.f32 %v1068, %v1343
    %v1345 = vpop.f32.mrf.mxu0
    %v1346 = vadd.f32 %v1072, %v1345
    %1347 = vmatprep.mubr.bf16.mxu0 0
    %1348 = vmatmul.mubr.bf16.gmra.mxu0 %v1047
    %v1349 = vpop.f32.mrf.mxu0
    %v1350 = vadd.f32 %v1068, %v1349
    %v1351 = vpop.f32.mrf.mxu0
    %v1352 = vadd.f32 %v1072, %v1351
    %v1353 = vpop.f32.mrf.mxu0
    %v1354 = vadd.f32 %v1068, %v1353
    %v1355 = vpop.f32.mrf.mxu0
    %v1356 = vadd.f32 %v1072, %v1355
    %1357 = vmatprep.mubr.bf16.mxu0 0
    %1358 = vmatmul.mubr.bf16.gmra.mxu0 %v1048
    %v1359 = vpop.f32.mrf.mxu0
    %v1360 = vadd.f32 %v1068, %v1359
    %v1361 = vpop.f32.mrf.mxu0
    %v1362 = vadd.f32 %v1072, %v1361
    %v1363 = vpop.f32.mrf.mxu0
    %v1364 = vadd.f32 %v1068, %v1363
    %v1365 = vpop.f32.mrf.mxu0
    %v1366 = vadd.f32 %v1072, %v1365
    %1367 = vmatprep.mubr.bf16.mxu0 0
    %1368 = vmatmul.mubr.bf16.gmra.mxu0 %v1049
    %v1369 = vpop.f32.mrf.mxu0
    %v1370 = vadd.f32 %v1068, %v1369
    %v1371 = vpop.f32.mrf.mxu0
    %v1372 = vadd.f32 %v1072, %v1371
    %v1373 = vpop.f32.mrf.mxu0
    %v1374 = vadd.f32 %v1068, %v1373
    %v1375 = vpop.f32.mrf.mxu0
    %v1376 = vadd.f32 %v1072, %v1375
    %1377 = vmatprep.mubr.bf16.mxu0 0
    %1378 = vmatmul.mubr.bf16.gmra.mxu0 %v1050
    %v1379 = vpop.f32.mrf.mxu0
    %v1380 = vadd.f32 %v1068, %v1379
    %v1381 = vpop.f32.mrf.mxu0
    %v1382 = vadd.f32 %v1072, %v1381
    %v1383 = vpop.f32.mrf.mxu0
    %v1384 = vadd.f32 %v1068, %v1383
    %v1385 = vpop.f32.mrf.mxu0
    %v1386 = vadd.f32 %v1072, %v1385
    %1387 = vmatprep.mubr.bf16.mxu0 0
    %1388 = vmatmul.mubr.bf16.gmra.mxu0 %v1051
    %v1389 = vpop.f32.mrf.mxu0
    %v1390 = vadd.f32 %v1068, %v1389
    %v1391 = vpop.f32.mrf.mxu0
    %v1392 = vadd.f32 %v1072, %v1391
    %v1393 = vpop.f32.mrf.mxu0
    %v1394 = vadd.f32 %v1068, %v1393
    %v1395 = vpop.f32.mrf.mxu0
    %v1396 = vadd.f32 %v1072, %v1395
    %1397 = vmatprep.mubr.bf16.mxu0 0
    %1398 = vmatmul.mubr.bf16.gmra.mxu0 %v1052
    %v1399 = vpop.f32.mrf.mxu0
    %v1400 = vadd.f32 %v1068, %v1399
    %v1401 = vpop.f32.mrf.mxu0
    %v1402 = vadd.f32 %v1072, %v1401
    %v1403 = vpop.f32.mrf.mxu0
    %v1404 = vadd.f32 %v1068, %v1403
    %v1405 = vpop.f32.mrf.mxu0
    %v1406 = vadd.f32 %v1072, %v1405
    %1407 = vmatprep.mubr.bf16.mxu0 0
    %1408 = vmatmul.mubr.bf16.gmra.mxu0 %v1053
    %v1409 = vpop.f32.mrf.mxu0
    %v1410 = vadd.f32 %v1068, %v1409
    %v1411 = vpop.f32.mrf.mxu0
    %v1412 = vadd.f32 %v1072, %v1411
    %v1413 = vpop.f32.mrf.mxu0
    %v1414 = vadd.f32 %v1068, %v1413
    %v1415 = vpop.f32.mrf.mxu0
    %v1416 = vadd.f32 %v1072, %v1415
    %1417 = vmatprep.mubr.bf16.mxu0 0
    %1418 = vmatmul.mubr.bf16.gmra.mxu0 %v1054
    %v1419 = vpop.f32.mrf.mxu0
    %v1420 = vadd.f32 %v1068, %v1419
    %v1421 = vpop.f32.mrf.mxu0
    %v1422 = vadd.f32 %v1072, %v1421
    %v1423 = vpop.f32.mrf.mxu0
    %v1424 = vadd.f32 %v1068, %v1423
    %v1425 = vpop.f32.mrf.mxu0
    %v1426 = vadd.f32 %v1072, %v1425
    %1427 = vmatprep.mubr.bf16.mxu0 0
    %1428 = vmatmul.mubr.bf16.gmra.mxu0 %v1055
    %v1429 = vpop.f32.mrf.mxu0
    %v1430 = vadd.f32 %v1068, %v1429
    %v1431 = vpop.f32.mrf.mxu0
    %v1432 = vadd.f32 %v1072, %v1431
    %v1433 = vpop.f32.mrf.mxu0
    %v1434 = vadd.f32 %v1068, %v1433
    %v1435 = vpop.f32.mrf.mxu0
    %v1436 = vadd.f32 %v1072, %v1435
    %1437 = vmatprep.mubr.bf16.mxu0 0
    %1438 = vmatmul.mubr.bf16.gmra.mxu0 %v1056
    %v1439 = vpop.f32.mrf.mxu0
    %v1440 = vadd.f32 %v1068, %v1439
    %v1441 = vpop.f32.mrf.mxu0
    %v1442 = vadd.f32 %v1072, %v1441
    %v1443 = vpop.f32.mrf.mxu0
    %v1444 = vadd.f32 %v1068, %v1443
    %v1445 = vpop.f32.mrf.mxu0
    %v1446 = vadd.f32 %v1072, %v1445
    %1447 = vmatprep.mubr.bf16.mxu0 0
    %1448 = vmatmul.mubr.bf16.gmra.mxu0 %v1057
    %v1449 = vpop.f32.mrf.mxu0
    %v1450 = vadd.f32 %v1068, %v1449
    %v1451 = vpop.f32.mrf.mxu0
    %v1452 = vadd.f32 %v1072, %v1451
    %v1453 = vpop.f32.mrf.mxu0
    %v1454 = vadd.f32 %v1068, %v1453
    %v1455 = vpop.f32.mrf.mxu0
    %v1456 = vadd.f32 %v1072, %v1455
    %1457 = vmatprep.mubr.bf16.mxu0 0
    %1458 = vmatmul.mubr.bf16.gmra.mxu0 %v1058
    %v1459 = vpop.f32.mrf.mxu0
    %v1460 = vadd.f32 %v1068, %v1459
    %v1461 = vpop.f32.mrf.mxu0
    %v1462 = vadd.f32 %v1072, %v1461
    %v1463 = vpop.f32.mrf.mxu0
    %v1464 = vadd.f32 %v1068, %v1463
    %v1465 = vpop.f32.mrf.mxu0
    %v1466 = vadd.f32 %v1072, %v1465
    %1467 = vmatprep.mubr.bf16.mxu0 0
    %1468 = vmatmul.mubr.bf16.gmra.mxu0 %v1059
    %v1469 = vpop.f32.mrf.mxu0
    %v1470 = vadd.f32 %v1068, %v1469
    %v1471 = vpop.f32.mrf.mxu0
    %v1472 = vadd.f32 %v1072, %v1471
    %v1473 = vpop.f32.mrf.mxu0
    %v1474 = vadd.f32 %v1068, %v1473
    %v1475 = vpop.f32.mrf.mxu0
    %v1476 = vadd.f32 %v1072, %v1475
    %1477 = vmatprep.mubr.bf16.mxu0 0
    %1478 = vmatmul.mubr.bf16.gmra.mxu0 %v1060
    %v1479 = vpop.f32.mrf.mxu0
    %v1480 = vadd.f32 %v1068, %v1479
    %v1481 = vpop.f32.mrf.mxu0
    %v1482 = vadd.f32 %v1072, %v1481
    %v1483 = vpop.f32.mrf.mxu0
    %v1484 = vadd.f32 %v1068, %v1483
    %v1485 = vpop.f32.mrf.mxu0
    %v1486 = vadd.f32 %v1072, %v1485
    %1487 = vmatprep.mubr.bf16.mxu0 0
    %1488 = vmatmul.mubr.bf16.gmra.mxu0 %v1061
    %v1489 = vpop.f32.mrf.mxu0
    %v1490 = vadd.f32 %v1068, %v1489
    %v1491 = vpop.f32.mrf.mxu0
    %v1492 = vadd.f32 %v1072, %v1491
    %v1493 = vpop.f32.mrf.mxu0
    %v1494 = vadd.f32 %v1068, %v1493
    %v1495 = vpop.f32.mrf.mxu0
    %v1496 = vadd.f32 %v1072, %v1495
    %1497 = vmatprep.mubr.bf16.mxu0 0
    %1498 = vmatmul.mubr.bf16.gmra.mxu0 %v1062
    %v1499 = vpop.f32.mrf.mxu0
    %v1500 = vadd.f32 %v1068, %v1499
    %v1501 = vpop.f32.mrf.mxu0
    %v1502 = vadd.f32 %v1072, %v1501
    %v1503 = vpop.f32.mrf.mxu0
    %v1504 = vadd.f32 %v1068, %v1503
    %v1505 = vpop.f32.mrf.mxu0
    %v1506 = vadd.f32 %v1072, %v1505
    %1507 = vdwg.mxu0
    %v1508 = vpack.c.bf16 %v306, %v306
    %v1509 = vpack.c.bf16 %v1194, %v1190
    %v1510 = vpack.c.bf16 %v1204, %v1200
    %v1511 = vpack.c.bf16 %v1214, %v1210
    %v1512 = vpack.c.bf16 %v1224, %v1220
    %v1513 = vpack.c.bf16 %v1234, %v1230
    %v1514 = vpack.c.bf16 %v1244, %v1240
    %v1515 = vpack.c.bf16 %v1254, %v1250
    %v1516 = vpack.c.bf16 %v1264, %v1260
    %v1517 = vpack.c.bf16 %v1274, %v1270
    %v1518 = vpack.c.bf16 %v1284, %v1280
    %v1519 = vpack.c.bf16 %v1294, %v1290
    %v1520 = vpack.c.bf16 %v1304, %v1300
    %v1521 = vpack.c.bf16 %v1314, %v1310
    %v1522 = vpack.c.bf16 %v1324, %v1320
    %v1523 = vpack.c.bf16 %v1334, %v1330
    %v1524 = vpack.c.bf16 %v1344, %v1340
    %v1525 = vpack.c.bf16 %v1354, %v1350
    %v1526 = vpack.c.bf16 %v1364, %v1360
    %v1527 = vpack.c.bf16 %v1374, %v1370
    %v1528 = vpack.c.bf16 %v1384, %v1380
    %v1529 = vpack.c.bf16 %v1394, %v1390
    %v1530 = vpack.c.bf16 %v1404, %v1400
    %v1531 = vpack.c.bf16 %v1414, %v1410
    %v1532 = vpack.c.bf16 %v1424, %v1420
    %v1533 = vpack.c.bf16 %v1434, %v1430
    %v1534 = vpack.c.bf16 %v1444, %v1440
    %v1535 = vpack.c.bf16 %v1454, %v1450
    %v1536 = vpack.c.bf16 %v1464, %v1460
    %v1537 = vpack.c.bf16 %v1474, %v1470
    %v1538 = vpack.c.bf16 %v1484, %v1480
    %v1539 = vpack.c.bf16 %v1494, %v1490
    %v1540 = vpack.c.bf16 %v1504, %v1500
    %1541 = vmatprep.subr.bf16.mxu0 0
    %1542 = vmatpush1.bf16.xpose.msra.mxu0 %v1516
    %1543 = vmatprep.subr.bf16.mxu0 0
    %1544 = vmatpush1.bf16.xpose.msra.mxu0 %v1515
    %1545 = vmatprep.subr.bf16.mxu0 0
    %1546 = vmatpush1.bf16.xpose.msra.mxu0 %v1514
    %1547 = vmatprep.subr.bf16.mxu0 0
    %1548 = vmatpush1.bf16.xpose.msra.mxu0 %v1513
    %1549 = vmatprep.subr.bf16.mxu0 0
    %1550 = vmatpush1.bf16.xpose.msra.mxu0 %v1512
    %1551 = vmatprep.subr.bf16.mxu0 0
    %1552 = vmatpush1.bf16.xpose.msra.mxu0 %v1511
    %1553 = vmatprep.subr.bf16.mxu0 0
    %1554 = vmatpush1.bf16.xpose.msra.mxu0 %v1510
    %1555 = vmatprep.subr.bf16.mxu0 0
    %1556 = vmatpush1.bf16.xpose.msra.mxu0 %v1509
    %1557 = vmatprep.subr.bf16.mxu0 0
    %1558 = vmatpush2.bf16.xpose.msra.mxu0 %v1524
    %1559 = vmatprep.subr.bf16.mxu0 0
    %1560 = vmatpush2.bf16.xpose.msra.mxu0 %v1523
    %1561 = vmatprep.subr.bf16.mxu0 0
    %1562 = vmatpush2.bf16.xpose.msra.mxu0 %v1522
    %1563 = vmatprep.subr.bf16.mxu0 0
    %1564 = vmatpush2.bf16.xpose.msra.mxu0 %v1521
    %1565 = vmatprep.subr.bf16.mxu0 0
    %1566 = vmatpush2.bf16.xpose.msra.mxu0 %v1520
    %1567 = vmatprep.subr.bf16.mxu0 0
    %1568 = vmatpush2.bf16.xpose.msra.mxu0 %v1519
    %1569 = vmatprep.subr.bf16.mxu0 0
    %1570 = vmatpush2.bf16.xpose.msra.mxu0 %v1518
    %1571 = vmatprep.subr.bf16.mxu0 0
    %1572 = vmatpush2.bf16.xpose.msra.mxu0 %v1517
    %1573 = vmatprep.mubr.bf16.mxu0 0
    %1574 = vmatmul.mubr.bf16.gmra.mxu0 %v1508
    %v1575 = vpop.f32.mrf.mxu0
    %v1576 = vadd.f32 0.0, %v1575
    %v1577 = vpop.f32.mrf.mxu0
    %v1578 = vadd.f32 0.0, %v1577
    %v1579 = vpop.f32.mrf.mxu0
    %v1580 = vpop.f32.mrf.mxu0
    %1581 = vdwg.mxu0
    %1582 = vmatprep.subr.bf16.mxu0 0
    %1583 = vmatpush1.bf16.xpose.msra.mxu0 %v1532
    %1584 = vmatprep.subr.bf16.mxu0 0
    %1585 = vmatpush1.bf16.xpose.msra.mxu0 %v1531
    %1586 = vmatprep.subr.bf16.mxu0 0
    %1587 = vmatpush1.bf16.xpose.msra.mxu0 %v1530
    %1588 = vmatprep.subr.bf16.mxu0 0
    %1589 = vmatpush1.bf16.xpose.msra.mxu0 %v1529
    %1590 = vmatprep.subr.bf16.mxu0 0
    %1591 = vmatpush1.bf16.xpose.msra.mxu0 %v1528
    %1592 = vmatprep.subr.bf16.mxu0 0
    %1593 = vmatpush1.bf16.xpose.msra.mxu0 %v1527
    %1594 = vmatprep.subr.bf16.mxu0 0
    %1595 = vmatpush1.bf16.xpose.msra.mxu0 %v1526
    %1596 = vmatprep.subr.bf16.mxu0 0
    %1597 = vmatpush1.bf16.xpose.msra.mxu0 %v1525
    %1598 = vmatprep.subr.bf16.mxu0 0
    %1599 = vmatpush2.bf16.xpose.msra.mxu0 %v1540
    %1600 = vmatprep.subr.bf16.mxu0 0
    %1601 = vmatpush2.bf16.xpose.msra.mxu0 %v1539
    %1602 = vmatprep.subr.bf16.mxu0 0
    %1603 = vmatpush2.bf16.xpose.msra.mxu0 %v1538
    %1604 = vmatprep.subr.bf16.mxu0 0
    %1605 = vmatpush2.bf16.xpose.msra.mxu0 %v1537
    %1606 = vmatprep.subr.bf16.mxu0 0
    %1607 = vmatpush2.bf16.xpose.msra.mxu0 %v1536
    %1608 = vmatprep.subr.bf16.mxu0 0
    %1609 = vmatpush2.bf16.xpose.msra.mxu0 %v1535
    %1610 = vmatprep.subr.bf16.mxu0 0
    %1611 = vmatpush2.bf16.xpose.msra.mxu0 %v1534
    %1612 = vmatprep.subr.bf16.mxu0 0
    %1613 = vmatpush2.bf16.xpose.msra.mxu0 %v1533
    %1614 = vmatprep.mubr.bf16.mxu0 0
    %1615 = vmatmul.mubr.bf16.gmra.mxu0 %v1508
    %v1616 = vpop.f32.mrf.mxu0
    %v1617 = vadd.f32 0.0, %v1616
    %v1618 = vpop.f32.mrf.mxu0
    %v1619 = vadd.f32 0.0, %v1618
    %v1620 = vpop.f32.mrf.mxu0
    %v1621 = vpop.f32.mrf.mxu0
    %1622 = vdwg.mxu0
    %v1623 = vmul.f32 %v1576, 0.088388346
    %v1624 = vmul.f32 %v1578, 0.088388346
    %v1625 = vmul.f32 %v1617, 0.088388346
    %v1626 = vmul.f32 %v1619, 0.088388346
    %v1627 = vmax.f32 %v1623, %v1624
    %v1628 = vmax.f32 %v1625, %v1626
    %v1629 = vmax.f32 %v1627, %v1628
    %1630 = vmax.xlane.f32.xlu0 %v1629
    %v1631 = vpop.xlane.xlu0 %1630
    %v1632 = vsub.f32 %v1623, %v1631
    %v1633 = vsub.f32 %v1624, %v1631
    %v1634 = vsub.f32 %v1625, %v1631
    %v1635 = vsub.f32 %v1626, %v1631
    %v1636 = vmul.f32 %v1632, 1.442695
    %v1637 = vpow.pop %v1636
    %v1638 = vmul.f32 %v1633, 1.442695
    %v1639 = vpow.pop %v1638
    %v1640 = vmul.f32 %v1634, 1.442695
    %v1641 = vpow.pop %v1640
    %v1642 = vmul.f32 %v1635, 1.442695
    %v1643 = vpow.pop %v1642
    %v1644 = vpack.c.bf16 %v1637, %v1637
    %v1645 = vpack.c.bf16 %v1639, %v1639
    %v1646 = vpack.c.bf16 %v1641, %v1641
    %v1647 = vpack.c.bf16 %v1643, %v1643
    %v1648 = vpack.c.bf16 %v1196, %v1192
    %v1649 = vpack.c.bf16 %v1206, %v1202
    %v1650 = vpack.c.bf16 %v1216, %v1212
    %v1651 = vpack.c.bf16 %v1226, %v1222
    %v1652 = vpack.c.bf16 %v1236, %v1232
    %v1653 = vpack.c.bf16 %v1246, %v1242
    %v1654 = vpack.c.bf16 %v1256, %v1252
    %v1655 = vpack.c.bf16 %v1266, %v1262
    %v1656 = vpack.c.bf16 %v1276, %v1272
    %v1657 = vpack.c.bf16 %v1286, %v1282
    %v1658 = vpack.c.bf16 %v1296, %v1292
    %v1659 = vpack.c.bf16 %v1306, %v1302
    %v1660 = vpack.c.bf16 %v1316, %v1312
    %v1661 = vpack.c.bf16 %v1326, %v1322
    %v1662 = vpack.c.bf16 %v1336, %v1332
    %v1663 = vpack.c.bf16 %v1346, %v1342
    %v1664 = vpack.c.bf16 %v1356, %v1352
    %v1665 = vpack.c.bf16 %v1366, %v1362
    %v1666 = vpack.c.bf16 %v1376, %v1372
    %v1667 = vpack.c.bf16 %v1386, %v1382
    %v1668 = vpack.c.bf16 %v1396, %v1392
    %v1669 = vpack.c.bf16 %v1406, %v1402
    %v1670 = vpack.c.bf16 %v1416, %v1412
    %v1671 = vpack.c.bf16 %v1426, %v1422
    %v1672 = vpack.c.bf16 %v1436, %v1432
    %v1673 = vpack.c.bf16 %v1446, %v1442
    %v1674 = vpack.c.bf16 %v1456, %v1452
    %v1675 = vpack.c.bf16 %v1466, %v1462
    %v1676 = vpack.c.bf16 %v1476, %v1472
    %v1677 = vpack.c.bf16 %v1486, %v1482
    %v1678 = vpack.c.bf16 %v1496, %v1492
    %v1679 = vpack.c.bf16 %v1506, %v1502
    %1680 = vmatprep.subr.bf16.mxu0 0
    %1681 = vmatpush1.bf16.msra.mxu0 %v1655
    %1682 = vmatprep.subr.bf16.mxu0 0
    %1683 = vmatpush1.bf16.msra.mxu0 %v1654
    %1684 = vmatprep.subr.bf16.mxu0 0
    %1685 = vmatpush1.bf16.msra.mxu0 %v1653
    %1686 = vmatprep.subr.bf16.mxu0 0
    %1687 = vmatpush1.bf16.msra.mxu0 %v1652
    %1688 = vmatprep.subr.bf16.mxu0 0
    %1689 = vmatpush1.bf16.msra.mxu0 %v1651
    %1690 = vmatprep.subr.bf16.mxu0 0
    %1691 = vmatpush1.bf16.msra.mxu0 %v1650
    %1692 = vmatprep.subr.bf16.mxu0 0
    %1693 = vmatpush1.bf16.msra.mxu0 %v1649
    %1694 = vmatprep.subr.bf16.mxu0 0
    %1695 = vmatpush1.bf16.msra.mxu0 %v1648
    %1696 = vmatprep.subr.bf16.mxu0 0
    %1697 = vmatpush2.bf16.msra.mxu0 %v1663
    %1698 = vmatprep.subr.bf16.mxu0 0
    %1699 = vmatpush2.bf16.msra.mxu0 %v1662
    %1700 = vmatprep.subr.bf16.mxu0 0
    %1701 = vmatpush2.bf16.msra.mxu0 %v1661
    %1702 = vmatprep.subr.bf16.mxu0 0
    %1703 = vmatpush2.bf16.msra.mxu0 %v1660
    %1704 = vmatprep.subr.bf16.mxu0 0
    %1705 = vmatpush2.bf16.msra.mxu0 %v1659
    %1706 = vmatprep.subr.bf16.mxu0 0
    %1707 = vmatpush2.bf16.msra.mxu0 %v1658
    %1708 = vmatprep.subr.bf16.mxu0 0
    %1709 = vmatpush2.bf16.msra.mxu0 %v1657
    %1710 = vmatprep.subr.bf16.mxu0 0
    %1711 = vmatpush2.bf16.msra.mxu0 %v1656
    %1712 = vmatprep.mubr.bf16.mxu0 %v1645
    %1713 = vmatmul.mubr.bf16.gmra.mxu0 %v1644
    %v1714 = vpop.f32.mrf.mxu0
    %v1715 = vadd.f32 0.0, %v1714
    %v1716 = vpop.f32.mrf.mxu0
    %v1717 = vpop.f32.mrf.mxu0
    %v1718 = vpop.f32.mrf.mxu0
    %1719 = vdwg.mxu0
    %1720 = vmatprep.subr.bf16.mxu0 0
    %1721 = vmatpush1.bf16.msra.mxu0 %v1671
    %1722 = vmatprep.subr.bf16.mxu0 0
    %1723 = vmatpush1.bf16.msra.mxu0 %v1670
    %1724 = vmatprep.subr.bf16.mxu0 0
    %1725 = vmatpush1.bf16.msra.mxu0 %v1669
    %1726 = vmatprep.subr.bf16.mxu0 0
    %1727 = vmatpush1.bf16.msra.mxu0 %v1668
    %1728 = vmatprep.subr.bf16.mxu0 0
    %1729 = vmatpush1.bf16.msra.mxu0 %v1667
    %1730 = vmatprep.subr.bf16.mxu0 0
    %1731 = vmatpush1.bf16.msra.mxu0 %v1666
    %1732 = vmatprep.subr.bf16.mxu0 0
    %1733 = vmatpush1.bf16.msra.mxu0 %v1665
    %1734 = vmatprep.subr.bf16.mxu0 0
    %1735 = vmatpush1.bf16.msra.mxu0 %v1664
    %1736 = vmatprep.subr.bf16.mxu0 0
    %1737 = vmatpush2.bf16.msra.mxu0 %v1679
    %1738 = vmatprep.subr.bf16.mxu0 0
    %1739 = vmatpush2.bf16.msra.mxu0 %v1678
    %1740 = vmatprep.subr.bf16.mxu0 0
    %1741 = vmatpush2.bf16.msra.mxu0 %v1677
    %1742 = vmatprep.subr.bf16.mxu0 0
    %1743 = vmatpush2.bf16.msra.mxu0 %v1676
    %1744 = vmatprep.subr.bf16.mxu0 0
    %1745 = vmatpush2.bf16.msra.mxu0 %v1675
    %1746 = vmatprep.subr.bf16.mxu0 0
    %1747 = vmatpush2.bf16.msra.mxu0 %v1674
    %1748 = vmatprep.subr.bf16.mxu0 0
    %1749 = vmatpush2.bf16.msra.mxu0 %v1673
    %1750 = vmatprep.subr.bf16.mxu0 0
    %1751 = vmatpush2.bf16.msra.mxu0 %v1672
    %1752 = vmatprep.mubr.bf16.mxu0 %v1647
    %1753 = vmatmul.mubr.bf16.gmra.mxu0 %v1646
    %v1754 = vpop.f32.mrf.mxu0
    %v1755 = vadd.f32 %v1715, %v1754
    %v1756 = vpop.f32.mrf.mxu0
    %v1757 = vpop.f32.mrf.mxu0
    %v1758 = vpop.f32.mrf.mxu0
    %1759 = vdwg.mxu0
    %v1760 = vadd.f32 %v1637, %v1639
    %v1761 = vadd.f32 %v1760, %v1641
    %v1762 = vadd.f32 %v1761, %v1643
    %1763 = vadd.xlane.f32.xlu0 %v1762
    %v1764 = vpop.xlane.xlu0 %1763
    %v1765 = vrcp.pop %v1764
    %v1766 = vmul.f32 %v1755, %v1765
    %v1767 = vld [vmem:[%s19] sm:$0xf]
    %v1768 = vld [vmem:[%s19 + $0x4] sm:$0xf]
    %v1769 = vld [vmem:[%s19 + $0x8] sm:$0xf]
    %v1770 = vld [vmem:[%s19 + $0xc] sm:$0xf]
    %v1771 = vld [vmem:[%s19 + $0x10] sm:$0xf]
    %v1772 = vld [vmem:[%s19 + $0x14] sm:$0xf]
    %v1773 = vld [vmem:[%s19 + $0x18] sm:$0xf]
    %v1774 = vld [vmem:[%s19 + $0x1c] sm:$0xf]
    %v1775 = vld [vmem:[%s19 + $0x20] sm:$0xf]
    %v1776 = vld [vmem:[%s19 + $0x24] sm:$0xf]
    %v1777 = vld [vmem:[%s19 + $0x28] sm:$0xf]
    %v1778 = vld [vmem:[%s19 + $0x2c] sm:$0xf]
    %v1779 = vld [vmem:[%s19 + $0x30] sm:$0xf]
    %v1780 = vld [vmem:[%s19 + $0x34] sm:$0xf]
    %v1781 = vld [vmem:[%s19 + $0x38] sm:$0xf]
    %v1782 = vld [vmem:[%s19 + $0x3c] sm:$0xf]
    %v1783 = vpack.c.bf16 %v1766, %v1766
    %v1800 = vunpack.c.l.b16 %v1767
    %v1801 = vunpack.c.l.b16 %v1768
    %v1802 = vunpack.c.l.b16 %v1769
    %v1803 = vunpack.c.l.b16 %v1770
    %v1804 = vunpack.c.l.b16 %v1771
    %v1805 = vunpack.c.l.b16 %v1772
    %v1806 = vunpack.c.l.b16 %v1773
    %v1807 = vunpack.c.l.b16 %v1774
    %v1808 = vunpack.c.l.b16 %v1775
    %v1809 = vunpack.c.l.b16 %v1776
    %v1810 = vunpack.c.l.b16 %v1777
    %v1811 = vunpack.c.l.b16 %v1778
    %v1812 = vunpack.c.l.b16 %v1779
    %v1813 = vunpack.c.l.b16 %v1780
    %v1814 = vunpack.c.l.b16 %v1781
    %v1815 = vunpack.c.l.b16 %v1782
    %v1816 = vpack.c.b16 %v1801, %v1800
    %v1817 = vpack.c.b16 %v1803, %v1802
    %v1818 = vpack.c.b16 %v1805, %v1804
    %v1819 = vpack.c.b16 %v1807, %v1806
    %v1820 = vpack.c.b16 %v1809, %v1808
    %v1821 = vpack.c.b16 %v1811, %v1810
    %v1822 = vpack.c.b16 %v1813, %v1812
    %v1823 = vpack.c.b16 %v1815, %v1814
    %1832 = vmatprep.subr.bf16.mxu0 0
    %1833 = vmatpush1.bf16.msra.mxu0 %v1823
    %1834 = vmatprep.subr.bf16.mxu0 0
    %1835 = vmatpush1.bf16.msra.mxu0 %v1822
    %1836 = vmatprep.subr.bf16.mxu0 0
    %1837 = vmatpush1.bf16.msra.mxu0 %v1821
    %1838 = vmatprep.subr.bf16.mxu0 0
    %1839 = vmatpush1.bf16.msra.mxu0 %v1820
    %1840 = vmatprep.subr.bf16.mxu0 0
    %1841 = vmatpush1.bf16.msra.mxu0 %v1819
    %1842 = vmatprep.subr.bf16.mxu0 0
    %1843 = vmatpush1.bf16.msra.mxu0 %v1818
    %1844 = vmatprep.subr.bf16.mxu0 0
    %1845 = vmatpush1.bf16.msra.mxu0 %v1817
    %1846 = vmatprep.subr.bf16.mxu0 0
    %1847 = vmatpush1.bf16.msra.mxu0 %v1816
    %1848 = vmatprep.subr.bf16.mxu0 0
    %1849 = vmatpush2.bf16.msra.mxu0 0
    %1850 = vmatprep.subr.bf16.mxu0 0
    %1851 = vmatpush2.bf16.msra.mxu0 0
    %1852 = vmatprep.subr.bf16.mxu0 0
    %1853 = vmatpush2.bf16.msra.mxu0 0
    %1854 = vmatprep.subr.bf16.mxu0 0
    %1855 = vmatpush2.bf16.msra.mxu0 0
    %1856 = vmatprep.subr.bf16.mxu0 0
    %1857 = vmatpush2.bf16.msra.mxu0 0
    %1858 = vmatprep.subr.bf16.mxu0 0
    %1859 = vmatpush2.bf16.msra.mxu0 0
    %1860 = vmatprep.subr.bf16.mxu0 0
    %1861 = vmatpush2.bf16.msra.mxu0 0
    %1862 = vmatprep.subr.bf16.mxu0 0
    %1863 = vmatpush2.bf16.msra.mxu0 0
    %1864 = vmatprep.mubr.bf16.mxu0 0
    %1865 = vmatmul.mubr.bf16.gmra.mxu0 %v1783
    %v1866 = vpop.f32.mrf.mxu0
    %v1867 = vadd.f32 0.0, %v1866
    %v1868 = vpop.f32.mrf.mxu0
    %v1869 = vpop.f32.mrf.mxu0
    %v1870 = vpop.f32.mrf.mxu0
    %1871 = vdwg.mxu0
    %v1872 = vadd.f32 %v186, %v1867
    %v1873 = vld [vmem:[%s21] sm:$0x1]
    %v1875 = vlaneseq
    %v1876 = vshrl.u32 %v1875, 7
    %v1877 = vsub.s32 0, %v1876
    %v1878 = vrot.slane %v1873, %v1877
    %v1880 = vadd.f32 %v1872, %v1878
    %v1881 = vld [vmem:[%s5] sm:$0xff]
    %v1882 = vld [vmem:[%s5 + $0x8] sm:$0xff]
    %v1883 = vld [vmem:[%s7] sm:$0xf]
    %v1884 = vld [vmem:[%s7 + $0x4] sm:$0xf]
    %v1885 = vld [vmem:[%s7 + $0x8] sm:$0xf]
    %v1886 = vld [vmem:[%s7 + $0xc] sm:$0xf]
    %v1887 = vpack.c.bf16 %v1882, %v1881
    %v1888 = vld [vmem:[%s9] sm:$0x1]
    %v1890 = vlaneseq
    %v1891 = vshrl.u32 %v1890, 7
    %v1892 = vsub.s32 0, %v1891
    %v1893 = vrot.slane %v1888, %v1892
    %v1899 = vunpack.c.l.b16 %v1883
    %v1900 = vunpack.c.l.b16 %v1884
    %v1901 = vunpack.c.l.b16 %v1885
    %v1902 = vunpack.c.l.b16 %v1886
    %v1903 = vpack.c.b16 %v1900, %v1899
    %v1904 = vpack.c.b16 %v1902, %v1901
    %vm1907 = vcmask 261120
    %v1909 = vsel %vm1907, %v1887, 0
    %1911 = vmatprep.subr.bf16.mxu0 0
    %1912 = vmatpush1.bf16.msra.mxu0 0
    %1913 = vmatprep.subr.bf16.mxu0 0
    %1914 = vmatpush1.bf16.msra.mxu0 0
    %1915 = vmatprep.subr.bf16.mxu0 0
    %1916 = vmatpush1.bf16.msra.mxu0 0
    %1917 = vmatprep.subr.bf16.mxu0 0
    %1918 = vmatpush1.bf16.msra.mxu0 0
    %1919 = vmatprep.subr.bf16.mxu0 0
    %1920 = vmatpush1.bf16.msra.mxu0 0
    %1921 = vmatprep.subr.bf16.mxu0 0
    %1922 = vmatpush1.bf16.msra.mxu0 0
    %1923 = vmatprep.subr.bf16.mxu0 0
    %1924 = vmatpush1.bf16.msra.mxu0 %v1904
    %1925 = vmatprep.subr.bf16.mxu0 0
    %1926 = vmatpush1.bf16.msra.mxu0 %v1903
    %1927 = vmatprep.subr.bf16.mxu0 0
    %1928 = vmatpush2.bf16.msra.mxu0 0
    %1929 = vmatprep.subr.bf16.mxu0 0
    %1930 = vmatpush2.bf16.msra.mxu0 0
    %1931 = vmatprep.subr.bf16.mxu0 0
    %1932 = vmatpush2.bf16.msra.mxu0 0
    %1933 = vmatprep.subr.bf16.mxu0 0
    %1934 = vmatpush2.bf16.msra.mxu0 0
    %1935 = vmatprep.subr.bf16.mxu0 0
    %1936 = vmatpush2.bf16.msra.mxu0 0
    %1937 = vmatprep.subr.bf16.mxu0 0
    %1938 = vmatpush2.bf16.msra.mxu0 0
    %1939 = vmatprep.subr.bf16.mxu0 0
    %1940 = vmatpush2.bf16.msra.mxu0 0
    %1941 = vmatprep.subr.bf16.mxu0 0
    %1942 = vmatpush2.bf16.msra.mxu0 0
    %1943 = vmatprep.mubr.bf16.mxu0 0
    %1944 = vmatmul.mubr.bf16.gmra.mxu0 %v1909
    %v1945 = vpop.f32.mrf.mxu0
    %v1946 = vadd.f32 %v1893, %v1945
    %v1947 = vpop.f32.mrf.mxu0
    %v1948 = vpop.f32.mrf.mxu0
    %v1949 = vadd.f32 %v1893, %v1948
    %v1950 = vpop.f32.mrf.mxu0
    %1951 = vdwg.mxu0
    %1952 = vadd.xlane.f32.xlu0 %v1880
    %v1953 = vpop.xlane.xlu0 %1952
    %v1954 = vmul.f32 %v1953, %v189
    %v1955 = vsub.f32 %v1880, %v1954
    %v1956 = vmul.f32 %v1955, %v1955
    %1957 = vadd.xlane.f32.xlu0 %v1956
    %v1958 = vpop.xlane.xlu0 %1957
    %v1959 = vmul.f32 %v1958, %v189
    %v1960 = vadd.f32 %v1959, 1e-05
    %v1961 = vrsqrt.pop %v1960
    %v1962 = vmul.f32 %v1955, %v1961
    %1963 = vadd.xlane.f32.xlu0 %v1946
    %v1964 = vpop.xlane.xlu0 %1963
    %1965 = vadd.xlane.f32.xlu0 %v1949
    %v1966 = vpop.xlane.xlu0 %1965
    %v1967 = vmul.f32 %v1964, %v189
    %v1968 = vmul.f32 %v1966, %v189
    %v1969 = vsub.f32 %v1946, %v1967
    %v1970 = vsub.f32 %v1949, %v1968
    %v1971 = vmul.f32 %v1969, %v1969
    %v1972 = vmul.f32 %v1970, %v1970
    %1973 = vadd.xlane.f32.xlu0 %v1971
    %v1974 = vpop.xlane.xlu0 %1973
    %1975 = vadd.xlane.f32.xlu0 %v1972
    %v1976 = vpop.xlane.xlu0 %1975
    %v1977 = vmul.f32 %v1974, %v189
    %v1978 = vmul.f32 %v1976, %v189
    %v1979 = vadd.f32 %v1977, 1e-05
    %v1980 = vadd.f32 %v1978, 1e-05
    %v1981 = vrsqrt.pop %v1979
    %v1982 = vrsqrt.pop %v1980
    %v1983 = vmul.f32 %v1969, %v1981
    %v1984 = vmul.f32 %v1970, %v1982
    %v1985 = vld [vmem:[%s23] sm:$0xf]
    %v1986 = vld [vmem:[%s23 + $0x4] sm:$0xf]
    %v1987 = vld [vmem:[%s23 + $0x8] sm:$0xf]
    %v1988 = vld [vmem:[%s23 + $0xc] sm:$0xf]
    %v1989 = vld [vmem:[%s23 + $0x10] sm:$0xf]
    %v1990 = vld [vmem:[%s23 + $0x14] sm:$0xf]
    %v1991 = vld [vmem:[%s23 + $0x18] sm:$0xf]
    %v1992 = vld [vmem:[%s23 + $0x1c] sm:$0xf]
    %v1993 = vld [vmem:[%s23 + $0x20] sm:$0xf]
    %v1994 = vld [vmem:[%s23 + $0x24] sm:$0xf]
    %v1995 = vld [vmem:[%s23 + $0x28] sm:$0xf]
    %v1996 = vld [vmem:[%s23 + $0x2c] sm:$0xf]
    %v1997 = vld [vmem:[%s23 + $0x30] sm:$0xf]
    %v1998 = vld [vmem:[%s23 + $0x34] sm:$0xf]
    %v1999 = vld [vmem:[%s23 + $0x38] sm:$0xf]
    %v2000 = vld [vmem:[%s23 + $0x3c] sm:$0xf]
    %v2001 = vpack.c.bf16 %v1962, %v1962
    %v2002 = vld [vmem:[%s25] sm:$0x1]
    %v2004 = vlaneseq
    %v2005 = vshrl.u32 %v2004, 7
    %v2006 = vsub.s32 0, %v2005
    %v2007 = vrot.slane %v2002, %v2006
    %v2025 = vunpack.c.l.b16 %v1985
    %v2026 = vunpack.c.l.b16 %v1986
    %v2027 = vunpack.c.l.b16 %v1987
    %v2028 = vunpack.c.l.b16 %v1988
    %v2029 = vunpack.c.l.b16 %v1989
    %v2030 = vunpack.c.l.b16 %v1990
    %v2031 = vunpack.c.l.b16 %v1991
    %v2032 = vunpack.c.l.b16 %v1992
    %v2033 = vunpack.c.l.b16 %v1993
    %v2034 = vunpack.c.l.b16 %v1994
    %v2035 = vunpack.c.l.b16 %v1995
    %v2036 = vunpack.c.l.b16 %v1996
    %v2037 = vunpack.c.l.b16 %v1997
    %v2038 = vunpack.c.l.b16 %v1998
    %v2039 = vunpack.c.l.b16 %v1999
    %v2040 = vunpack.c.l.b16 %v2000
    %v2041 = vpack.c.b16 %v2026, %v2025
    %v2042 = vpack.c.b16 %v2028, %v2027
    %v2043 = vpack.c.b16 %v2030, %v2029
    %v2044 = vpack.c.b16 %v2032, %v2031
    %v2045 = vpack.c.b16 %v2034, %v2033
    %v2046 = vpack.c.b16 %v2036, %v2035
    %v2047 = vpack.c.b16 %v2038, %v2037
    %v2048 = vpack.c.b16 %v2040, %v2039
    %2057 = vmatprep.subr.bf16.mxu0 0
    %2058 = vmatpush1.bf16.msra.mxu0 %v2048
    %2059 = vmatprep.subr.bf16.mxu0 0
    %2060 = vmatpush1.bf16.msra.mxu0 %v2047
    %2061 = vmatprep.subr.bf16.mxu0 0
    %2062 = vmatpush1.bf16.msra.mxu0 %v2046
    %2063 = vmatprep.subr.bf16.mxu0 0
    %2064 = vmatpush1.bf16.msra.mxu0 %v2045
    %2065 = vmatprep.subr.bf16.mxu0 0
    %2066 = vmatpush1.bf16.msra.mxu0 %v2044
    %2067 = vmatprep.subr.bf16.mxu0 0
    %2068 = vmatpush1.bf16.msra.mxu0 %v2043
    %2069 = vmatprep.subr.bf16.mxu0 0
    %2070 = vmatpush1.bf16.msra.mxu0 %v2042
    %2071 = vmatprep.subr.bf16.mxu0 0
    %2072 = vmatpush1.bf16.msra.mxu0 %v2041
    %2073 = vmatprep.subr.bf16.mxu0 0
    %2074 = vmatpush2.bf16.msra.mxu0 0
    %2075 = vmatprep.subr.bf16.mxu0 0
    %2076 = vmatpush2.bf16.msra.mxu0 0
    %2077 = vmatprep.subr.bf16.mxu0 0
    %2078 = vmatpush2.bf16.msra.mxu0 0
    %2079 = vmatprep.subr.bf16.mxu0 0
    %2080 = vmatpush2.bf16.msra.mxu0 0
    %2081 = vmatprep.subr.bf16.mxu0 0
    %2082 = vmatpush2.bf16.msra.mxu0 0
    %2083 = vmatprep.subr.bf16.mxu0 0
    %2084 = vmatpush2.bf16.msra.mxu0 0
    %2085 = vmatprep.subr.bf16.mxu0 0
    %2086 = vmatpush2.bf16.msra.mxu0 0
    %2087 = vmatprep.subr.bf16.mxu0 0
    %2088 = vmatpush2.bf16.msra.mxu0 0
    %2089 = vmatprep.mubr.bf16.mxu0 0
    %2090 = vmatmul.mubr.bf16.gmra.mxu0 %v2001
    %v2091 = vpop.f32.mrf.mxu0
    %v2092 = vadd.f32 %v2007, %v2091
    %v2093 = vpop.f32.mrf.mxu0
    %v2094 = vpop.f32.mrf.mxu0
    %v2095 = vpop.f32.mrf.mxu0
    %2096 = vdwg.mxu0
    %v2097 = vld [vmem:[%s27] sm:$0xff]
    %v2098 = vld [vmem:[%s27 + $0x8] sm:$0xff]
    %v2099 = vld [vmem:[%s27 + $0x10] sm:$0xff]
    %v2100 = vld [vmem:[%s27 + $0x18] sm:$0xff]
    %v2101 = vld [vmem:[%s27 + $0x20] sm:$0xff]
    %v2102 = vld [vmem:[%s27 + $0x28] sm:$0xff]
    %v2103 = vld [vmem:[%s27 + $0x30] sm:$0xff]
    %v2104 = vld [vmem:[%s27 + $0x38] sm:$0xff]
    %v2105 = vld [vmem:[%s27 + $0x40] sm:$0xff]
    %v2106 = vld [vmem:[%s27 + $0x48] sm:$0xff]
    %v2107 = vld [vmem:[%s27 + $0x50] sm:$0xff]
    %v2108 = vld [vmem:[%s27 + $0x58] sm:$0xff]
    %v2109 = vld [vmem:[%s27 + $0x60] sm:$0xff]
    %v2110 = vld [vmem:[%s27 + $0x68] sm:$0xff]
    %v2111 = vld [vmem:[%s27 + $0x70] sm:$0xff]
    %v2112 = vld [vmem:[%s27 + $0x78] sm:$0xff]
    %v2113 = vpack.c.bf16 %v1984, %v1983
    %v2114 = vld [vmem:[%s29] sm:$0x3]
    %v2116 = vlaneseq
    %v2117 = vshrl.u32 %v2116, 7
    %v2118 = vsub.s32 0, %v2117
    %v2119 = vrot.slane %v2114, %v2118
    %v2120 = vlaneseq
    %v2121 = vshrl.u32 %v2120, 7
    %v2122 = vsub.s32 1, %v2121
    %v2123 = vrot.slane %v2114, %v2122
    %v2142 = vunpack.c.l.b16 %v2097
    %v2143 = vunpack.c.h.b16 %v2097
    %v2144 = vunpack.c.l.b16 %v2098
    %v2145 = vunpack.c.h.b16 %v2098
    %v2146 = vunpack.c.l.b16 %v2099
    %v2147 = vunpack.c.h.b16 %v2099
    %v2148 = vunpack.c.l.b16 %v2100
    %v2149 = vunpack.c.h.b16 %v2100
    %v2150 = vunpack.c.l.b16 %v2101
    %v2151 = vunpack.c.h.b16 %v2101
    %v2152 = vunpack.c.l.b16 %v2102
    %v2153 = vunpack.c.h.b16 %v2102
    %v2154 = vunpack.c.l.b16 %v2103
    %v2155 = vunpack.c.h.b16 %v2103
    %v2156 = vunpack.c.l.b16 %v2104
    %v2157 = vunpack.c.h.b16 %v2104
    %v2158 = vunpack.c.l.b16 %v2105
    %v2159 = vunpack.c.h.b16 %v2105
    %v2160 = vunpack.c.l.b16 %v2106
    %v2161 = vunpack.c.h.b16 %v2106
    %v2162 = vunpack.c.l.b16 %v2107
    %v2163 = vunpack.c.h.b16 %v2107
    %v2164 = vunpack.c.l.b16 %v2108
    %v2165 = vunpack.c.h.b16 %v2108
    %v2166 = vunpack.c.l.b16 %v2109
    %v2167 = vunpack.c.h.b16 %v2109
    %v2168 = vunpack.c.l.b16 %v2110
    %v2169 = vunpack.c.h.b16 %v2110
    %v2170 = vunpack.c.l.b16 %v2111
    %v2171 = vunpack.c.h.b16 %v2111
    %v2172 = vunpack.c.l.b16 %v2112
    %v2173 = vunpack.c.h.b16 %v2112
    %v2174 = vpack.c.b16 %v2144, %v2142
    %v2175 = vpack.c.b16 %v2145, %v2143
    %v2176 = vpack.c.b16 %v2148, %v2146
    %v2177 = vpack.c.b16 %v2149, %v2147
    %v2178 = vpack.c.b16 %v2152, %v2150
    %v2179 = vpack.c.b16 %v2153, %v2151
    %v2180 = vpack.c.b16 %v2156, %v2154
    %v2181 = vpack.c.b16 %v2157, %v2155
    %v2182 = vpack.c.b16 %v2160, %v2158
    %v2183 = vpack.c.b16 %v2161, %v2159
    %v2184 = vpack.c.b16 %v2164, %v2162
    %v2185 = vpack.c.b16 %v2165, %v2163
    %v2186 = vpack.c.b16 %v2168, %v2166
    %v2187 = vpack.c.b16 %v2169, %v2167
    %v2188 = vpack.c.b16 %v2172, %v2170
    %v2189 = vpack.c.b16 %v2173, %v2171
    %2206 = vmatprep.subr.bf16.mxu0 %v2189
    %2207 = vmatpush1.bf16.msra.mxu0 %v2188
    %2208 = vmatprep.subr.bf16.mxu0 %v2187
    %2209 = vmatpush1.bf16.msra.mxu0 %v2186
    %2210 = vmatprep.subr.bf16.mxu0 %v2185
    %2211 = vmatpush1.bf16.msra.mxu0 %v2184
    %2212 = vmatprep.subr.bf16.mxu0 %v2183
    %2213 = vmatpush1.bf16.msra.mxu0 %v2182
    %2214 = vmatprep.subr.bf16.mxu0 %v2181
    %2215 = vmatpush1.bf16.msra.mxu0 %v2180
    %2216 = vmatprep.subr.bf16.mxu0 %v2179
    %2217 = vmatpush1.bf16.msra.mxu0 %v2178
    %2218 = vmatprep.subr.bf16.mxu0 %v2177
    %2219 = vmatpush1.bf16.msra.mxu0 %v2176
    %2220 = vmatprep.subr.bf16.mxu0 %v2175
    %2221 = vmatpush1.bf16.msra.mxu0 %v2174
    %2222 = vmatprep.subr.bf16.mxu0 0
    %2223 = vmatpush2.bf16.msra.mxu0 0
    %2224 = vmatprep.subr.bf16.mxu0 0
    %2225 = vmatpush2.bf16.msra.mxu0 0
    %2226 = vmatprep.subr.bf16.mxu0 0
    %2227 = vmatpush2.bf16.msra.mxu0 0
    %2228 = vmatprep.subr.bf16.mxu0 0
    %2229 = vmatpush2.bf16.msra.mxu0 0
    %2230 = vmatprep.subr.bf16.mxu0 0
    %2231 = vmatpush2.bf16.msra.mxu0 0
    %2232 = vmatprep.subr.bf16.mxu0 0
    %2233 = vmatpush2.bf16.msra.mxu0 0
    %2234 = vmatprep.subr.bf16.mxu0 0
    %2235 = vmatpush2.bf16.msra.mxu0 0
    %2236 = vmatprep.subr.bf16.mxu0 0
    %2237 = vmatpush2.bf16.msra.mxu0 0
    %2238 = vmatprep.mubr.bf16.mxu0 0
    %2239 = vmatmul.mubr.bf16.gmra.mxu0 %v2113
    %v2240 = vpop.f32.mrf.mxu0
    %v2241 = vadd.f32 %v2119, %v2240
    %v2242 = vpop.f32.mrf.mxu0
    %v2243 = vadd.f32 %v2123, %v2242
    %v2244 = vpop.f32.mrf.mxu0
    %v2245 = vadd.f32 %v2119, %v2244
    %v2246 = vpop.f32.mrf.mxu0
    %v2247 = vadd.f32 %v2123, %v2246
    %2248 = vdwg.mxu0
    %v2249 = vpack.c.bf16 %v2092, %v2092
    %v2250 = vpack.c.bf16 %v2245, %v2241
    %2251 = vmatprep.subr.bf16.mxu0 0
    %2252 = vmatpush1.bf16.xpose.msra.mxu0 0
    %2253 = vmatprep.subr.bf16.mxu0 0
    %2254 = vmatpush1.bf16.xpose.msra.mxu0 0
    %2255 = vmatprep.subr.bf16.mxu0 0
    %2256 = vmatpush1.bf16.xpose.msra.mxu0 0
    %2257 = vmatprep.subr.bf16.mxu0 0
    %2258 = vmatpush1.bf16.xpose.msra.mxu0 0
    %2259 = vmatprep.subr.bf16.mxu0 0
    %2260 = vmatpush1.bf16.xpose.msra.mxu0 0
    %2261 = vmatprep.subr.bf16.mxu0 0
    %2262 = vmatpush1.bf16.xpose.msra.mxu0 0
    %2263 = vmatprep.subr.bf16.mxu0 0
    %2264 = vmatpush1.bf16.xpose.msra.mxu0 0
    %2265 = vmatprep.subr.bf16.mxu0 0
    %2266 = vmatpush1.bf16.xpose.msra.mxu0 %v2250
    %2267 = vmatprep.subr.bf16.mxu0 0
    %2268 = vmatpush2.bf16.xpose.msra.mxu0 0
    %2269 = vmatprep.subr.bf16.mxu0 0
    %2270 = vmatpush2.bf16.xpose.msra.mxu0 0
    %2271 = vmatprep.subr.bf16.mxu0 0
    %2272 = vmatpush2.bf16.xpose.msra.mxu0 0
    %2273 = vmatprep.subr.bf16.mxu0 0
    %2274 = vmatpush2.bf16.xpose.msra.mxu0 0
    %2275 = vmatprep.subr.bf16.mxu0 0
    %2276 = vmatpush2.bf16.xpose.msra.mxu0 0
    %2277 = vmatprep.subr.bf16.mxu0 0
    %2278 = vmatpush2.bf16.xpose.msra.mxu0 0
    %2279 = vmatprep.subr.bf16.mxu0 0
    %2280 = vmatpush2.bf16.xpose.msra.mxu0 0
    %2281 = vmatprep.subr.bf16.mxu0 0
    %2282 = vmatpush2.bf16.xpose.msra.mxu0 0
    %2283 = vmatprep.mubr.bf16.mxu0 0
    %2284 = vmatmul.mubr.bf16.gmra.mxu0 %v2249
    %v2285 = vpop.f32.mrf.mxu0
    %v2286 = vadd.f32 0.0, %v2285
    %v2287 = vpop.f32.mrf.mxu0
    %v2288 = vpop.f32.mrf.mxu0
    %v2289 = vpop.f32.mrf.mxu0
    %2290 = vdwg.mxu0
    %v2291 = vmul.f32 %v2286, 0.088388346
    %vm2292 = vcmask 130048
    %v2293 = vsel %vm2292, %v2291, -inf
    %2294 = vmax.xlane.f32.xlu0 %v2293
    %v2295 = vpop.xlane.xlu0 %2294
    %v2296 = vsub.f32 %v2291, %v2295
    %v2297 = vmul.f32 %v2296, 1.442695
    %v2298 = vpow.pop %v2297
    %v2299 = vpack.c.bf16 %v2298, %v2298
    %v2300 = vpack.c.bf16 %v2247, %v2243
    %v2302 = vsel %vm2292, %v2299, 0
    %2304 = vmatprep.subr.bf16.mxu0 0
    %2305 = vmatpush1.bf16.msra.mxu0 0
    %2306 = vmatprep.subr.bf16.mxu0 0
    %2307 = vmatpush1.bf16.msra.mxu0 0
    %2308 = vmatprep.subr.bf16.mxu0 0
    %2309 = vmatpush1.bf16.msra.mxu0 0
    %2310 = vmatprep.subr.bf16.mxu0 0
    %2311 = vmatpush1.bf16.msra.mxu0 0
    %2312 = vmatprep.subr.bf16.mxu0 0
    %2313 = vmatpush1.bf16.msra.mxu0 0
    %2314 = vmatprep.subr.bf16.mxu0 0
    %2315 = vmatpush1.bf16.msra.mxu0 0
    %2316 = vmatprep.subr.bf16.mxu0 0
    %2317 = vmatpush1.bf16.msra.mxu0 0
    %2318 = vmatprep.subr.bf16.mxu0 0
    %2319 = vmatpush1.bf16.msra.mxu0 %v2300
    %2320 = vmatprep.subr.bf16.mxu0 0
    %2321 = vmatpush2.bf16.msra.mxu0 0
    %2322 = vmatprep.subr.bf16.mxu0 0
    %2323 = vmatpush2.bf16.msra.mxu0 0
    %2324 = vmatprep.subr.bf16.mxu0 0
    %2325 = vmatpush2.bf16.msra.mxu0 0
    %2326 = vmatprep.subr.bf16.mxu0 0
    %2327 = vmatpush2.bf16.msra.mxu0 0
    %2328 = vmatprep.subr.bf16.mxu0 0
    %2329 = vmatpush2.bf16.msra.mxu0 0
    %2330 = vmatprep.subr.bf16.mxu0 0
    %2331 = vmatpush2.bf16.msra.mxu0 0
    %2332 = vmatprep.subr.bf16.mxu0 0
    %2333 = vmatpush2.bf16.msra.mxu0 0
    %2334 = vmatprep.subr.bf16.mxu0 0
    %2335 = vmatpush2.bf16.msra.mxu0 0
    %2336 = vmatprep.mubr.bf16.mxu0 0
    %2337 = vmatmul.mubr.bf16.gmra.mxu0 %v2302
    %v2338 = vpop.f32.mrf.mxu0
    %v2339 = vadd.f32 0.0, %v2338
    %v2340 = vpop.f32.mrf.mxu0
    %v2341 = vpop.f32.mrf.mxu0
    %v2342 = vpop.f32.mrf.mxu0
    %2343 = vdwg.mxu0
    %v2344 = vsel %vm2292, %v2298, 0.0
    %2345 = vadd.xlane.f32.xlu0 %v2344
    %v2346 = vpop.xlane.xlu0 %2345
    %v2347 = vrcp.pop %v2346
    %v2348 = vmul.f32 %v2339, %v2347
    %v2349 = vld [vmem:[%s31] sm:$0xf]
    %v2350 = vld [vmem:[%s31 + $0x4] sm:$0xf]
    %v2351 = vld [vmem:[%s31 + $0x8] sm:$0xf]
    %v2352 = vld [vmem:[%s31 + $0xc] sm:$0xf]
    %v2353 = vld [vmem:[%s31 + $0x10] sm:$0xf]
    %v2354 = vld [vmem:[%s31 + $0x14] sm:$0xf]
    %v2355 = vld [vmem:[%s31 + $0x18] sm:$0xf]
    %v2356 = vld [vmem:[%s31 + $0x1c] sm:$0xf]
    %v2357 = vld [vmem:[%s31 + $0x20] sm:$0xf]
    %v2358 = vld [vmem:[%s31 + $0x24] sm:$0xf]
    %v2359 = vld [vmem:[%s31 + $0x28] sm:$0xf]
    %v2360 = vld [vmem:[%s31 + $0x2c] sm:$0xf]
    %v2361 = vld [vmem:[%s31 + $0x30] sm:$0xf]
    %v2362 = vld [vmem:[%s31 + $0x34] sm:$0xf]
    %v2363 = vld [vmem:[%s31 + $0x38] sm:$0xf]
    %v2364 = vld [vmem:[%s31 + $0x3c] sm:$0xf]
    %v2365 = vpack.c.bf16 %v2348, %v2348
    %v2382 = vunpack.c.l.b16 %v2349
    %v2383 = vunpack.c.l.b16 %v2350
    %v2384 = vunpack.c.l.b16 %v2351
    %v2385 = vunpack.c.l.b16 %v2352
    %v2386 = vunpack.c.l.b16 %v2353
    %v2387 = vunpack.c.l.b16 %v2354
    %v2388 = vunpack.c.l.b16 %v2355
    %v2389 = vunpack.c.l.b16 %v2356
    %v2390 = vunpack.c.l.b16 %v2357
    %v2391 = vunpack.c.l.b16 %v2358
    %v2392 = vunpack.c.l.b16 %v2359
    %v2393 = vunpack.c.l.b16 %v2360
    %v2394 = vunpack.c.l.b16 %v2361
    %v2395 = vunpack.c.l.b16 %v2362
    %v2396 = vunpack.c.l.b16 %v2363
    %v2397 = vunpack.c.l.b16 %v2364
    %v2398 = vpack.c.b16 %v2383, %v2382
    %v2399 = vpack.c.b16 %v2385, %v2384
    %v2400 = vpack.c.b16 %v2387, %v2386
    %v2401 = vpack.c.b16 %v2389, %v2388
    %v2402 = vpack.c.b16 %v2391, %v2390
    %v2403 = vpack.c.b16 %v2393, %v2392
    %v2404 = vpack.c.b16 %v2395, %v2394
    %v2405 = vpack.c.b16 %v2397, %v2396
    %2414 = vmatprep.subr.bf16.mxu0 0
    %2415 = vmatpush1.bf16.msra.mxu0 %v2405
    %2416 = vmatprep.subr.bf16.mxu0 0
    %2417 = vmatpush1.bf16.msra.mxu0 %v2404
    %2418 = vmatprep.subr.bf16.mxu0 0
    %2419 = vmatpush1.bf16.msra.mxu0 %v2403
    %2420 = vmatprep.subr.bf16.mxu0 0
    %2421 = vmatpush1.bf16.msra.mxu0 %v2402
    %2422 = vmatprep.subr.bf16.mxu0 0
    %2423 = vmatpush1.bf16.msra.mxu0 %v2401
    %2424 = vmatprep.subr.bf16.mxu0 0
    %2425 = vmatpush1.bf16.msra.mxu0 %v2400
    %2426 = vmatprep.subr.bf16.mxu0 0
    %2427 = vmatpush1.bf16.msra.mxu0 %v2399
    %2428 = vmatprep.subr.bf16.mxu0 0
    %2429 = vmatpush1.bf16.msra.mxu0 %v2398
    %2430 = vmatprep.subr.bf16.mxu0 0
    %2431 = vmatpush2.bf16.msra.mxu0 0
    %2432 = vmatprep.subr.bf16.mxu0 0
    %2433 = vmatpush2.bf16.msra.mxu0 0
    %2434 = vmatprep.subr.bf16.mxu0 0
    %2435 = vmatpush2.bf16.msra.mxu0 0
    %2436 = vmatprep.subr.bf16.mxu0 0
    %2437 = vmatpush2.bf16.msra.mxu0 0
    %2438 = vmatprep.subr.bf16.mxu0 0
    %2439 = vmatpush2.bf16.msra.mxu0 0
    %2440 = vmatprep.subr.bf16.mxu0 0
    %2441 = vmatpush2.bf16.msra.mxu0 0
    %2442 = vmatprep.subr.bf16.mxu0 0
    %2443 = vmatpush2.bf16.msra.mxu0 0
    %2444 = vmatprep.subr.bf16.mxu0 0
    %2445 = vmatpush2.bf16.msra.mxu0 0
    %2446 = vmatprep.mubr.bf16.mxu0 0
    %2447 = vmatmul.mubr.bf16.gmra.mxu0 %v2365
    %v2448 = vpop.f32.mrf.mxu0
    %v2449 = vadd.f32 0.0, %v2448
    %v2450 = vpop.f32.mrf.mxu0
    %v2451 = vpop.f32.mrf.mxu0
    %v2452 = vpop.f32.mrf.mxu0
    %2453 = vdwg.mxu0
    %v2454 = vadd.f32 %v1880, %v2449
    %v2455 = vld [vmem:[%s33] sm:$0x1]
    %v2457 = vlaneseq
    %v2458 = vshrl.u32 %v2457, 7
    %v2459 = vsub.s32 0, %v2458
    %v2460 = vrot.slane %v2455, %v2459
    %v2462 = vadd.f32 %v2454, %v2460
    %2463 = vadd.xlane.f32.xlu0 %v2462
    %v2464 = vpop.xlane.xlu0 %2463
    %v2465 = vmul.f32 %v2464, %v189
    %v2466 = vsub.f32 %v2462, %v2465
    %v2467 = vmul.f32 %v2466, %v2466
    %2468 = vadd.xlane.f32.xlu0 %v2467
    %v2469 = vpop.xlane.xlu0 %2468
    %v2470 = vmul.f32 %v2469, %v189
    %v2471 = vadd.f32 %v2470, 1e-05
    %v2472 = vrsqrt.pop %v2471
    %v2473 = vmul.f32 %v2466, %v2472
    %v2474 = vld [vmem:[%s35] sm:$0xff]
    %v2475 = vld [vmem:[%s35 + $0x8] sm:$0xff]
    %v2476 = vld [vmem:[%s35 + $0x10] sm:$0xff]
    %v2477 = vld [vmem:[%s35 + $0x18] sm:$0xff]
    %v2478 = vld [vmem:[%s35 + $0x20] sm:$0xff]
    %v2479 = vld [vmem:[%s35 + $0x28] sm:$0xff]
    %v2480 = vld [vmem:[%s35 + $0x30] sm:$0xff]
    %v2481 = vld [vmem:[%s35 + $0x38] sm:$0xff]
    %v2482 = vld [vmem:[%s35 + $0x40] sm:$0xff]
    %v2483 = vld [vmem:[%s35 + $0x48] sm:$0xff]
    %v2484 = vld [vmem:[%s35 + $0x50] sm:$0xff]
    %v2485 = vld [vmem:[%s35 + $0x58] sm:$0xff]
    %v2486 = vld [vmem:[%s35 + $0x60] sm:$0xff]
    %v2487 = vld [vmem:[%s35 + $0x68] sm:$0xff]
    %v2488 = vld [vmem:[%s35 + $0x70] sm:$0xff]
    %v2489 = vld [vmem:[%s35 + $0x78] sm:$0xff]
    %v2490 = vpack.c.bf16 %v2473, %v2473
    %v2491 = vld [vmem:[%s37] sm:$0x3]
    %v2493 = vlaneseq
    %v2494 = vshrl.u32 %v2493, 7
    %v2495 = vsub.s32 0, %v2494
    %v2496 = vrot.slane %v2491, %v2495
    %v2497 = vlaneseq
    %v2498 = vshrl.u32 %v2497, 7
    %v2499 = vsub.s32 1, %v2498
    %v2500 = vrot.slane %v2491, %v2499
    %v2519 = vunpack.c.l.b16 %v2474
    %v2520 = vunpack.c.h.b16 %v2474
    %v2521 = vunpack.c.l.b16 %v2475
    %v2522 = vunpack.c.h.b16 %v2475
    %v2523 = vunpack.c.l.b16 %v2476
    %v2524 = vunpack.c.h.b16 %v2476
    %v2525 = vunpack.c.l.b16 %v2477
    %v2526 = vunpack.c.h.b16 %v2477
    %v2527 = vunpack.c.l.b16 %v2478
    %v2528 = vunpack.c.h.b16 %v2478
    %v2529 = vunpack.c.l.b16 %v2479
    %v2530 = vunpack.c.h.b16 %v2479
    %v2531 = vunpack.c.l.b16 %v2480
    %v2532 = vunpack.c.h.b16 %v2480
    %v2533 = vunpack.c.l.b16 %v2481
    %v2534 = vunpack.c.h.b16 %v2481
    %v2535 = vunpack.c.l.b16 %v2482
    %v2536 = vunpack.c.h.b16 %v2482
    %v2537 = vunpack.c.l.b16 %v2483
    %v2538 = vunpack.c.h.b16 %v2483
    %v2539 = vunpack.c.l.b16 %v2484
    %v2540 = vunpack.c.h.b16 %v2484
    %v2541 = vunpack.c.l.b16 %v2485
    %v2542 = vunpack.c.h.b16 %v2485
    %v2543 = vunpack.c.l.b16 %v2486
    %v2544 = vunpack.c.h.b16 %v2486
    %v2545 = vunpack.c.l.b16 %v2487
    %v2546 = vunpack.c.h.b16 %v2487
    %v2547 = vunpack.c.l.b16 %v2488
    %v2548 = vunpack.c.h.b16 %v2488
    %v2549 = vunpack.c.l.b16 %v2489
    %v2550 = vunpack.c.h.b16 %v2489
    %v2551 = vpack.c.b16 %v2521, %v2519
    %v2552 = vpack.c.b16 %v2522, %v2520
    %v2553 = vpack.c.b16 %v2525, %v2523
    %v2554 = vpack.c.b16 %v2526, %v2524
    %v2555 = vpack.c.b16 %v2529, %v2527
    %v2556 = vpack.c.b16 %v2530, %v2528
    %v2557 = vpack.c.b16 %v2533, %v2531
    %v2558 = vpack.c.b16 %v2534, %v2532
    %v2559 = vpack.c.b16 %v2537, %v2535
    %v2560 = vpack.c.b16 %v2538, %v2536
    %v2561 = vpack.c.b16 %v2541, %v2539
    %v2562 = vpack.c.b16 %v2542, %v2540
    %v2563 = vpack.c.b16 %v2545, %v2543
    %v2564 = vpack.c.b16 %v2546, %v2544
    %v2565 = vpack.c.b16 %v2549, %v2547
    %v2566 = vpack.c.b16 %v2550, %v2548
    %2583 = vmatprep.subr.bf16.mxu0 %v2566
    %2584 = vmatpush1.bf16.msra.mxu0 %v2565
    %2585 = vmatprep.subr.bf16.mxu0 %v2564
    %2586 = vmatpush1.bf16.msra.mxu0 %v2563
    %2587 = vmatprep.subr.bf16.mxu0 %v2562
    %2588 = vmatpush1.bf16.msra.mxu0 %v2561
    %2589 = vmatprep.subr.bf16.mxu0 %v2560
    %2590 = vmatpush1.bf16.msra.mxu0 %v2559
    %2591 = vmatprep.subr.bf16.mxu0 %v2558
    %2592 = vmatpush1.bf16.msra.mxu0 %v2557
    %2593 = vmatprep.subr.bf16.mxu0 %v2556
    %2594 = vmatpush1.bf16.msra.mxu0 %v2555
    %2595 = vmatprep.subr.bf16.mxu0 %v2554
    %2596 = vmatpush1.bf16.msra.mxu0 %v2553
    %2597 = vmatprep.subr.bf16.mxu0 %v2552
    %2598 = vmatpush1.bf16.msra.mxu0 %v2551
    %2599 = vmatprep.subr.bf16.mxu0 0
    %2600 = vmatpush2.bf16.msra.mxu0 0
    %2601 = vmatprep.subr.bf16.mxu0 0
    %2602 = vmatpush2.bf16.msra.mxu0 0
    %2603 = vmatprep.subr.bf16.mxu0 0
    %2604 = vmatpush2.bf16.msra.mxu0 0
    %2605 = vmatprep.subr.bf16.mxu0 0
    %2606 = vmatpush2.bf16.msra.mxu0 0
    %2607 = vmatprep.subr.bf16.mxu0 0
    %2608 = vmatpush2.bf16.msra.mxu0 0
    %2609 = vmatprep.subr.bf16.mxu0 0
    %2610 = vmatpush2.bf16.msra.mxu0 0
    %2611 = vmatprep.subr.bf16.mxu0 0
    %2612 = vmatpush2.bf16.msra.mxu0 0
    %2613 = vmatprep.subr.bf16.mxu0 0
    %2614 = vmatpush2.bf16.msra.mxu0 0
    %2615 = vmatprep.mubr.bf16.mxu0 0
    %2616 = vmatmul.mubr.bf16.gmra.mxu0 %v2490
    %v2617 = vpop.f32.mrf.mxu0
    %v2618 = vadd.f32 %v2496, %v2617
    %v2619 = vpop.f32.mrf.mxu0
    %v2620 = vadd.f32 %v2500, %v2619
    %v2621 = vpop.f32.mrf.mxu0
    %v2622 = vpop.f32.mrf.mxu0
    %2623 = vdwg.mxu0
    %v2624 = vmul.f32 %v2618, %v2618
    %v2625 = vmul.f32 %v2620, %v2620
    %v2626 = vmul.f32 %v2618, %v2624
    %v2627 = vmul.f32 %v2620, %v2625
    %v2628 = vmul.f32 %v2626, 0.044715
    %v2629 = vmul.f32 %v2627, 0.044715
    %v2630 = vadd.f32 %v2618, %v2628
    %v2631 = vadd.f32 %v2620, %v2629
    %v2632 = vmul.f32 %v2630, 0.7978846
    %v2633 = vmul.f32 %v2631, 0.7978846
    %v2634 = vtanh.pop %v2632
    %v2635 = vtanh.pop %v2633
    %v2636 = vadd.f32 %v2634, 1.0
    %v2637 = vadd.f32 %v2635, 1.0
    %v2638 = vmul.f32 %v2636, 0.5
    %v2639 = vmul.f32 %v2637, 0.5
    %v2640 = vmul.f32 %v2618, %v2638
    %v2641 = vmul.f32 %v2620, %v2639
    %v2642 = vld [vmem:[%s39] sm:$0xf]
    %v2643 = vld [vmem:[%s39 + $0x4] sm:$0xf]
    %v2644 = vld [vmem:[%s39 + $0x8] sm:$0xf]
    %v2645 = vld [vmem:[%s39 + $0xc] sm:$0xf]
    %v2646 = vld [vmem:[%s39 + $0x10] sm:$0xf]
    %v2647 = vld [vmem:[%s39 + $0x14] sm:$0xf]
    %v2648 = vld [vmem:[%s39 + $0x18] sm:$0xf]
    %v2649 = vld [vmem:[%s39 + $0x1c] sm:$0xf]
    %v2650 = vld [vmem:[%s39 + $0x20] sm:$0xf]
    %v2651 = vld [vmem:[%s39 + $0x24] sm:$0xf]
    %v2652 = vld [vmem:[%s39 + $0x28] sm:$0xf]
    %v2653 = vld [vmem:[%s39 + $0x2c] sm:$0xf]
    %v2654 = vld [vmem:[%s39 + $0x30] sm:$0xf]
    %v2655 = vld [vmem:[%s39 + $0x34] sm:$0xf]
    %v2656 = vld [vmem:[%s39 + $0x38] sm:$0xf]
    %v2657 = vld [vmem:[%s39 + $0x3c] sm:$0xf]
    %v2658 = vld [vmem:[%s39 + $0x40] sm:$0xf]
    %v2659 = vld [vmem:[%s39 + $0x44] sm:$0xf]
    %v2660 = vld [vmem:[%s39 + $0x48] sm:$0xf]
    %v2661 = vld [vmem:[%s39 + $0x4c] sm:$0xf]
    %v2662 = vld [vmem:[%s39 + $0x50] sm:$0xf]
    %v2663 = vld [vmem:[%s39 + $0x54] sm:$0xf]
    %v2664 = vld [vmem:[%s39 + $0x58] sm:$0xf]
    %v2665 = vld [vmem:[%s39 + $0x5c] sm:$0xf]
    %v2666 = vld [vmem:[%s39 + $0x60] sm:$0xf]
    %v2667 = vld [vmem:[%s39 + $0x64] sm:$0xf]
    %v2668 = vld [vmem:[%s39 + $0x68] sm:$0xf]
    %v2669 = vld [vmem:[%s39 + $0x6c] sm:$0xf]
    %v2670 = vld [vmem:[%s39 + $0x70] sm:$0xf]
    %v2671 = vld [vmem:[%s39 + $0x74] sm:$0xf]
    %v2672 = vld [vmem:[%s39 + $0x78] sm:$0xf]
    %v2673 = vld [vmem:[%s39 + $0x7c] sm:$0xf]
    %v2674 = vpack.c.bf16 %v2640, %v2640
    %v2675 = vpack.c.bf16 %v2641, %v2641
    %v2708 = vunpack.c.l.b16 %v2642
    %v2709 = vunpack.c.l.b16 %v2643
    %v2710 = vunpack.c.l.b16 %v2644
    %v2711 = vunpack.c.l.b16 %v2645
    %v2712 = vunpack.c.l.b16 %v2646
    %v2713 = vunpack.c.l.b16 %v2647
    %v2714 = vunpack.c.l.b16 %v2648
    %v2715 = vunpack.c.l.b16 %v2649
    %v2716 = vunpack.c.l.b16 %v2650
    %v2717 = vunpack.c.l.b16 %v2651
    %v2718 = vunpack.c.l.b16 %v2652
    %v2719 = vunpack.c.l.b16 %v2653
    %v2720 = vunpack.c.l.b16 %v2654
    %v2721 = vunpack.c.l.b16 %v2655
    %v2722 = vunpack.c.l.b16 %v2656
    %v2723 = vunpack.c.l.b16 %v2657
    %v2724 = vunpack.c.l.b16 %v2658
    %v2725 = vunpack.c.l.b16 %v2659
    %v2726 = vunpack.c.l.b16 %v2660
    %v2727 = vunpack.c.l.b16 %v2661
    %v2728 = vunpack.c.l.b16 %v2662
    %v2729 = vunpack.c.l.b16 %v2663
    %v2730 = vunpack.c.l.b16 %v2664
    %v2731 = vunpack.c.l.b16 %v2665
    %v2732 = vunpack.c.l.b16 %v2666
    %v2733 = vunpack.c.l.b16 %v2667
    %v2734 = vunpack.c.l.b16 %v2668
    %v2735 = vunpack.c.l.b16 %v2669
    %v2736 = vunpack.c.l.b16 %v2670
    %v2737 = vunpack.c.l.b16 %v2671
    %v2738 = vunpack.c.l.b16 %v2672
    %v2739 = vunpack.c.l.b16 %v2673
    %v2740 = vpack.c.b16 %v2709, %v2708
    %v2741 = vpack.c.b16 %v2711, %v2710
    %v2742 = vpack.c.b16 %v2713, %v2712
    %v2743 = vpack.c.b16 %v2715, %v2714
    %v2744 = vpack.c.b16 %v2717, %v2716
    %v2745 = vpack.c.b16 %v2719, %v2718
    %v2746 = vpack.c.b16 %v2721, %v2720
    %v2747 = vpack.c.b16 %v2723, %v2722
    %v2748 = vpack.c.b16 %v2725, %v2724
    %v2749 = vpack.c.b16 %v2727, %v2726
    %v2750 = vpack.c.b16 %v2729, %v2728
    %v2751 = vpack.c.b16 %v2731, %v2730
    %v2752 = vpack.c.b16 %v2733, %v2732
    %v2753 = vpack.c.b16 %v2735, %v2734
    %v2754 = vpack.c.b16 %v2737, %v2736
    %v2755 = vpack.c.b16 %v2739, %v2738
    %2772 = vmatprep.subr.bf16.mxu0 0
    %2773 = vmatpush1.bf16.msra.mxu0 %v2747
    %2774 = vmatprep.subr.bf16.mxu0 0
    %2775 = vmatpush1.bf16.msra.mxu0 %v2746
    %2776 = vmatprep.subr.bf16.mxu0 0
    %2777 = vmatpush1.bf16.msra.mxu0 %v2745
    %2778 = vmatprep.subr.bf16.mxu0 0
    %2779 = vmatpush1.bf16.msra.mxu0 %v2744
    %2780 = vmatprep.subr.bf16.mxu0 0
    %2781 = vmatpush1.bf16.msra.mxu0 %v2743
    %2782 = vmatprep.subr.bf16.mxu0 0
    %2783 = vmatpush1.bf16.msra.mxu0 %v2742
    %2784 = vmatprep.subr.bf16.mxu0 0
    %2785 = vmatpush1.bf16.msra.mxu0 %v2741
    %2786 = vmatprep.subr.bf16.mxu0 0
    %2787 = vmatpush1.bf16.msra.mxu0 %v2740
    %2788 = vmatprep.subr.bf16.mxu0 0
    %2789 = vmatpush2.bf16.msra.mxu0 %v2755
    %2790 = vmatprep.subr.bf16.mxu0 0
    %2791 = vmatpush2.bf16.msra.mxu0 %v2754
    %2792 = vmatprep.subr.bf16.mxu0 0
    %2793 = vmatpush2.bf16.msra.mxu0 %v2753
    %2794 = vmatprep.subr.bf16.mxu0 0
    %2795 = vmatpush2.bf16.msra.mxu0 %v2752
    %2796 = vmatprep.subr.bf16.mxu0 0
    %2797 = vmatpush2.bf16.msra.mxu0 %v2751
    %2798 = vmatprep.subr.bf16.mxu0 0
    %2799 = vmatpush2.bf16.msra.mxu0 %v2750
    %2800 = vmatprep.subr.bf16.mxu0 0
    %2801 = vmatpush2.bf16.msra.mxu0 %v2749
    %2802 = vmatprep.subr.bf16.mxu0 0
    %2803 = vmatpush2.bf16.msra.mxu0 %v2748
    %2804 = vmatprep.mubr.bf16.mxu0 %v2675
    %2805 = vmatmul.mubr.bf16.gmra.mxu0 %v2674
    %v2806 = vpop.f32.mrf.mxu0
    %v2807 = vadd.f32 0.0, %v2806
    %v2808 = vpop.f32.mrf.mxu0
    %v2809 = vpop.f32.mrf.mxu0
    %v2810 = vpop.f32.mrf.mxu0
    %2811 = vdwg.mxu0
    %v2812 = vadd.f32 %v2462, %v2807
    %v2813 = vld [vmem:[%s41] sm:$0x1]
    %v2815 = vlaneseq
    %v2816 = vshrl.u32 %v2815, 7
    %v2817 = vsub.s32 0, %v2816
    %v2818 = vrot.slane %v2813, %v2817
    %v2820 = vadd.f32 %v2812, %v2818
    %v2821 = vld [vmem:[%s43] sm:$0xf]
    %v2822 = vld [vmem:[%s43 + $0x4] sm:$0xf]
    %v2823 = vld [vmem:[%s43 + $0x8] sm:$0xf]
    %v2824 = vld [vmem:[%s43 + $0xc] sm:$0xf]
    %v2825 = vld [vmem:[%s43 + $0x10] sm:$0xf]
    %v2826 = vld [vmem:[%s43 + $0x14] sm:$0xf]
    %v2827 = vld [vmem:[%s43 + $0x18] sm:$0xf]
    %v2828 = vld [vmem:[%s43 + $0x1c] sm:$0xf]
    %v2829 = vld [vmem:[%s43 + $0x20] sm:$0xf]
    %v2830 = vld [vmem:[%s43 + $0x24] sm:$0xf]
    %v2831 = vld [vmem:[%s43 + $0x28] sm:$0xf]
    %v2832 = vld [vmem:[%s43 + $0x2c] sm:$0xf]
    %v2833 = vld [vmem:[%s43 + $0x30] sm:$0xf]
    %v2834 = vld [vmem:[%s43 + $0x34] sm:$0xf]
    %v2835 = vld [vmem:[%s43 + $0x38] sm:$0xf]
    %v2836 = vld [vmem:[%s43 + $0x3c] sm:$0xf]
    %v2837 = vpack.c.bf16 %v2820, %v2820
    %v2838 = vld [vmem:[%s45] sm:$0x1]
    %v2840 = vlaneseq
    %v2841 = vshrl.u32 %v2840, 7
    %v2842 = vsub.s32 0, %v2841
    %v2843 = vrot.slane %v2838, %v2842
    %v2861 = vunpack.c.l.b16 %v2821
    %v2862 = vunpack.c.l.b16 %v2822
    %v2863 = vunpack.c.l.b16 %v2823
    %v2864 = vunpack.c.l.b16 %v2824
    %v2865 = vunpack.c.l.b16 %v2825
    %v2866 = vunpack.c.l.b16 %v2826
    %v2867 = vunpack.c.l.b16 %v2827
    %v2868 = vunpack.c.l.b16 %v2828
    %v2869 = vunpack.c.l.b16 %v2829
    %v2870 = vunpack.c.l.b16 %v2830
    %v2871 = vunpack.c.l.b16 %v2831
    %v2872 = vunpack.c.l.b16 %v2832
    %v2873 = vunpack.c.l.b16 %v2833
    %v2874 = vunpack.c.l.b16 %v2834
    %v2875 = vunpack.c.l.b16 %v2835
    %v2876 = vunpack.c.l.b16 %v2836
    %v2877 = vpack.c.b16 %v2862, %v2861
    %v2878 = vpack.c.b16 %v2864, %v2863
    %v2879 = vpack.c.b16 %v2866, %v2865
    %v2880 = vpack.c.b16 %v2868, %v2867
    %v2881 = vpack.c.b16 %v2870, %v2869
    %v2882 = vpack.c.b16 %v2872, %v2871
    %v2883 = vpack.c.b16 %v2874, %v2873
    %v2884 = vpack.c.b16 %v2876, %v2875
    %2893 = vmatprep.subr.bf16.mxu0 0
    %2894 = vmatpush1.bf16.msra.mxu0 %v2884
    %2895 = vmatprep.subr.bf16.mxu0 0
    %2896 = vmatpush1.bf16.msra.mxu0 %v2883
    %2897 = vmatprep.subr.bf16.mxu0 0
    %2898 = vmatpush1.bf16.msra.mxu0 %v2882
    %2899 = vmatprep.subr.bf16.mxu0 0
    %2900 = vmatpush1.bf16.msra.mxu0 %v2881
    %2901 = vmatprep.subr.bf16.mxu0 0
    %2902 = vmatpush1.bf16.msra.mxu0 %v2880
    %2903 = vmatprep.subr.bf16.mxu0 0
    %2904 = vmatpush1.bf16.msra.mxu0 %v2879
    %2905 = vmatprep.subr.bf16.mxu0 0
    %2906 = vmatpush1.bf16.msra.mxu0 %v2878
    %2907 = vmatprep.subr.bf16.mxu0 0
    %2908 = vmatpush1.bf16.msra.mxu0 %v2877
    %2909 = vmatprep.subr.bf16.mxu0 0
    %2910 = vmatpush2.bf16.msra.mxu0 0
    %2911 = vmatprep.subr.bf16.mxu0 0
    %2912 = vmatpush2.bf16.msra.mxu0 0
    %2913 = vmatprep.subr.bf16.mxu0 0
    %2914 = vmatpush2.bf16.msra.mxu0 0
    %2915 = vmatprep.subr.bf16.mxu0 0
    %2916 = vmatpush2.bf16.msra.mxu0 0
    %2917 = vmatprep.subr.bf16.mxu0 0
    %2918 = vmatpush2.bf16.msra.mxu0 0
    %2919 = vmatprep.subr.bf16.mxu0 0
    %2920 = vmatpush2.bf16.msra.mxu0 0
    %2921 = vmatprep.subr.bf16.mxu0 0
    %2922 = vmatpush2.bf16.msra.mxu0 0
    %2923 = vmatprep.subr.bf16.mxu0 0
    %2924 = vmatpush2.bf16.msra.mxu0 0
    %2925 = vmatprep.mubr.bf16.mxu0 0
    %2926 = vmatmul.mubr.bf16.gmra.mxu0 %v2837
    %v2927 = vpop.f32.mrf.mxu0
    %v2928 = vadd.f32 %v2843, %v2927
    %v2929 = vpop.f32.mrf.mxu0
    %v2930 = vpop.f32.mrf.mxu0
    %v2931 = vpop.f32.mrf.mxu0
    %2932 = vdwg.mxu0
    %v2933 = vpack.c.bf16 %v2928, %v2928
    %v2934 = vpack.c.bf16 %v1949, %v1946
    %2935 = vmatprep.subr.bf16.mxu0 0
    %2936 = vmatpush1.bf16.xpose.msra.mxu0 0
    %2937 = vmatprep.subr.bf16.mxu0 0
    %2938 = vmatpush1.bf16.xpose.msra.mxu0 0
    %2939 = vmatprep.subr.bf16.mxu0 0
    %2940 = vmatpush1.bf16.xpose.msra.mxu0 0
    %2941 = vmatprep.subr.bf16.mxu0 0
    %2942 = vmatpush1.bf16.xpose.msra.mxu0 0
    %2943 = vmatprep.subr.bf16.mxu0 0
    %2944 = vmatpush1.bf16.xpose.msra.mxu0 0
    %2945 = vmatprep.subr.bf16.mxu0 0
    %2946 = vmatpush1.bf16.xpose.msra.mxu0 0
    %2947 = vmatprep.subr.bf16.mxu0 0
    %2948 = vmatpush1.bf16.xpose.msra.mxu0 0
    %2949 = vmatprep.subr.bf16.mxu0 0
    %2950 = vmatpush1.bf16.xpose.msra.mxu0 %v2934
    %2951 = vmatprep.subr.bf16.mxu0 0
    %2952 = vmatpush2.bf16.xpose.msra.mxu0 0
    %2953 = vmatprep.subr.bf16.mxu0 0
    %2954 = vmatpush2.bf16.xpose.msra.mxu0 0
    %2955 = vmatprep.subr.bf16.mxu0 0
    %2956 = vmatpush2.bf16.xpose.msra.mxu0 0
    %2957 = vmatprep.subr.bf16.mxu0 0
    %2958 = vmatpush2.bf16.xpose.msra.mxu0 0
    %2959 = vmatprep.subr.bf16.mxu0 0
    %2960 = vmatpush2.bf16.xpose.msra.mxu0 0
    %2961 = vmatprep.subr.bf16.mxu0 0
    %2962 = vmatpush2.bf16.xpose.msra.mxu0 0
    %2963 = vmatprep.subr.bf16.mxu0 0
    %2964 = vmatpush2.bf16.xpose.msra.mxu0 0
    %2965 = vmatprep.subr.bf16.mxu0 0
    %2966 = vmatpush2.bf16.xpose.msra.mxu0 0
    %2967 = vmatprep.mubr.bf16.mxu0 0
    %2968 = vmatmul.mubr.bf16.gmra.mxu0 %v2933
    %v2969 = vpop.f32.mrf.mxu0
    %v2970 = vadd.f32 0.0, %v2969
    %v2971 = vpop.f32.mrf.mxu0
    %v2972 = vpop.f32.mrf.mxu0
    %v2973 = vpop.f32.mrf.mxu0
    %2974 = vdwg.mxu0
    %2975 = vst.msk [vmem:[#allocation2] sm:$0xff] %vm2292, %v2970
    %v2976 = vld [vmem:[%s47] sm:$0xf]
    %v2977 = vld [vmem:[%s47 + $0x4] sm:$0xf]
    %v2978 = vld [vmem:[%s47 + $0x8] sm:$0xf]
    %v2979 = vld [vmem:[%s47 + $0xc] sm:$0xf]
    %v2980 = vld [vmem:[%s47 + $0x10] sm:$0xf]
    %v2981 = vld [vmem:[%s47 + $0x14] sm:$0xf]
    %v2982 = vld [vmem:[%s47 + $0x18] sm:$0xf]
    %v2983 = vld [vmem:[%s47 + $0x1c] sm:$0xf]
    %v2984 = vld [vmem:[%s47 + $0x20] sm:$0xf]
    %v2985 = vld [vmem:[%s47 + $0x24] sm:$0xf]
    %v2986 = vld [vmem:[%s47 + $0x28] sm:$0xf]
    %v2987 = vld [vmem:[%s47 + $0x2c] sm:$0xf]
    %v2988 = vld [vmem:[%s47 + $0x30] sm:$0xf]
    %v2989 = vld [vmem:[%s47 + $0x34] sm:$0xf]
    %v2990 = vld [vmem:[%s47 + $0x38] sm:$0xf]
    %v2991 = vld [vmem:[%s47 + $0x3c] sm:$0xf]
    %v2992 = vld [vmem:[%s49] sm:$0x1]
    %v2994 = vlaneseq
    %v2995 = vshrl.u32 %v2994, 7
    %v2996 = vsub.s32 0, %v2995
    %v2997 = vrot.slane %v2992, %v2996
    %v3015 = vunpack.c.l.b16 %v2976
    %v3016 = vunpack.c.l.b16 %v2977
    %v3017 = vunpack.c.l.b16 %v2978
    %v3018 = vunpack.c.l.b16 %v2979
    %v3019 = vunpack.c.l.b16 %v2980
    %v3020 = vunpack.c.l.b16 %v2981
    %v3021 = vunpack.c.l.b16 %v2982
    %v3022 = vunpack.c.l.b16 %v2983
    %v3023 = vunpack.c.l.b16 %v2984
    %v3024 = vunpack.c.l.b16 %v2985
    %v3025 = vunpack.c.l.b16 %v2986
    %v3026 = vunpack.c.l.b16 %v2987
    %v3027 = vunpack.c.l.b16 %v2988
    %v3028 = vunpack.c.l.b16 %v2989
    %v3029 = vunpack.c.l.b16 %v2990
    %v3030 = vunpack.c.l.b16 %v2991
    %v3031 = vpack.c.b16 %v3016, %v3015
    %v3032 = vpack.c.b16 %v3018, %v3017
    %v3033 = vpack.c.b16 %v3020, %v3019
    %v3034 = vpack.c.b16 %v3022, %v3021
    %v3035 = vpack.c.b16 %v3024, %v3023
    %v3036 = vpack.c.b16 %v3026, %v3025
    %v3037 = vpack.c.b16 %v3028, %v3027
    %v3038 = vpack.c.b16 %v3030, %v3029
    %3047 = vmatprep.subr.bf16.mxu0 0
    %3048 = vmatpush1.bf16.msra.mxu0 %v3038
    %3049 = vmatprep.subr.bf16.mxu0 0
    %3050 = vmatpush1.bf16.msra.mxu0 %v3037
    %3051 = vmatprep.subr.bf16.mxu0 0
    %3052 = vmatpush1.bf16.msra.mxu0 %v3036
    %3053 = vmatprep.subr.bf16.mxu0 0
    %3054 = vmatpush1.bf16.msra.mxu0 %v3035
    %3055 = vmatprep.subr.bf16.mxu0 0
    %3056 = vmatpush1.bf16.msra.mxu0 %v3034
    %3057 = vmatprep.subr.bf16.mxu0 0
    %3058 = vmatpush1.bf16.msra.mxu0 %v3033
    %3059 = vmatprep.subr.bf16.mxu0 0
    %3060 = vmatpush1.bf16.msra.mxu0 %v3032
    %3061 = vmatprep.subr.bf16.mxu0 0
    %3062 = vmatpush1.bf16.msra.mxu0 %v3031
    %3063 = vmatprep.subr.bf16.mxu0 0
    %3064 = vmatpush2.bf16.msra.mxu0 0
    %3065 = vmatprep.subr.bf16.mxu0 0
    %3066 = vmatpush2.bf16.msra.mxu0 0
    %3067 = vmatprep.subr.bf16.mxu0 0
    %3068 = vmatpush2.bf16.msra.mxu0 0
    %3069 = vmatprep.subr.bf16.mxu0 0
    %3070 = vmatpush2.bf16.msra.mxu0 0
    %3071 = vmatprep.subr.bf16.mxu0 0
    %3072 = vmatpush2.bf16.msra.mxu0 0
    %3073 = vmatprep.subr.bf16.mxu0 0
    %3074 = vmatpush2.bf16.msra.mxu0 0
    %3075 = vmatprep.subr.bf16.mxu0 0
    %3076 = vmatpush2.bf16.msra.mxu0 0
    %3077 = vmatprep.subr.bf16.mxu0 0
    %3078 = vmatpush2.bf16.msra.mxu0 0
    %3079 = vmatprep.mubr.bf16.mxu0 0
    %3080 = vmatmul.mubr.bf16.gmra.mxu0 %v2837
    %v3081 = vpop.f32.mrf.mxu0
    %v3082 = vadd.f32 %v2997, %v3081
    %v3083 = vpop.f32.mrf.mxu0
    %v3084 = vpop.f32.mrf.mxu0
    %v3085 = vpop.f32.mrf.mxu0
    %3086 = vdwg.mxu0
    %v3087 = vpack.c.bf16 %v3082, %v3082
    %v3088 = vpack.c.bf16 %v123, %v122
    %v3089 = vpack.c.bf16 %v125, %v124
    %v3090 = vpack.c.bf16 %v127, %v126
    %v3091 = vpack.c.bf16 %v129, %v128
    %v3092 = vpack.c.bf16 %v131, %v130
    %v3093 = vpack.c.bf16 %v133, %v132
    %v3094 = vpack.c.bf16 %v135, %v134
    %v3095 = vpack.c.bf16 %v137, %v136
    %v3096 = vpack.c.bf16 %v139, %v138
    %v3097 = vpack.c.bf16 %v141, %v140
    %v3098 = vpack.c.bf16 %v143, %v142
    %v3099 = vpack.c.bf16 %v145, %v144
    %v3100 = vpack.c.bf16 %v147, %v146
    %v3101 = vpack.c.bf16 %v149, %v148
    %v3102 = vpack.c.bf16 %v151, %v150
    %v3103 = vpack.c.bf16 %v153, %v152
    %v3104 = vpack.c.bf16 %v155, %v154
    %v3105 = vpack.c.bf16 %v157, %v156
    %v3106 = vpack.c.bf16 %v159, %v158
    %v3107 = vpack.c.bf16 %v161, %v160
    %v3108 = vpack.c.bf16 %v163, %v162
    %v3109 = vpack.c.bf16 %v165, %v164
    %v3110 = vpack.c.bf16 %v167, %v166
    %v3111 = vpack.c.bf16 %v169, %v168
    %v3112 = vpack.c.bf16 %v171, %v170
    %v3113 = vpack.c.bf16 %v173, %v172
    %v3114 = vpack.c.bf16 %v175, %v174
    %v3115 = vpack.c.bf16 %v177, %v176
    %v3116 = vpack.c.bf16 %v179, %v178
    %v3117 = vpack.c.bf16 %v181, %v180
    %v3118 = vpack.c.bf16 %v183, %v182
    %v3119 = vpack.c.bf16 %v185, %v184
    %3120 = vmatprep.subr.bf16.mxu0 0
    %3121 = vmatpush1.bf16.xpose.msra.mxu0 %v3095
    %3122 = vmatprep.subr.bf16.mxu0 0
    %3123 = vmatpush1.bf16.xpose.msra.mxu0 %v3094
    %3124 = vmatprep.subr.bf16.mxu0 0
    %3125 = vmatpush1.bf16.xpose.msra.mxu0 %v3093
    %3126 = vmatprep.subr.bf16.mxu0 0
    %3127 = vmatpush1.bf16.xpose.msra.mxu0 %v3092
    %3128 = vmatprep.subr.bf16.mxu0 0
    %3129 = vmatpush1.bf16.xpose.msra.mxu0 %v3091
    %3130 = vmatprep.subr.bf16.mxu0 0
    %3131 = vmatpush1.bf16.xpose.msra.mxu0 %v3090
    %3132 = vmatprep.subr.bf16.mxu0 0
    %3133 = vmatpush1.bf16.xpose.msra.mxu0 %v3089
    %3134 = vmatprep.subr.bf16.mxu0 0
    %3135 = vmatpush1.bf16.xpose.msra.mxu0 %v3088
    %3136 = vmatprep.subr.bf16.mxu0 0
    %3137 = vmatpush2.bf16.xpose.msra.mxu0 %v3103
    %3138 = vmatprep.subr.bf16.mxu0 0
    %3139 = vmatpush2.bf16.xpose.msra.mxu0 %v3102
    %3140 = vmatprep.subr.bf16.mxu0 0
    %3141 = vmatpush2.bf16.xpose.msra.mxu0 %v3101
    %3142 = vmatprep.subr.bf16.mxu0 0
    %3143 = vmatpush2.bf16.xpose.msra.mxu0 %v3100
    %3144 = vmatprep.subr.bf16.mxu0 0
    %3145 = vmatpush2.bf16.xpose.msra.mxu0 %v3099
    %3146 = vmatprep.subr.bf16.mxu0 0
    %3147 = vmatpush2.bf16.xpose.msra.mxu0 %v3098
    %3148 = vmatprep.subr.bf16.mxu0 0
    %3149 = vmatpush2.bf16.xpose.msra.mxu0 %v3097
    %3150 = vmatprep.subr.bf16.mxu0 0
    %3151 = vmatpush2.bf16.xpose.msra.mxu0 %v3096
    %3152 = vmatprep.mubr.bf16.mxu0 0
    %3153 = vmatmul.mubr.bf16.gmra.mxu0 %v3087
    %v3154 = vpop.f32.mrf.mxu0
    %v3155 = vadd.f32 0.0, %v3154
    %v3156 = vpop.f32.mrf.mxu0
    %v3157 = vadd.f32 0.0, %v3156
    %v3158 = vpop.f32.mrf.mxu0
    %v3159 = vpop.f32.mrf.mxu0
    %3160 = vdwg.mxu0
    %3161 = vmatprep.subr.bf16.mxu0 0
    %3162 = vmatpush1.bf16.xpose.msra.mxu0 %v3111
    %3163 = vmatprep.subr.bf16.mxu0 0
    %3164 = vmatpush1.bf16.xpose.msra.mxu0 %v3110
    %3165 = vmatprep.subr.bf16.mxu0 0
    %3166 = vmatpush1.bf16.xpose.msra.mxu0 %v3109
    %3167 = vmatprep.subr.bf16.mxu0 0
    %3168 = vmatpush1.bf16.xpose.msra.mxu0 %v3108
    %3169 = vmatprep.subr.bf16.mxu0 0
    %3170 = vmatpush1.bf16.xpose.msra.mxu0 %v3107
    %3171 = vmatprep.subr.bf16.mxu0 0
    %3172 = vmatpush1.bf16.xpose.msra.mxu0 %v3106
    %3173 = vmatprep.subr.bf16.mxu0 0
    %3174 = vmatpush1.bf16.xpose.msra.mxu0 %v3105
    %3175 = vmatprep.subr.bf16.mxu0 0
    %3176 = vmatpush1.bf16.xpose.msra.mxu0 %v3104
    %3177 = vmatprep.subr.bf16.mxu0 0
    %3178 = vmatpush2.bf16.xpose.msra.mxu0 %v3119
    %3179 = vmatprep.subr.bf16.mxu0 0
    %3180 = vmatpush2.bf16.xpose.msra.mxu0 %v3118
    %3181 = vmatprep.subr.bf16.mxu0 0
    %3182 = vmatpush2.bf16.xpose.msra.mxu0 %v3117
    %3183 = vmatprep.subr.bf16.mxu0 0
    %3184 = vmatpush2.bf16.xpose.msra.mxu0 %v3116
    %3185 = vmatprep.subr.bf16.mxu0 0
    %3186 = vmatpush2.bf16.xpose.msra.mxu0 %v3115
    %3187 = vmatprep.subr.bf16.mxu0 0
    %3188 = vmatpush2.bf16.xpose.msra.mxu0 %v3114
    %3189 = vmatprep.subr.bf16.mxu0 0
    %3190 = vmatpush2.bf16.xpose.msra.mxu0 %v3113
    %3191 = vmatprep.subr.bf16.mxu0 0
    %3192 = vmatpush2.bf16.xpose.msra.mxu0 %v3112
    %3193 = vmatprep.mubr.bf16.mxu0 0
    %3194 = vmatmul.mubr.bf16.gmra.mxu0 %v3087
    %v3195 = vpop.f32.mrf.mxu0
    %v3196 = vadd.f32 0.0, %v3195
    %v3197 = vpop.f32.mrf.mxu0
    %v3198 = vadd.f32 0.0, %v3197
    %v3199 = vpop.f32.mrf.mxu0
    %v3200 = vpop.f32.mrf.mxu0
    %3201 = vdwg.mxu0
    %3202 = vst [vmem:[#allocation4] sm:$0xff] %v3155
    %3203 = vst [vmem:[#allocation4 + $0x8] sm:$0xff] %v3157
    %3204 = vst [vmem:[#allocation4 + $0x10] sm:$0xff] %v3196
    %3205 = vst [vmem:[#allocation4 + $0x18] sm:$0xff] %v3198
    %v3206 = vld [vmem:[%s51] sm:$0xf]
    %v3207 = vld [vmem:[%s51 + $0x4] sm:$0xf]
    %v3208 = vld [vmem:[%s51 + $0x8] sm:$0xf]
    %v3209 = vld [vmem:[%s51 + $0xc] sm:$0xf]
    %v3210 = vld [vmem:[%s51 + $0x10] sm:$0xf]
    %v3211 = vld [vmem:[%s51 + $0x14] sm:$0xf]
    %v3212 = vld [vmem:[%s51 + $0x18] sm:$0xf]
    %v3213 = vld [vmem:[%s51 + $0x1c] sm:$0xf]
    %v3214 = vld [vmem:[%s51 + $0x20] sm:$0xf]
    %v3215 = vld [vmem:[%s51 + $0x24] sm:$0xf]
    %v3216 = vld [vmem:[%s51 + $0x28] sm:$0xf]
    %v3217 = vld [vmem:[%s51 + $0x2c] sm:$0xf]
    %v3218 = vld [vmem:[%s51 + $0x30] sm:$0xf]
    %v3219 = vld [vmem:[%s51 + $0x34] sm:$0xf]
    %v3220 = vld [vmem:[%s51 + $0x38] sm:$0xf]
    %v3221 = vld [vmem:[%s51 + $0x3c] sm:$0xf]
    %v3222 = vld [vmem:[%s53] sm:$0x1]
    %v3224 = vlaneseq
    %v3225 = vshrl.u32 %v3224, 7
    %v3226 = vsub.s32 0, %v3225
    %v3227 = vrot.slane %v3222, %v3226
    %v3245 = vunpack.c.l.b16 %v3206
    %v3246 = vunpack.c.l.b16 %v3207
    %v3247 = vunpack.c.l.b16 %v3208
    %v3248 = vunpack.c.l.b16 %v3209
    %v3249 = vunpack.c.l.b16 %v3210
    %v3250 = vunpack.c.l.b16 %v3211
    %v3251 = vunpack.c.l.b16 %v3212
    %v3252 = vunpack.c.l.b16 %v3213
    %v3253 = vunpack.c.l.b16 %v3214
    %v3254 = vunpack.c.l.b16 %v3215
    %v3255 = vunpack.c.l.b16 %v3216
    %v3256 = vunpack.c.l.b16 %v3217
    %v3257 = vunpack.c.l.b16 %v3218
    %v3258 = vunpack.c.l.b16 %v3219
    %v3259 = vunpack.c.l.b16 %v3220
    %v3260 = vunpack.c.l.b16 %v3221
    %v3261 = vpack.c.b16 %v3246, %v3245
    %v3262 = vpack.c.b16 %v3248, %v3247
    %v3263 = vpack.c.b16 %v3250, %v3249
    %v3264 = vpack.c.b16 %v3252, %v3251
    %v3265 = vpack.c.b16 %v3254, %v3253
    %v3266 = vpack.c.b16 %v3256, %v3255
    %v3267 = vpack.c.b16 %v3258, %v3257
    %v3268 = vpack.c.b16 %v3260, %v3259
    %3277 = vmatprep.subr.bf16.mxu0 0
    %3278 = vmatpush1.bf16.msra.mxu0 %v3268
    %3279 = vmatprep.subr.bf16.mxu0 0
    %3280 = vmatpush1.bf16.msra.mxu0 %v3267
    %3281 = vmatprep.subr.bf16.mxu0 0
    %3282 = vmatpush1.bf16.msra.mxu0 %v3266
    %3283 = vmatprep.subr.bf16.mxu0 0
    %3284 = vmatpush1.bf16.msra.mxu0 %v3265
    %3285 = vmatprep.subr.bf16.mxu0 0
    %3286 = vmatpush1.bf16.msra.mxu0 %v3264
    %3287 = vmatprep.subr.bf16.mxu0 0
    %3288 = vmatpush1.bf16.msra.mxu0 %v3263
    %3289 = vmatprep.subr.bf16.mxu0 0
    %3290 = vmatpush1.bf16.msra.mxu0 %v3262
    %3291 = vmatprep.subr.bf16.mxu0 0
    %3292 = vmatpush1.bf16.msra.mxu0 %v3261
    %3293 = vmatprep.subr.bf16.mxu0 0
    %3294 = vmatpush2.bf16.msra.mxu0 0
    %3295 = vmatprep.subr.bf16.mxu0 0
    %3296 = vmatpush2.bf16.msra.mxu0 0
    %3297 = vmatprep.subr.bf16.mxu0 0
    %3298 = vmatpush2.bf16.msra.mxu0 0
    %3299 = vmatprep.subr.bf16.mxu0 0
    %3300 = vmatpush2.bf16.msra.mxu0 0
    %3301 = vmatprep.subr.bf16.mxu0 0
    %3302 = vmatpush2.bf16.msra.mxu0 0
    %3303 = vmatprep.subr.bf16.mxu0 0
    %3304 = vmatpush2.bf16.msra.mxu0 0
    %3305 = vmatprep.subr.bf16.mxu0 0
    %3306 = vmatpush2.bf16.msra.mxu0 0
    %3307 = vmatprep.subr.bf16.mxu0 0
    %3308 = vmatpush2.bf16.msra.mxu0 0
    %3309 = vmatprep.mubr.bf16.mxu0 0
    %3310 = vmatmul.mubr.bf16.gmra.mxu0 %v2837
    %v3311 = vpop.f32.mrf.mxu0
    %v3312 = vadd.f32 %v3227, %v3311
    %v3313 = vpop.f32.mrf.mxu0
    %v3314 = vpop.f32.mrf.mxu0
    %v3315 = vpop.f32.mrf.mxu0
    %3316 = vdwg.mxu0
    %v3317 = vxor.u32 %v3312, 2147483648
    %v3318 = vmul.f32 %v3317, 1.442695
    %v3319 = vpow.pop %v3318
    %v3320 = vadd.f32 %v3319, 1.0
    %v3321 = vrcp.pop %v3320
    %v3322 = vmul.f32 1.0, %v3321
    %vm3323 = vcmask 48128
    %3324 = vst.msk [vmem:[%s57] sm:$0xff] %vm3323, %v3322
    // Predicated region
    $region110: #{locate3d_forward.3} parent=1 // pred_check
      _
    $region111: #{locate3d_forward.3} parent=1 // pred_check_branch
      %3326 = sbr.rel (0) target = $region113
    $region112: #{locate3d_forward.3} parent=1 // pred_region
      %s3328 = ssub.s32 128, 128
      %3329 = vsyncadd [#allocation3], %s3328
      %s3331 = sshll.u32 [#allocation2], 4
      %s3332 = int_to_ptr.vmem [resolvable:$true] %s3331
      %3334 = dma.vmem_to_hbm [thread:$0]  %s3332, 128, %s55, [#allocation3]
    $region113: #{locate3d_forward.3} parent=1 // pred_fallthru
      _
    // Predicated region
    $region114: #{locate3d_forward.3} parent=1 // pred_check
      _
    $region115: #{locate3d_forward.3} parent=1 // pred_check_branch
      %3336 = sbr.rel (0) target = $region117
    $region116: #{locate3d_forward.3} parent=1 // pred_region
      _
    $region117: #{locate3d_forward.3} parent=1 // pred_fallthru
      _
    // Predicated region
    $region118: #{locate3d_forward.3} parent=1 // pred_check
      _
    $region119: #{locate3d_forward.3} parent=1 // pred_check_branch
      %3338 = sbr.rel (0) target = $region121
    $region120: #{locate3d_forward.3} parent=1 // pred_region
      %s3340 = ssub.s32 512, 512
      %3341 = vsyncadd [#allocation5], %s3340
      %s3343 = sshll.u32 [#allocation4], 4
      %s3344 = int_to_ptr.vmem [resolvable:$true] %s3343
      %3346 = dma.vmem_to_hbm [thread:$0]  %s3344, 512, %s59, [#allocation5]
    $region121: #{locate3d_forward.3} parent=1 // pred_fallthru
      _
    // Predicated region
    $region122: #{locate3d_forward.3} parent=1 // pred_check
      _
    $region123: #{locate3d_forward.3} parent=1 // pred_check_branch
      %3348 = sbr.rel (0) target = $region125
    $region124: #{locate3d_forward.3} parent=1 // pred_region
      %3349 = dma.done [#allocation3], 128
    $region125: #{locate3d_forward.3} parent=1 // pred_fallthru
      _
    // Predicated region
    $region126: #{locate3d_forward.3} parent=1 // pred_check
      _
    $region127: #{locate3d_forward.3} parent=1 // pred_check_branch
      %3351 = sbr.rel (0) target = $region129
    $region128: #{locate3d_forward.3} parent=1 // pred_region
      _
    $region129: #{locate3d_forward.3} parent=1 // pred_fallthru
      _
    // Predicated region
    $region130: #{locate3d_forward.3} parent=1 // pred_check
      _
    $region131: #{locate3d_forward.3} parent=1 // pred_check_branch
      %3353 = sbr.rel (0) target = $region133
    $region132: #{locate3d_forward.3} parent=1 // pred_region
      %3354 = dma.done [#allocation5], 512
    $region133: #{locate3d_forward.3} parent=1 // pred_fallthru
      _
    %3355 = vsyncpa [#allocation3], 1
    %3356 = vsyncpa [#allocation5], 1

// kernel: locate3d_forward.2
$region0: #{locate3d_forward.2}
  #allocation0 [shape = 'u32[]', space=smem, size = 0x4, offset = 0x4, fixed_abs, tag = 'smem constant byte address 0x4 - core index']
  #allocation1 [shape = 'u32[144,128]{1,0:T(1,128)}', space=vmem, size = 0x12000, scoped, tag = 'internal scratch']
  %s0 = inlined_call_operand.vmem [shape: f32[512,35], index: 0, kind: input, shape index: {}]
  %s1 = inlined_call_operand.vmem [shape: bf16[35,128], index: 1, kind: input, shape index: {}]
  %s2 = inlined_call_operand.vmem [shape: f32[1,128], index: 2, kind: input, shape index: {}]
  %s3 = inlined_call_operand.vmem [shape: bf16[128,384], index: 3, kind: input, shape index: {}]
  %s4 = inlined_call_operand.vmem [shape: f32[1,384], index: 4, kind: input, shape index: {}]
  %s5 = inlined_call_operand.vmem [shape: bf16[128,128], index: 5, kind: input, shape index: {}]
  %s6 = inlined_call_operand.vmem [shape: f32[1,128], index: 6, kind: input, shape index: {}]
  %s7 = inlined_call_operand.vmem [shape: bf16[128,256], index: 7, kind: input, shape index: {}]
  %s8 = inlined_call_operand.vmem [shape: f32[1,256], index: 8, kind: input, shape index: {}]
  %s9 = inlined_call_operand.vmem [shape: bf16[256,128], index: 9, kind: input, shape index: {}]
  %s10 = inlined_call_operand.vmem [shape: f32[1,128], index: 10, kind: input, shape index: {}]
  %s11 = inlined_call_operand.vmem [shape: f32[512,128], index: 11, kind: output, shape index: {}]
  %s12 = sld [smem:[#allocation0]]
  $region54: #{locate3d_forward.2} parent=0
    _
  %s14 = ssub.s32 1, %s12
  %s15 = scalar_select 0, %s14, %s12
  // Predicated region
  $region2: #{locate3d_forward.2} parent=0 // pred_check
    _
  $region3: #{locate3d_forward.2} parent=0 // pred_check_branch
    %17 = sbr.rel (0) target = $region5
  $region4: #{locate3d_forward.2} parent=0 // pred_region
    _
  $region5: #{locate3d_forward.2} parent=0 // pred_fallthru
    _
  // Predicated region
  $region6: #{locate3d_forward.2} parent=0 // pred_check
    _
  $region7: #{locate3d_forward.2} parent=0 // pred_check_branch
    %19 = sbr.rel (0) target = $region9
  $region8: #{locate3d_forward.2} parent=0 // pred_region
    _
  $region9: #{locate3d_forward.2} parent=0 // pred_fallthru
    _
  // Predicated region
  $region10: #{locate3d_forward.2} parent=0 // pred_check
    _
  $region11: #{locate3d_forward.2} parent=0 // pred_check_branch
    %21 = sbr.rel (0) target = $region13
  $region12: #{locate3d_forward.2} parent=0 // pred_region
    _
  $region13: #{locate3d_forward.2} parent=0 // pred_fallthru
    _
  // Predicated region
  $region14: #{locate3d_forward.2} parent=0 // pred_check
    _
  $region15: #{locate3d_forward.2} parent=0 // pred_check_branch
    %23 = sbr.rel (0) target = $region17
  $region16: #{locate3d_forward.2} parent=0 // pred_region
    _
  $region17: #{locate3d_forward.2} parent=0 // pred_fallthru
    _
  // Predicated region
  $region18: #{locate3d_forward.2} parent=0 // pred_check
    _
  $region19: #{locate3d_forward.2} parent=0 // pred_check_branch
    %25 = sbr.rel (0) target = $region21
  $region20: #{locate3d_forward.2} parent=0 // pred_region
    _
  $region21: #{locate3d_forward.2} parent=0 // pred_fallthru
    _
  // Predicated region
  $region22: #{locate3d_forward.2} parent=0 // pred_check
    _
  $region23: #{locate3d_forward.2} parent=0 // pred_check_branch
    %27 = sbr.rel (0) target = $region25
  $region24: #{locate3d_forward.2} parent=0 // pred_region
    _
  $region25: #{locate3d_forward.2} parent=0 // pred_fallthru
    _
  // Predicated region
  $region26: #{locate3d_forward.2} parent=0 // pred_check
    _
  $region27: #{locate3d_forward.2} parent=0 // pred_check_branch
    %29 = sbr.rel (0) target = $region29
  $region28: #{locate3d_forward.2} parent=0 // pred_region
    _
  $region29: #{locate3d_forward.2} parent=0 // pred_fallthru
    _
  // Predicated region
  $region30: #{locate3d_forward.2} parent=0 // pred_check
    _
  $region31: #{locate3d_forward.2} parent=0 // pred_check_branch
    %31 = sbr.rel (0) target = $region33
  $region32: #{locate3d_forward.2} parent=0 // pred_region
    _
  $region33: #{locate3d_forward.2} parent=0 // pred_fallthru
    _
  // Predicated region
  $region34: #{locate3d_forward.2} parent=0 // pred_check
    _
  $region35: #{locate3d_forward.2} parent=0 // pred_check_branch
    %33 = sbr.rel (0) target = $region37
  $region36: #{locate3d_forward.2} parent=0 // pred_region
    _
  $region37: #{locate3d_forward.2} parent=0 // pred_fallthru
    _
  // Predicated region
  $region38: #{locate3d_forward.2} parent=0 // pred_check
    _
  $region39: #{locate3d_forward.2} parent=0 // pred_check_branch
    %35 = sbr.rel (0) target = $region41
  $region40: #{locate3d_forward.2} parent=0 // pred_region
    _
  $region41: #{locate3d_forward.2} parent=0 // pred_fallthru
    _
  // Predicated region
  $region42: #{locate3d_forward.2} parent=0 // pred_check
    _
  $region43: #{locate3d_forward.2} parent=0 // pred_check_branch
    %37 = sbr.rel (0) target = $region45
  $region44: #{locate3d_forward.2} parent=0 // pred_region
    _
  $region45: #{locate3d_forward.2} parent=0 // pred_fallthru
    _
  %v39 = vld [vmem:[%s0] sm:$0xff]
  %v40 = vld [vmem:[%s0 + $0x8] sm:$0xff]
  %v41 = vld [vmem:[%s0 + $0x10] sm:$0xff]
  %v42 = vld [vmem:[%s0 + $0x18] sm:$0xff]
  %v43 = vld [vmem:[%s0 + $0x20] sm:$0xff]
  %v44 = vld [vmem:[%s0 + $0x28] sm:$0xff]
  %v45 = vld [vmem:[%s0 + $0x30] sm:$0xff]
  %v46 = vld [vmem:[%s0 + $0x38] sm:$0xff]
  %v47 = vld [vmem:[%s0 + $0x40] sm:$0xff]
  %v48 = vld [vmem:[%s0 + $0x48] sm:$0xff]
  %v49 = vld [vmem:[%s0 + $0x50] sm:$0xff]
  %v50 = vld [vmem:[%s0 + $0x58] sm:$0xff]
  %v51 = vld [vmem:[%s0 + $0x60] sm:$0xff]
  %v52 = vld [vmem:[%s0 + $0x68] sm:$0xff]
  %v53 = vld [vmem:[%s0 + $0x70] sm:$0xff]
  %v54 = vld [vmem:[%s0 + $0x78] sm:$0xff]
  %v55 = vld [vmem:[%s0 + $0x80] sm:$0xff]
  %v56 = vld [vmem:[%s0 + $0x88] sm:$0xff]
  %v57 = vld [vmem:[%s0 + $0x90] sm:$0xff]
  %v58 = vld [vmem:[%s0 + $0x98] sm:$0xff]
  %v59 = vld [vmem:[%s0 + $0xa0] sm:$0xff]
  %v60 = vld [vmem:[%s0 + $0xa8] sm:$0xff]
  %v61 = vld [vmem:[%s0 + $0xb0] sm:$0xff]
  %v62 = vld [vmem:[%s0 + $0xb8] sm:$0xff]
  %v63 = vld [vmem:[%s0 + $0xc0] sm:$0xff]
  %v64 = vld [vmem:[%s0 + $0xc8] sm:$0xff]
  %v65 = vld [vmem:[%s0 + $0xd0] sm:$0xff]
  %v66 = vld [vmem:[%s0 + $0xd8] sm:$0xff]
  %v67 = vld [vmem:[%s0 + $0xe0] sm:$0xff]
  %v68 = vld [vmem:[%s0 + $0xe8] sm:$0xff]
  %v69 = vld [vmem:[%s0 + $0xf0] sm:$0xff]
  %v70 = vld [vmem:[%s0 + $0xf8] sm:$0xff]
  %v71 = vld [vmem:[%s0 + $0x100] sm:$0xff]
  %v72 = vld [vmem:[%s0 + $0x108] sm:$0xff]
  %v73 = vld [vmem:[%s0 + $0x110] sm:$0xff]
  %v74 = vld [vmem:[%s0 + $0x118] sm:$0xff]
  %v75 = vld [vmem:[%s0 + $0x120] sm:$0xff]
  %v76 = vld [vmem:[%s0 + $0x128] sm:$0xff]
  %v77 = vld [vmem:[%s0 + $0x130] sm:$0xff]
  %v78 = vld [vmem:[%s0 + $0x138] sm:$0xff]
  %v79 = vld [vmem:[%s0 + $0x140] sm:$0xff]
  %v80 = vld [vmem:[%s0 + $0x148] sm:$0xff]
  %v81 = vld [vmem:[%s0 + $0x150] sm:$0xff]
  %v82 = vld [vmem:[%s0 + $0x158] sm:$0xff]
  %v83 = vld [vmem:[%s0 + $0x160] sm:$0xff]
  %v84 = vld [vmem:[%s0 + $0x168] sm:$0xff]
  %v85 = vld [vmem:[%s0 + $0x170] sm:$0xff]
  %v86 = vld [vmem:[%s0 + $0x178] sm:$0xff]
  %v87 = vld [vmem:[%s0 + $0x180] sm:$0xff]
  %v88 = vld [vmem:[%s0 + $0x188] sm:$0xff]
  %v89 = vld [vmem:[%s0 + $0x190] sm:$0xff]
  %v90 = vld [vmem:[%s0 + $0x198] sm:$0xff]
  %v91 = vld [vmem:[%s0 + $0x1a0] sm:$0xff]
  %v92 = vld [vmem:[%s0 + $0x1a8] sm:$0xff]
  %v93 = vld [vmem:[%s0 + $0x1b0] sm:$0xff]
  %v94 = vld [vmem:[%s0 + $0x1b8] sm:$0xff]
  %v95 = vld [vmem:[%s0 + $0x1c0] sm:$0xff]
  %v96 = vld [vmem:[%s0 + $0x1c8] sm:$0xff]
  %v97 = vld [vmem:[%s0 + $0x1d0] sm:$0xff]
  %v98 = vld [vmem:[%s0 + $0x1d8] sm:$0xff]
  %v99 = vld [vmem:[%s0 + $0x1e0] sm:$0xff]
  %v100 = vld [vmem:[%s0 + $0x1e8] sm:$0xff]
  %v101 = vld [vmem:[%s0 + $0x1f0] sm:$0xff]
  %v102 = vld [vmem:[%s0 + $0x1f8] sm:$0xff]
  %v103 = vld [vmem:[%s1] sm:$0xf]
  %v104 = vld [vmem:[%s1 + $0x4] sm:$0xf]
  %v105 = vld [vmem:[%s1 + $0x8] sm:$0xf]
  %v106 = vld [vmem:[%s1 + $0xc] sm:$0xf]
  %v107 = vld [vmem:[%s1 + $0x10] sm:$0x3]
  %v108 = vpack.c.bf16 %v40, %v39
  %v109 = vpack.c.bf16 %v42, %v41
  %v110 = vpack.c.bf16 %v44, %v43
  %v111 = vpack.c.bf16 %v46, %v45
  %v112 = vpack.c.bf16 %v48, %v47
  %v113 = vpack.c.bf16 %v50, %v49
  %v114 = vpack.c.bf16 %v52, %v51
  %v115 = vpack.c.bf16 %v54, %v53
  %v116 = vpack.c.bf16 %v56, %v55
  %v117 = vpack.c.bf16 %v58, %v57
  %v118 = vpack.c.bf16 %v60, %v59
  %v119 = vpack.c.bf16 %v62, %v61
  %v120 = vpack.c.bf16 %v64, %v63
  %v121 = vpack.c.bf16 %v66, %v65
  %v122 = vpack.c.bf16 %v68, %v67
  %v123 = vpack.c.bf16 %v70, %v69
  %v124 = vpack.c.bf16 %v72, %v71
  %v125 = vpack.c.bf16 %v74, %v73
  %v126 = vpack.c.bf16 %v76, %v75
  %v127 = vpack.c.bf16 %v78, %v77
  %v128 = vpack.c.bf16 %v80, %v79
  %v129 = vpack.c.bf16 %v82, %v81
  %v130 = vpack.c.bf16 %v84, %v83
  %v131 = vpack.c.bf16 %v86, %v85
  %v132 = vpack.c.bf16 %v88, %v87
  %v133 = vpack.c.bf16 %v90, %v89
  %v134 = vpack.c.bf16 %v92, %v91
  %v135 = vpack.c.bf16 %v94, %v93
  %v136 = vpack.c.bf16 %v96, %v95
  %v137 = vpack.c.bf16 %v98, %v97
  %v138 = vpack.c.bf16 %v100, %v99
  %v139 = vpack.c.bf16 %v102, %v101
  %v140 = vld [vmem:[%s2] sm:$0x1]
  %v142 = vlaneseq
  %v143 = vshrl.u32 %v142, 7
  %v144 = vsub.s32 0, %v143
  %v145 = vrot.slane %v140, %v144
  %v152 = vunpack.c.l.b16 %v103
  %v153 = vunpack.c.l.b16 %v104
  %v154 = vunpack.c.l.b16 %v105
  %v155 = vunpack.c.l.b16 %v106
  %v156 = vunpack.c.l.b16 %v107
  %v157 = vpack.c.b16 %v153, %v152
  %v158 = vpack.c.b16 %v155, %v154
  %v159 = vpack.c.b16 %v156, %v156
  %vm162 = vcmask 285696
  %v164 = vsel %vm162, %v108, 0
  %v167 = vsel %vm162, %v109, 0
  %v170 = vsel %vm162, %v110, 0
  %v173 = vsel %vm162, %v111, 0
  %v176 = vsel %vm162, %v112, 0
  %v179 = vsel %vm162, %v113, 0
  %v182 = vsel %vm162, %v114, 0
  %v185 = vsel %vm162, %v115, 0
  %v188 = vsel %vm162, %v116, 0
  %v191 = vsel %vm162, %v117, 0
  %v194 = vsel %vm162, %v118, 0
  %v197 = vsel %vm162, %v119, 0
  %v200 = vsel %vm162, %v120, 0
  %v203 = vsel %vm162, %v121, 0
  %v206 = vsel %vm162, %v122, 0
  %v209 = vsel %vm162, %v123, 0
  %v212 = vsel %vm162, %v124, 0
  %v215 = vsel %vm162, %v125, 0
  %v218 = vsel %vm162, %v126, 0
  %v221 = vsel %vm162, %v127, 0
  %v224 = vsel %vm162, %v128, 0
  %v227 = vsel %vm162, %v129, 0
  %v230 = vsel %vm162, %v130, 0
  %v233 = vsel %vm162, %v131, 0
  %v236 = vsel %vm162, %v132, 0
  %v239 = vsel %vm162, %v133, 0
  %v242 = vsel %vm162, %v134, 0
  %v245 = vsel %vm162, %v135, 0
  %v248 = vsel %vm162, %v136, 0
  %v251 = vsel %vm162, %v137, 0
  %v254 = vsel %vm162, %v138, 0
  %v257 = vsel %vm162, %v139, 0
  %vm259 = vcmask 1040384
  %vm260 = vcmask 1041408
  %v261 = vsel %vm259, 4294967295, 65535
  %v262 = vsel %vm260, %v261, 0
  %v264 = vand.u32 %v159, %v262
  %266 = vmatprep.subr.bf16.mxu0 0
  %267 = vmatpush1.bf16.msra.mxu0 0
  %268 = vmatprep.subr.bf16.mxu0 0
  %269 = vmatpush1.bf16.msra.mxu0 0
  %270 = vmatprep.subr.bf16.mxu0 0
  %271 = vmatpush1.bf16.msra.mxu0 0
  %272 = vmatprep.subr.bf16.mxu0 0
  %273 = vmatpush1.bf16.msra.mxu0 0
  %274 = vmatprep.subr.bf16.mxu0 0
  %275 = vmatpush1.bf16.msra.mxu0 0
  %276 = vmatprep.subr.bf16.mxu0 0
  %277 = vmatpush1.bf16.msra.mxu0 %v264
  %278 = vmatprep.subr.bf16.mxu0 0
  %279 = vmatpush1.bf16.msra.mxu0 %v158
  %280 = vmatprep.subr.bf16.mxu0 0
  %281 = vmatpush1.bf16.msra.mxu0 %v157
  %282 = vmatprep.subr.bf16.mxu0 0
  %283 = vmatpush2.bf16.msra.mxu0 0
  %284 = vmatprep.subr.bf16.mxu0 0
  %285 = vmatpush2.bf16.msra.mxu0 0
  %286 = vmatprep.subr.bf16.mxu0 0
  %287 = vmatpush2.bf16.msra.mxu0 0
  %288 = vmatprep.subr.bf16.mxu0 0
  %289 = vmatpush2.bf16.msra.mxu0 0
  %290 = vmatprep.subr.bf16.mxu0 0
  %291 = vmatpush2.bf16.msra.mxu0 0
  %292 = vmatprep.subr.bf16.mxu0 0
  %293 = vmatpush2.bf16.msra.mxu0 0
  %294 = vmatprep.subr.bf16.mxu0 0
  %295 = vmatpush2.bf16.msra.mxu0 0
  %296 = vmatprep.subr.bf16.mxu0 0
  %297 = vmatpush2.bf16.msra.mxu0 0
  %298 = vmatprep.mubr.bf16.mxu0 0
  %299 = vmatmul.mubr.bf16.gmra.mxu0 %v164
  %v300 = vpop.f32.mrf.mxu0
  %v301 = vadd.f32 %v145, %v300
  %v302 = vpop.f32.mrf.mxu0
  %v303 = vpop.f32.mrf.mxu0
  %v304 = vadd.f32 %v145, %v303
  %v305 = vpop.f32.mrf.mxu0
  %306 = vmatprep.mubr.bf16.mxu0 0
  %307 = vmatmul.mubr.bf16.gmra.mxu0 %v167
  %v308 = vpop.f32.mrf.mxu0
  %v309 = vadd.f32 %v145, %v308
  %v310 = vpop.f32.mrf.mxu0
  %v311 = vpop.f32.mrf.mxu0
  %v312 = vadd.f32 %v145, %v311
  %v313 = vpop.f32.mrf.mxu0
  %314 = vmatprep.mubr.bf16.mxu0 0
  %315 = vmatmul.mubr.bf16.gmra.mxu0 %v170
  %v316 = vpop.f32.mrf.mxu0
  %v317 = vadd.f32 %v145, %v316
  %v318 = vpop.f32.mrf.mxu0
  %v319 = vpop.f32.mrf.mxu0
  %v320 = vadd.f32 %v145, %v319
  %v321 = vpop.f32.mrf.mxu0
  %322 = vmatprep.mubr.bf16.mxu0 0
  %323 = vmatmul.mubr.bf16.gmra.mxu0 %v173
  %v324 = vpop.f32.mrf.mxu0
  %v325 = vadd.f32 %v145, %v324
  %v326 = vpop.f32.mrf.mxu0
  %v327 = vpop.f32.mrf.mxu0
  %v328 = vadd.f32 %v145, %v327
  %v329 = vpop.f32.mrf.mxu0
  %330 = vmatprep.mubr.bf16.mxu0 0
  %331 = vmatmul.mubr.bf16.gmra.mxu0 %v176
  %v332 = vpop.f32.mrf.mxu0
  %v333 = vadd.f32 %v145, %v332
  %v334 = vpop.f32.mrf.mxu0
  %v335 = vpop.f32.mrf.mxu0
  %v336 = vadd.f32 %v145, %v335
  %v337 = vpop.f32.mrf.mxu0
  %338 = vmatprep.mubr.bf16.mxu0 0
  %339 = vmatmul.mubr.bf16.gmra.mxu0 %v179
  %v340 = vpop.f32.mrf.mxu0
  %v341 = vadd.f32 %v145, %v340
  %v342 = vpop.f32.mrf.mxu0
  %v343 = vpop.f32.mrf.mxu0
  %v344 = vadd.f32 %v145, %v343
  %v345 = vpop.f32.mrf.mxu0
  %346 = vmatprep.mubr.bf16.mxu0 0
  %347 = vmatmul.mubr.bf16.gmra.mxu0 %v182
  %v348 = vpop.f32.mrf.mxu0
  %v349 = vadd.f32 %v145, %v348
  %v350 = vpop.f32.mrf.mxu0
  %v351 = vpop.f32.mrf.mxu0
  %v352 = vadd.f32 %v145, %v351
  %v353 = vpop.f32.mrf.mxu0
  %354 = vmatprep.mubr.bf16.mxu0 0
  %355 = vmatmul.mubr.bf16.gmra.mxu0 %v185
  %v356 = vpop.f32.mrf.mxu0
  %v357 = vadd.f32 %v145, %v356
  %v358 = vpop.f32.mrf.mxu0
  %v359 = vpop.f32.mrf.mxu0
  %v360 = vadd.f32 %v145, %v359
  %v361 = vpop.f32.mrf.mxu0
  %362 = vmatprep.mubr.bf16.mxu0 0
  %363 = vmatmul.mubr.bf16.gmra.mxu0 %v188
  %v364 = vpop.f32.mrf.mxu0
  %v365 = vadd.f32 %v145, %v364
  %v366 = vpop.f32.mrf.mxu0
  %v367 = vpop.f32.mrf.mxu0
  %v368 = vadd.f32 %v145, %v367
  %v369 = vpop.f32.mrf.mxu0
  %370 = vmatprep.mubr.bf16.mxu0 0
  %371 = vmatmul.mubr.bf16.gmra.mxu0 %v191
  %v372 = vpop.f32.mrf.mxu0
  %v373 = vadd.f32 %v145, %v372
  %v374 = vpop.f32.mrf.mxu0
  %v375 = vpop.f32.mrf.mxu0
  %v376 = vadd.f32 %v145, %v375
  %v377 = vpop.f32.mrf.mxu0
  %378 = vmatprep.mubr.bf16.mxu0 0
  %379 = vmatmul.mubr.bf16.gmra.mxu0 %v194
  %v380 = vpop.f32.mrf.mxu0
  %v381 = vadd.f32 %v145, %v380
  %v382 = vpop.f32.mrf.mxu0
  %v383 = vpop.f32.mrf.mxu0
  %v384 = vadd.f32 %v145, %v383
  %v385 = vpop.f32.mrf.mxu0
  %386 = vmatprep.mubr.bf16.mxu0 0
  %387 = vmatmul.mubr.bf16.gmra.mxu0 %v197
  %v388 = vpop.f32.mrf.mxu0
  %v389 = vadd.f32 %v145, %v388
  %v390 = vpop.f32.mrf.mxu0
  %v391 = vpop.f32.mrf.mxu0
  %v392 = vadd.f32 %v145, %v391
  %v393 = vpop.f32.mrf.mxu0
  %394 = vmatprep.mubr.bf16.mxu0 0
  %395 = vmatmul.mubr.bf16.gmra.mxu0 %v200
  %v396 = vpop.f32.mrf.mxu0
  %v397 = vadd.f32 %v145, %v396
  %v398 = vpop.f32.mrf.mxu0
  %v399 = vpop.f32.mrf.mxu0
  %v400 = vadd.f32 %v145, %v399
  %v401 = vpop.f32.mrf.mxu0
  %402 = vmatprep.mubr.bf16.mxu0 0
  %403 = vmatmul.mubr.bf16.gmra.mxu0 %v203
  %v404 = vpop.f32.mrf.mxu0
  %v405 = vadd.f32 %v145, %v404
  %v406 = vpop.f32.mrf.mxu0
  %v407 = vpop.f32.mrf.mxu0
  %v408 = vadd.f32 %v145, %v407
  %v409 = vpop.f32.mrf.mxu0
  %410 = vmatprep.mubr.bf16.mxu0 0
  %411 = vmatmul.mubr.bf16.gmra.mxu0 %v206
  %v412 = vpop.f32.mrf.mxu0
  %v413 = vadd.f32 %v145, %v412
  %v414 = vpop.f32.mrf.mxu0
  %v415 = vpop.f32.mrf.mxu0
  %v416 = vadd.f32 %v145, %v415
  %v417 = vpop.f32.mrf.mxu0
  %418 = vmatprep.mubr.bf16.mxu0 0
  %419 = vmatmul.mubr.bf16.gmra.mxu0 %v209
  %v420 = vpop.f32.mrf.mxu0
  %v421 = vadd.f32 %v145, %v420
  %v422 = vpop.f32.mrf.mxu0
  %v423 = vpop.f32.mrf.mxu0
  %v424 = vadd.f32 %v145, %v423
  %v425 = vpop.f32.mrf.mxu0
  %426 = vmatprep.mubr.bf16.mxu0 0
  %427 = vmatmul.mubr.bf16.gmra.mxu0 %v212
  %v428 = vpop.f32.mrf.mxu0
  %v429 = vadd.f32 %v145, %v428
  %v430 = vpop.f32.mrf.mxu0
  %v431 = vpop.f32.mrf.mxu0
  %v432 = vadd.f32 %v145, %v431
  %v433 = vpop.f32.mrf.mxu0
  %434 = vmatprep.mubr.bf16.mxu0 0
  %435 = vmatmul.mubr.bf16.gmra.mxu0 %v215
  %v436 = vpop.f32.mrf.mxu0
  %v437 = vadd.f32 %v145, %v436
  %v438 = vpop.f32.mrf.mxu0
  %v439 = vpop.f32.mrf.mxu0
  %v440 = vadd.f32 %v145, %v439
  %v441 = vpop.f32.mrf.mxu0
  %442 = vmatprep.mubr.bf16.mxu0 0
  %443 = vmatmul.mubr.bf16.gmra.mxu0 %v218
  %v444 = vpop.f32.mrf.mxu0
  %v445 = vadd.f32 %v145, %v444
  %v446 = vpop.f32.mrf.mxu0
  %v447 = vpop.f32.mrf.mxu0
  %v448 = vadd.f32 %v145, %v447
  %v449 = vpop.f32.mrf.mxu0
  %450 = vmatprep.mubr.bf16.mxu0 0
  %451 = vmatmul.mubr.bf16.gmra.mxu0 %v221
  %v452 = vpop.f32.mrf.mxu0
  %v453 = vadd.f32 %v145, %v452
  %v454 = vpop.f32.mrf.mxu0
  %v455 = vpop.f32.mrf.mxu0
  %v456 = vadd.f32 %v145, %v455
  %v457 = vpop.f32.mrf.mxu0
  %458 = vmatprep.mubr.bf16.mxu0 0
  %459 = vmatmul.mubr.bf16.gmra.mxu0 %v224
  %v460 = vpop.f32.mrf.mxu0
  %v461 = vadd.f32 %v145, %v460
  %v462 = vpop.f32.mrf.mxu0
  %v463 = vpop.f32.mrf.mxu0
  %v464 = vadd.f32 %v145, %v463
  %v465 = vpop.f32.mrf.mxu0
  %466 = vmatprep.mubr.bf16.mxu0 0
  %467 = vmatmul.mubr.bf16.gmra.mxu0 %v227
  %v468 = vpop.f32.mrf.mxu0
  %v469 = vadd.f32 %v145, %v468
  %v470 = vpop.f32.mrf.mxu0
  %v471 = vpop.f32.mrf.mxu0
  %v472 = vadd.f32 %v145, %v471
  %v473 = vpop.f32.mrf.mxu0
  %474 = vmatprep.mubr.bf16.mxu0 0
  %475 = vmatmul.mubr.bf16.gmra.mxu0 %v230
  %v476 = vpop.f32.mrf.mxu0
  %v477 = vadd.f32 %v145, %v476
  %v478 = vpop.f32.mrf.mxu0
  %v479 = vpop.f32.mrf.mxu0
  %v480 = vadd.f32 %v145, %v479
  %v481 = vpop.f32.mrf.mxu0
  %482 = vmatprep.mubr.bf16.mxu0 0
  %483 = vmatmul.mubr.bf16.gmra.mxu0 %v233
  %v484 = vpop.f32.mrf.mxu0
  %v485 = vadd.f32 %v145, %v484
  %v486 = vpop.f32.mrf.mxu0
  %v487 = vpop.f32.mrf.mxu0
  %v488 = vadd.f32 %v145, %v487
  %v489 = vpop.f32.mrf.mxu0
  %490 = vmatprep.mubr.bf16.mxu0 0
  %491 = vmatmul.mubr.bf16.gmra.mxu0 %v236
  %v492 = vpop.f32.mrf.mxu0
  %v493 = vadd.f32 %v145, %v492
  %v494 = vpop.f32.mrf.mxu0
  %v495 = vpop.f32.mrf.mxu0
  %v496 = vadd.f32 %v145, %v495
  %v497 = vpop.f32.mrf.mxu0
  %498 = vmatprep.mubr.bf16.mxu0 0
  %499 = vmatmul.mubr.bf16.gmra.mxu0 %v239
  %v500 = vpop.f32.mrf.mxu0
  %v501 = vadd.f32 %v145, %v500
  %v502 = vpop.f32.mrf.mxu0
  %v503 = vpop.f32.mrf.mxu0
  %v504 = vadd.f32 %v145, %v503
  %v505 = vpop.f32.mrf.mxu0
  %506 = vmatprep.mubr.bf16.mxu0 0
  %507 = vmatmul.mubr.bf16.gmra.mxu0 %v242
  %v508 = vpop.f32.mrf.mxu0
  %v509 = vadd.f32 %v145, %v508
  %v510 = vpop.f32.mrf.mxu0
  %v511 = vpop.f32.mrf.mxu0
  %v512 = vadd.f32 %v145, %v511
  %v513 = vpop.f32.mrf.mxu0
  %514 = vmatprep.mubr.bf16.mxu0 0
  %515 = vmatmul.mubr.bf16.gmra.mxu0 %v245
  %v516 = vpop.f32.mrf.mxu0
  %v517 = vadd.f32 %v145, %v516
  %v518 = vpop.f32.mrf.mxu0
  %v519 = vpop.f32.mrf.mxu0
  %v520 = vadd.f32 %v145, %v519
  %v521 = vpop.f32.mrf.mxu0
  %522 = vmatprep.mubr.bf16.mxu0 0
  %523 = vmatmul.mubr.bf16.gmra.mxu0 %v248
  %v524 = vpop.f32.mrf.mxu0
  %v525 = vadd.f32 %v145, %v524
  %v526 = vpop.f32.mrf.mxu0
  %v527 = vpop.f32.mrf.mxu0
  %v528 = vadd.f32 %v145, %v527
  %v529 = vpop.f32.mrf.mxu0
  %530 = vmatprep.mubr.bf16.mxu0 0
  %531 = vmatmul.mubr.bf16.gmra.mxu0 %v251
  %v532 = vpop.f32.mrf.mxu0
  %v533 = vadd.f32 %v145, %v532
  %v534 = vpop.f32.mrf.mxu0
  %v535 = vpop.f32.mrf.mxu0
  %v536 = vadd.f32 %v145, %v535
  %v537 = vpop.f32.mrf.mxu0
  %538 = vmatprep.mubr.bf16.mxu0 0
  %539 = vmatmul.mubr.bf16.gmra.mxu0 %v254
  %v540 = vpop.f32.mrf.mxu0
  %v541 = vadd.f32 %v145, %v540
  %v542 = vpop.f32.mrf.mxu0
  %v543 = vpop.f32.mrf.mxu0
  %v544 = vadd.f32 %v145, %v543
  %v545 = vpop.f32.mrf.mxu0
  %546 = vmatprep.mubr.bf16.mxu0 0
  %547 = vmatmul.mubr.bf16.gmra.mxu0 %v257
  %v548 = vpop.f32.mrf.mxu0
  %v549 = vadd.f32 %v145, %v548
  %v550 = vpop.f32.mrf.mxu0
  %v551 = vpop.f32.mrf.mxu0
  %v552 = vadd.f32 %v145, %v551
  %v553 = vpop.f32.mrf.mxu0
  %554 = vdwg.mxu0
  %555 = vadd.xlane.f32.xlu0 %v301
  %v556 = vpop.xlane.xlu0 %555
  %557 = vadd.xlane.f32.xlu0 %v304
  %v558 = vpop.xlane.xlu0 %557
  %559 = vadd.xlane.f32.xlu0 %v309
  %v560 = vpop.xlane.xlu0 %559
  %561 = vadd.xlane.f32.xlu0 %v312
  %v562 = vpop.xlane.xlu0 %561
  %563 = vadd.xlane.f32.xlu0 %v317
  %v564 = vpop.xlane.xlu0 %563
  %565 = vadd.xlane.f32.xlu0 %v320
  %v566 = vpop.xlane.xlu0 %565
  %567 = vadd.xlane.f32.xlu0 %v325
  %v568 = vpop.xlane.xlu0 %567
  %569 = vadd.xlane.f32.xlu0 %v328
  %v570 = vpop.xlane.xlu0 %569
  %571 = vadd.xlane.f32.xlu0 %v333
  %v572 = vpop.xlane.xlu0 %571
  %573 = vadd.xlane.f32.xlu0 %v336
  %v574 = vpop.xlane.xlu0 %573
  %575 = vadd.xlane.f32.xlu0 %v341
  %v576 = vpop.xlane.xlu0 %575
  %577 = vadd.xlane.f32.xlu0 %v344
  %v578 = vpop.xlane.xlu0 %577
  %579 = vadd.xlane.f32.xlu0 %v349
  %v580 = vpop.xlane.xlu0 %579
  %581 = vadd.xlane.f32.xlu0 %v352
  %v582 = vpop.xlane.xlu0 %581
  %583 = vadd.xlane.f32.xlu0 %v357
  %v584 = vpop.xlane.xlu0 %583
  %585 = vadd.xlane.f32.xlu0 %v360
  %v586 = vpop.xlane.xlu0 %585
  %587 = vadd.xlane.f32.xlu0 %v365
  %v588 = vpop.xlane.xlu0 %587
  %589 = vadd.xlane.f32.xlu0 %v368
  %v590 = vpop.xlane.xlu0 %589
  %591 = vadd.xlane.f32.xlu0 %v373
  %v592 = vpop.xlane.xlu0 %591
  %593 = vadd.xlane.f32.xlu0 %v376
  %v594 = vpop.xlane.xlu0 %593
  %595 = vadd.xlane.f32.xlu0 %v381
  %v596 = vpop.xlane.xlu0 %595
  %597 = vadd.xlane.f32.xlu0 %v384
  %v598 = vpop.xlane.xlu0 %597
  %599 = vadd.xlane.f32.xlu0 %v389
  %v600 = vpop.xlane.xlu0 %599
  %601 = vadd.xlane.f32.xlu0 %v392
  %v602 = vpop.xlane.xlu0 %601
  %603 = vadd.xlane.f32.xlu0 %v397
  %v604 = vpop.xlane.xlu0 %603
  %605 = vadd.xlane.f32.xlu0 %v400
  %v606 = vpop.xlane.xlu0 %605
  %607 = vadd.xlane.f32.xlu0 %v405
  %v608 = vpop.xlane.xlu0 %607
  %609 = vadd.xlane.f32.xlu0 %v408
  %v610 = vpop.xlane.xlu0 %609
  %611 = vadd.xlane.f32.xlu0 %v413
  %v612 = vpop.xlane.xlu0 %611
  %613 = vadd.xlane.f32.xlu0 %v416
  %v614 = vpop.xlane.xlu0 %613
  %615 = vadd.xlane.f32.xlu0 %v421
  %v616 = vpop.xlane.xlu0 %615
  %617 = vadd.xlane.f32.xlu0 %v424
  %v618 = vpop.xlane.xlu0 %617
  %619 = vadd.xlane.f32.xlu0 %v429
  %v620 = vpop.xlane.xlu0 %619
  %621 = vadd.xlane.f32.xlu0 %v432
  %v622 = vpop.xlane.xlu0 %621
  %623 = vadd.xlane.f32.xlu0 %v437
  %v624 = vpop.xlane.xlu0 %623
  %625 = vadd.xlane.f32.xlu0 %v440
  %v626 = vpop.xlane.xlu0 %625
  %627 = vadd.xlane.f32.xlu0 %v445
  %v628 = vpop.xlane.xlu0 %627
  %629 = vadd.xlane.f32.xlu0 %v448
  %v630 = vpop.xlane.xlu0 %629
  %631 = vadd.xlane.f32.xlu0 %v453
  %v632 = vpop.xlane.xlu0 %631
  %633 = vadd.xlane.f32.xlu0 %v456
  %v634 = vpop.xlane.xlu0 %633
  %635 = vadd.xlane.f32.xlu0 %v461
  %v636 = vpop.xlane.xlu0 %635
  %637 = vadd.xlane.f32.xlu0 %v464
  %v638 = vpop.xlane.xlu0 %637
  %639 = vadd.xlane.f32.xlu0 %v469
  %v640 = vpop.xlane.xlu0 %639
  %641 = vadd.xlane.f32.xlu0 %v472
  %v642 = vpop.xlane.xlu0 %641
  %643 = vadd.xlane.f32.xlu0 %v477
  %v644 = vpop.xlane.xlu0 %643
  %645 = vadd.xlane.f32.xlu0 %v480
  %v646 = vpop.xlane.xlu0 %645
  %647 = vadd.xlane.f32.xlu0 %v485
  %v648 = vpop.xlane.xlu0 %647
  %649 = vadd.xlane.f32.xlu0 %v488
  %v650 = vpop.xlane.xlu0 %649
  %651 = vadd.xlane.f32.xlu0 %v493
  %v652 = vpop.xlane.xlu0 %651
  %653 = vadd.xlane.f32.xlu0 %v496
  %v654 = vpop.xlane.xlu0 %653
  %655 = vadd.xlane.f32.xlu0 %v501
  %v656 = vpop.xlane.xlu0 %655
  %657 = vadd.xlane.f32.xlu0 %v504
  %v658 = vpop.xlane.xlu0 %657
  %659 = vadd.xlane.f32.xlu0 %v509
  %v660 = vpop.xlane.xlu0 %659
  %661 = vadd.xlane.f32.xlu0 %v512
  %v662 = vpop.xlane.xlu0 %661
  %663 = vadd.xlane.f32.xlu0 %v517
  %v664 = vpop.xlane.xlu0 %663
  %665 = vadd.xlane.f32.xlu0 %v520
  %v666 = vpop.xlane.xlu0 %665
  %667 = vadd.xlane.f32.xlu0 %v525
  %v668 = vpop.xlane.xlu0 %667
  %669 = vadd.xlane.f32.xlu0 %v528
  %v670 = vpop.xlane.xlu0 %669
  %671 = vadd.xlane.f32.xlu0 %v533
  %v672 = vpop.xlane.xlu0 %671
  %673 = vadd.xlane.f32.xlu0 %v536
  %v674 = vpop.xlane.xlu0 %673
  %675 = vadd.xlane.f32.xlu0 %v541
  %v676 = vpop.xlane.xlu0 %675
  %677 = vadd.xlane.f32.xlu0 %v544
  %v678 = vpop.xlane.xlu0 %677
  %679 = vadd.xlane.f32.xlu0 %v549
  %v680 = vpop.xlane.xlu0 %679
  %681 = vadd.xlane.f32.xlu0 %v552
  %v682 = vpop.xlane.xlu0 %681
  %v683 = vrcp.pop 128.0
  %v684 = vmul.f32 %v556, %v683
  %v685 = vmul.f32 %v558, %v683
  %v686 = vmul.f32 %v560, %v683
  %v687 = vmul.f32 %v562, %v683
  %v688 = vmul.f32 %v564, %v683
  %v689 = vmul.f32 %v566, %v683
  %v690 = vmul.f32 %v568, %v683
  %v691 = vmul.f32 %v570, %v683
  %v692 = vmul.f32 %v572, %v683
  %v693 = vmul.f32 %v574, %v683
  %v694 = vmul.f32 %v576, %v683
  %v695 = vmul.f32 %v578, %v683
  %v696 = vmul.f32 %v580, %v683
  %v697 = vmul.f32 %v582, %v683
  %v698 = vmul.f32 %v584, %v683
  %v699 = vmul.f32 %v586, %v683
  %v700 = vmul.f32 %v588, %v683
  %v701 = vmul.f32 %v590, %v683
  %v702 = vmul.f32 %v592, %v683
  %v703 = vmul.f32 %v594, %v683
  %v704 = vmul.f32 %v596, %v683
  %v705 = vmul.f32 %v598, %v683
  %v706 = vmul.f32 %v600, %v683
  %v707 = vmul.f32 %v602, %v683
  %v708 = vmul.f32 %v604, %v683
  %v709 = vmul.f32 %v606, %v683
  %v710 = vmul.f32 %v608, %v683
  %v711 = vmul.f32 %v610, %v683
  %v712 = vmul.f32 %v612, %v683
  %v713 = vmul.f32 %v614, %v683
  %v714 = vmul.f32 %v616, %v683
  %v715 = vmul.f32 %v618, %v683
  %v716 = vmul.f32 %v620, %v683
  %v717 = vmul.f32 %v622, %v683
  %v718 = vmul.f32 %v624, %v683
  %v719 = vmul.f32 %v626, %v683
  %v720 = vmul.f32 %v628, %v683
  %v721 = vmul.f32 %v630, %v683
  %v722 = vmul.f32 %v632, %v683
  %v723 = vmul.f32 %v634, %v683
  %v724 = vmul.f32 %v636, %v683
  %v725 = vmul.f32 %v638, %v683
  %v726 = vmul.f32 %v640, %v683
  %v727 = vmul.f32 %v642, %v683
  %v728 = vmul.f32 %v644, %v683
  %v729 = vmul.f32 %v646, %v683
  %v730 = vmul.f32 %v648, %v683
  %v731 = vmul.f32 %v650, %v683
  %v732 = vmul.f32 %v652, %v683
  %v733 = vmul.f32 %v654, %v683
  %v734 = vmul.f32 %v656, %v683
  %v735 = vmul.f32 %v658, %v683
  %v736 = vmul.f32 %v660, %v683
  %v737 = vmul.f32 %v662, %v683
  %v738 = vmul.f32 %v664, %v683
  %v739 = vmul.f32 %v666, %v683
  %v740 = vmul.f32 %v668, %v683
  %v741 = vmul.f32 %v670, %v683
  %v742 = vmul.f32 %v672, %v683
  %v743 = vmul.f32 %v674, %v683
  %v744 = vmul.f32 %v676, %v683
  %v745 = vmul.f32 %v678, %v683
  %v746 = vmul.f32 %v680, %v683
  %v747 = vmul.f32 %v682, %v683
  %v748 = vsub.f32 %v301, %v684
  %v749 = vsub.f32 %v304, %v685
  %v750 = vsub.f32 %v309, %v686
  %v751 = vsub.f32 %v312, %v687
  %v752 = vsub.f32 %v317, %v688
  %v753 = vsub.f32 %v320, %v689
  %v754 = vsub.f32 %v325, %v690
  %v755 = vsub.f32 %v328, %v691
  %v756 = vsub.f32 %v333, %v692
  %v757 = vsub.f32 %v336, %v693
  %v758 = vsub.f32 %v341, %v694
  %v759 = vsub.f32 %v344, %v695
  %v760 = vsub.f32 %v349, %v696
  %v761 = vsub.f32 %v352, %v697
  %v762 = vsub.f32 %v357, %v698
  %v763 = vsub.f32 %v360, %v699
  %v764 = vsub.f32 %v365, %v700
  %v765 = vsub.f32 %v368, %v701
  %v766 = vsub.f32 %v373, %v702
  %v767 = vsub.f32 %v376, %v703
  %v768 = vsub.f32 %v381, %v704
  %v769 = vsub.f32 %v384, %v705
  %v770 = vsub.f32 %v389, %v706
  %v771 = vsub.f32 %v392, %v707
  %v772 = vsub.f32 %v397, %v708
  %v773 = vsub.f32 %v400, %v709
  %v774 = vsub.f32 %v405, %v710
  %v775 = vsub.f32 %v408, %v711
  %v776 = vsub.f32 %v413, %v712
  %v777 = vsub.f32 %v416, %v713
  %v778 = vsub.f32 %v421, %v714
  %v779 = vsub.f32 %v424, %v715
  %v780 = vsub.f32 %v429, %v716
  %v781 = vsub.f32 %v432, %v717
  %v782 = vsub.f32 %v437, %v718
  %v783 = vsub.f32 %v440, %v719
  %v784 = vsub.f32 %v445, %v720
  %v785 = vsub.f32 %v448, %v721
  %v786 = vsub.f32 %v453, %v722
  %v787 = vsub.f32 %v456, %v723
  %v788 = vsub.f32 %v461, %v724
  %v789 = vsub.f32 %v464, %v725
  %v790 = vsub.f32 %v469, %v726
  %v791 = vsub.f32 %v472, %v727
  %v792 = vsub.f32 %v477, %v728
  %v793 = vsub.f32 %v480, %v729
  %v794 = vsub.f32 %v485, %v730
  %v795 = vsub.f32 %v488, %v731
  %v796 = vsub.f32 %v493, %v732
  %v797 = vsub.f32 %v496, %v733
  %v798 = vsub.f32 %v501, %v734
  %v799 = vsub.f32 %v504, %v735
  %v800 = vsub.f32 %v509, %v736
  %v801 = vsub.f32 %v512, %v737
  %v802 = vsub.f32 %v517, %v738
  %v803 = vsub.f32 %v520, %v739
  %v804 = vsub.f32 %v525, %v740
  %v805 = vsub.f32 %v528, %v741
  %v806 = vsub.f32 %v533, %v742
  %v807 = vsub.f32 %v536, %v743
  %v808 = vsub.f32 %v541, %v744
  %v809 = vsub.f32 %v544, %v745
  %v810 = vsub.f32 %v549, %v746
  %v811 = vsub.f32 %v552, %v747
  %v812 = vmul.f32 %v748, %v748
  %v813 = vmul.f32 %v749, %v749
  %v814 = vmul.f32 %v750, %v750
  %v815 = vmul.f32 %v751, %v751
  %v816 = vmul.f32 %v752, %v752
  %v817 = vmul.f32 %v753, %v753
  %v818 = vmul.f32 %v754, %v754
  %v819 = vmul.f32 %v755, %v755
  %v820 = vmul.f32 %v756, %v756
  %v821 = vmul.f32 %v757, %v757
  %v822 = vmul.f32 %v758, %v758
  %v823 = vmul.f32 %v759, %v759
  %v824 = vmul.f32 %v760, %v760
  %v825 = vmul.f32 %v761, %v761
  %v826 = vmul.f32 %v762, %v762
  %v827 = vmul.f32 %v763, %v763
  %v828 = vmul.f32 %v764, %v764
  %v829 = vmul.f32 %v765, %v765
  %v830 = vmul.f32 %v766, %v766
  %v831 = vmul.f32 %v767, %v767
  %v832 = vmul.f32 %v768, %v768
  %v833 = vmul.f32 %v769, %v769
  %v834 = vmul.f32 %v770, %v770
  %v835 = vmul.f32 %v771, %v771
  %v836 = vmul.f32 %v772, %v772
  %v837 = vmul.f32 %v773, %v773
  %v838 = vmul.f32 %v774, %v774
  %v839 = vmul.f32 %v775, %v775
  %v840 = vmul.f32 %v776, %v776
  %v841 = vmul.f32 %v777, %v777
  %v842 = vmul.f32 %v778, %v778
  %v843 = vmul.f32 %v779, %v779
  %v844 = vmul.f32 %v780, %v780
  %v845 = vmul.f32 %v781, %v781
  %v846 = vmul.f32 %v782, %v782
  %v847 = vmul.f32 %v783, %v783
  %v848 = vmul.f32 %v784, %v784
  %v849 = vmul.f32 %v785, %v785
  %v850 = vmul.f32 %v786, %v786
  %v851 = vmul.f32 %v787, %v787
  %v852 = vmul.f32 %v788, %v788
  %v853 = vmul.f32 %v789, %v789
  %v854 = vmul.f32 %v790, %v790
  %v855 = vmul.f32 %v791, %v791
  %v856 = vmul.f32 %v792, %v792
  %v857 = vmul.f32 %v793, %v793
  %v858 = vmul.f32 %v794, %v794
  %v859 = vmul.f32 %v795, %v795
  %v860 = vmul.f32 %v796, %v796
  %v861 = vmul.f32 %v797, %v797
  %v862 = vmul.f32 %v798, %v798
  %v863 = vmul.f32 %v799, %v799
  %v864 = vmul.f32 %v800, %v800
  %v865 = vmul.f32 %v801, %v801
  %v866 = vmul.f32 %v802, %v802
  %v867 = vmul.f32 %v803, %v803
  %v868 = vmul.f32 %v804, %v804
  %v869 = vmul.f32 %v805, %v805
  %v870 = vmul.f32 %v806, %v806
  %v871 = vmul.f32 %v807, %v807
  %v872 = vmul.f32 %v808, %v808
  %v873 = vmul.f32 %v809, %v809
  %v874 = vmul.f32 %v810, %v810
  %v875 = vmul.f32 %v811, %v811
  %876 = vadd.xlane.f32.xlu0 %v812
  %v877 = vpop.xlane.xlu0 %876
  %878 = vadd.xlane.f32.xlu0 %v813
  %v879 = vpop.xlane.xlu0 %878
  %880 = vadd.xlane.f32.xlu0 %v814
  %v881 = vpop.xlane.xlu0 %880
  %882 = vadd.xlane.f32.xlu0 %v815
  %v883 = vpop.xlane.xlu0 %882
  %884 = vadd.xlane.f32.xlu0 %v816
  %v885 = vpop.xlane.xlu0 %884
  %886 = vadd.xlane.f32.xlu0 %v817
  %v887 = vpop.xlane.xlu0 %886
  %888 = vadd.xlane.f32.xlu0 %v818
  %v889 = vpop.xlane.xlu0 %888
  %890 = vadd.xlane.f32.xlu0 %v819
  %v891 = vpop.xlane.xlu0 %890
  %892 = vadd.xlane.f32.xlu0 %v820
  %v893 = vpop.xlane.xlu0 %892
  %894 = vadd.xlane.f32.xlu0 %v821
  %v895 = vpop.xlane.xlu0 %894
  %896 = vadd.xlane.f32.xlu0 %v822
  %v897 = vpop.xlane.xlu0 %896
  %898 = vadd.xlane.f32.xlu0 %v823
  %v899 = vpop.xlane.xlu0 %898
  %900 = vadd.xlane.f32.xlu0 %v824
  %v901 = vpop.xlane.xlu0 %900
  %902 = vadd.xlane.f32.xlu0 %v825
  %v903 = vpop.xlane.xlu0 %902
  %904 = vadd.xlane.f32.xlu0 %v826
  %v905 = vpop.xlane.xlu0 %904
  %906 = vadd.xlane.f32.xlu0 %v827
  %v907 = vpop.xlane.xlu0 %906
  %908 = vadd.xlane.f32.xlu0 %v828
  %v909 = vpop.xlane.xlu0 %908
  %910 = vadd.xlane.f32.xlu0 %v829
  %v911 = vpop.xlane.xlu0 %910
  %912 = vadd.xlane.f32.xlu0 %v830
  %v913 = vpop.xlane.xlu0 %912
  %914 = vadd.xlane.f32.xlu0 %v831
  %v915 = vpop.xlane.xlu0 %914
  %916 = vadd.xlane.f32.xlu0 %v832
  %v917 = vpop.xlane.xlu0 %916
  %918 = vadd.xlane.f32.xlu0 %v833
  %v919 = vpop.xlane.xlu0 %918
  %920 = vadd.xlane.f32.xlu0 %v834
  %v921 = vpop.xlane.xlu0 %920
  %922 = vadd.xlane.f32.xlu0 %v835
  %v923 = vpop.xlane.xlu0 %922
  %924 = vadd.xlane.f32.xlu0 %v836
  %v925 = vpop.xlane.xlu0 %924
  %926 = vadd.xlane.f32.xlu0 %v837
  %v927 = vpop.xlane.xlu0 %926
  %928 = vadd.xlane.f32.xlu0 %v838
  %v929 = vpop.xlane.xlu0 %928
  %930 = vadd.xlane.f32.xlu0 %v839
  %v931 = vpop.xlane.xlu0 %930
  %932 = vadd.xlane.f32.xlu0 %v840
  %v933 = vpop.xlane.xlu0 %932
  %934 = vadd.xlane.f32.xlu0 %v841
  %v935 = vpop.xlane.xlu0 %934
  %936 = vadd.xlane.f32.xlu0 %v842
  %v937 = vpop.xlane.xlu0 %936
  %938 = vadd.xlane.f32.xlu0 %v843
  %v939 = vpop.xlane.xlu0 %938
  %940 = vadd.xlane.f32.xlu0 %v844
  %v941 = vpop.xlane.xlu0 %940
  %942 = vadd.xlane.f32.xlu0 %v845
  %v943 = vpop.xlane.xlu0 %942
  %944 = vadd.xlane.f32.xlu0 %v846
  %v945 = vpop.xlane.xlu0 %944
  %946 = vadd.xlane.f32.xlu0 %v847
  %v947 = vpop.xlane.xlu0 %946
  %948 = vadd.xlane.f32.xlu0 %v848
  %v949 = vpop.xlane.xlu0 %948
  %950 = vadd.xlane.f32.xlu0 %v849
  %v951 = vpop.xlane.xlu0 %950
  %952 = vadd.xlane.f32.xlu0 %v850
  %v953 = vpop.xlane.xlu0 %952
  %954 = vadd.xlane.f32.xlu0 %v851
  %v955 = vpop.xlane.xlu0 %954
  %956 = vadd.xlane.f32.xlu0 %v852
  %v957 = vpop.xlane.xlu0 %956
  %958 = vadd.xlane.f32.xlu0 %v853
  %v959 = vpop.xlane.xlu0 %958
  %960 = vadd.xlane.f32.xlu0 %v854
  %v961 = vpop.xlane.xlu0 %960
  %962 = vadd.xlane.f32.xlu0 %v855
  %v963 = vpop.xlane.xlu0 %962
  %964 = vadd.xlane.f32.xlu0 %v856
  %v965 = vpop.xlane.xlu0 %964
  %966 = vadd.xlane.f32.xlu0 %v857
  %v967 = vpop.xlane.xlu0 %966
  %968 = vadd.xlane.f32.xlu0 %v858
  %v969 = vpop.xlane.xlu0 %968
  %970 = vadd.xlane.f32.xlu0 %v859
  %v971 = vpop.xlane.xlu0 %970
  %972 = vadd.xlane.f32.xlu0 %v860
  %v973 = vpop.xlane.xlu0 %972
  %974 = vadd.xlane.f32.xlu0 %v861
  %v975 = vpop.xlane.xlu0 %974
  %976 = vadd.xlane.f32.xlu0 %v862
  %v977 = vpop.xlane.xlu0 %976
  %978 = vadd.xlane.f32.xlu0 %v863
  %v979 = vpop.xlane.xlu0 %978
  %980 = vadd.xlane.f32.xlu0 %v864
  %v981 = vpop.xlane.xlu0 %980
  %982 = vadd.xlane.f32.xlu0 %v865
  %v983 = vpop.xlane.xlu0 %982
  %984 = vadd.xlane.f32.xlu0 %v866
  %v985 = vpop.xlane.xlu0 %984
  %986 = vadd.xlane.f32.xlu0 %v867
  %v987 = vpop.xlane.xlu0 %986
  %988 = vadd.xlane.f32.xlu0 %v868
  %v989 = vpop.xlane.xlu0 %988
  %990 = vadd.xlane.f32.xlu0 %v869
  %v991 = vpop.xlane.xlu0 %990
  %992 = vadd.xlane.f32.xlu0 %v870
  %v993 = vpop.xlane.xlu0 %992
  %994 = vadd.xlane.f32.xlu0 %v871
  %v995 = vpop.xlane.xlu0 %994
  %996 = vadd.xlane.f32.xlu0 %v872
  %v997 = vpop.xlane.xlu0 %996
  %998 = vadd.xlane.f32.xlu0 %v873
  %v999 = vpop.xlane.xlu0 %998
  %1000 = vadd.xlane.f32.xlu0 %v874
  %v1001 = vpop.xlane.xlu0 %1000
  %1002 = vadd.xlane.f32.xlu0 %v875
  %v1003 = vpop.xlane.xlu0 %1002
  %v1004 = vmul.f32 %v877, %v683
  %v1005 = vmul.f32 %v879, %v683
  %v1006 = vmul.f32 %v881, %v683
  %v1007 = vmul.f32 %v883, %v683
  %v1008 = vmul.f32 %v885, %v683
  %v1009 = vmul.f32 %v887, %v683
  %v1010 = vmul.f32 %v889, %v683
  %v1011 = vmul.f32 %v891, %v683
  %v1012 = vmul.f32 %v893, %v683
  %v1013 = vmul.f32 %v895, %v683
  %v1014 = vmul.f32 %v897, %v683
  %v1015 = vmul.f32 %v899, %v683
  %v1016 = vmul.f32 %v901, %v683
  %v1017 = vmul.f32 %v903, %v683
  %v1018 = vmul.f32 %v905, %v683
  %v1019 = vmul.f32 %v907, %v683
  %v1020 = vmul.f32 %v909, %v683
  %v1021 = vmul.f32 %v911, %v683
  %v1022 = vmul.f32 %v913, %v683
  %v1023 = vmul.f32 %v915, %v683
  %v1024 = vmul.f32 %v917, %v683
  %v1025 = vmul.f32 %v919, %v683
  %v1026 = vmul.f32 %v921, %v683
  %v1027 = vmul.f32 %v923, %v683
  %v1028 = vmul.f32 %v925, %v683
  %v1029 = vmul.f32 %v927, %v683
  %v1030 = vmul.f32 %v929, %v683
  %v1031 = vmul.f32 %v931, %v683
  %v1032 = vmul.f32 %v933, %v683
  %v1033 = vmul.f32 %v935, %v683
  %v1034 = vmul.f32 %v937, %v683
  %v1035 = vmul.f32 %v939, %v683
  %v1036 = vmul.f32 %v941, %v683
  %v1037 = vmul.f32 %v943, %v683
  %v1038 = vmul.f32 %v945, %v683
  %v1039 = vmul.f32 %v947, %v683
  %v1040 = vmul.f32 %v949, %v683
  %v1041 = vmul.f32 %v951, %v683
  %v1042 = vmul.f32 %v953, %v683
  %v1043 = vmul.f32 %v955, %v683
  %v1044 = vmul.f32 %v957, %v683
  %v1045 = vmul.f32 %v959, %v683
  %v1046 = vmul.f32 %v961, %v683
  %v1047 = vmul.f32 %v963, %v683
  %v1048 = vmul.f32 %v965, %v683
  %v1049 = vmul.f32 %v967, %v683
  %v1050 = vmul.f32 %v969, %v683
  %v1051 = vmul.f32 %v971, %v683
  %v1052 = vmul.f32 %v973, %v683
  %v1053 = vmul.f32 %v975, %v683
  %v1054 = vmul.f32 %v977, %v683
  %v1055 = vmul.f32 %v979, %v683
  %v1056 = vmul.f32 %v981, %v683
  %v1057 = vmul.f32 %v983, %v683
  %v1058 = vmul.f32 %v985, %v683
  %v1059 = vmul.f32 %v987, %v683
  %v1060 = vmul.f32 %v989, %v683
  %v1061 = vmul.f32 %v991, %v683
  %v1062 = vmul.f32 %v993, %v683
  %v1063 = vmul.f32 %v995, %v683
  %v1064 = vmul.f32 %v997, %v683
  %v1065 = vmul.f32 %v999, %v683
  %v1066 = vmul.f32 %v1001, %v683
  %v1067 = vmul.f32 %v1003, %v683
  %v1068 = vadd.f32 %v1004, 1e-05
  %v1069 = vadd.f32 %v1005, 1e-05
  %v1070 = vadd.f32 %v1006, 1e-05
  %v1071 = vadd.f32 %v1007, 1e-05
  %v1072 = vadd.f32 %v1008, 1e-05
  %v1073 = vadd.f32 %v1009, 1e-05
  %v1074 = vadd.f32 %v1010, 1e-05
  %v1075 = vadd.f32 %v1011, 1e-05
  %v1076 = vadd.f32 %v1012, 1e-05
  %v1077 = vadd.f32 %v1013, 1e-05
  %v1078 = vadd.f32 %v1014, 1e-05
  %v1079 = vadd.f32 %v1015, 1e-05
  %v1080 = vadd.f32 %v1016, 1e-05
  %v1081 = vadd.f32 %v1017, 1e-05
  %v1082 = vadd.f32 %v1018, 1e-05
  %v1083 = vadd.f32 %v1019, 1e-05
  %v1084 = vadd.f32 %v1020, 1e-05
  %v1085 = vadd.f32 %v1021, 1e-05
  %v1086 = vadd.f32 %v1022, 1e-05
  %v1087 = vadd.f32 %v1023, 1e-05
  %v1088 = vadd.f32 %v1024, 1e-05
  %v1089 = vadd.f32 %v1025, 1e-05
  %v1090 = vadd.f32 %v1026, 1e-05
  %v1091 = vadd.f32 %v1027, 1e-05
  %v1092 = vadd.f32 %v1028, 1e-05
  %v1093 = vadd.f32 %v1029, 1e-05
  %v1094 = vadd.f32 %v1030, 1e-05
  %v1095 = vadd.f32 %v1031, 1e-05
  %v1096 = vadd.f32 %v1032, 1e-05
  %v1097 = vadd.f32 %v1033, 1e-05
  %v1098 = vadd.f32 %v1034, 1e-05
  %v1099 = vadd.f32 %v1035, 1e-05
  %v1100 = vadd.f32 %v1036, 1e-05
  %v1101 = vadd.f32 %v1037, 1e-05
  %v1102 = vadd.f32 %v1038, 1e-05
  %v1103 = vadd.f32 %v1039, 1e-05
  %v1104 = vadd.f32 %v1040, 1e-05
  %v1105 = vadd.f32 %v1041, 1e-05
  %v1106 = vadd.f32 %v1042, 1e-05
  %v1107 = vadd.f32 %v1043, 1e-05
  %v1108 = vadd.f32 %v1044, 1e-05
  %v1109 = vadd.f32 %v1045, 1e-05
  %v1110 = vadd.f32 %v1046, 1e-05
  %v1111 = vadd.f32 %v1047, 1e-05
  %v1112 = vadd.f32 %v1048, 1e-05
  %v1113 = vadd.f32 %v1049, 1e-05
  %v1114 = vadd.f32 %v1050, 1e-05
  %v1115 = vadd.f32 %v1051, 1e-05
  %v1116 = vadd.f32 %v1052, 1e-05
  %v1117 = vadd.f32 %v1053, 1e-05
  %v1118 = vadd.f32 %v1054, 1e-05
  %v1119 = vadd.f32 %v1055, 1e-05
  %v1120 = vadd.f32 %v1056, 1e-05
  %v1121 = vadd.f32 %v1057, 1e-05
  %v1122 = vadd.f32 %v1058, 1e-05
  %v1123 = vadd.f32 %v1059, 1e-05
  %v1124 = vadd.f32 %v1060, 1e-05
  %v1125 = vadd.f32 %v1061, 1e-05
  %v1126 = vadd.f32 %v1062, 1e-05
  %v1127 = vadd.f32 %v1063, 1e-05
  %v1128 = vadd.f32 %v1064, 1e-05
  %v1129 = vadd.f32 %v1065, 1e-05
  %v1130 = vadd.f32 %v1066, 1e-05
  %v1131 = vadd.f32 %v1067, 1e-05
  %v1132 = vrsqrt.pop %v1068
  %v1133 = vrsqrt.pop %v1069
  %v1134 = vrsqrt.pop %v1070
  %v1135 = vrsqrt.pop %v1071
  %v1136 = vrsqrt.pop %v1072
  %v1137 = vrsqrt.pop %v1073
  %v1138 = vrsqrt.pop %v1074
  %v1139 = vrsqrt.pop %v1075
  %v1140 = vrsqrt.pop %v1076
  %v1141 = vrsqrt.pop %v1077
  %v1142 = vrsqrt.pop %v1078
  %v1143 = vrsqrt.pop %v1079
  %v1144 = vrsqrt.pop %v1080
  %v1145 = vrsqrt.pop %v1081
  %v1146 = vrsqrt.pop %v1082
  %v1147 = vrsqrt.pop %v1083
  %v1148 = vrsqrt.pop %v1084
  %v1149 = vrsqrt.pop %v1085
  %v1150 = vrsqrt.pop %v1086
  %v1151 = vrsqrt.pop %v1087
  %v1152 = vrsqrt.pop %v1088
  %v1153 = vrsqrt.pop %v1089
  %v1154 = vrsqrt.pop %v1090
  %v1155 = vrsqrt.pop %v1091
  %v1156 = vrsqrt.pop %v1092
  %v1157 = vrsqrt.pop %v1093
  %v1158 = vrsqrt.pop %v1094
  %v1159 = vrsqrt.pop %v1095
  %v1160 = vrsqrt.pop %v1096
  %v1161 = vrsqrt.pop %v1097
  %v1162 = vrsqrt.pop %v1098
  %v1163 = vrsqrt.pop %v1099
  %v1164 = vrsqrt.pop %v1100
  %v1165 = vrsqrt.pop %v1101
  %v1166 = vrsqrt.pop %v1102
  %v1167 = vrsqrt.pop %v1103
  %v1168 = vrsqrt.pop %v1104
  %v1169 = vrsqrt.pop %v1105
  %v1170 = vrsqrt.pop %v1106
  %v1171 = vrsqrt.pop %v1107
  %v1172 = vrsqrt.pop %v1108
  %v1173 = vrsqrt.pop %v1109
  %v1174 = vrsqrt.pop %v1110
  %v1175 = vrsqrt.pop %v1111
  %v1176 = vrsqrt.pop %v1112
  %v1177 = vrsqrt.pop %v1113
  %v1178 = vrsqrt.pop %v1114
  %v1179 = vrsqrt.pop %v1115
  %v1180 = vrsqrt.pop %v1116
  %v1181 = vrsqrt.pop %v1117
  %v1182 = vrsqrt.pop %v1118
  %v1183 = vrsqrt.pop %v1119
  %v1184 = vrsqrt.pop %v1120
  %v1185 = vrsqrt.pop %v1121
  %v1186 = vrsqrt.pop %v1122
  %v1187 = vrsqrt.pop %v1123
  %v1188 = vrsqrt.pop %v1124
  %v1189 = vrsqrt.pop %v1125
  %v1190 = vrsqrt.pop %v1126
  %v1191 = vrsqrt.pop %v1127
  %v1192 = vrsqrt.pop %v1128
  %v1193 = vrsqrt.pop %v1129
  %v1194 = vrsqrt.pop %v1130
  %v1195 = vrsqrt.pop %v1131
  %v1196 = vmul.f32 %v748, %v1132
  %v1197 = vmul.f32 %v749, %v1133
  %v1198 = vmul.f32 %v750, %v1134
  %v1199 = vmul.f32 %v751, %v1135
  %v1200 = vmul.f32 %v752, %v1136
  %v1201 = vmul.f32 %v753, %v1137
  %v1202 = vmul.f32 %v754, %v1138
  %v1203 = vmul.f32 %v755, %v1139
  %v1204 = vmul.f32 %v756, %v1140
  %v1205 = vmul.f32 %v757, %v1141
  %v1206 = vmul.f32 %v758, %v1142
  %v1207 = vmul.f32 %v759, %v1143
  %v1208 = vmul.f32 %v760, %v1144
  %v1209 = vmul.f32 %v761, %v1145
  %v1210 = vmul.f32 %v762, %v1146
  %v1211 = vmul.f32 %v763, %v1147
  %v1212 = vmul.f32 %v764, %v1148
  %v1213 = vmul.f32 %v765, %v1149
  %v1214 = vmul.f32 %v766, %v1150
  %v1215 = vmul.f32 %v767, %v1151
  %v1216 = vmul.f32 %v768, %v1152
  %v1217 = vmul.f32 %v769, %v1153
  %v1218 = vmul.f32 %v770, %v1154
  %v1219 = vmul.f32 %v771, %v1155
  %v1220 = vmul.f32 %v772, %v1156
  %v1221 = vmul.f32 %v773, %v1157
  %v1222 = vmul.f32 %v774, %v1158
  %v1223 = vmul.f32 %v775, %v1159
  %v1224 = vmul.f32 %v776, %v1160
  %v1225 = vmul.f32 %v777, %v1161
  %v1226 = vmul.f32 %v778, %v1162
  %v1227 = vmul.f32 %v779, %v1163
  %v1228 = vmul.f32 %v780, %v1164
  %v1229 = vmul.f32 %v781, %v1165
  %v1230 = vmul.f32 %v782, %v1166
  %v1231 = vmul.f32 %v783, %v1167
  %v1232 = vmul.f32 %v784, %v1168
  %v1233 = vmul.f32 %v785, %v1169
  %v1234 = vmul.f32 %v786, %v1170
  %v1235 = vmul.f32 %v787, %v1171
  %v1236 = vmul.f32 %v788, %v1172
  %v1237 = vmul.f32 %v789, %v1173
  %v1238 = vmul.f32 %v790, %v1174
  %v1239 = vmul.f32 %v791, %v1175
  %v1240 = vmul.f32 %v792, %v1176
  %v1241 = vmul.f32 %v793, %v1177
  %v1242 = vmul.f32 %v794, %v1178
  %v1243 = vmul.f32 %v795, %v1179
  %v1244 = vmul.f32 %v796, %v1180
  %v1245 = vmul.f32 %v797, %v1181
  %v1246 = vmul.f32 %v798, %v1182
  %v1247 = vmul.f32 %v799, %v1183
  %v1248 = vmul.f32 %v800, %v1184
  %v1249 = vmul.f32 %v801, %v1185
  %v1250 = vmul.f32 %v802, %v1186
  %v1251 = vmul.f32 %v803, %v1187
  %v1252 = vmul.f32 %v804, %v1188
  %v1253 = vmul.f32 %v805, %v1189
  %v1254 = vmul.f32 %v806, %v1190
  %v1255 = vmul.f32 %v807, %v1191
  %v1256 = vmul.f32 %v808, %v1192
  %v1257 = vmul.f32 %v809, %v1193
  %v1258 = vmul.f32 %v810, %v1194
  %v1259 = vmul.f32 %v811, %v1195
  %v1260 = vld [vmem:[%s3] sm:$0xff]
  %v1261 = vld [vmem:[%s3 + $0x8] sm:$0xf]
  %v1262 = vld [vmem:[%s3 + $0xc] sm:$0xff]
  %v1263 = vld [vmem:[%s3 + $0x14] sm:$0xf]
  %v1264 = vld [vmem:[%s3 + $0x18] sm:$0xff]
  %v1265 = vld [vmem:[%s3 + $0x20] sm:$0xf]
  %v1266 = vld [vmem:[%s3 + $0x24] sm:$0xff]
  %v1267 = vld [vmem:[%s3 + $0x2c] sm:$0xf]
  %v1268 = vld [vmem:[%s3 + $0x30] sm:$0xff]
  %v1269 = vld [vmem:[%s3 + $0x38] sm:$0xf]
  %v1270 = vld [vmem:[%s3 + $0x3c] sm:$0xff]
  %v1271 = vld [vmem:[%s3 + $0x44] sm:$0xf]
  %v1272 = vld [vmem:[%s3 + $0x48] sm:$0xff]
  %v1273 = vld [vmem:[%s3 + $0x50] sm:$0xf]
  %v1274 = vld [vmem:[%s3 + $0x54] sm:$0xff]
  %v1275 = vld [vmem:[%s3 + $0x5c] sm:$0xf]
  %v1276 = vld [vmem:[%s3 + $0x60] sm:$0xff]
  %v1277 = vld [vmem:[%s3 + $0x68] sm:$0xf]
  %v1278 = vld [vmem:[%s3 + $0x6c] sm:$0xff]
  %v1279 = vld [vmem:[%s3 + $0x74] sm:$0xf]
  %v1280 = vld [vmem:[%s3 + $0x78] sm:$0xff]
  %v1281 = vld [vmem:[%s3 + $0x80] sm:$0xf]
  %v1282 = vld [vmem:[%s3 + $0x84] sm:$0xff]
  %v1283 = vld [vmem:[%s3 + $0x8c] sm:$0xf]
  %v1284 = vld [vmem:[%s3 + $0x90] sm:$0xff]
  %v1285 = vld [vmem:[%s3 + $0x98] sm:$0xf]
  %v1286 = vld [vmem:[%s3 + $0x9c] sm:$0xff]
  %v1287 = vld [vmem:[%s3 + $0xa4] sm:$0xf]
  %v1288 = vld [vmem:[%s3 + $0xa8] sm:$0xff]
  %v1289 = vld [vmem:[%s3 + $0xb0] sm:$0xf]
  %v1290 = vld [vmem:[%s3 + $0xb4] sm:$0xff]
  %v1291 = vld [vmem:[%s3 + $0xbc] sm:$0xf]
  %v1292 = vpack.c.bf16 %v1197, %v1196
  %v1293 = vpack.c.bf16 %v1199, %v1198
  %v1294 = vpack.c.bf16 %v1201, %v1200
  %v1295 = vpack.c.bf16 %v1203, %v1202
  %v1296 = vpack.c.bf16 %v1205, %v1204
  %v1297 = vpack.c.bf16 %v1207, %v1206
  %v1298 = vpack.c.bf16 %v1209, %v1208
  %v1299 = vpack.c.bf16 %v1211, %v1210
  %v1300 = vpack.c.bf16 %v1213, %v1212
  %v1301 = vpack.c.bf16 %v1215, %v1214
  %v1302 = vpack.c.bf16 %v1217, %v1216
  %v1303 = vpack.c.bf16 %v1219, %v1218
  %v1304 = vpack.c.bf16 %v1221, %v1220
  %v1305 = vpack.c.bf16 %v1223, %v1222
  %v1306 = vpack.c.bf16 %v1225, %v1224
  %v1307 = vpack.c.bf16 %v1227, %v1226
  %v1308 = vpack.c.bf16 %v1229, %v1228
  %v1309 = vpack.c.bf16 %v1231, %v1230
  %v1310 = vpack.c.bf16 %v1233, %v1232
  %v1311 = vpack.c.bf16 %v1235, %v1234
  %v1312 = vpack.c.bf16 %v1237, %v1236
  %v1313 = vpack.c.bf16 %v1239, %v1238
  %v1314 = vpack.c.bf16 %v1241, %v1240
  %v1315 = vpack.c.bf16 %v1243, %v1242
  %v1316 = vpack.c.bf16 %v1245, %v1244
  %v1317 = vpack.c.bf16 %v1247, %v1246
  %v1318 = vpack.c.bf16 %v1249, %v1248
  %v1319 = vpack.c.bf16 %v1251, %v1250
  %v1320 = vpack.c.bf16 %v1253, %v1252
  %v1321 = vpack.c.bf16 %v1255, %v1254
  %v1322 = vpack.c.bf16 %v1257, %v1256
  %v1323 = vpack.c.bf16 %v1259, %v1258
  %v1324 = vld [vmem:[%s4] sm:$0x7]
  %v1326 = vlaneseq
  %v1327 = vshrl.u32 %v1326, 7
  %v1328 = vsub.s32 0, %v1327
  %v1329 = vrot.slane %v1324, %v1328
  %v1330 = vlaneseq
  %v1331 = vshrl.u32 %v1330, 7
  %v1332 = vsub.s32 1, %v1331
  %v1333 = vrot.slane %v1324, %v1332
  %v1334 = vlaneseq
  %v1335 = vshrl.u32 %v1334, 7
  %v1336 = vsub.s32 2, %v1335
  %v1337 = vrot.slane %v1324, %v1336
  %v1373 = vunpack.c.l.b16 %v1260
  %v1374 = vunpack.c.h.b16 %v1260
  %v1375 = vunpack.c.l.b16 %v1261
  %v1376 = vunpack.c.l.b16 %v1262
  %v1377 = vunpack.c.h.b16 %v1262
  %v1378 = vunpack.c.l.b16 %v1263
  %v1379 = vunpack.c.l.b16 %v1264
  %v1380 = vunpack.c.h.b16 %v1264
  %v1381 = vunpack.c.l.b16 %v1265
  %v1382 = vunpack.c.l.b16 %v1266
  %v1383 = vunpack.c.h.b16 %v1266
  %v1384 = vunpack.c.l.b16 %v1267
  %v1385 = vunpack.c.l.b16 %v1268
  %v1386 = vunpack.c.h.b16 %v1268
  %v1387 = vunpack.c.l.b16 %v1269
  %v1388 = vunpack.c.l.b16 %v1270
  %v1389 = vunpack.c.h.b16 %v1270
  %v1390 = vunpack.c.l.b16 %v1271
  %v1391 = vunpack.c.l.b16 %v1272
  %v1392 = vunpack.c.h.b16 %v1272
  %v1393 = vunpack.c.l.b16 %v1273
  %v1394 = vunpack.c.l.b16 %v1274
  %v1395 = vunpack.c.h.b16 %v1274
  %v1396 = vunpack.c.l.b16 %v1275
  %v1397 = vunpack.c.l.b16 %v1276
  %v1398 = vunpack.c.h.b16 %v1276
  %v1399 = vunpack.c.l.b16 %v1277
  %v1400 = vunpack.c.l.b16 %v1278
  %v1401 = vunpack.c.h.b16 %v1278
  %v1402 = vunpack.c.l.b16 %v1279
  %v1403 = vunpack.c.l.b16 %v1280
  %v1404 = vunpack.c.h.b16 %v1280
  %v1405 = vunpack.c.l.b16 %v1281
  %v1406 = vunpack.c.l.b16 %v1282
  %v1407 = vunpack.c.h.b16 %v1282
  %v1408 = vunpack.c.l.b16 %v1283
  %v1409 = vunpack.c.l.b16 %v1284
  %v1410 = vunpack.c.h.b16 %v1284
  %v1411 = vunpack.c.l.b16 %v1285
  %v1412 = vunpack.c.l.b16 %v1286
  %v1413 = vunpack.c.h.b16 %v1286
  %v1414 = vunpack.c.l.b16 %v1287
  %v1415 = vunpack.c.l.b16 %v1288
  %v1416 = vunpack.c.h.b16 %v1288
  %v1417 = vunpack.c.l.b16 %v1289
  %v1418 = vunpack.c.l.b16 %v1290
  %v1419 = vunpack.c.h.b16 %v1290
  %v1420 = vunpack.c.l.b16 %v1291
  %v1421 = vpack.c.b16 %v1376, %v1373
  %v1422 = vpack.c.b16 %v1377, %v1374
  %v1423 = vpack.c.b16 %v1378, %v1375
  %v1424 = vpack.c.b16 %v1382, %v1379
  %v1425 = vpack.c.b16 %v1383, %v1380
  %v1426 = vpack.c.b16 %v1384, %v1381
  %v1427 = vpack.c.b16 %v1388, %v1385
  %v1428 = vpack.c.b16 %v1389, %v1386
  %v1429 = vpack.c.b16 %v1390, %v1387
  %v1430 = vpack.c.b16 %v1394, %v1391
  %v1431 = vpack.c.b16 %v1395, %v1392
  %v1432 = vpack.c.b16 %v1396, %v1393
  %v1433 = vpack.c.b16 %v1400, %v1397
  %v1434 = vpack.c.b16 %v1401, %v1398
  %v1435 = vpack.c.b16 %v1402, %v1399
  %v1436 = vpack.c.b16 %v1406, %v1403
  %v1437 = vpack.c.b16 %v1407, %v1404
  %v1438 = vpack.c.b16 %v1408, %v1405
  %v1439 = vpack.c.b16 %v1412, %v1409
  %v1440 = vpack.c.b16 %v1413, %v1410
  %v1441 = vpack.c.b16 %v1414, %v1411
  %v1442 = vpack.c.b16 %v1418, %v1415
  %v1443 = vpack.c.b16 %v1419, %v1416
  %v1444 = vpack.c.b16 %v1420, %v1417
  %1469 = vmatprep.subr.bf16.mxu0 %v1443
  %1470 = vmatpush1.bf16.msra.mxu0 %v1442
  %1471 = vmatprep.subr.bf16.mxu0 %v1440
  %1472 = vmatpush1.bf16.msra.mxu0 %v1439
  %1473 = vmatprep.subr.bf16.mxu0 %v1437
  %1474 = vmatpush1.bf16.msra.mxu0 %v1436
  %1475 = vmatprep.subr.bf16.mxu0 %v1434
  %1476 = vmatpush1.bf16.msra.mxu0 %v1433
  %1477 = vmatprep.subr.bf16.mxu0 %v1431
  %1478 = vmatpush1.bf16.msra.mxu0 %v1430
  %1479 = vmatprep.subr.bf16.mxu0 %v1428
  %1480 = vmatpush1.bf16.msra.mxu0 %v1427
  %1481 = vmatprep.subr.bf16.mxu0 %v1425
  %1482 = vmatpush1.bf16.msra.mxu0 %v1424
  %1483 = vmatprep.subr.bf16.mxu0 %v1422
  %1484 = vmatpush1.bf16.msra.mxu0 %v1421
  %1485 = vmatprep.subr.bf16.mxu0 0
  %1486 = vmatpush2.bf16.msra.mxu0 0
  %1487 = vmatprep.subr.bf16.mxu0 0
  %1488 = vmatpush2.bf16.msra.mxu0 0
  %1489 = vmatprep.subr.bf16.mxu0 0
  %1490 = vmatpush2.bf16.msra.mxu0 0
  %1491 = vmatprep.subr.bf16.mxu0 0
  %1492 = vmatpush2.bf16.msra.mxu0 0
  %1493 = vmatprep.subr.bf16.mxu0 0
  %1494 = vmatpush2.bf16.msra.mxu0 0
  %1495 = vmatprep.subr.bf16.mxu0 0
  %1496 = vmatpush2.bf16.msra.mxu0 0
  %1497 = vmatprep.subr.bf16.mxu0 0
  %1498 = vmatpush2.bf16.msra.mxu0 0
  %1499 = vmatprep.subr.bf16.mxu0 0
  %1500 = vmatpush2.bf16.msra.mxu0 0
  %1501 = vmatprep.mubr.bf16.mxu0 0
  %1502 = vmatmul.mubr.bf16.gmra.mxu0 %v1292
  %v1503 = vpop.f32.mrf.mxu0
  %v1504 = vadd.f32 %v1329, %v1503
  %v1505 = vpop.f32.mrf.mxu0
  %v1506 = vadd.f32 %v1333, %v1505
  %v1507 = vpop.f32.mrf.mxu0
  %v1508 = vadd.f32 %v1329, %v1507
  %v1509 = vpop.f32.mrf.mxu0
  %v1510 = vadd.f32 %v1333, %v1509
  %1511 = vmatprep.mubr.bf16.mxu0 0
  %1512 = vmatmul.mubr.bf16.gmra.mxu0 %v1293
  %v1513 = vpop.f32.mrf.mxu0
  %v1514 = vadd.f32 %v1329, %v1513
  %v1515 = vpop.f32.mrf.mxu0
  %v1516 = vadd.f32 %v1333, %v1515
  %v1517 = vpop.f32.mrf.mxu0
  %v1518 = vadd.f32 %v1329, %v1517
  %v1519 = vpop.f32.mrf.mxu0
  %v1520 = vadd.f32 %v1333, %v1519
  %1521 = vmatprep.mubr.bf16.mxu0 0
  %1522 = vmatmul.mubr.bf16.gmra.mxu0 %v1294
  %v1523 = vpop.f32.mrf.mxu0
  %v1524 = vadd.f32 %v1329, %v1523
  %v1525 = vpop.f32.mrf.mxu0
  %v1526 = vadd.f32 %v1333, %v1525
  %v1527 = vpop.f32.mrf.mxu0
  %v1528 = vadd.f32 %v1329, %v1527
  %v1529 = vpop.f32.mrf.mxu0
  %v1530 = vadd.f32 %v1333, %v1529
  %1531 = vmatprep.mubr.bf16.mxu0 0
  %1532 = vmatmul.mubr.bf16.gmra.mxu0 %v1295
  %v1533 = vpop.f32.mrf.mxu0
  %v1534 = vadd.f32 %v1329, %v1533
  %v1535 = vpop.f32.mrf.mxu0
  %v1536 = vadd.f32 %v1333, %v1535
  %v1537 = vpop.f32.mrf.mxu0
  %v1538 = vadd.f32 %v1329, %v1537
  %v1539 = vpop.f32.mrf.mxu0
  %v1540 = vadd.f32 %v1333, %v1539
  %1541 = vmatprep.mubr.bf16.mxu0 0
  %1542 = vmatmul.mubr.bf16.gmra.mxu0 %v1296
  %v1543 = vpop.f32.mrf.mxu0
  %v1544 = vadd.f32 %v1329, %v1543
  %v1545 = vpop.f32.mrf.mxu0
  %v1546 = vadd.f32 %v1333, %v1545
  %v1547 = vpop.f32.mrf.mxu0
  %v1548 = vadd.f32 %v1329, %v1547
  %v1549 = vpop.f32.mrf.mxu0
  %v1550 = vadd.f32 %v1333, %v1549
  %1551 = vmatprep.mubr.bf16.mxu0 0
  %1552 = vmatmul.mubr.bf16.gmra.mxu0 %v1297
  %v1553 = vpop.f32.mrf.mxu0
  %v1554 = vadd.f32 %v1329, %v1553
  %v1555 = vpop.f32.mrf.mxu0
  %v1556 = vadd.f32 %v1333, %v1555
  %v1557 = vpop.f32.mrf.mxu0
  %v1558 = vadd.f32 %v1329, %v1557
  %v1559 = vpop.f32.mrf.mxu0
  %v1560 = vadd.f32 %v1333, %v1559
  %1561 = vmatprep.mubr.bf16.mxu0 0
  %1562 = vmatmul.mubr.bf16.gmra.mxu0 %v1298
  %v1563 = vpop.f32.mrf.mxu0
  %v1564 = vadd.f32 %v1329, %v1563
  %v1565 = vpop.f32.mrf.mxu0
  %v1566 = vadd.f32 %v1333, %v1565
  %v1567 = vpop.f32.mrf.mxu0
  %v1568 = vadd.f32 %v1329, %v1567
  %v1569 = vpop.f32.mrf.mxu0
  %v1570 = vadd.f32 %v1333, %v1569
  %1571 = vmatprep.mubr.bf16.mxu0 0
  %1572 = vmatmul.mubr.bf16.gmra.mxu0 %v1299
  %v1573 = vpop.f32.mrf.mxu0
  %v1574 = vadd.f32 %v1329, %v1573
  %v1575 = vpop.f32.mrf.mxu0
  %v1576 = vadd.f32 %v1333, %v1575
  %v1577 = vpop.f32.mrf.mxu0
  %v1578 = vadd.f32 %v1329, %v1577
  %v1579 = vpop.f32.mrf.mxu0
  %v1580 = vadd.f32 %v1333, %v1579
  %1581 = vmatprep.mubr.bf16.mxu0 0
  %1582 = vmatmul.mubr.bf16.gmra.mxu0 %v1300
  %v1583 = vpop.f32.mrf.mxu0
  %v1584 = vadd.f32 %v1329, %v1583
  %v1585 = vpop.f32.mrf.mxu0
  %v1586 = vadd.f32 %v1333, %v1585
  %v1587 = vpop.f32.mrf.mxu0
  %v1588 = vadd.f32 %v1329, %v1587
  %v1589 = vpop.f32.mrf.mxu0
  %v1590 = vadd.f32 %v1333, %v1589
  %1591 = vmatprep.mubr.bf16.mxu0 0
  %1592 = vmatmul.mubr.bf16.gmra.mxu0 %v1301
  %v1593 = vpop.f32.mrf.mxu0
  %v1594 = vadd.f32 %v1329, %v1593
  %v1595 = vpop.f32.mrf.mxu0
  %v1596 = vadd.f32 %v1333, %v1595
  %v1597 = vpop.f32.mrf.mxu0
  %v1598 = vadd.f32 %v1329, %v1597
  %v1599 = vpop.f32.mrf.mxu0
  %v1600 = vadd.f32 %v1333, %v1599
  %1601 = vmatprep.mubr.bf16.mxu0 0
  %1602 = vmatmul.mubr.bf16.gmra.mxu0 %v1302
  %v1603 = vpop.f32.mrf.mxu0
  %v1604 = vadd.f32 %v1329, %v1603
  %v1605 = vpop.f32.mrf.mxu0
  %v1606 = vadd.f32 %v1333, %v1605
  %v1607 = vpop.f32.mrf.mxu0
  %v1608 = vadd.f32 %v1329, %v1607
  %v1609 = vpop.f32.mrf.mxu0
  %v1610 = vadd.f32 %v1333, %v1609
  %1611 = vmatprep.mubr.bf16.mxu0 0
  %1612 = vmatmul.mubr.bf16.gmra.mxu0 %v1303
  %v1613 = vpop.f32.mrf.mxu0
  %v1614 = vadd.f32 %v1329, %v1613
  %v1615 = vpop.f32.mrf.mxu0
  %v1616 = vadd.f32 %v1333, %v1615
  %v1617 = vpop.f32.mrf.mxu0
  %v1618 = vadd.f32 %v1329, %v1617
  %v1619 = vpop.f32.mrf.mxu0
  %v1620 = vadd.f32 %v1333, %v1619
  %1621 = vmatprep.mubr.bf16.mxu0 0
  %1622 = vmatmul.mubr.bf16.gmra.mxu0 %v1304
  %v1623 = vpop.f32.mrf.mxu0
  %v1624 = vadd.f32 %v1329, %v1623
  %v1625 = vpop.f32.mrf.mxu0
  %v1626 = vadd.f32 %v1333, %v1625
  %v1627 = vpop.f32.mrf.mxu0
  %v1628 = vadd.f32 %v1329, %v1627
  %v1629 = vpop.f32.mrf.mxu0
  %v1630 = vadd.f32 %v1333, %v1629
  %1631 = vmatprep.mubr.bf16.mxu0 0
  %1632 = vmatmul.mubr.bf16.gmra.mxu0 %v1305
  %v1633 = vpop.f32.mrf.mxu0
  %v1634 = vadd.f32 %v1329, %v1633
  %v1635 = vpop.f32.mrf.mxu0
  %v1636 = vadd.f32 %v1333, %v1635
  %v1637 = vpop.f32.mrf.mxu0
  %v1638 = vadd.f32 %v1329, %v1637
  %v1639 = vpop.f32.mrf.mxu0
  %v1640 = vadd.f32 %v1333, %v1639
  %1641 = vmatprep.mubr.bf16.mxu0 0
  %1642 = vmatmul.mubr.bf16.gmra.mxu0 %v1306
  %v1643 = vpop.f32.mrf.mxu0
  %v1644 = vadd.f32 %v1329, %v1643
  %v1645 = vpop.f32.mrf.mxu0
  %v1646 = vadd.f32 %v1333, %v1645
  %v1647 = vpop.f32.mrf.mxu0
  %v1648 = vadd.f32 %v1329, %v1647
  %v1649 = vpop.f32.mrf.mxu0
  %v1650 = vadd.f32 %v1333, %v1649
  %1651 = vmatprep.mubr.bf16.mxu0 0
  %1652 = vmatmul.mubr.bf16.gmra.mxu0 %v1307
  %v1653 = vpop.f32.mrf.mxu0
  %v1654 = vadd.f32 %v1329, %v1653
  %v1655 = vpop.f32.mrf.mxu0
  %v1656 = vadd.f32 %v1333, %v1655
  %v1657 = vpop.f32.mrf.mxu0
  %v1658 = vadd.f32 %v1329, %v1657
  %v1659 = vpop.f32.mrf.mxu0
  %v1660 = vadd.f32 %v1333, %v1659
  %1661 = vmatprep.mubr.bf16.mxu0 0
  %1662 = vmatmul.mubr.bf16.gmra.mxu0 %v1308
  %v1663 = vpop.f32.mrf.mxu0
  %v1664 = vadd.f32 %v1329, %v1663
  %v1665 = vpop.f32.mrf.mxu0
  %v1666 = vadd.f32 %v1333, %v1665
  %v1667 = vpop.f32.mrf.mxu0
  %v1668 = vadd.f32 %v1329, %v1667
  %v1669 = vpop.f32.mrf.mxu0
  %v1670 = vadd.f32 %v1333, %v1669
  %1671 = vmatprep.mubr.bf16.mxu0 0
  %1672 = vmatmul.mubr.bf16.gmra.mxu0 %v1309
  %v1673 = vpop.f32.mrf.mxu0
  %v1674 = vadd.f32 %v1329, %v1673
  %v1675 = vpop.f32.mrf.mxu0
  %v1676 = vadd.f32 %v1333, %v1675
  %v1677 = vpop.f32.mrf.mxu0
  %v1678 = vadd.f32 %v1329, %v1677
  %v1679 = vpop.f32.mrf.mxu0
  %v1680 = vadd.f32 %v1333, %v1679
  %1681 = vmatprep.mubr.bf16.mxu0 0
  %1682 = vmatmul.mubr.bf16.gmra.mxu0 %v1310
  %v1683 = vpop.f32.mrf.mxu0
  %v1684 = vadd.f32 %v1329, %v1683
  %v1685 = vpop.f32.mrf.mxu0
  %v1686 = vadd.f32 %v1333, %v1685
  %v1687 = vpop.f32.mrf.mxu0
  %v1688 = vadd.f32 %v1329, %v1687
  %v1689 = vpop.f32.mrf.mxu0
  %v1690 = vadd.f32 %v1333, %v1689
  %1691 = vmatprep.mubr.bf16.mxu0 0
  %1692 = vmatmul.mubr.bf16.gmra.mxu0 %v1311
  %v1693 = vpop.f32.mrf.mxu0
  %v1694 = vadd.f32 %v1329, %v1693
  %v1695 = vpop.f32.mrf.mxu0
  %v1696 = vadd.f32 %v1333, %v1695
  %v1697 = vpop.f32.mrf.mxu0
  %v1698 = vadd.f32 %v1329, %v1697
  %v1699 = vpop.f32.mrf.mxu0
  %v1700 = vadd.f32 %v1333, %v1699
  %1701 = vmatprep.mubr.bf16.mxu0 0
  %1702 = vmatmul.mubr.bf16.gmra.mxu0 %v1312
  %v1703 = vpop.f32.mrf.mxu0
  %v1704 = vadd.f32 %v1329, %v1703
  %v1705 = vpop.f32.mrf.mxu0
  %v1706 = vadd.f32 %v1333, %v1705
  %v1707 = vpop.f32.mrf.mxu0
  %v1708 = vadd.f32 %v1329, %v1707
  %v1709 = vpop.f32.mrf.mxu0
  %v1710 = vadd.f32 %v1333, %v1709
  %1711 = vmatprep.mubr.bf16.mxu0 0
  %1712 = vmatmul.mubr.bf16.gmra.mxu0 %v1313
  %v1713 = vpop.f32.mrf.mxu0
  %v1714 = vadd.f32 %v1329, %v1713
  %v1715 = vpop.f32.mrf.mxu0
  %v1716 = vadd.f32 %v1333, %v1715
  %v1717 = vpop.f32.mrf.mxu0
  %v1718 = vadd.f32 %v1329, %v1717
  %v1719 = vpop.f32.mrf.mxu0
  %v1720 = vadd.f32 %v1333, %v1719
  %1721 = vmatprep.mubr.bf16.mxu0 0
  %1722 = vmatmul.mubr.bf16.gmra.mxu0 %v1314
  %v1723 = vpop.f32.mrf.mxu0
  %v1724 = vadd.f32 %v1329, %v1723
  %v1725 = vpop.f32.mrf.mxu0
  %v1726 = vadd.f32 %v1333, %v1725
  %v1727 = vpop.f32.mrf.mxu0
  %v1728 = vadd.f32 %v1329, %v1727
  %v1729 = vpop.f32.mrf.mxu0
  %v1730 = vadd.f32 %v1333, %v1729
  %1731 = vmatprep.mubr.bf16.mxu0 0
  %1732 = vmatmul.mubr.bf16.gmra.mxu0 %v1315
  %v1733 = vpop.f32.mrf.mxu0
  %v1734 = vadd.f32 %v1329, %v1733
  %v1735 = vpop.f32.mrf.mxu0
  %v1736 = vadd.f32 %v1333, %v1735
  %v1737 = vpop.f32.mrf.mxu0
  %v1738 = vadd.f32 %v1329, %v1737
  %v1739 = vpop.f32.mrf.mxu0
  %v1740 = vadd.f32 %v1333, %v1739
  %1741 = vmatprep.mubr.bf16.mxu0 0
  %1742 = vmatmul.mubr.bf16.gmra.mxu0 %v1316
  %v1743 = vpop.f32.mrf.mxu0
  %v1744 = vadd.f32 %v1329, %v1743
  %v1745 = vpop.f32.mrf.mxu0
  %v1746 = vadd.f32 %v1333, %v1745
  %v1747 = vpop.f32.mrf.mxu0
  %v1748 = vadd.f32 %v1329, %v1747
  %v1749 = vpop.f32.mrf.mxu0
  %v1750 = vadd.f32 %v1333, %v1749
  %1751 = vmatprep.mubr.bf16.mxu0 0
  %1752 = vmatmul.mubr.bf16.gmra.mxu0 %v1317
  %v1753 = vpop.f32.mrf.mxu0
  %v1754 = vadd.f32 %v1329, %v1753
  %v1755 = vpop.f32.mrf.mxu0
  %v1756 = vadd.f32 %v1333, %v1755
  %v1757 = vpop.f32.mrf.mxu0
  %v1758 = vadd.f32 %v1329, %v1757
  %v1759 = vpop.f32.mrf.mxu0
  %v1760 = vadd.f32 %v1333, %v1759
  %1761 = vmatprep.mubr.bf16.mxu0 0
  %1762 = vmatmul.mubr.bf16.gmra.mxu0 %v1318
  %v1763 = vpop.f32.mrf.mxu0
  %v1764 = vadd.f32 %v1329, %v1763
  %v1765 = vpop.f32.mrf.mxu0
  %v1766 = vadd.f32 %v1333, %v1765
  %v1767 = vpop.f32.mrf.mxu0
  %v1768 = vadd.f32 %v1329, %v1767
  %v1769 = vpop.f32.mrf.mxu0
  %v1770 = vadd.f32 %v1333, %v1769
  %1771 = vmatprep.mubr.bf16.mxu0 0
  %1772 = vmatmul.mubr.bf16.gmra.mxu0 %v1319
  %v1773 = vpop.f32.mrf.mxu0
  %v1774 = vadd.f32 %v1329, %v1773
  %v1775 = vpop.f32.mrf.mxu0
  %v1776 = vadd.f32 %v1333, %v1775
  %v1777 = vpop.f32.mrf.mxu0
  %v1778 = vadd.f32 %v1329, %v1777
  %v1779 = vpop.f32.mrf.mxu0
  %v1780 = vadd.f32 %v1333, %v1779
  %1781 = vmatprep.mubr.bf16.mxu0 0
  %1782 = vmatmul.mubr.bf16.gmra.mxu0 %v1320
  %v1783 = vpop.f32.mrf.mxu0
  %v1784 = vadd.f32 %v1329, %v1783
  %v1785 = vpop.f32.mrf.mxu0
  %v1786 = vadd.f32 %v1333, %v1785
  %v1787 = vpop.f32.mrf.mxu0
  %v1788 = vadd.f32 %v1329, %v1787
  %v1789 = vpop.f32.mrf.mxu0
  %v1790 = vadd.f32 %v1333, %v1789
  %1791 = vmatprep.mubr.bf16.mxu0 0
  %1792 = vmatmul.mubr.bf16.gmra.mxu0 %v1321
  %v1793 = vpop.f32.mrf.mxu0
  %v1794 = vadd.f32 %v1329, %v1793
  %v1795 = vpop.f32.mrf.mxu0
  %v1796 = vadd.f32 %v1333, %v1795
  %v1797 = vpop.f32.mrf.mxu0
  %v1798 = vadd.f32 %v1329, %v1797
  %v1799 = vpop.f32.mrf.mxu0
  %v1800 = vadd.f32 %v1333, %v1799
  %1801 = vmatprep.mubr.bf16.mxu0 0
  %1802 = vmatmul.mubr.bf16.gmra.mxu0 %v1322
  %v1803 = vpop.f32.mrf.mxu0
  %v1804 = vadd.f32 %v1329, %v1803
  %v1805 = vpop.f32.mrf.mxu0
  %v1806 = vadd.f32 %v1333, %v1805
  %v1807 = vpop.f32.mrf.mxu0
  %v1808 = vadd.f32 %v1329, %v1807
  %v1809 = vpop.f32.mrf.mxu0
  %v1810 = vadd.f32 %v1333, %v1809
  %1811 = vmatprep.mubr.bf16.mxu0 0
  %1812 = vmatmul.mubr.bf16.gmra.mxu0 %v1323
  %v1813 = vpop.f32.mrf.mxu0
  %v1814 = vadd.f32 %v1329, %v1813
  %v1815 = vpop.f32.mrf.mxu0
  %v1816 = vadd.f32 %v1333, %v1815
  %v1817 = vpop.f32.mrf.mxu0
  %v1818 = vadd.f32 %v1329, %v1817
  %v1819 = vpop.f32.mrf.mxu0
  %v1820 = vadd.f32 %v1333, %v1819
  %1821 = vdwg.mxu0
  %1822 = vmatprep.subr.bf16.mxu0 0
  %1823 = vmatpush1.bf16.msra.mxu0 %v1444
  %1824 = vmatprep.subr.bf16.mxu0 0
  %1825 = vmatpush1.bf16.msra.mxu0 %v1441
  %1826 = vmatprep.subr.bf16.mxu0 0
  %1827 = vmatpush1.bf16.msra.mxu0 %v1438
  %1828 = vmatprep.subr.bf16.mxu0 0
  %1829 = vmatpush1.bf16.msra.mxu0 %v1435
  %1830 = vmatprep.subr.bf16.mxu0 0
  %1831 = vmatpush1.bf16.msra.mxu0 %v1432
  %1832 = vmatprep.subr.bf16.mxu0 0
  %1833 = vmatpush1.bf16.msra.mxu0 %v1429
  %1834 = vmatprep.subr.bf16.mxu0 0
  %1835 = vmatpush1.bf16.msra.mxu0 %v1426
  %1836 = vmatprep.subr.bf16.mxu0 0
  %1837 = vmatpush1.bf16.msra.mxu0 %v1423
  %1838 = vmatprep.subr.bf16.mxu0 0
  %1839 = vmatpush2.bf16.msra.mxu0 0
  %1840 = vmatprep.subr.bf16.mxu0 0
  %1841 = vmatpush2.bf16.msra.mxu0 0
  %1842 = vmatprep.subr.bf16.mxu0 0
  %1843 = vmatpush2.bf16.msra.mxu0 0
  %1844 = vmatprep.subr.bf16.mxu0 0
  %1845 = vmatpush2.bf16.msra.mxu0 0
  %1846 = vmatprep.subr.bf16.mxu0 0
  %1847 = vmatpush2.bf16.msra.mxu0 0
  %1848 = vmatprep.subr.bf16.mxu0 0
  %1849 = vmatpush2.bf16.msra.mxu0 0
  %1850 = vmatprep.subr.bf16.mxu0 0
  %1851 = vmatpush2.bf16.msra.mxu0 0
  %1852 = vmatprep.subr.bf16.mxu0 0
  %1853 = vmatpush2.bf16.msra.mxu0 0
  %1854 = vmatprep.mubr.bf16.mxu0 0
  %1855 = vmatmul.mubr.bf16.gmra.mxu0 %v1292
  %v1856 = vpop.f32.mrf.mxu0
  %v1857 = vadd.f32 %v1337, %v1856
  %v1858 = vpop.f32.mrf.mxu0
  %v1859 = vpop.f32.mrf.mxu0
  %v1860 = vadd.f32 %v1337, %v1859
  %v1861 = vpop.f32.mrf.mxu0
  %1862 = vmatprep.mubr.bf16.mxu0 0
  %1863 = vmatmul.mubr.bf16.gmra.mxu0 %v1293
  %v1864 = vpop.f32.mrf.mxu0
  %v1865 = vadd.f32 %v1337, %v1864
  %v1866 = vpop.f32.mrf.mxu0
  %v1867 = vpop.f32.mrf.mxu0
  %v1868 = vadd.f32 %v1337, %v1867
  %v1869 = vpop.f32.mrf.mxu0
  %1870 = vmatprep.mubr.bf16.mxu0 0
  %1871 = vmatmul.mubr.bf16.gmra.mxu0 %v1294
  %v1872 = vpop.f32.mrf.mxu0
  %v1873 = vadd.f32 %v1337, %v1872
  %v1874 = vpop.f32.mrf.mxu0
  %v1875 = vpop.f32.mrf.mxu0
  %v1876 = vadd.f32 %v1337, %v1875
  %v1877 = vpop.f32.mrf.mxu0
  %1878 = vmatprep.mubr.bf16.mxu0 0
  %1879 = vmatmul.mubr.bf16.gmra.mxu0 %v1295
  %v1880 = vpop.f32.mrf.mxu0
  %v1881 = vadd.f32 %v1337, %v1880
  %v1882 = vpop.f32.mrf.mxu0
  %v1883 = vpop.f32.mrf.mxu0
  %v1884 = vadd.f32 %v1337, %v1883
  %v1885 = vpop.f32.mrf.mxu0
  %1886 = vmatprep.mubr.bf16.mxu0 0
  %1887 = vmatmul.mubr.bf16.gmra.mxu0 %v1296
  %v1888 = vpop.f32.mrf.mxu0
  %v1889 = vadd.f32 %v1337, %v1888
  %v1890 = vpop.f32.mrf.mxu0
  %v1891 = vpop.f32.mrf.mxu0
  %v1892 = vadd.f32 %v1337, %v1891
  %v1893 = vpop.f32.mrf.mxu0
  %1894 = vmatprep.mubr.bf16.mxu0 0
  %1895 = vmatmul.mubr.bf16.gmra.mxu0 %v1297
  %v1896 = vpop.f32.mrf.mxu0
  %v1897 = vadd.f32 %v1337, %v1896
  %v1898 = vpop.f32.mrf.mxu0
  %v1899 = vpop.f32.mrf.mxu0
  %v1900 = vadd.f32 %v1337, %v1899
  %v1901 = vpop.f32.mrf.mxu0
  %1902 = vmatprep.mubr.bf16.mxu0 0
  %1903 = vmatmul.mubr.bf16.gmra.mxu0 %v1298
  %v1904 = vpop.f32.mrf.mxu0
  %v1905 = vadd.f32 %v1337, %v1904
  %v1906 = vpop.f32.mrf.mxu0
  %v1907 = vpop.f32.mrf.mxu0
  %v1908 = vadd.f32 %v1337, %v1907
  %v1909 = vpop.f32.mrf.mxu0
  %1910 = vmatprep.mubr.bf16.mxu0 0
  %1911 = vmatmul.mubr.bf16.gmra.mxu0 %v1299
  %v1912 = vpop.f32.mrf.mxu0
  %v1913 = vadd.f32 %v1337, %v1912
  %v1914 = vpop.f32.mrf.mxu0
  %v1915 = vpop.f32.mrf.mxu0
  %v1916 = vadd.f32 %v1337, %v1915
  %v1917 = vpop.f32.mrf.mxu0
  %1918 = vmatprep.mubr.bf16.mxu0 0
  %1919 = vmatmul.mubr.bf16.gmra.mxu0 %v1300
  %v1920 = vpop.f32.mrf.mxu0
  %v1921 = vadd.f32 %v1337, %v1920
  %v1922 = vpop.f32.mrf.mxu0
  %v1923 = vpop.f32.mrf.mxu0
  %v1924 = vadd.f32 %v1337, %v1923
  %v1925 = vpop.f32.mrf.mxu0
  %1926 = vmatprep.mubr.bf16.mxu0 0
  %1927 = vmatmul.mubr.bf16.gmra.mxu0 %v1301
  %v1928 = vpop.f32.mrf.mxu0
  %v1929 = vadd.f32 %v1337, %v1928
  %v1930 = vpop.f32.mrf.mxu0
  %v1931 = vpop.f32.mrf.mxu0
  %v1932 = vadd.f32 %v1337, %v1931
  %v1933 = vpop.f32.mrf.mxu0
  %1934 = vmatprep.mubr.bf16.mxu0 0
  %1935 = vmatmul.mubr.bf16.gmra.mxu0 %v1302
  %v1936 = vpop.f32.mrf.mxu0
  %v1937 = vadd.f32 %v1337, %v1936
  %v1938 = vpop.f32.mrf.mxu0
  %v1939 = vpop.f32.mrf.mxu0
  %v1940 = vadd.f32 %v1337, %v1939
  %v1941 = vpop.f32.mrf.mxu0
  %1942 = vmatprep.mubr.bf16.mxu0 0
  %1943 = vmatmul.mubr.bf16.gmra.mxu0 %v1303
  %v1944 = vpop.f32.mrf.mxu0
  %v1945 = vadd.f32 %v1337, %v1944
  %v1946 = vpop.f32.mrf.mxu0
  %v1947 = vpop.f32.mrf.mxu0
  %v1948 = vadd.f32 %v1337, %v1947
  %v1949 = vpop.f32.mrf.mxu0
  %1950 = vmatprep.mubr.bf16.mxu0 0
  %1951 = vmatmul.mubr.bf16.gmra.mxu0 %v1304
  %v1952 = vpop.f32.mrf.mxu0
  %v1953 = vadd.f32 %v1337, %v1952
  %v1954 = vpop.f32.mrf.mxu0
  %v1955 = vpop.f32.mrf.mxu0
  %v1956 = vadd.f32 %v1337, %v1955
  %v1957 = vpop.f32.mrf.mxu0
  %1958 = vmatprep.mubr.bf16.mxu0 0
  %1959 = vmatmul.mubr.bf16.gmra.mxu0 %v1305
  %v1960 = vpop.f32.mrf.mxu0
  %v1961 = vadd.f32 %v1337, %v1960
  %v1962 = vpop.f32.mrf.mxu0
  %v1963 = vpop.f32.mrf.mxu0
  %v1964 = vadd.f32 %v1337, %v1963
  %v1965 = vpop.f32.mrf.mxu0
  %1966 = vmatprep.mubr.bf16.mxu0 0
  %1967 = vmatmul.mubr.bf16.gmra.mxu0 %v1306
  %v1968 = vpop.f32.mrf.mxu0
  %v1969 = vadd.f32 %v1337, %v1968
  %v1970 = vpop.f32.mrf.mxu0
  %v1971 = vpop.f32.mrf.mxu0
  %v1972 = vadd.f32 %v1337, %v1971
  %v1973 = vpop.f32.mrf.mxu0
  %1974 = vmatprep.mubr.bf16.mxu0 0
  %1975 = vmatmul.mubr.bf16.gmra.mxu0 %v1307
  %v1976 = vpop.f32.mrf.mxu0
  %v1977 = vadd.f32 %v1337, %v1976
  %v1978 = vpop.f32.mrf.mxu0
  %v1979 = vpop.f32.mrf.mxu0
  %v1980 = vadd.f32 %v1337, %v1979
  %v1981 = vpop.f32.mrf.mxu0
  %1982 = vmatprep.mubr.bf16.mxu0 0
  %1983 = vmatmul.mubr.bf16.gmra.mxu0 %v1308
  %v1984 = vpop.f32.mrf.mxu0
  %v1985 = vadd.f32 %v1337, %v1984
  %v1986 = vpop.f32.mrf.mxu0
  %v1987 = vpop.f32.mrf.mxu0
  %v1988 = vadd.f32 %v1337, %v1987
  %v1989 = vpop.f32.mrf.mxu0
  %1990 = vmatprep.mubr.bf16.mxu0 0
  %1991 = vmatmul.mubr.bf16.gmra.mxu0 %v1309
  %v1992 = vpop.f32.mrf.mxu0
  %v1993 = vadd.f32 %v1337, %v1992
  %v1994 = vpop.f32.mrf.mxu0
  %v1995 = vpop.f32.mrf.mxu0
  %v1996 = vadd.f32 %v1337, %v1995
  %v1997 = vpop.f32.mrf.mxu0
  %1998 = vmatprep.mubr.bf16.mxu0 0
  %1999 = vmatmul.mubr.bf16.gmra.mxu0 %v1310
  %v2000 = vpop.f32.mrf.mxu0
  %v2001 = vadd.f32 %v1337, %v2000
  %v2002 = vpop.f32.mrf.mxu0
  %v2003 = vpop.f32.mrf.mxu0
  %v2004 = vadd.f32 %v1337, %v2003
  %v2005 = vpop.f32.mrf.mxu0
  %2006 = vmatprep.mubr.bf16.mxu0 0
  %2007 = vmatmul.mubr.bf16.gmra.mxu0 %v1311
  %v2008 = vpop.f32.mrf.mxu0
  %v2009 = vadd.f32 %v1337, %v2008
  %v2010 = vpop.f32.mrf.mxu0
  %v2011 = vpop.f32.mrf.mxu0
  %v2012 = vadd.f32 %v1337, %v2011
  %v2013 = vpop.f32.mrf.mxu0
  %2014 = vmatprep.mubr.bf16.mxu0 0
  %2015 = vmatmul.mubr.bf16.gmra.mxu0 %v1312
  %v2016 = vpop.f32.mrf.mxu0
  %v2017 = vadd.f32 %v1337, %v2016
  %v2018 = vpop.f32.mrf.mxu0
  %v2019 = vpop.f32.mrf.mxu0
  %v2020 = vadd.f32 %v1337, %v2019
  %v2021 = vpop.f32.mrf.mxu0
  %2022 = vmatprep.mubr.bf16.mxu0 0
  %2023 = vmatmul.mubr.bf16.gmra.mxu0 %v1313
  %v2024 = vpop.f32.mrf.mxu0
  %v2025 = vadd.f32 %v1337, %v2024
  %v2026 = vpop.f32.mrf.mxu0
  %v2027 = vpop.f32.mrf.mxu0
  %v2028 = vadd.f32 %v1337, %v2027
  %v2029 = vpop.f32.mrf.mxu0
  %2030 = vmatprep.mubr.bf16.mxu0 0
  %2031 = vmatmul.mubr.bf16.gmra.mxu0 %v1314
  %v2032 = vpop.f32.mrf.mxu0
  %v2033 = vadd.f32 %v1337, %v2032
  %v2034 = vpop.f32.mrf.mxu0
  %v2035 = vpop.f32.mrf.mxu0
  %v2036 = vadd.f32 %v1337, %v2035
  %v2037 = vpop.f32.mrf.mxu0
  %2038 = vmatprep.mubr.bf16.mxu0 0
  %2039 = vmatmul.mubr.bf16.gmra.mxu0 %v1315
  %v2040 = vpop.f32.mrf.mxu0
  %v2041 = vadd.f32 %v1337, %v2040
  %v2042 = vpop.f32.mrf.mxu0
  %v2043 = vpop.f32.mrf.mxu0
  %v2044 = vadd.f32 %v1337, %v2043
  %v2045 = vpop.f32.mrf.mxu0
  %2046 = vmatprep.mubr.bf16.mxu0 0
  %2047 = vmatmul.mubr.bf16.gmra.mxu0 %v1316
  %v2048 = vpop.f32.mrf.mxu0
  %v2049 = vadd.f32 %v1337, %v2048
  %v2050 = vpop.f32.mrf.mxu0
  %v2051 = vpop.f32.mrf.mxu0
  %v2052 = vadd.f32 %v1337, %v2051
  %v2053 = vpop.f32.mrf.mxu0
  %2054 = vmatprep.mubr.bf16.mxu0 0
  %2055 = vmatmul.mubr.bf16.gmra.mxu0 %v1317
  %v2056 = vpop.f32.mrf.mxu0
  %v2057 = vadd.f32 %v1337, %v2056
  %v2058 = vpop.f32.mrf.mxu0
  %v2059 = vpop.f32.mrf.mxu0
  %v2060 = vadd.f32 %v1337, %v2059
  %v2061 = vpop.f32.mrf.mxu0
  %2062 = vmatprep.mubr.bf16.mxu0 0
  %2063 = vmatmul.mubr.bf16.gmra.mxu0 %v1318
  %v2064 = vpop.f32.mrf.mxu0
  %v2065 = vadd.f32 %v1337, %v2064
  %v2066 = vpop.f32.mrf.mxu0
  %v2067 = vpop.f32.mrf.mxu0
  %v2068 = vadd.f32 %v1337, %v2067
  %v2069 = vpop.f32.mrf.mxu0
  %2070 = vmatprep.mubr.bf16.mxu0 0
  %2071 = vmatmul.mubr.bf16.gmra.mxu0 %v1319
  %v2072 = vpop.f32.mrf.mxu0
  %v2073 = vadd.f32 %v1337, %v2072
  %v2074 = vpop.f32.mrf.mxu0
  %v2075 = vpop.f32.mrf.mxu0
  %v2076 = vadd.f32 %v1337, %v2075
  %v2077 = vpop.f32.mrf.mxu0
  %2078 = vmatprep.mubr.bf16.mxu0 0
  %2079 = vmatmul.mubr.bf16.gmra.mxu0 %v1320
  %v2080 = vpop.f32.mrf.mxu0
  %v2081 = vadd.f32 %v1337, %v2080
  %v2082 = vpop.f32.mrf.mxu0
  %v2083 = vpop.f32.mrf.mxu0
  %v2084 = vadd.f32 %v1337, %v2083
  %v2085 = vpop.f32.mrf.mxu0
  %2086 = vmatprep.mubr.bf16.mxu0 0
  %2087 = vmatmul.mubr.bf16.gmra.mxu0 %v1321
  %v2088 = vpop.f32.mrf.mxu0
  %v2089 = vadd.f32 %v1337, %v2088
  %v2090 = vpop.f32.mrf.mxu0
  %v2091 = vpop.f32.mrf.mxu0
  %v2092 = vadd.f32 %v1337, %v2091
  %v2093 = vpop.f32.mrf.mxu0
  %2094 = vmatprep.mubr.bf16.mxu0 0
  %2095 = vmatmul.mubr.bf16.gmra.mxu0 %v1322
  %v2096 = vpop.f32.mrf.mxu0
  %v2097 = vadd.f32 %v1337, %v2096
  %v2098 = vpop.f32.mrf.mxu0
  %v2099 = vpop.f32.mrf.mxu0
  %v2100 = vadd.f32 %v1337, %v2099
  %v2101 = vpop.f32.mrf.mxu0
  %2102 = vmatprep.mubr.bf16.mxu0 0
  %2103 = vmatmul.mubr.bf16.gmra.mxu0 %v1323
  %v2104 = vpop.f32.mrf.mxu0
  %v2105 = vadd.f32 %v1337, %v2104
  %v2106 = vpop.f32.mrf.mxu0
  %v2107 = vpop.f32.mrf.mxu0
  %v2108 = vadd.f32 %v1337, %v2107
  %v2109 = vpop.f32.mrf.mxu0
  %2110 = vdwg.mxu0
  %v2111 = vpack.c.bf16 %v1508, %v1504
  %v2112 = vpack.c.bf16 %v1518, %v1514
  %v2113 = vpack.c.bf16 %v1528, %v1524
  %v2114 = vpack.c.bf16 %v1538, %v1534
  %v2115 = vpack.c.bf16 %v1548, %v1544
  %v2116 = vpack.c.bf16 %v1558, %v1554
  %v2117 = vpack.c.bf16 %v1568, %v1564
  %v2118 = vpack.c.bf16 %v1578, %v1574
  %v2119 = vpack.c.bf16 %v1588, %v1584
  %v2120 = vpack.c.bf16 %v1598, %v1594
  %v2121 = vpack.c.bf16 %v1608, %v1604
  %v2122 = vpack.c.bf16 %v1618, %v1614
  %v2123 = vpack.c.bf16 %v1628, %v1624
  %v2124 = vpack.c.bf16 %v1638, %v1634
  %v2125 = vpack.c.bf16 %v1648, %v1644
  %v2126 = vpack.c.bf16 %v1658, %v1654
  %v2127 = vpack.c.bf16 %v1668, %v1664
  %v2128 = vpack.c.bf16 %v1678, %v1674
  %v2129 = vpack.c.bf16 %v1688, %v1684
  %v2130 = vpack.c.bf16 %v1698, %v1694
  %v2131 = vpack.c.bf16 %v1708, %v1704
  %v2132 = vpack.c.bf16 %v1718, %v1714
  %v2133 = vpack.c.bf16 %v1728, %v1724
  %v2134 = vpack.c.bf16 %v1738, %v1734
  %v2135 = vpack.c.bf16 %v1748, %v1744
  %v2136 = vpack.c.bf16 %v1758, %v1754
  %v2137 = vpack.c.bf16 %v1768, %v1764
  %v2138 = vpack.c.bf16 %v1778, %v1774
  %v2139 = vpack.c.bf16 %v1788, %v1784
  %v2140 = vpack.c.bf16 %v1798, %v1794
  %v2141 = vpack.c.bf16 %v1808, %v1804
  %v2142 = vpack.c.bf16 %v1818, %v1814
  %v2143 = vpack.c.bf16 %v1510, %v1506
  %v2144 = vpack.c.bf16 %v1520, %v1516
  %v2145 = vpack.c.bf16 %v1530, %v1526
  %v2146 = vpack.c.bf16 %v1540, %v1536
  %v2147 = vpack.c.bf16 %v1550, %v1546
  %v2148 = vpack.c.bf16 %v1560, %v1556
  %v2149 = vpack.c.bf16 %v1570, %v1566
  %v2150 = vpack.c.bf16 %v1580, %v1576
  %v2151 = vpack.c.bf16 %v1590, %v1586
  %v2152 = vpack.c.bf16 %v1600, %v1596
  %v2153 = vpack.c.bf16 %v1610, %v1606
  %v2154 = vpack.c.bf16 %v1620, %v1616
  %v2155 = vpack.c.bf16 %v1630, %v1626
  %v2156 = vpack.c.bf16 %v1640, %v1636
  %v2157 = vpack.c.bf16 %v1650, %v1646
  %v2158 = vpack.c.bf16 %v1660, %v1656
  %v2159 = vpack.c.bf16 %v1670, %v1666
  %v2160 = vpack.c.bf16 %v1680, %v1676
  %v2161 = vpack.c.bf16 %v1690, %v1686
  %v2162 = vpack.c.bf16 %v1700, %v1696
  %v2163 = vpack.c.bf16 %v1710, %v1706
  %v2164 = vpack.c.bf16 %v1720, %v1716
  %v2165 = vpack.c.bf16 %v1730, %v1726
  %v2166 = vpack.c.bf16 %v1740, %v1736
  %v2167 = vpack.c.bf16 %v1750, %v1746
  %v2168 = vpack.c.bf16 %v1760, %v1756
  %v2169 = vpack.c.bf16 %v1770, %v1766
  %v2170 = vpack.c.bf16 %v1780, %v1776
  %v2171 = vpack.c.bf16 %v1790, %v1786
  %v2172 = vpack.c.bf16 %v1800, %v1796
  %v2173 = vpack.c.bf16 %v1810, %v1806
  %v2174 = vpack.c.bf16 %v1820, %v1816
  %2175 = vmatprep.subr.bf16.mxu0 0
  %2176 = vmatpush1.bf16.xpose.msra.mxu0 %v2150
  %2177 = vmatprep.subr.bf16.mxu0 0
  %2178 = vmatpush1.bf16.xpose.msra.mxu0 %v2149
  %2179 = vmatprep.subr.bf16.mxu0 0
  %2180 = vmatpush1.bf16.xpose.msra.mxu0 %v2148
  %2181 = vmatprep.subr.bf16.mxu0 0
  %2182 = vmatpush1.bf16.xpose.msra.mxu0 %v2147
  %2183 = vmatprep.subr.bf16.mxu0 0
  %2184 = vmatpush1.bf16.xpose.msra.mxu0 %v2146
  %2185 = vmatprep.subr.bf16.mxu0 0
  %2186 = vmatpush1.bf16.xpose.msra.mxu0 %v2145
  %2187 = vmatprep.subr.bf16.mxu0 0
  %2188 = vmatpush1.bf16.xpose.msra.mxu0 %v2144
  %2189 = vmatprep.subr.bf16.mxu0 0
  %2190 = vmatpush1.bf16.xpose.msra.mxu0 %v2143
  %2191 = vmatprep.subr.bf16.mxu0 0
  %2192 = vmatpush2.bf16.xpose.msra.mxu0 %v2158
  %2193 = vmatprep.subr.bf16.mxu0 0
  %2194 = vmatpush2.bf16.xpose.msra.mxu0 %v2157
  %2195 = vmatprep.subr.bf16.mxu0 0
  %2196 = vmatpush2.bf16.xpose.msra.mxu0 %v2156
  %2197 = vmatprep.subr.bf16.mxu0 0
  %2198 = vmatpush2.bf16.xpose.msra.mxu0 %v2155
  %2199 = vmatprep.subr.bf16.mxu0 0
  %2200 = vmatpush2.bf16.xpose.msra.mxu0 %v2154
  %2201 = vmatprep.subr.bf16.mxu0 0
  %2202 = vmatpush2.bf16.xpose.msra.mxu0 %v2153
  %2203 = vmatprep.subr.bf16.mxu0 0
  %2204 = vmatpush2.bf16.xpose.msra.mxu0 %v2152
  %2205 = vmatprep.subr.bf16.mxu0 0
  %2206 = vmatpush2.bf16.xpose.msra.mxu0 %v2151
  %2207 = vmatprep.mubr.bf16.mxu0 0
  %2208 = vmatmul.mubr.bf16.gmra.mxu0 %v2111
  %v2209 = vpop.f32.mrf.mxu0
  %v2210 = vadd.f32 0.0, %v2209
  %v2211 = vpop.f32.mrf.mxu0
  %v2212 = vadd.f32 0.0, %v2211
  %v2213 = vpop.f32.mrf.mxu0
  %v2214 = vadd.f32 0.0, %v2213
  %v2215 = vpop.f32.mrf.mxu0
  %v2216 = vadd.f32 0.0, %v2215
  %2217 = vmatprep.mubr.bf16.mxu0 0
  %2218 = vmatmul.mubr.bf16.gmra.mxu0 %v2112
  %v2219 = vpop.f32.mrf.mxu0
  %v2220 = vadd.f32 0.0, %v2219
  %v2221 = vpop.f32.mrf.mxu0
  %v2222 = vadd.f32 0.0, %v2221
  %v2223 = vpop.f32.mrf.mxu0
  %v2224 = vadd.f32 0.0, %v2223
  %v2225 = vpop.f32.mrf.mxu0
  %v2226 = vadd.f32 0.0, %v2225
  %2227 = vmatprep.mubr.bf16.mxu0 0
  %2228 = vmatmul.mubr.bf16.gmra.mxu0 %v2113
  %v2229 = vpop.f32.mrf.mxu0
  %v2230 = vadd.f32 0.0, %v2229
  %v2231 = vpop.f32.mrf.mxu0
  %v2232 = vadd.f32 0.0, %v2231
  %v2233 = vpop.f32.mrf.mxu0
  %v2234 = vadd.f32 0.0, %v2233
  %v2235 = vpop.f32.mrf.mxu0
  %v2236 = vadd.f32 0.0, %v2235
  %2237 = vmatprep.mubr.bf16.mxu0 0
  %2238 = vmatmul.mubr.bf16.gmra.mxu0 %v2114
  %v2239 = vpop.f32.mrf.mxu0
  %v2240 = vadd.f32 0.0, %v2239
  %v2241 = vpop.f32.mrf.mxu0
  %v2242 = vadd.f32 0.0, %v2241
  %v2243 = vpop.f32.mrf.mxu0
  %v2244 = vadd.f32 0.0, %v2243
  %v2245 = vpop.f32.mrf.mxu0
  %v2246 = vadd.f32 0.0, %v2245
  %2247 = vmatprep.mubr.bf16.mxu0 0
  %2248 = vmatmul.mubr.bf16.gmra.mxu0 %v2115
  %v2249 = vpop.f32.mrf.mxu0
  %v2250 = vadd.f32 0.0, %v2249
  %v2251 = vpop.f32.mrf.mxu0
  %v2252 = vadd.f32 0.0, %v2251
  %v2253 = vpop.f32.mrf.mxu0
  %v2254 = vadd.f32 0.0, %v2253
  %v2255 = vpop.f32.mrf.mxu0
  %v2256 = vadd.f32 0.0, %v2255
  %2257 = vmatprep.mubr.bf16.mxu0 0
  %2258 = vmatmul.mubr.bf16.gmra.mxu0 %v2116
  %v2259 = vpop.f32.mrf.mxu0
  %v2260 = vadd.f32 0.0, %v2259
  %v2261 = vpop.f32.mrf.mxu0
  %v2262 = vadd.f32 0.0, %v2261
  %v2263 = vpop.f32.mrf.mxu0
  %v2264 = vadd.f32 0.0, %v2263
  %v2265 = vpop.f32.mrf.mxu0
  %v2266 = vadd.f32 0.0, %v2265
  %2267 = vmatprep.mubr.bf16.mxu0 0
  %2268 = vmatmul.mubr.bf16.gmra.mxu0 %v2117
  %v2269 = vpop.f32.mrf.mxu0
  %v2270 = vadd.f32 0.0, %v2269
  %v2271 = vpop.f32.mrf.mxu0
  %v2272 = vadd.f32 0.0, %v2271
  %v2273 = vpop.f32.mrf.mxu0
  %v2274 = vadd.f32 0.0, %v2273
  %v2275 = vpop.f32.mrf.mxu0
  %v2276 = vadd.f32 0.0, %v2275
  %2277 = vmatprep.mubr.bf16.mxu0 0
  %2278 = vmatmul.mubr.bf16.gmra.mxu0 %v2118
  %v2279 = vpop.f32.mrf.mxu0
  %v2280 = vadd.f32 0.0, %v2279
  %v2281 = vpop.f32.mrf.mxu0
  %v2282 = vadd.f32 0.0, %v2281
  %v2283 = vpop.f32.mrf.mxu0
  %v2284 = vadd.f32 0.0, %v2283
  %v2285 = vpop.f32.mrf.mxu0
  %v2286 = vadd.f32 0.0, %v2285
  %2287 = vmatprep.mubr.bf16.mxu0 0
  %2288 = vmatmul.mubr.bf16.gmra.mxu0 %v2119
  %v2289 = vpop.f32.mrf.mxu0
  %v2290 = vadd.f32 0.0, %v2289
  %v2291 = vpop.f32.mrf.mxu0
  %v2292 = vadd.f32 0.0, %v2291
  %v2293 = vpop.f32.mrf.mxu0
  %v2294 = vadd.f32 0.0, %v2293
  %v2295 = vpop.f32.mrf.mxu0
  %v2296 = vadd.f32 0.0, %v2295
  %2297 = vmatprep.mubr.bf16.mxu0 0
  %2298 = vmatmul.mubr.bf16.gmra.mxu0 %v2120
  %v2299 = vpop.f32.mrf.mxu0
  %v2300 = vadd.f32 0.0, %v2299
  %v2301 = vpop.f32.mrf.mxu0
  %v2302 = vadd.f32 0.0, %v2301
  %v2303 = vpop.f32.mrf.mxu0
  %v2304 = vadd.f32 0.0, %v2303
  %v2305 = vpop.f32.mrf.mxu0
  %v2306 = vadd.f32 0.0, %v2305
  %2307 = vmatprep.mubr.bf16.mxu0 0
  %2308 = vmatmul.mubr.bf16.gmra.mxu0 %v2121
  %v2309 = vpop.f32.mrf.mxu0
  %v2310 = vadd.f32 0.0, %v2309
  %v2311 = vpop.f32.mrf.mxu0
  %v2312 = vadd.f32 0.0, %v2311
  %v2313 = vpop.f32.mrf.mxu0
  %v2314 = vadd.f32 0.0, %v2313
  %v2315 = vpop.f32.mrf.mxu0
  %v2316 = vadd.f32 0.0, %v2315
  %2317 = vmatprep.mubr.bf16.mxu0 0
  %2318 = vmatmul.mubr.bf16.gmra.mxu0 %v2122
  %v2319 = vpop.f32.mrf.mxu0
  %v2320 = vadd.f32 0.0, %v2319
  %v2321 = vpop.f32.mrf.mxu0
  %v2322 = vadd.f32 0.0, %v2321
  %v2323 = vpop.f32.mrf.mxu0
  %v2324 = vadd.f32 0.0, %v2323
  %v2325 = vpop.f32.mrf.mxu0
  %v2326 = vadd.f32 0.0, %v2325
  %2327 = vmatprep.mubr.bf16.mxu0 0
  %2328 = vmatmul.mubr.bf16.gmra.mxu0 %v2123
  %v2329 = vpop.f32.mrf.mxu0
  %v2330 = vadd.f32 0.0, %v2329
  %v2331 = vpop.f32.mrf.mxu0
  %v2332 = vadd.f32 0.0, %v2331
  %v2333 = vpop.f32.mrf.mxu0
  %v2334 = vadd.f32 0.0, %v2333
  %v2335 = vpop.f32.mrf.mxu0
  %v2336 = vadd.f32 0.0, %v2335
  %2337 = vmatprep.mubr.bf16.mxu0 0
  %2338 = vmatmul.mubr.bf16.gmra.mxu0 %v2124
  %v2339 = vpop.f32.mrf.mxu0
  %v2340 = vadd.f32 0.0, %v2339
  %v2341 = vpop.f32.mrf.mxu0
  %v2342 = vadd.f32 0.0, %v2341
  %v2343 = vpop.f32.mrf.mxu0
  %v2344 = vadd.f32 0.0, %v2343
  %v2345 = vpop.f32.mrf.mxu0
  %v2346 = vadd.f32 0.0, %v2345
  %2347 = vmatprep.mubr.bf16.mxu0 0
  %2348 = vmatmul.mubr.bf16.gmra.mxu0 %v2125
  %v2349 = vpop.f32.mrf.mxu0
  %v2350 = vadd.f32 0.0, %v2349
  %v2351 = vpop.f32.mrf.mxu0
  %v2352 = vadd.f32 0.0, %v2351
  %v2353 = vpop.f32.mrf.mxu0
  %v2354 = vadd.f32 0.0, %v2353
  %v2355 = vpop.f32.mrf.mxu0
  %v2356 = vadd.f32 0.0, %v2355
  %2357 = vmatprep.mubr.bf16.mxu0 0
  %2358 = vmatmul.mubr.bf16.gmra.mxu0 %v2126
  %v2359 = vpop.f32.mrf.mxu0
  %v2360 = vadd.f32 0.0, %v2359
  %v2361 = vpop.f32.mrf.mxu0
  %v2362 = vadd.f32 0.0, %v2361
  %v2363 = vpop.f32.mrf.mxu0
  %v2364 = vadd.f32 0.0, %v2363
  %v2365 = vpop.f32.mrf.mxu0
  %v2366 = vadd.f32 0.0, %v2365
  %2367 = vmatprep.mubr.bf16.mxu0 0
  %2368 = vmatmul.mubr.bf16.gmra.mxu0 %v2127
  %v2369 = vpop.f32.mrf.mxu0
  %v2370 = vadd.f32 0.0, %v2369
  %v2371 = vpop.f32.mrf.mxu0
  %v2372 = vadd.f32 0.0, %v2371
  %v2373 = vpop.f32.mrf.mxu0
  %v2374 = vadd.f32 0.0, %v2373
  %v2375 = vpop.f32.mrf.mxu0
  %v2376 = vadd.f32 0.0, %v2375
  %2377 = vmatprep.mubr.bf16.mxu0 0
  %2378 = vmatmul.mubr.bf16.gmra.mxu0 %v2128
  %v2379 = vpop.f32.mrf.mxu0
  %v2380 = vadd.f32 0.0, %v2379
  %v2381 = vpop.f32.mrf.mxu0
  %v2382 = vadd.f32 0.0, %v2381
  %v2383 = vpop.f32.mrf.mxu0
  %v2384 = vadd.f32 0.0, %v2383
  %v2385 = vpop.f32.mrf.mxu0
  %v2386 = vadd.f32 0.0, %v2385
  %2387 = vmatprep.mubr.bf16.mxu0 0
  %2388 = vmatmul.mubr.bf16.gmra.mxu0 %v2129
  %v2389 = vpop.f32.mrf.mxu0
  %v2390 = vadd.f32 0.0, %v2389
  %v2391 = vpop.f32.mrf.mxu0
  %v2392 = vadd.f32 0.0, %v2391
  %v2393 = vpop.f32.mrf.mxu0
  %v2394 = vadd.f32 0.0, %v2393
  %v2395 = vpop.f32.mrf.mxu0
  %v2396 = vadd.f32 0.0, %v2395
  %2397 = vmatprep.mubr.bf16.mxu0 0
  %2398 = vmatmul.mubr.bf16.gmra.mxu0 %v2130
  %v2399 = vpop.f32.mrf.mxu0
  %v2400 = vadd.f32 0.0, %v2399
  %v2401 = vpop.f32.mrf.mxu0
  %v2402 = vadd.f32 0.0, %v2401
  %v2403 = vpop.f32.mrf.mxu0
  %v2404 = vadd.f32 0.0, %v2403
  %v2405 = vpop.f32.mrf.mxu0
  %v2406 = vadd.f32 0.0, %v2405
  %2407 = vmatprep.mubr.bf16.mxu0 0
  %2408 = vmatmul.mubr.bf16.gmra.mxu0 %v2131
  %v2409 = vpop.f32.mrf.mxu0
  %v2410 = vadd.f32 0.0, %v2409
  %v2411 = vpop.f32.mrf.mxu0
  %v2412 = vadd.f32 0.0, %v2411
  %v2413 = vpop.f32.mrf.mxu0
  %v2414 = vadd.f32 0.0, %v2413
  %v2415 = vpop.f32.mrf.mxu0
  %v2416 = vadd.f32 0.0, %v2415
  %2417 = vmatprep.mubr.bf16.mxu0 0
  %2418 = vmatmul.mubr.bf16.gmra.mxu0 %v2132
  %v2419 = vpop.f32.mrf.mxu0
  %v2420 = vadd.f32 0.0, %v2419
  %v2421 = vpop.f32.mrf.mxu0
  %v2422 = vadd.f32 0.0, %v2421
  %v2423 = vpop.f32.mrf.mxu0
  %v2424 = vadd.f32 0.0, %v2423
  %v2425 = vpop.f32.mrf.mxu0
  %v2426 = vadd.f32 0.0, %v2425
  %2427 = vmatprep.mubr.bf16.mxu0 0
  %2428 = vmatmul.mubr.bf16.gmra.mxu0 %v2133
  %v2429 = vpop.f32.mrf.mxu0
  %v2430 = vadd.f32 0.0, %v2429
  %v2431 = vpop.f32.mrf.mxu0
  %v2432 = vadd.f32 0.0, %v2431
  %v2433 = vpop.f32.mrf.mxu0
  %v2434 = vadd.f32 0.0, %v2433
  %v2435 = vpop.f32.mrf.mxu0
  %v2436 = vadd.f32 0.0, %v2435
  %2437 = vmatprep.mubr.bf16.mxu0 0
  %2438 = vmatmul.mubr.bf16.gmra.mxu0 %v2134
  %v2439 = vpop.f32.mrf.mxu0
  %v2440 = vadd.f32 0.0, %v2439
  %v2441 = vpop.f32.mrf.mxu0
  %v2442 = vadd.f32 0.0, %v2441
  %v2443 = vpop.f32.mrf.mxu0
  %v2444 = vadd.f32 0.0, %v2443
  %v2445 = vpop.f32.mrf.mxu0
  %v2446 = vadd.f32 0.0, %v2445
  %2447 = vmatprep.mubr.bf16.mxu0 0
  %2448 = vmatmul.mubr.bf16.gmra.mxu0 %v2135
  %v2449 = vpop.f32.mrf.mxu0
  %v2450 = vadd.f32 0.0, %v2449
  %v2451 = vpop.f32.mrf.mxu0
  %v2452 = vadd.f32 0.0, %v2451
  %v2453 = vpop.f32.mrf.mxu0
  %v2454 = vadd.f32 0.0, %v2453
  %v2455 = vpop.f32.mrf.mxu0
  %v2456 = vadd.f32 0.0, %v2455
  %2457 = vmatprep.mubr.bf16.mxu0 0
  %2458 = vmatmul.mubr.bf16.gmra.mxu0 %v2136
  %v2459 = vpop.f32.mrf.mxu0
  %v2460 = vadd.f32 0.0, %v2459
  %v2461 = vpop.f32.mrf.mxu0
  %v2462 = vadd.f32 0.0, %v2461
  %v2463 = vpop.f32.mrf.mxu0
  %v2464 = vadd.f32 0.0, %v2463
  %v2465 = vpop.f32.mrf.mxu0
  %v2466 = vadd.f32 0.0, %v2465
  %2467 = vmatprep.mubr.bf16.mxu0 0
  %2468 = vmatmul.mubr.bf16.gmra.mxu0 %v2137
  %v2469 = vpop.f32.mrf.mxu0
  %v2470 = vadd.f32 0.0, %v2469
  %v2471 = vpop.f32.mrf.mxu0
  %v2472 = vadd.f32 0.0, %v2471
  %v2473 = vpop.f32.mrf.mxu0
  %v2474 = vadd.f32 0.0, %v2473
  %v2475 = vpop.f32.mrf.mxu0
  %v2476 = vadd.f32 0.0, %v2475
  %2477 = vmatprep.mubr.bf16.mxu0 0
  %2478 = vmatmul.mubr.bf16.gmra.mxu0 %v2138
  %v2479 = vpop.f32.mrf.mxu0
  %v2480 = vadd.f32 0.0, %v2479
  %v2481 = vpop.f32.mrf.mxu0
  %v2482 = vadd.f32 0.0, %v2481
  %v2483 = vpop.f32.mrf.mxu0
  %v2484 = vadd.f32 0.0, %v2483
  %v2485 = vpop.f32.mrf.mxu0
  %v2486 = vadd.f32 0.0, %v2485
  %2487 = vmatprep.mubr.bf16.mxu0 0
  %2488 = vmatmul.mubr.bf16.gmra.mxu0 %v2139
  %v2489 = vpop.f32.mrf.mxu0
  %v2490 = vadd.f32 0.0, %v2489
  %v2491 = vpop.f32.mrf.mxu0
  %v2492 = vadd.f32 0.0, %v2491
  %v2493 = vpop.f32.mrf.mxu0
  %v2494 = vadd.f32 0.0, %v2493
  %v2495 = vpop.f32.mrf.mxu0
  %v2496 = vadd.f32 0.0, %v2495
  %2497 = vmatprep.mubr.bf16.mxu0 0
  %2498 = vmatmul.mubr.bf16.gmra.mxu0 %v2140
  %v2499 = vpop.f32.mrf.mxu0
  %v2500 = vadd.f32 0.0, %v2499
  %v2501 = vpop.f32.mrf.mxu0
  %v2502 = vadd.f32 0.0, %v2501
  %v2503 = vpop.f32.mrf.mxu0
  %v2504 = vadd.f32 0.0, %v2503
  %v2505 = vpop.f32.mrf.mxu0
  %v2506 = vadd.f32 0.0, %v2505
  %2507 = vmatprep.mubr.bf16.mxu0 0
  %2508 = vmatmul.mubr.bf16.gmra.mxu0 %v2141
  %v2509 = vpop.f32.mrf.mxu0
  %v2510 = vadd.f32 0.0, %v2509
  %v2511 = vpop.f32.mrf.mxu0
  %v2512 = vadd.f32 0.0, %v2511
  %v2513 = vpop.f32.mrf.mxu0
  %v2514 = vadd.f32 0.0, %v2513
  %v2515 = vpop.f32.mrf.mxu0
  %v2516 = vadd.f32 0.0, %v2515
  %2517 = vmatprep.mubr.bf16.mxu0 0
  %2518 = vmatmul.mubr.bf16.gmra.mxu0 %v2142
  %v2519 = vpop.f32.mrf.mxu0
  %v2520 = vadd.f32 0.0, %v2519
  %v2521 = vpop.f32.mrf.mxu0
  %v2522 = vadd.f32 0.0, %v2521
  %v2523 = vpop.f32.mrf.mxu0
  %v2524 = vadd.f32 0.0, %v2523
  %v2525 = vpop.f32.mrf.mxu0
  %v2526 = vadd.f32 0.0, %v2525
  %2527 = vdwg.mxu0
  %2528 = vmatprep.subr.bf16.mxu0 0
  %2529 = vmatpush1.bf16.xpose.msra.mxu0 %v2166
  %2530 = vmatprep.subr.bf16.mxu0 0
  %2531 = vmatpush1.bf16.xpose.msra.mxu0 %v2165
  %2532 = vmatprep.subr.bf16.mxu0 0
  %2533 = vmatpush1.bf16.xpose.msra.mxu0 %v2164
  %2534 = vmatprep.subr.bf16.mxu0 0
  %2535 = vmatpush1.bf16.xpose.msra.mxu0 %v2163
  %2536 = vmatprep.subr.bf16.mxu0 0
  %2537 = vmatpush1.bf16.xpose.msra.mxu0 %v2162
  %2538 = vmatprep.subr.bf16.mxu0 0
  %2539 = vmatpush1.bf16.xpose.msra.mxu0 %v2161
  %2540 = vmatprep.subr.bf16.mxu0 0
  %2541 = vmatpush1.bf16.xpose.msra.mxu0 %v2160
  %2542 = vmatprep.subr.bf16.mxu0 0
  %2543 = vmatpush1.bf16.xpose.msra.mxu0 %v2159
  %2544 = vmatprep.subr.bf16.mxu0 0
  %2545 = vmatpush2.bf16.xpose.msra.mxu0 %v2174
  %2546 = vmatprep.subr.bf16.mxu0 0
  %2547 = vmatpush2.bf16.xpose.msra.mxu0 %v2173
  %2548 = vmatprep.subr.bf16.mxu0 0
  %2549 = vmatpush2.bf16.xpose.msra.mxu0 %v2172
  %2550 = vmatprep.subr.bf16.mxu0 0
  %2551 = vmatpush2.bf16.xpose.msra.mxu0 %v2171
  %2552 = vmatprep.subr.bf16.mxu0 0
  %2553 = vmatpush2.bf16.xpose.msra.mxu0 %v2170
  %2554 = vmatprep.subr.bf16.mxu0 0
  %2555 = vmatpush2.bf16.xpose.msra.mxu0 %v2169
  %2556 = vmatprep.subr.bf16.mxu0 0
  %2557 = vmatpush2.bf16.xpose.msra.mxu0 %v2168
  %2558 = vmatprep.subr.bf16.mxu0 0
  %2559 = vmatpush2.bf16.xpose.msra.mxu0 %v2167
  %2560 = vmatprep.mubr.bf16.mxu0 0
  %2561 = vmatmul.mubr.bf16.gmra.mxu0 %v2111
  %v2562 = vpop.f32.mrf.mxu0
  %v2563 = vadd.f32 0.0, %v2562
  %v2564 = vpop.f32.mrf.mxu0
  %v2565 = vadd.f32 0.0, %v2564
  %v2566 = vpop.f32.mrf.mxu0
  %v2567 = vadd.f32 0.0, %v2566
  %v2568 = vpop.f32.mrf.mxu0
  %v2569 = vadd.f32 0.0, %v2568
  %2570 = vmatprep.mubr.bf16.mxu0 0
  %2571 = vmatmul.mubr.bf16.gmra.mxu0 %v2112
  %v2572 = vpop.f32.mrf.mxu0
  %v2573 = vadd.f32 0.0, %v2572
  %v2574 = vpop.f32.mrf.mxu0
  %v2575 = vadd.f32 0.0, %v2574
  %v2576 = vpop.f32.mrf.mxu0
  %v2577 = vadd.f32 0.0, %v2576
  %v2578 = vpop.f32.mrf.mxu0
  %v2579 = vadd.f32 0.0, %v2578
  %2580 = vmatprep.mubr.bf16.mxu0 0
  %2581 = vmatmul.mubr.bf16.gmra.mxu0 %v2113
  %v2582 = vpop.f32.mrf.mxu0
  %v2583 = vadd.f32 0.0, %v2582
  %v2584 = vpop.f32.mrf.mxu0
  %v2585 = vadd.f32 0.0, %v2584
  %v2586 = vpop.f32.mrf.mxu0
  %v2587 = vadd.f32 0.0, %v2586
  %v2588 = vpop.f32.mrf.mxu0
  %v2589 = vadd.f32 0.0, %v2588
  %2590 = vmatprep.mubr.bf16.mxu0 0
  %2591 = vmatmul.mubr.bf16.gmra.mxu0 %v2114
  %v2592 = vpop.f32.mrf.mxu0
  %v2593 = vadd.f32 0.0, %v2592
  %v2594 = vpop.f32.mrf.mxu0
  %v2595 = vadd.f32 0.0, %v2594
  %v2596 = vpop.f32.mrf.mxu0
  %v2597 = vadd.f32 0.0, %v2596
  %v2598 = vpop.f32.mrf.mxu0
  %v2599 = vadd.f32 0.0, %v2598
  %2600 = vmatprep.mubr.bf16.mxu0 0
  %2601 = vmatmul.mubr.bf16.gmra.mxu0 %v2115
  %v2602 = vpop.f32.mrf.mxu0
  %v2603 = vadd.f32 0.0, %v2602
  %v2604 = vpop.f32.mrf.mxu0
  %v2605 = vadd.f32 0.0, %v2604
  %v2606 = vpop.f32.mrf.mxu0
  %v2607 = vadd.f32 0.0, %v2606
  %v2608 = vpop.f32.mrf.mxu0
  %v2609 = vadd.f32 0.0, %v2608
  %2610 = vmatprep.mubr.bf16.mxu0 0
  %2611 = vmatmul.mubr.bf16.gmra.mxu0 %v2116
  %v2612 = vpop.f32.mrf.mxu0
  %v2613 = vadd.f32 0.0, %v2612
  %v2614 = vpop.f32.mrf.mxu0
  %v2615 = vadd.f32 0.0, %v2614
  %v2616 = vpop.f32.mrf.mxu0
  %v2617 = vadd.f32 0.0, %v2616
  %v2618 = vpop.f32.mrf.mxu0
  %v2619 = vadd.f32 0.0, %v2618
  %2620 = vmatprep.mubr.bf16.mxu0 0
  %2621 = vmatmul.mubr.bf16.gmra.mxu0 %v2117
  %v2622 = vpop.f32.mrf.mxu0
  %v2623 = vadd.f32 0.0, %v2622
  %v2624 = vpop.f32.mrf.mxu0
  %v2625 = vadd.f32 0.0, %v2624
  %v2626 = vpop.f32.mrf.mxu0
  %v2627 = vadd.f32 0.0, %v2626
  %v2628 = vpop.f32.mrf.mxu0
  %v2629 = vadd.f32 0.0, %v2628
  %2630 = vmatprep.mubr.bf16.mxu0 0
  %2631 = vmatmul.mubr.bf16.gmra.mxu0 %v2118
  %v2632 = vpop.f32.mrf.mxu0
  %v2633 = vadd.f32 0.0, %v2632
  %v2634 = vpop.f32.mrf.mxu0
  %v2635 = vadd.f32 0.0, %v2634
  %v2636 = vpop.f32.mrf.mxu0
  %v2637 = vadd.f32 0.0, %v2636
  %v2638 = vpop.f32.mrf.mxu0
  %v2639 = vadd.f32 0.0, %v2638
  %2640 = vmatprep.mubr.bf16.mxu0 0
  %2641 = vmatmul.mubr.bf16.gmra.mxu0 %v2119
  %v2642 = vpop.f32.mrf.mxu0
  %v2643 = vadd.f32 0.0, %v2642
  %v2644 = vpop.f32.mrf.mxu0
  %v2645 = vadd.f32 0.0, %v2644
  %v2646 = vpop.f32.mrf.mxu0
  %v2647 = vadd.f32 0.0, %v2646
  %v2648 = vpop.f32.mrf.mxu0
  %v2649 = vadd.f32 0.0, %v2648
  %2650 = vmatprep.mubr.bf16.mxu0 0
  %2651 = vmatmul.mubr.bf16.gmra.mxu0 %v2120
  %v2652 = vpop.f32.mrf.mxu0
  %v2653 = vadd.f32 0.0, %v2652
  %v2654 = vpop.f32.mrf.mxu0
  %v2655 = vadd.f32 0.0, %v2654
  %v2656 = vpop.f32.mrf.mxu0
  %v2657 = vadd.f32 0.0, %v2656
  %v2658 = vpop.f32.mrf.mxu0
  %v2659 = vadd.f32 0.0, %v2658
  %2660 = vmatprep.mubr.bf16.mxu0 0
  %2661 = vmatmul.mubr.bf16.gmra.mxu0 %v2121
  %v2662 = vpop.f32.mrf.mxu0
  %v2663 = vadd.f32 0.0, %v2662
  %v2664 = vpop.f32.mrf.mxu0
  %v2665 = vadd.f32 0.0, %v2664
  %v2666 = vpop.f32.mrf.mxu0
  %v2667 = vadd.f32 0.0, %v2666
  %v2668 = vpop.f32.mrf.mxu0
  %v2669 = vadd.f32 0.0, %v2668
  %2670 = vmatprep.mubr.bf16.mxu0 0
  %2671 = vmatmul.mubr.bf16.gmra.mxu0 %v2122
  %v2672 = vpop.f32.mrf.mxu0
  %v2673 = vadd.f32 0.0, %v2672
  %v2674 = vpop.f32.mrf.mxu0
  %v2675 = vadd.f32 0.0, %v2674
  %v2676 = vpop.f32.mrf.mxu0
  %v2677 = vadd.f32 0.0, %v2676
  %v2678 = vpop.f32.mrf.mxu0
  %v2679 = vadd.f32 0.0, %v2678
  %2680 = vmatprep.mubr.bf16.mxu0 0
  %2681 = vmatmul.mubr.bf16.gmra.mxu0 %v2123
  %v2682 = vpop.f32.mrf.mxu0
  %v2683 = vadd.f32 0.0, %v2682
  %v2684 = vpop.f32.mrf.mxu0
  %v2685 = vadd.f32 0.0, %v2684
  %v2686 = vpop.f32.mrf.mxu0
  %v2687 = vadd.f32 0.0, %v2686
  %v2688 = vpop.f32.mrf.mxu0
  %v2689 = vadd.f32 0.0, %v2688
  %2690 = vmatprep.mubr.bf16.mxu0 0
  %2691 = vmatmul.mubr.bf16.gmra.mxu0 %v2124
  %v2692 = vpop.f32.mrf.mxu0
  %v2693 = vadd.f32 0.0, %v2692
  %v2694 = vpop.f32.mrf.mxu0
  %v2695 = vadd.f32 0.0, %v2694
  %v2696 = vpop.f32.mrf.mxu0
  %v2697 = vadd.f32 0.0, %v2696
  %v2698 = vpop.f32.mrf.mxu0
  %v2699 = vadd.f32 0.0, %v2698
  %2700 = vmatprep.mubr.bf16.mxu0 0
  %2701 = vmatmul.mubr.bf16.gmra.mxu0 %v2125
  %v2702 = vpop.f32.mrf.mxu0
  %v2703 = vadd.f32 0.0, %v2702
  %v2704 = vpop.f32.mrf.mxu0
  %v2705 = vadd.f32 0.0, %v2704
  %v2706 = vpop.f32.mrf.mxu0
  %v2707 = vadd.f32 0.0, %v2706
  %v2708 = vpop.f32.mrf.mxu0
  %v2709 = vadd.f32 0.0, %v2708
  %2710 = vmatprep.mubr.bf16.mxu0 0
  %2711 = vmatmul.mubr.bf16.gmra.mxu0 %v2126
  %v2712 = vpop.f32.mrf.mxu0
  %v2713 = vadd.f32 0.0, %v2712
  %v2714 = vpop.f32.mrf.mxu0
  %v2715 = vadd.f32 0.0, %v2714
  %v2716 = vpop.f32.mrf.mxu0
  %v2717 = vadd.f32 0.0, %v2716
  %v2718 = vpop.f32.mrf.mxu0
  %v2719 = vadd.f32 0.0, %v2718
  %2720 = vmatprep.mubr.bf16.mxu0 0
  %2721 = vmatmul.mubr.bf16.gmra.mxu0 %v2127
  %v2722 = vpop.f32.mrf.mxu0
  %v2723 = vadd.f32 0.0, %v2722
  %v2724 = vpop.f32.mrf.mxu0
  %v2725 = vadd.f32 0.0, %v2724
  %v2726 = vpop.f32.mrf.mxu0
  %v2727 = vadd.f32 0.0, %v2726
  %v2728 = vpop.f32.mrf.mxu0
  %v2729 = vadd.f32 0.0, %v2728
  %2730 = vmatprep.mubr.bf16.mxu0 0
  %2731 = vmatmul.mubr.bf16.gmra.mxu0 %v2128
  %v2732 = vpop.f32.mrf.mxu0
  %v2733 = vadd.f32 0.0, %v2732
  %v2734 = vpop.f32.mrf.mxu0
  %v2735 = vadd.f32 0.0, %v2734
  %v2736 = vpop.f32.mrf.mxu0
  %v2737 = vadd.f32 0.0, %v2736
  %v2738 = vpop.f32.mrf.mxu0
  %v2739 = vadd.f32 0.0, %v2738
  %2740 = vmatprep.mubr.bf16.mxu0 0
  %2741 = vmatmul.mubr.bf16.gmra.mxu0 %v2129
  %v2742 = vpop.f32.mrf.mxu0
  %v2743 = vadd.f32 0.0, %v2742
  %v2744 = vpop.f32.mrf.mxu0
  %v2745 = vadd.f32 0.0, %v2744
  %v2746 = vpop.f32.mrf.mxu0
  %v2747 = vadd.f32 0.0, %v2746
  %v2748 = vpop.f32.mrf.mxu0
  %v2749 = vadd.f32 0.0, %v2748
  %2750 = vmatprep.mubr.bf16.mxu0 0
  %2751 = vmatmul.mubr.bf16.gmra.mxu0 %v2130
  %v2752 = vpop.f32.mrf.mxu0
  %v2753 = vadd.f32 0.0, %v2752
  %v2754 = vpop.f32.mrf.mxu0
  %v2755 = vadd.f32 0.0, %v2754
  %v2756 = vpop.f32.mrf.mxu0
  %v2757 = vadd.f32 0.0, %v2756
  %v2758 = vpop.f32.mrf.mxu0
  %v2759 = vadd.f32 0.0, %v2758
  %2760 = vmatprep.mubr.bf16.mxu0 0
  %2761 = vmatmul.mubr.bf16.gmra.mxu0 %v2131
  %v2762 = vpop.f32.mrf.mxu0
  %v2763 = vadd.f32 0.0, %v2762
  %v2764 = vpop.f32.mrf.mxu0
  %v2765 = vadd.f32 0.0, %v2764
  %v2766 = vpop.f32.mrf.mxu0
  %v2767 = vadd.f32 0.0, %v2766
  %v2768 = vpop.f32.mrf.mxu0
  %v2769 = vadd.f32 0.0, %v2768
  %2770 = vmatprep.mubr.bf16.mxu0 0
  %2771 = vmatmul.mubr.bf16.gmra.mxu0 %v2132
  %v2772 = vpop.f32.mrf.mxu0
  %v2773 = vadd.f32 0.0, %v2772
  %v2774 = vpop.f32.mrf.mxu0
  %v2775 = vadd.f32 0.0, %v2774
  %v2776 = vpop.f32.mrf.mxu0
  %v2777 = vadd.f32 0.0, %v2776
  %v2778 = vpop.f32.mrf.mxu0
  %v2779 = vadd.f32 0.0, %v2778
  %2780 = vmatprep.mubr.bf16.mxu0 0
  %2781 = vmatmul.mubr.bf16.gmra.mxu0 %v2133
  %v2782 = vpop.f32.mrf.mxu0
  %v2783 = vadd.f32 0.0, %v2782
  %v2784 = vpop.f32.mrf.mxu0
  %v2785 = vadd.f32 0.0, %v2784
  %v2786 = vpop.f32.mrf.mxu0
  %v2787 = vadd.f32 0.0, %v2786
  %v2788 = vpop.f32.mrf.mxu0
  %v2789 = vadd.f32 0.0, %v2788
  %2790 = vmatprep.mubr.bf16.mxu0 0
  %2791 = vmatmul.mubr.bf16.gmra.mxu0 %v2134
  %v2792 = vpop.f32.mrf.mxu0
  %v2793 = vadd.f32 0.0, %v2792
  %v2794 = vpop.f32.mrf.mxu0
  %v2795 = vadd.f32 0.0, %v2794
  %v2796 = vpop.f32.mrf.mxu0
  %v2797 = vadd.f32 0.0, %v2796
  %v2798 = vpop.f32.mrf.mxu0
  %v2799 = vadd.f32 0.0, %v2798
  %2800 = vmatprep.mubr.bf16.mxu0 0
  %2801 = vmatmul.mubr.bf16.gmra.mxu0 %v2135
  %v2802 = vpop.f32.mrf.mxu0
  %v2803 = vadd.f32 0.0, %v2802
  %v2804 = vpop.f32.mrf.mxu0
  %v2805 = vadd.f32 0.0, %v2804
  %v2806 = vpop.f32.mrf.mxu0
  %v2807 = vadd.f32 0.0, %v2806
  %v2808 = vpop.f32.mrf.mxu0
  %v2809 = vadd.f32 0.0, %v2808
  %2810 = vmatprep.mubr.bf16.mxu0 0
  %2811 = vmatmul.mubr.bf16.gmra.mxu0 %v2136
  %v2812 = vpop.f32.mrf.mxu0
  %v2813 = vadd.f32 0.0, %v2812
  %v2814 = vpop.f32.mrf.mxu0
  %v2815 = vadd.f32 0.0, %v2814
  %v2816 = vpop.f32.mrf.mxu0
  %v2817 = vadd.f32 0.0, %v2816
  %v2818 = vpop.f32.mrf.mxu0
  %v2819 = vadd.f32 0.0, %v2818
  %2820 = vmatprep.mubr.bf16.mxu0 0
  %2821 = vmatmul.mubr.bf16.gmra.mxu0 %v2137
  %v2822 = vpop.f32.mrf.mxu0
  %v2823 = vadd.f32 0.0, %v2822
  %v2824 = vpop.f32.mrf.mxu0
  %v2825 = vadd.f32 0.0, %v2824
  %v2826 = vpop.f32.mrf.mxu0
  %v2827 = vadd.f32 0.0, %v2826
  %v2828 = vpop.f32.mrf.mxu0
  %v2829 = vadd.f32 0.0, %v2828
  %2830 = vmatprep.mubr.bf16.mxu0 0
  %2831 = vmatmul.mubr.bf16.gmra.mxu0 %v2138
  %v2832 = vpop.f32.mrf.mxu0
  %v2833 = vadd.f32 0.0, %v2832
  %v2834 = vpop.f32.mrf.mxu0
  %v2835 = vadd.f32 0.0, %v2834
  %v2836 = vpop.f32.mrf.mxu0
  %v2837 = vadd.f32 0.0, %v2836
  %v2838 = vpop.f32.mrf.mxu0
  %v2839 = vadd.f32 0.0, %v2838
  %2840 = vmatprep.mubr.bf16.mxu0 0
  %2841 = vmatmul.mubr.bf16.gmra.mxu0 %v2139
  %v2842 = vpop.f32.mrf.mxu0
  %v2843 = vadd.f32 0.0, %v2842
  %v2844 = vpop.f32.mrf.mxu0
  %v2845 = vadd.f32 0.0, %v2844
  %v2846 = vpop.f32.mrf.mxu0
  %v2847 = vadd.f32 0.0, %v2846
  %v2848 = vpop.f32.mrf.mxu0
  %v2849 = vadd.f32 0.0, %v2848
  %2850 = vmatprep.mubr.bf16.mxu0 0
  %2851 = vmatmul.mubr.bf16.gmra.mxu0 %v2140
  %v2852 = vpop.f32.mrf.mxu0
  %v2853 = vadd.f32 0.0, %v2852
  %v2854 = vpop.f32.mrf.mxu0
  %v2855 = vadd.f32 0.0, %v2854
  %v2856 = vpop.f32.mrf.mxu0
  %v2857 = vadd.f32 0.0, %v2856
  %v2858 = vpop.f32.mrf.mxu0
  %v2859 = vadd.f32 0.0, %v2858
  %2860 = vmatprep.mubr.bf16.mxu0 0
  %2861 = vmatmul.mubr.bf16.gmra.mxu0 %v2141
  %v2862 = vpop.f32.mrf.mxu0
  %v2863 = vadd.f32 0.0, %v2862
  %v2864 = vpop.f32.mrf.mxu0
  %v2865 = vadd.f32 0.0, %v2864
  %v2866 = vpop.f32.mrf.mxu0
  %v2867 = vadd.f32 0.0, %v2866
  %v2868 = vpop.f32.mrf.mxu0
  %v2869 = vadd.f32 0.0, %v2868
  %2870 = vmatprep.mubr.bf16.mxu0 0
  %2871 = vmatmul.mubr.bf16.gmra.mxu0 %v2142
  %v2872 = vpop.f32.mrf.mxu0
  %v2873 = vadd.f32 0.0, %v2872
  %v2874 = vpop.f32.mrf.mxu0
  %v2875 = vadd.f32 0.0, %v2874
  %v2876 = vpop.f32.mrf.mxu0
  %v2877 = vadd.f32 0.0, %v2876
  %v2878 = vpop.f32.mrf.mxu0
  %v2879 = vadd.f32 0.0, %v2878
  %2880 = vdwg.mxu0
  %v2881 = vmul.f32 %v2210, 0.088388346
  %v2882 = vmul.f32 %v2212, 0.088388346
  %v2883 = vmul.f32 %v2563, 0.088388346
  %v2884 = vmul.f32 %v2565, 0.088388346
  %v2885 = vmul.f32 %v2214, 0.088388346
  %v2886 = vmul.f32 %v2216, 0.088388346
  %v2887 = vmul.f32 %v2567, 0.088388346
  %v2888 = vmul.f32 %v2569, 0.088388346
  %v2889 = vmul.f32 %v2220, 0.088388346
  %v2890 = vmul.f32 %v2222, 0.088388346
  %v2891 = vmul.f32 %v2573, 0.088388346
  %v2892 = vmul.f32 %v2575, 0.088388346
  %v2893 = vmul.f32 %v2224, 0.088388346
  %v2894 = vmul.f32 %v2226, 0.088388346
  %v2895 = vmul.f32 %v2577, 0.088388346
  %v2896 = vmul.f32 %v2579, 0.088388346
  %v2897 = vmul.f32 %v2230, 0.088388346
  %v2898 = vmul.f32 %v2232, 0.088388346
  %v2899 = vmul.f32 %v2583, 0.088388346
  %v2900 = vmul.f32 %v2585, 0.088388346
  %v2901 = vmul.f32 %v2234, 0.088388346
  %v2902 = vmul.f32 %v2236, 0.088388346
  %v2903 = vmul.f32 %v2587, 0.088388346
  %v2904 = vmul.f32 %v2589, 0.088388346
  %v2905 = vmul.f32 %v2240, 0.088388346
  %v2906 = vmul.f32 %v2242, 0.088388346
  %v2907 = vmul.f32 %v2593, 0.088388346
  %v2908 = vmul.f32 %v2595, 0.088388346
  %v2909 = vmul.f32 %v2244, 0.088388346
  %v2910 = vmul.f32 %v2246, 0.088388346
  %v2911 = vmul.f32 %v2597, 0.088388346
  %v2912 = vmul.f32 %v2599, 0.088388346
  %v2913 = vmul.f32 %v2250, 0.088388346
  %v2914 = vmul.f32 %v2252, 0.088388346
  %v2915 = vmul.f32 %v2603, 0.088388346
  %v2916 = vmul.f32 %v2605, 0.088388346
  %v2917 = vmul.f32 %v2254, 0.088388346
  %v2918 = vmul.f32 %v2256, 0.088388346
  %v2919 = vmul.f32 %v2607, 0.088388346
  %v2920 = vmul.f32 %v2609, 0.088388346
  %v2921 = vmul.f32 %v2260, 0.088388346
  %v2922 = vmul.f32 %v2262, 0.088388346
  %v2923 = vmul.f32 %v2613, 0.088388346
  %v2924 = vmul.f32 %v2615, 0.088388346
  %v2925 = vmul.f32 %v2264, 0.088388346
  %v2926 = vmul.f32 %v2266, 0.088388346
  %v2927 = vmul.f32 %v2617, 0.088388346
  %v2928 = vmul.f32 %v2619, 0.088388346
  %v2929 = vmul.f32 %v2270, 0.088388346
  %v2930 = vmul.f32 %v2272, 0.088388346
  %v2931 = vmul.f32 %v2623, 0.088388346
  %v2932 = vmul.f32 %v2625, 0.088388346
  %v2933 = vmul.f32 %v2274, 0.088388346
  %v2934 = vmul.f32 %v2276, 0.088388346
  %v2935 = vmul.f32 %v2627, 0.088388346
  %v2936 = vmul.f32 %v2629, 0.088388346
  %v2937 = vmul.f32 %v2280, 0.088388346
  %v2938 = vmul.f32 %v2282, 0.088388346
  %v2939 = vmul.f32 %v2633, 0.088388346
  %v2940 = vmul.f32 %v2635, 0.088388346
  %v2941 = vmul.f32 %v2284, 0.088388346
  %v2942 = vmul.f32 %v2286, 0.088388346
  %v2943 = vmul.f32 %v2637, 0.088388346
  %v2944 = vmul.f32 %v2639, 0.088388346
  %v2945 = vmul.f32 %v2290, 0.088388346
  %v2946 = vmul.f32 %v2292, 0.088388346
  %v2947 = vmul.f32 %v2643, 0.088388346
  %v2948 = vmul.f32 %v2645, 0.088388346
  %v2949 = vmul.f32 %v2294, 0.088388346
  %v2950 = vmul.f32 %v2296, 0.088388346
  %v2951 = vmul.f32 %v2647, 0.088388346
  %v2952 = vmul.f32 %v2649, 0.088388346
  %v2953 = vmul.f32 %v2300, 0.088388346
  %v2954 = vmul.f32 %v2302, 0.088388346
  %v2955 = vmul.f32 %v2653, 0.088388346
  %v2956 = vmul.f32 %v2655, 0.088388346
  %v2957 = vmul.f32 %v2304, 0.088388346
  %v2958 = vmul.f32 %v2306, 0.088388346
  %v2959 = vmul.f32 %v2657, 0.088388346
  %v2960 = vmul.f32 %v2659, 0.088388346
  %v2961 = vmul.f32 %v2310, 0.088388346
  %v2962 = vmul.f32 %v2312, 0.088388346
  %v2963 = vmul.f32 %v2663, 0.088388346
  %v2964 = vmul.f32 %v2665, 0.088388346
  %v2965 = vmul.f32 %v2314, 0.088388346
  %v2966 = vmul.f32 %v2316, 0.088388346
  %v2967 = vmul.f32 %v2667, 0.088388346
  %v2968 = vmul.f32 %v2669, 0.088388346
  %v2969 = vmul.f32 %v2320, 0.088388346
  %v2970 = vmul.f32 %v2322, 0.088388346
  %v2971 = vmul.f32 %v2673, 0.088388346
  %v2972 = vmul.f32 %v2675, 0.088388346
  %v2973 = vmul.f32 %v2324, 0.088388346
  %v2974 = vmul.f32 %v2326, 0.088388346
  %v2975 = vmul.f32 %v2677, 0.088388346
  %v2976 = vmul.f32 %v2679, 0.088388346
  %v2977 = vmul.f32 %v2330, 0.088388346
  %v2978 = vmul.f32 %v2332, 0.088388346
  %v2979 = vmul.f32 %v2683, 0.088388346
  %v2980 = vmul.f32 %v2685, 0.088388346
  %v2981 = vmul.f32 %v2334, 0.088388346
  %v2982 = vmul.f32 %v2336, 0.088388346
  %v2983 = vmul.f32 %v2687, 0.088388346
  %v2984 = vmul.f32 %v2689, 0.088388346
  %v2985 = vmul.f32 %v2340, 0.088388346
  %v2986 = vmul.f32 %v2342, 0.088388346
  %v2987 = vmul.f32 %v2693, 0.088388346
  %v2988 = vmul.f32 %v2695, 0.088388346
  %v2989 = vmul.f32 %v2344, 0.088388346
  %v2990 = vmul.f32 %v2346, 0.088388346
  %v2991 = vmul.f32 %v2697, 0.088388346
  %v2992 = vmul.f32 %v2699, 0.088388346
  %v2993 = vmul.f32 %v2350, 0.088388346
  %v2994 = vmul.f32 %v2352, 0.088388346
  %v2995 = vmul.f32 %v2703, 0.088388346
  %v2996 = vmul.f32 %v2705, 0.088388346
  %v2997 = vmul.f32 %v2354, 0.088388346
  %v2998 = vmul.f32 %v2356, 0.088388346
  %v2999 = vmul.f32 %v2707, 0.088388346
  %v3000 = vmul.f32 %v2709, 0.088388346
  %v3001 = vmul.f32 %v2360, 0.088388346
  %v3002 = vmul.f32 %v2362, 0.088388346
  %v3003 = vmul.f32 %v2713, 0.088388346
  %v3004 = vmul.f32 %v2715, 0.088388346
  %v3005 = vmul.f32 %v2364, 0.088388346
  %v3006 = vmul.f32 %v2366, 0.088388346
  %v3007 = vmul.f32 %v2717, 0.088388346
  %v3008 = vmul.f32 %v2719, 0.088388346
  %v3009 = vmul.f32 %v2370, 0.088388346
  %v3010 = vmul.f32 %v2372, 0.088388346
  %v3011 = vmul.f32 %v2723, 0.088388346
  %v3012 = vmul.f32 %v2725, 0.088388346
  %v3013 = vmul.f32 %v2374, 0.088388346
  %v3014 = vmul.f32 %v2376, 0.088388346
  %v3015 = vmul.f32 %v2727, 0.088388346
  %v3016 = vmul.f32 %v2729, 0.088388346
  %v3017 = vmul.f32 %v2380, 0.088388346
  %v3018 = vmul.f32 %v2382, 0.088388346
  %v3019 = vmul.f32 %v2733, 0.088388346
  %v3020 = vmul.f32 %v2735, 0.088388346
  %v3021 = vmul.f32 %v2384, 0.088388346
  %v3022 = vmul.f32 %v2386, 0.088388346
  %v3023 = vmul.f32 %v2737, 0.088388346
  %v3024 = vmul.f32 %v2739, 0.088388346
  %v3025 = vmul.f32 %v2390, 0.088388346
  %v3026 = vmul.f32 %v2392, 0.088388346
  %v3027 = vmul.f32 %v2743, 0.088388346
  %v3028 = vmul.f32 %v2745, 0.088388346
  %v3029 = vmul.f32 %v2394, 0.088388346
  %v3030 = vmul.f32 %v2396, 0.088388346
  %v3031 = vmul.f32 %v2747, 0.088388346
  %v3032 = vmul.f32 %v2749, 0.088388346
  %v3033 = vmul.f32 %v2400, 0.088388346
  %v3034 = vmul.f32 %v2402, 0.088388346
  %v3035 = vmul.f32 %v2753, 0.088388346
  %v3036 = vmul.f32 %v2755, 0.088388346
  %v3037 = vmul.f32 %v2404, 0.088388346
  %v3038 = vmul.f32 %v2406, 0.088388346
  %v3039 = vmul.f32 %v2757, 0.088388346
  %v3040 = vmul.f32 %v2759, 0.088388346
  %v3041 = vmul.f32 %v2410, 0.088388346
  %v3042 = vmul.f32 %v2412, 0.088388346
  %v3043 = vmul.f32 %v2763, 0.088388346
  %v3044 = vmul.f32 %v2765, 0.088388346
  %v3045 = vmul.f32 %v2414, 0.088388346
  %v3046 = vmul.f32 %v2416, 0.088388346
  %v3047 = vmul.f32 %v2767, 0.088388346
  %v3048 = vmul.f32 %v2769, 0.088388346
  %v3049 = vmul.f32 %v2420, 0.088388346
  %v3050 = vmul.f32 %v2422, 0.088388346
  %v3051 = vmul.f32 %v2773, 0.088388346
  %v3052 = vmul.f32 %v2775, 0.088388346
  %v3053 = vmul.f32 %v2424, 0.088388346
  %v3054 = vmul.f32 %v2426, 0.088388346
  %v3055 = vmul.f32 %v2777, 0.088388346
  %v3056 = vmul.f32 %v2779, 0.088388346
  %v3057 = vmul.f32 %v2430, 0.088388346
  %v3058 = vmul.f32 %v2432, 0.088388346
  %v3059 = vmul.f32 %v2783, 0.088388346
  %v3060 = vmul.f32 %v2785, 0.088388346
  %v3061 = vmul.f32 %v2434, 0.088388346
  %v3062 = vmul.f32 %v2436, 0.088388346
  %v3063 = vmul.f32 %v2787, 0.088388346
  %v3064 = vmul.f32 %v2789, 0.088388346
  %v3065 = vmul.f32 %v2440, 0.088388346
  %v3066 = vmul.f32 %v2442, 0.088388346
  %v3067 = vmul.f32 %v2793, 0.088388346
  %v3068 = vmul.f32 %v2795, 0.088388346
  %v3069 = vmul.f32 %v2444, 0.088388346
  %v3070 = vmul.f32 %v2446, 0.088388346
  %v3071 = vmul.f32 %v2797, 0.088388346
  %v3072 = vmul.f32 %v2799, 0.088388346
  %v3073 = vmul.f32 %v2450, 0.088388346
  %v3074 = vmul.f32 %v2452, 0.088388346
  %v3075 = vmul.f32 %v2803, 0.088388346
  %v3076 = vmul.f32 %v2805, 0.088388346
  %v3077 = vmul.f32 %v2454, 0.088388346
  %v3078 = vmul.f32 %v2456, 0.088388346
  %v3079 = vmul.f32 %v2807, 0.088388346
  %v3080 = vmul.f32 %v2809, 0.088388346
  %v3081 = vmul.f32 %v2460, 0.088388346
  %v3082 = vmul.f32 %v2462, 0.088388346
  %v3083 = vmul.f32 %v2813, 0.088388346
  %v3084 = vmul.f32 %v2815, 0.088388346
  %v3085 = vmul.f32 %v2464, 0.088388346
  %v3086 = vmul.f32 %v2466, 0.088388346
  %v3087 = vmul.f32 %v2817, 0.088388346
  %v3088 = vmul.f32 %v2819, 0.088388346
  %v3089 = vmul.f32 %v2470, 0.088388346
  %v3090 = vmul.f32 %v2472, 0.088388346
  %v3091 = vmul.f32 %v2823, 0.088388346
  %v3092 = vmul.f32 %v2825, 0.088388346
  %v3093 = vmul.f32 %v2474, 0.088388346
  %v3094 = vmul.f32 %v2476, 0.088388346
  %v3095 = vmul.f32 %v2827, 0.088388346
  %v3096 = vmul.f32 %v2829, 0.088388346
  %v3097 = vmul.f32 %v2480, 0.088388346
  %v3098 = vmul.f32 %v2482, 0.088388346
  %v3099 = vmul.f32 %v2833, 0.088388346
  %v3100 = vmul.f32 %v2835, 0.088388346
  %v3101 = vmul.f32 %v2484, 0.088388346
  %v3102 = vmul.f32 %v2486, 0.088388346
  %v3103 = vmul.f32 %v2837, 0.088388346
  %v3104 = vmul.f32 %v2839, 0.088388346
  %v3105 = vmul.f32 %v2490, 0.088388346
  %v3106 = vmul.f32 %v2492, 0.088388346
  %v3107 = vmul.f32 %v2843, 0.088388346
  %v3108 = vmul.f32 %v2845, 0.088388346
  %v3109 = vmul.f32 %v2494, 0.088388346
  %v3110 = vmul.f32 %v2496, 0.088388346
  %v3111 = vmul.f32 %v2847, 0.088388346
  %v3112 = vmul.f32 %v2849, 0.088388346
  %v3113 = vmul.f32 %v2500, 0.088388346
  %v3114 = vmul.f32 %v2502, 0.088388346
  %v3115 = vmul.f32 %v2853, 0.088388346
  %v3116 = vmul.f32 %v2855, 0.088388346
  %v3117 = vmul.f32 %v2504, 0.088388346
  %v3118 = vmul.f32 %v2506, 0.088388346
  %v3119 = vmul.f32 %v2857, 0.088388346
  %v3120 = vmul.f32 %v2859, 0.088388346
  %v3121 = vmul.f32 %v2510, 0.088388346
  %v3122 = vmul.f32 %v2512, 0.088388346
  %v3123 = vmul.f32 %v2863, 0.088388346
  %v3124 = vmul.f32 %v2865, 0.088388346
  %v3125 = vmul.f32 %v2514, 0.088388346
  %v3126 = vmul.f32 %v2516, 0.088388346
  %v3127 = vmul.f32 %v2867, 0.088388346
  %v3128 = vmul.f32 %v2869, 0.088388346
  %v3129 = vmul.f32 %v2520, 0.088388346
  %v3130 = vmul.f32 %v2522, 0.088388346
  %v3131 = vmul.f32 %v2873, 0.088388346
  %v3132 = vmul.f32 %v2875, 0.088388346
  %v3133 = vmul.f32 %v2524, 0.088388346
  %v3134 = vmul.f32 %v2526, 0.088388346
  %v3135 = vmul.f32 %v2877, 0.088388346
  %v3136 = vmul.f32 %v2879, 0.088388346
  %v3137 = vmax.f32 %v2881, %v2882
  %v3138 = vmax.f32 %v3137, %v2883
  %v3139 = vmax.f32 %v3138, %v2884
  %3140 = vmax.xlane.f32.xlu0 %v3139
  %v3141 = vpop.xlane.xlu0 %3140
  %v3142 = vmax.f32 %v2885, %v2886
  %v3143 = vmax.f32 %v3142, %v2887
  %v3144 = vmax.f32 %v3143, %v2888
  %3145 = vmax.xlane.f32.xlu0 %v3144
  %v3146 = vpop.xlane.xlu0 %3145
  %v3147 = vmax.f32 %v2889, %v2890
  %v3148 = vmax.f32 %v3147, %v2891
  %v3149 = vmax.f32 %v3148, %v2892
  %3150 = vmax.xlane.f32.xlu0 %v3149
  %v3151 = vpop.xlane.xlu0 %3150
  %v3152 = vmax.f32 %v2893, %v2894
  %v3153 = vmax.f32 %v3152, %v2895
  %v3154 = vmax.f32 %v3153, %v2896
  %3155 = vmax.xlane.f32.xlu0 %v3154
  %v3156 = vpop.xlane.xlu0 %3155
  %v3157 = vmax.f32 %v2897, %v2898
  %v3158 = vmax.f32 %v3157, %v2899
  %v3159 = vmax.f32 %v3158, %v2900
  %3160 = vmax.xlane.f32.xlu0 %v3159
  %v3161 = vpop.xlane.xlu0 %3160
  %v3162 = vmax.f32 %v2901, %v2902
  %v3163 = vmax.f32 %v3162, %v2903
  %v3164 = vmax.f32 %v3163, %v2904
  %3165 = vmax.xlane.f32.xlu0 %v3164
  %v3166 = vpop.xlane.xlu0 %3165
  %v3167 = vmax.f32 %v2905, %v2906
  %v3168 = vmax.f32 %v3167, %v2907
  %v3169 = vmax.f32 %v3168, %v2908
  %3170 = vmax.xlane.f32.xlu0 %v3169
  %v3171 = vpop.xlane.xlu0 %3170
  %v3172 = vmax.f32 %v2909, %v2910
  %v3173 = vmax.f32 %v3172, %v2911
  %v3174 = vmax.f32 %v3173, %v2912
  %3175 = vmax.xlane.f32.xlu0 %v3174
  %v3176 = vpop.xlane.xlu0 %3175
  %v3177 = vmax.f32 %v2913, %v2914
  %v3178 = vmax.f32 %v3177, %v2915
  %v3179 = vmax.f32 %v3178, %v2916
  %3180 = vmax.xlane.f32.xlu0 %v3179
  %v3181 = vpop.xlane.xlu0 %3180
  %v3182 = vmax.f32 %v2917, %v2918
  %v3183 = vmax.f32 %v3182, %v2919
  %v3184 = vmax.f32 %v3183, %v2920
  %3185 = vmax.xlane.f32.xlu0 %v3184
  %v3186 = vpop.xlane.xlu0 %3185
  %v3187 = vmax.f32 %v2921, %v2922
  %v3188 = vmax.f32 %v3187, %v2923
  %v3189 = vmax.f32 %v3188, %v2924
  %3190 = vmax.xlane.f32.xlu0 %v3189
  %v3191 = vpop.xlane.xlu0 %3190
  %v3192 = vmax.f32 %v2925, %v2926
  %v3193 = vmax.f32 %v3192, %v2927
  %v3194 = vmax.f32 %v3193, %v2928
  %3195 = vmax.xlane.f32.xlu0 %v3194
  %v3196 = vpop.xlane.xlu0 %3195
  %v3197 = vmax.f32 %v2929, %v2930
  %v3198 = vmax.f32 %v3197, %v2931
  %v3199 = vmax.f32 %v3198, %v2932
  %3200 = vmax.xlane.f32.xlu0 %v3199
  %v3201 = vpop.xlane.xlu0 %3200
  %v3202 = vmax.f32 %v2933, %v2934
  %v3203 = vmax.f32 %v3202, %v2935
  %v3204 = vmax.f32 %v3203, %v2936
  %3205 = vmax.xlane.f32.xlu0 %v3204
  %v3206 = vpop.xlane.xlu0 %3205
  %v3207 = vmax.f32 %v2937, %v2938
  %v3208 = vmax.f32 %v3207, %v2939
  %v3209 = vmax.f32 %v3208, %v2940
  %3210 = vmax.xlane.f32.xlu0 %v3209
  %v3211 = vpop.xlane.xlu0 %3210
  %v3212 = vmax.f32 %v2941, %v2942
  %v3213 = vmax.f32 %v3212, %v2943
  %v3214 = vmax.f32 %v3213, %v2944
  %3215 = vmax.xlane.f32.xlu0 %v3214
  %v3216 = vpop.xlane.xlu0 %3215
  %v3217 = vmax.f32 %v2945, %v2946
  %v3218 = vmax.f32 %v3217, %v2947
  %v3219 = vmax.f32 %v3218, %v2948
  %3220 = vmax.xlane.f32.xlu0 %v3219
  %v3221 = vpop.xlane.xlu0 %3220
  %v3222 = vmax.f32 %v2949, %v2950
  %v3223 = vmax.f32 %v3222, %v2951
  %v3224 = vmax.f32 %v3223, %v2952
  %3225 = vmax.xlane.f32.xlu0 %v3224
  %v3226 = vpop.xlane.xlu0 %3225
  %v3227 = vmax.f32 %v2953, %v2954
  %v3228 = vmax.f32 %v3227, %v2955
  %v3229 = vmax.f32 %v3228, %v2956
  %3230 = vmax.xlane.f32.xlu0 %v3229
  %v3231 = vpop.xlane.xlu0 %3230
  %v3232 = vmax.f32 %v2957, %v2958
  %v3233 = vmax.f32 %v3232, %v2959
  %v3234 = vmax.f32 %v3233, %v2960
  %3235 = vmax.xlane.f32.xlu0 %v3234
  %v3236 = vpop.xlane.xlu0 %3235
  %v3237 = vmax.f32 %v2961, %v2962
  %v3238 = vmax.f32 %v3237, %v2963
  %v3239 = vmax.f32 %v3238, %v2964
  %3240 = vmax.xlane.f32.xlu0 %v3239
  %v3241 = vpop.xlane.xlu0 %3240
  %v3242 = vmax.f32 %v2965, %v2966
  %v3243 = vmax.f32 %v3242, %v2967
  %v3244 = vmax.f32 %v3243, %v2968
  %3245 = vmax.xlane.f32.xlu0 %v3244
  %v3246 = vpop.xlane.xlu0 %3245
  %v3247 = vmax.f32 %v2969, %v2970
  %v3248 = vmax.f32 %v3247, %v2971
  %v3249 = vmax.f32 %v3248, %v2972
  %3250 = vmax.xlane.f32.xlu0 %v3249
  %v3251 = vpop.xlane.xlu0 %3250
  %v3252 = vmax.f32 %v2973, %v2974
  %v3253 = vmax.f32 %v3252, %v2975
  %v3254 = vmax.f32 %v3253, %v2976
  %3255 = vmax.xlane.f32.xlu0 %v3254
  %v3256 = vpop.xlane.xlu0 %3255
  %v3257 = vmax.f32 %v2977, %v2978
  %v3258 = vmax.f32 %v3257, %v2979
  %v3259 = vmax.f32 %v3258, %v2980
  %3260 = vmax.xlane.f32.xlu0 %v3259
  %v3261 = vpop.xlane.xlu0 %3260
  %v3262 = vmax.f32 %v2981, %v2982
  %v3263 = vmax.f32 %v3262, %v2983
  %v3264 = vmax.f32 %v3263, %v2984
  %3265 = vmax.xlane.f32.xlu0 %v3264
  %v3266 = vpop.xlane.xlu0 %3265
  %v3267 = vmax.f32 %v2985, %v2986
  %v3268 = vmax.f32 %v3267, %v2987
  %v3269 = vmax.f32 %v3268, %v2988
  %3270 = vmax.xlane.f32.xlu0 %v3269
  %v3271 = vpop.xlane.xlu0 %3270
  %v3272 = vmax.f32 %v2989, %v2990
  %v3273 = vmax.f32 %v3272, %v2991
  %v3274 = vmax.f32 %v3273, %v2992
  %3275 = vmax.xlane.f32.xlu0 %v3274
  %v3276 = vpop.xlane.xlu0 %3275
  %v3277 = vmax.f32 %v2993, %v2994
  %v3278 = vmax.f32 %v3277, %v2995
  %v3279 = vmax.f32 %v3278, %v2996
  %3280 = vmax.xlane.f32.xlu0 %v3279
  %v3281 = vpop.xlane.xlu0 %3280
  %v3282 = vmax.f32 %v2997, %v2998
  %v3283 = vmax.f32 %v3282, %v2999
  %v3284 = vmax.f32 %v3283, %v3000
  %3285 = vmax.xlane.f32.xlu0 %v3284
  %v3286 = vpop.xlane.xlu0 %3285
  %v3287 = vmax.f32 %v3001, %v3002
  %v3288 = vmax.f32 %v3287, %v3003
  %v3289 = vmax.f32 %v3288, %v3004
  %3290 = vmax.xlane.f32.xlu0 %v3289
  %v3291 = vpop.xlane.xlu0 %3290
  %v3292 = vmax.f32 %v3005, %v3006
  %v3293 = vmax.f32 %v3292, %v3007
  %v3294 = vmax.f32 %v3293, %v3008
  %3295 = vmax.xlane.f32.xlu0 %v3294
  %v3296 = vpop.xlane.xlu0 %3295
  %v3297 = vmax.f32 %v3009, %v3010
  %v3298 = vmax.f32 %v3297, %v3011
  %v3299 = vmax.f32 %v3298, %v3012
  %3300 = vmax.xlane.f32.xlu0 %v3299
  %v3301 = vpop.xlane.xlu0 %3300
  %v3302 = vmax.f32 %v3013, %v3014
  %v3303 = vmax.f32 %v3302, %v3015
  %v3304 = vmax.f32 %v3303, %v3016
  %3305 = vmax.xlane.f32.xlu0 %v3304
  %v3306 = vpop.xlane.xlu0 %3305
  %v3307 = vmax.f32 %v3017, %v3018
  %v3308 = vmax.f32 %v3307, %v3019
  %v3309 = vmax.f32 %v3308, %v3020
  %3310 = vmax.xlane.f32.xlu0 %v3309
  %v3311 = vpop.xlane.xlu0 %3310
  %v3312 = vmax.f32 %v3021, %v3022
  %v3313 = vmax.f32 %v3312, %v3023
  %v3314 = vmax.f32 %v3313, %v3024
  %3315 = vmax.xlane.f32.xlu0 %v3314
  %v3316 = vpop.xlane.xlu0 %3315
  %v3317 = vmax.f32 %v3025, %v3026
  %v3318 = vmax.f32 %v3317, %v3027
  %v3319 = vmax.f32 %v3318, %v3028
  %3320 = vmax.xlane.f32.xlu0 %v3319
  %v3321 = vpop.xlane.xlu0 %3320
  %v3322 = vmax.f32 %v3029, %v3030
  %v3323 = vmax.f32 %v3322, %v3031
  %v3324 = vmax.f32 %v3323, %v3032
  %3325 = vmax.xlane.f32.xlu0 %v3324
  %v3326 = vpop.xlane.xlu0 %3325
  %v3327 = vmax.f32 %v3033, %v3034
  %v3328 = vmax.f32 %v3327, %v3035
  %v3329 = vmax.f32 %v3328, %v3036
  %3330 = vmax.xlane.f32.xlu0 %v3329
  %v3331 = vpop.xlane.xlu0 %3330
  %v3332 = vmax.f32 %v3037, %v3038
  %v3333 = vmax.f32 %v3332, %v3039
  %v3334 = vmax.f32 %v3333, %v3040
  %3335 = vmax.xlane.f32.xlu0 %v3334
  %v3336 = vpop.xlane.xlu0 %3335
  %v3337 = vmax.f32 %v3041, %v3042
  %v3338 = vmax.f32 %v3337, %v3043
  %v3339 = vmax.f32 %v3338, %v3044
  %3340 = vmax.xlane.f32.xlu0 %v3339
  %v3341 = vpop.xlane.xlu0 %3340
  %v3342 = vmax.f32 %v3045, %v3046
  %v3343 = vmax.f32 %v3342, %v3047
  %v3344 = vmax.f32 %v3343, %v3048
  %3345 = vmax.xlane.f32.xlu0 %v3344
  %v3346 = vpop.xlane.xlu0 %3345
  %v3347 = vmax.f32 %v3049, %v3050
  %v3348 = vmax.f32 %v3347, %v3051
  %v3349 = vmax.f32 %v3348, %v3052
  %3350 = vmax.xlane.f32.xlu0 %v3349
  %v3351 = vpop.xlane.xlu0 %3350
  %v3352 = vmax.f32 %v3053, %v3054
  %v3353 = vmax.f32 %v3352, %v3055
  %v3354 = vmax.f32 %v3353, %v3056
  %3355 = vmax.xlane.f32.xlu0 %v3354
  %v3356 = vpop.xlane.xlu0 %3355
  %v3357 = vmax.f32 %v3057, %v3058
  %v3358 = vmax.f32 %v3357, %v3059
  %v3359 = vmax.f32 %v3358, %v3060
  %3360 = vmax.xlane.f32.xlu0 %v3359
  %v3361 = vpop.xlane.xlu0 %3360
  %v3362 = vmax.f32 %v3061, %v3062
  %v3363 = vmax.f32 %v3362, %v3063
  %v3364 = vmax.f32 %v3363, %v3064
  %3365 = vmax.xlane.f32.xlu0 %v3364
  %v3366 = vpop.xlane.xlu0 %3365
  %v3367 = vmax.f32 %v3065, %v3066
  %v3368 = vmax.f32 %v3367, %v3067
  %v3369 = vmax.f32 %v3368, %v3068
  %3370 = vmax.xlane.f32.xlu0 %v3369
  %v3371 = vpop.xlane.xlu0 %3370
  %v3372 = vmax.f32 %v3069, %v3070
  %v3373 = vmax.f32 %v3372, %v3071
  %v3374 = vmax.f32 %v3373, %v3072
  %3375 = vmax.xlane.f32.xlu0 %v3374
  %v3376 = vpop.xlane.xlu0 %3375
  %v3377 = vmax.f32 %v3073, %v3074
  %v3378 = vmax.f32 %v3377, %v3075
  %v3379 = vmax.f32 %v3378, %v3076
  %3380 = vmax.xlane.f32.xlu0 %v3379
  %v3381 = vpop.xlane.xlu0 %3380
  %v3382 = vmax.f32 %v3077, %v3078
  %v3383 = vmax.f32 %v3382, %v3079
  %v3384 = vmax.f32 %v3383, %v3080
  %3385 = vmax.xlane.f32.xlu0 %v3384
  %v3386 = vpop.xlane.xlu0 %3385
  %v3387 = vmax.f32 %v3081, %v3082
  %v3388 = vmax.f32 %v3387, %v3083
  %v3389 = vmax.f32 %v3388, %v3084
  %3390 = vmax.xlane.f32.xlu0 %v3389
  %v3391 = vpop.xlane.xlu0 %3390
  %v3392 = vmax.f32 %v3085, %v3086
  %v3393 = vmax.f32 %v3392, %v3087
  %v3394 = vmax.f32 %v3393, %v3088
  %3395 = vmax.xlane.f32.xlu0 %v3394
  %v3396 = vpop.xlane.xlu0 %3395
  %v3397 = vmax.f32 %v3089, %v3090
  %v3398 = vmax.f32 %v3397, %v3091
  %v3399 = vmax.f32 %v3398, %v3092
  %3400 = vmax.xlane.f32.xlu0 %v3399
  %v3401 = vpop.xlane.xlu0 %3400
  %v3402 = vmax.f32 %v3093, %v3094
  %v3403 = vmax.f32 %v3402, %v3095
  %v3404 = vmax.f32 %v3403, %v3096
  %3405 = vmax.xlane.f32.xlu0 %v3404
  %v3406 = vpop.xlane.xlu0 %3405
  %v3407 = vmax.f32 %v3097, %v3098
  %v3408 = vmax.f32 %v3407, %v3099
  %v3409 = vmax.f32 %v3408, %v3100
  %3410 = vmax.xlane.f32.xlu0 %v3409
  %v3411 = vpop.xlane.xlu0 %3410
  %v3412 = vmax.f32 %v3101, %v3102
  %v3413 = vmax.f32 %v3412, %v3103
  %v3414 = vmax.f32 %v3413, %v3104
  %3415 = vmax.xlane.f32.xlu0 %v3414
  %v3416 = vpop.xlane.xlu0 %3415
  %v3417 = vmax.f32 %v3105, %v3106
  %v3418 = vmax.f32 %v3417, %v3107
  %v3419 = vmax.f32 %v3418, %v3108
  %3420 = vmax.xlane.f32.xlu0 %v3419
  %v3421 = vpop.xlane.xlu0 %3420
  %v3422 = vmax.f32 %v3109, %v3110
  %v3423 = vmax.f32 %v3422, %v3111
  %v3424 = vmax.f32 %v3423, %v3112
  %3425 = vmax.xlane.f32.xlu0 %v3424
  %v3426 = vpop.xlane.xlu0 %3425
  %v3427 = vmax.f32 %v3113, %v3114
  %v3428 = vmax.f32 %v3427, %v3115
  %v3429 = vmax.f32 %v3428, %v3116
  %3430 = vmax.xlane.f32.xlu0 %v3429
  %v3431 = vpop.xlane.xlu0 %3430
  %v3432 = vmax.f32 %v3117, %v3118
  %v3433 = vmax.f32 %v3432, %v3119
  %v3434 = vmax.f32 %v3433, %v3120
  %3435 = vmax.xlane.f32.xlu0 %v3434
  %v3436 = vpop.xlane.xlu0 %3435
  %v3437 = vmax.f32 %v3121, %v3122
  %v3438 = vmax.f32 %v3437, %v3123
  %v3439 = vmax.f32 %v3438, %v3124
  %3440 = vmax.xlane.f32.xlu0 %v3439
  %v3441 = vpop.xlane.xlu0 %3440
  %v3442 = vmax.f32 %v3125, %v3126
  %v3443 = vmax.f32 %v3442, %v3127
  %v3444 = vmax.f32 %v3443, %v3128
  %3445 = vmax.xlane.f32.xlu0 %v3444
  %v3446 = vpop.xlane.xlu0 %3445
  %v3447 = vmax.f32 %v3129, %v3130
  %v3448 = vmax.f32 %v3447, %v3131
  %v3449 = vmax.f32 %v3448, %v3132
  %3450 = vmax.xlane.f32.xlu0 %v3449
  %v3451 = vpop.xlane.xlu0 %3450
  %v3452 = vmax.f32 %v3133, %v3134
  %v3453 = vmax.f32 %v3452, %v3135
  %v3454 = vmax.f32 %v3453, %v3136
  %3455 = vmax.xlane.f32.xlu0 %v3454
  %v3456 = vpop.xlane.xlu0 %3455
  %v3457 = vsub.f32 %v2881, %v3141
  %v3458 = vsub.f32 %v2882, %v3141
  %v3459 = vsub.f32 %v2883, %v3141
  %v3460 = vsub.f32 %v2884, %v3141
  %v3461 = vsub.f32 %v2885, %v3146
  %v3462 = vsub.f32 %v2886, %v3146
  %v3463 = vsub.f32 %v2887, %v3146
  %v3464 = vsub.f32 %v2888, %v3146
  %v3465 = vsub.f32 %v2889, %v3151
  %v3466 = vsub.f32 %v2890, %v3151
  %v3467 = vsub.f32 %v2891, %v3151
  %v3468 = vsub.f32 %v2892, %v3151
  %v3469 = vsub.f32 %v2893, %v3156
  %v3470 = vsub.f32 %v2894, %v3156
  %v3471 = vsub.f32 %v2895, %v3156
  %v3472 = vsub.f32 %v2896, %v3156
  %v3473 = vsub.f32 %v2897, %v3161
  %v3474 = vsub.f32 %v2898, %v3161
  %v3475 = vsub.f32 %v2899, %v3161
  %v3476 = vsub.f32 %v2900, %v3161
  %v3477 = vsub.f32 %v2901, %v3166
  %v3478 = vsub.f32 %v2902, %v3166
  %v3479 = vsub.f32 %v2903, %v3166
  %v3480 = vsub.f32 %v2904, %v3166
  %v3481 = vsub.f32 %v2905, %v3171
  %v3482 = vsub.f32 %v2906, %v3171
  %v3483 = vsub.f32 %v2907, %v3171
  %v3484 = vsub.f32 %v2908, %v3171
  %v3485 = vsub.f32 %v2909, %v3176
  %v3486 = vsub.f32 %v2910, %v3176
  %v3487 = vsub.f32 %v2911, %v3176
  %v3488 = vsub.f32 %v2912, %v3176
  %v3489 = vsub.f32 %v2913, %v3181
  %v3490 = vsub.f32 %v2914, %v3181
  %v3491 = vsub.f32 %v2915, %v3181
  %v3492 = vsub.f32 %v2916, %v3181
  %v3493 = vsub.f32 %v2917, %v3186
  %v3494 = vsub.f32 %v2918, %v3186
  %v3495 = vsub.f32 %v2919, %v3186
  %v3496 = vsub.f32 %v2920, %v3186
  %v3497 = vsub.f32 %v2921, %v3191
  %v3498 = vsub.f32 %v2922, %v3191
  %v3499 = vsub.f32 %v2923, %v3191
  %v3500 = vsub.f32 %v2924, %v3191
  %v3501 = vsub.f32 %v2925, %v3196
  %v3502 = vsub.f32 %v2926, %v3196
  %v3503 = vsub.f32 %v2927, %v3196
  %v3504 = vsub.f32 %v2928, %v3196
  %v3505 = vsub.f32 %v2929, %v3201
  %v3506 = vsub.f32 %v2930, %v3201
  %v3507 = vsub.f32 %v2931, %v3201
  %v3508 = vsub.f32 %v2932, %v3201
  %v3509 = vsub.f32 %v2933, %v3206
  %v3510 = vsub.f32 %v2934, %v3206
  %v3511 = vsub.f32 %v2935, %v3206
  %v3512 = vsub.f32 %v2936, %v3206
  %v3513 = vsub.f32 %v2937, %v3211
  %v3514 = vsub.f32 %v2938, %v3211
  %v3515 = vsub.f32 %v2939, %v3211
  %v3516 = vsub.f32 %v2940, %v3211
  %v3517 = vsub.f32 %v2941, %v3216
  %v3518 = vsub.f32 %v2942, %v3216
  %v3519 = vsub.f32 %v2943, %v3216
  %v3520 = vsub.f32 %v2944, %v3216
  %v3521 = vsub.f32 %v2945, %v3221
  %v3522 = vsub.f32 %v2946, %v3221
  %v3523 = vsub.f32 %v2947, %v3221
  %v3524 = vsub.f32 %v2948, %v3221
  %v3525 = vsub.f32 %v2949, %v3226
  %v3526 = vsub.f32 %v2950, %v3226
  %v3527 = vsub.f32 %v2951, %v3226
  %v3528 = vsub.f32 %v2952, %v3226
  %v3529 = vsub.f32 %v2953, %v3231
  %v3530 = vsub.f32 %v2954, %v3231
  %v3531 = vsub.f32 %v2955, %v3231
  %v3532 = vsub.f32 %v2956, %v3231
  %v3533 = vsub.f32 %v2957, %v3236
  %v3534 = vsub.f32 %v2958, %v3236
  %v3535 = vsub.f32 %v2959, %v3236
  %v3536 = vsub.f32 %v2960, %v3236
  %v3537 = vsub.f32 %v2961, %v3241
  %v3538 = vsub.f32 %v2962, %v3241
  %v3539 = vsub.f32 %v2963, %v3241
  %v3540 = vsub.f32 %v2964, %v3241
  %v3541 = vsub.f32 %v2965, %v3246
  %v3542 = vsub.f32 %v2966, %v3246
  %v3543 = vsub.f32 %v2967, %v3246
  %v3544 = vsub.f32 %v2968, %v3246
  %v3545 = vsub.f32 %v2969, %v3251
  %v3546 = vsub.f32 %v2970, %v3251
  %v3547 = vsub.f32 %v2971, %v3251
  %v3548 = vsub.f32 %v2972, %v3251
  %v3549 = vsub.f32 %v2973, %v3256
  %v3550 = vsub.f32 %v2974, %v3256
  %v3551 = vsub.f32 %v2975, %v3256
  %v3552 = vsub.f32 %v2976, %v3256
  %v3553 = vsub.f32 %v2977, %v3261
  %v3554 = vsub.f32 %v2978, %v3261
  %v3555 = vsub.f32 %v2979, %v3261
  %v3556 = vsub.f32 %v2980, %v3261
  %v3557 = vsub.f32 %v2981, %v3266
  %v3558 = vsub.f32 %v2982, %v3266
  %v3559 = vsub.f32 %v2983, %v3266
  %v3560 = vsub.f32 %v2984, %v3266
  %v3561 = vsub.f32 %v2985, %v3271
  %v3562 = vsub.f32 %v2986, %v3271
  %v3563 = vsub.f32 %v2987, %v3271
  %v3564 = vsub.f32 %v2988, %v3271
  %v3565 = vsub.f32 %v2989, %v3276
  %v3566 = vsub.f32 %v2990, %v3276
  %v3567 = vsub.f32 %v2991, %v3276
  %v3568 = vsub.f32 %v2992, %v3276
  %v3569 = vsub.f32 %v2993, %v3281
  %v3570 = vsub.f32 %v2994, %v3281
  %v3571 = vsub.f32 %v2995, %v3281
  %v3572 = vsub.f32 %v2996, %v3281
  %v3573 = vsub.f32 %v2997, %v3286
  %v3574 = vsub.f32 %v2998, %v3286
  %v3575 = vsub.f32 %v2999, %v3286
  %v3576 = vsub.f32 %v3000, %v3286
  %v3577 = vsub.f32 %v3001, %v3291
  %v3578 = vsub.f32 %v3002, %v3291
  %v3579 = vsub.f32 %v3003, %v3291
  %v3580 = vsub.f32 %v3004, %v3291
  %v3581 = vsub.f32 %v3005, %v3296
  %v3582 = vsub.f32 %v3006, %v3296
  %v3583 = vsub.f32 %v3007, %v3296
  %v3584 = vsub.f32 %v3008, %v3296
  %v3585 = vsub.f32 %v3009, %v3301
  %v3586 = vsub.f32 %v3010, %v3301
  %v3587 = vsub.f32 %v3011, %v3301
  %v3588 = vsub.f32 %v3012, %v3301
  %v3589 = vsub.f32 %v3013, %v3306
  %v3590 = vsub.f32 %v3014, %v3306
  %v3591 = vsub.f32 %v3015, %v3306
  %v3592 = vsub.f32 %v3016, %v3306
  %v3593 = vsub.f32 %v3017, %v3311
  %v3594 = vsub.f32 %v3018, %v3311
  %v3595 = vsub.f32 %v3019, %v3311
  %v3596 = vsub.f32 %v3020, %v3311
  %v3597 = vsub.f32 %v3021, %v3316
  %v3598 = vsub.f32 %v3022, %v3316
  %v3599 = vsub.f32 %v3023, %v3316
  %v3600 = vsub.f32 %v3024, %v3316
  %v3601 = vsub.f32 %v3025, %v3321
  %v3602 = vsub.f32 %v3026, %v3321
  %v3603 = vsub.f32 %v3027, %v3321
  %v3604 = vsub.f32 %v3028, %v3321
  %v3605 = vsub.f32 %v3029, %v3326
  %v3606 = vsub.f32 %v3030, %v3326
  %v3607 = vsub.f32 %v3031, %v3326
  %v3608 = vsub.f32 %v3032, %v3326
  %v3609 = vsub.f32 %v3033, %v3331
  %v3610 = vsub.f32 %v3034, %v3331
  %v3611 = vsub.f32 %v3035, %v3331
  %v3612 = vsub.f32 %v3036, %v3331
  %v3613 = vsub.f32 %v3037, %v3336
  %v3614 = vsub.f32 %v3038, %v3336
  %v3615 = vsub.f32 %v3039, %v3336
  %v3616 = vsub.f32 %v3040, %v3336
  %v3617 = vsub.f32 %v3041, %v3341
  %v3618 = vsub.f32 %v3042, %v3341
  %v3619 = vsub.f32 %v3043, %v3341
  %v3620 = vsub.f32 %v3044, %v3341
  %v3621 = vsub.f32 %v3045, %v3346
  %v3622 = vsub.f32 %v3046, %v3346
  %v3623 = vsub.f32 %v3047, %v3346
  %v3624 = vsub.f32 %v3048, %v3346
  %v3625 = vsub.f32 %v3049, %v3351
  %v3626 = vsub.f32 %v3050, %v3351
  %v3627 = vsub.f32 %v3051, %v3351
  %v3628 = vsub.f32 %v3052, %v3351
  %v3629 = vsub.f32 %v3053, %v3356
  %v3630 = vsub.f32 %v3054, %v3356
  %v3631 = vsub.f32 %v3055, %v3356
  %v3632 = vsub.f32 %v3056, %v3356
  %v3633 = vsub.f32 %v3057, %v3361
  %v3634 = vsub.f32 %v3058, %v3361
  %v3635 = vsub.f32 %v3059, %v3361
  %v3636 = vsub.f32 %v3060, %v3361
  %v3637 = vsub.f32 %v3061, %v3366
  %v3638 = vsub.f32 %v3062, %v3366
  %v3639 = vsub.f32 %v3063, %v3366
  %v3640 = vsub.f32 %v3064, %v3366
  %v3641 = vsub.f32 %v3065, %v3371
  %v3642 = vsub.f32 %v3066, %v3371
  %v3643 = vsub.f32 %v3067, %v3371
  %v3644 = vsub.f32 %v3068, %v3371
  %v3645 = vsub.f32 %v3069, %v3376
  %v3646 = vsub.f32 %v3070, %v3376
  %v3647 = vsub.f32 %v3071, %v3376
  %v3648 = vsub.f32 %v3072, %v3376
  %v3649 = vsub.f32 %v3073, %v3381
  %v3650 = vsub.f32 %v3074, %v3381
  %v3651 = vsub.f32 %v3075, %v3381
  %v3652 = vsub.f32 %v3076, %v3381
  %v3653 = vsub.f32 %v3077, %v3386
  %v3654 = vsub.f32 %v3078, %v3386
  %v3655 = vsub.f32 %v3079, %v3386
  %v3656 = vsub.f32 %v3080, %v3386
  %v3657 = vsub.f32 %v3081, %v3391
  %v3658 = vsub.f32 %v3082, %v3391
  %v3659 = vsub.f32 %v3083, %v3391
  %v3660 = vsub.f32 %v3084, %v3391
  %v3661 = vsub.f32 %v3085, %v3396
  %v3662 = vsub.f32 %v3086, %v3396
  %v3663 = vsub.f32 %v3087, %v3396
  %v3664 = vsub.f32 %v3088, %v3396
  %v3665 = vsub.f32 %v3089, %v3401
  %v3666 = vsub.f32 %v3090, %v3401
  %v3667 = vsub.f32 %v3091, %v3401
  %v3668 = vsub.f32 %v3092, %v3401
  %v3669 = vsub.f32 %v3093, %v3406
  %v3670 = vsub.f32 %v3094, %v3406
  %v3671 = vsub.f32 %v3095, %v3406
  %v3672 = vsub.f32 %v3096, %v3406
  %v3673 = vsub.f32 %v3097, %v3411
  %v3674 = vsub.f32 %v3098, %v3411
  %v3675 = vsub.f32 %v3099, %v3411
  %v3676 = vsub.f32 %v3100, %v3411
  %v3677 = vsub.f32 %v3101, %v3416
  %v3678 = vsub.f32 %v3102, %v3416
  %v3679 = vsub.f32 %v3103, %v3416
  %v3680 = vsub.f32 %v3104, %v3416
  %v3681 = vsub.f32 %v3105, %v3421
  %v3682 = vsub.f32 %v3106, %v3421
  %v3683 = vsub.f32 %v3107, %v3421
  %v3684 = vsub.f32 %v3108, %v3421
  %v3685 = vsub.f32 %v3109, %v3426
  %v3686 = vsub.f32 %v3110, %v3426
  %v3687 = vsub.f32 %v3111, %v3426
  %v3688 = vsub.f32 %v3112, %v3426
  %v3689 = vsub.f32 %v3113, %v3431
  %v3690 = vsub.f32 %v3114, %v3431
  %v3691 = vsub.f32 %v3115, %v3431
  %v3692 = vsub.f32 %v3116, %v3431
  %v3693 = vsub.f32 %v3117, %v3436
  %v3694 = vsub.f32 %v3118, %v3436
  %v3695 = vsub.f32 %v3119, %v3436
  %v3696 = vsub.f32 %v3120, %v3436
  %v3697 = vsub.f32 %v3121, %v3441
  %v3698 = vsub.f32 %v3122, %v3441
  %v3699 = vsub.f32 %v3123, %v3441
  %v3700 = vsub.f32 %v3124, %v3441
  %v3701 = vsub.f32 %v3125, %v3446
  %v3702 = vsub.f32 %v3126, %v3446
  %v3703 = vsub.f32 %v3127, %v3446
  %v3704 = vsub.f32 %v3128, %v3446
  %v3705 = vsub.f32 %v3129, %v3451
  %v3706 = vsub.f32 %v3130, %v3451
  %v3707 = vsub.f32 %v3131, %v3451
  %v3708 = vsub.f32 %v3132, %v3451
  %v3709 = vsub.f32 %v3133, %v3456
  %v3710 = vsub.f32 %v3134, %v3456
  %v3711 = vsub.f32 %v3135, %v3456
  %v3712 = vsub.f32 %v3136, %v3456
  %v3713 = vmul.f32 %v3457, 1.442695
  %v3714 = vpow.pop %v3713
  %v3715 = vmul.f32 %v3458, 1.442695
  %v3716 = vpow.pop %v3715
  %v3717 = vmul.f32 %v3459, 1.442695
  %v3718 = vpow.pop %v3717
  %v3719 = vmul.f32 %v3460, 1.442695
  %v3720 = vpow.pop %v3719
  %v3721 = vmul.f32 %v3461, 1.442695
  %v3722 = vpow.pop %v3721
  %v3723 = vmul.f32 %v3462, 1.442695
  %v3724 = vpow.pop %v3723
  %v3725 = vmul.f32 %v3463, 1.442695
  %v3726 = vpow.pop %v3725
  %v3727 = vmul.f32 %v3464, 1.442695
  %v3728 = vpow.pop %v3727
  %v3729 = vmul.f32 %v3465, 1.442695
  %v3730 = vpow.pop %v3729
  %v3731 = vmul.f32 %v3466, 1.442695
  %v3732 = vpow.pop %v3731
  %v3733 = vmul.f32 %v3467, 1.442695
  %v3734 = vpow.pop %v3733
  %v3735 = vmul.f32 %v3468, 1.442695
  %v3736 = vpow.pop %v3735
  %v3737 = vmul.f32 %v3469, 1.442695
  %v3738 = vpow.pop %v3737
  %v3739 = vmul.f32 %v3470, 1.442695
  %v3740 = vpow.pop %v3739
  %v3741 = vmul.f32 %v3471, 1.442695
  %v3742 = vpow.pop %v3741
  %v3743 = vmul.f32 %v3472, 1.442695
  %v3744 = vpow.pop %v3743
  %v3745 = vmul.f32 %v3473, 1.442695
  %v3746 = vpow.pop %v3745
  %v3747 = vmul.f32 %v3474, 1.442695
  %v3748 = vpow.pop %v3747
  %v3749 = vmul.f32 %v3475, 1.442695
  %v3750 = vpow.pop %v3749
  %v3751 = vmul.f32 %v3476, 1.442695
  %v3752 = vpow.pop %v3751
  %v3753 = vmul.f32 %v3477, 1.442695
  %v3754 = vpow.pop %v3753
  %v3755 = vmul.f32 %v3478, 1.442695
  %v3756 = vpow.pop %v3755
  %v3757 = vmul.f32 %v3479, 1.442695
  %v3758 = vpow.pop %v3757
  %v3759 = vmul.f32 %v3480, 1.442695
  %v3760 = vpow.pop %v3759
  %v3761 = vmul.f32 %v3481, 1.442695
  %v3762 = vpow.pop %v3761
  %v3763 = vmul.f32 %v3482, 1.442695
  %v3764 = vpow.pop %v3763
  %v3765 = vmul.f32 %v3483, 1.442695
  %v3766 = vpow.pop %v3765
  %v3767 = vmul.f32 %v3484, 1.442695
  %v3768 = vpow.pop %v3767
  %v3769 = vmul.f32 %v3485, 1.442695
  %v3770 = vpow.pop %v3769
  %v3771 = vmul.f32 %v3486, 1.442695
  %v3772 = vpow.pop %v3771
  %v3773 = vmul.f32 %v3487, 1.442695
  %v3774 = vpow.pop %v3773
  %v3775 = vmul.f32 %v3488, 1.442695
  %v3776 = vpow.pop %v3775
  %v3777 = vmul.f32 %v3489, 1.442695
  %v3778 = vpow.pop %v3777
  %v3779 = vmul.f32 %v3490, 1.442695
  %v3780 = vpow.pop %v3779
  %v3781 = vmul.f32 %v3491, 1.442695
  %v3782 = vpow.pop %v3781
  %v3783 = vmul.f32 %v3492, 1.442695
  %v3784 = vpow.pop %v3783
  %v3785 = vmul.f32 %v3493, 1.442695
  %v3786 = vpow.pop %v3785
  %v3787 = vmul.f32 %v3494, 1.442695
  %v3788 = vpow.pop %v3787
  %v3789 = vmul.f32 %v3495, 1.442695
  %v3790 = vpow.pop %v3789
  %v3791 = vmul.f32 %v3496, 1.442695
  %v3792 = vpow.pop %v3791
  %v3793 = vmul.f32 %v3497, 1.442695
  %v3794 = vpow.pop %v3793
  %v3795 = vmul.f32 %v3498, 1.442695
  %v3796 = vpow.pop %v3795
  %v3797 = vmul.f32 %v3499, 1.442695
  %v3798 = vpow.pop %v3797
  %v3799 = vmul.f32 %v3500, 1.442695
  %v3800 = vpow.pop %v3799
  %v3801 = vmul.f32 %v3501, 1.442695
  %v3802 = vpow.pop %v3801
  %v3803 = vmul.f32 %v3502, 1.442695
  %v3804 = vpow.pop %v3803
  %v3805 = vmul.f32 %v3503, 1.442695
  %v3806 = vpow.pop %v3805
  %v3807 = vmul.f32 %v3504, 1.442695
  %v3808 = vpow.pop %v3807
  %v3809 = vmul.f32 %v3505, 1.442695
  %v3810 = vpow.pop %v3809
  %v3811 = vmul.f32 %v3506, 1.442695
  %v3812 = vpow.pop %v3811
  %v3813 = vmul.f32 %v3507, 1.442695
  %v3814 = vpow.pop %v3813
  %v3815 = vmul.f32 %v3508, 1.442695
  %v3816 = vpow.pop %v3815
  %v3817 = vmul.f32 %v3509, 1.442695
  %v3818 = vpow.pop %v3817
  %v3819 = vmul.f32 %v3510, 1.442695
  %v3820 = vpow.pop %v3819
  %v3821 = vmul.f32 %v3511, 1.442695
  %v3822 = vpow.pop %v3821
  %v3823 = vmul.f32 %v3512, 1.442695
  %v3824 = vpow.pop %v3823
  %v3825 = vmul.f32 %v3513, 1.442695
  %v3826 = vpow.pop %v3825
  %v3827 = vmul.f32 %v3514, 1.442695
  %v3828 = vpow.pop %v3827
  %v3829 = vmul.f32 %v3515, 1.442695
  %v3830 = vpow.pop %v3829
  %v3831 = vmul.f32 %v3516, 1.442695
  %v3832 = vpow.pop %v3831
  %v3833 = vmul.f32 %v3517, 1.442695
  %v3834 = vpow.pop %v3833
  %v3835 = vmul.f32 %v3518, 1.442695
  %v3836 = vpow.pop %v3835
  %v3837 = vmul.f32 %v3519, 1.442695
  %v3838 = vpow.pop %v3837
  %v3839 = vmul.f32 %v3520, 1.442695
  %v3840 = vpow.pop %v3839
  %v3841 = vmul.f32 %v3521, 1.442695
  %v3842 = vpow.pop %v3841
  %v3843 = vmul.f32 %v3522, 1.442695
  %v3844 = vpow.pop %v3843
  %v3845 = vmul.f32 %v3523, 1.442695
  %v3846 = vpow.pop %v3845
  %v3847 = vmul.f32 %v3524, 1.442695
  %v3848 = vpow.pop %v3847
  %v3849 = vmul.f32 %v3525, 1.442695
  %v3850 = vpow.pop %v3849
  %v3851 = vmul.f32 %v3526, 1.442695
  %v3852 = vpow.pop %v3851
  %v3853 = vmul.f32 %v3527, 1.442695
  %v3854 = vpow.pop %v3853
  %v3855 = vmul.f32 %v3528, 1.442695
  %v3856 = vpow.pop %v3855
  %v3857 = vmul.f32 %v3529, 1.442695
  %v3858 = vpow.pop %v3857
  %v3859 = vmul.f32 %v3530, 1.442695
  %v3860 = vpow.pop %v3859
  %v3861 = vmul.f32 %v3531, 1.442695
  %v3862 = vpow.pop %v3861
  %v3863 = vmul.f32 %v3532, 1.442695
  %v3864 = vpow.pop %v3863
  %v3865 = vmul.f32 %v3533, 1.442695
  %v3866 = vpow.pop %v3865
  %v3867 = vmul.f32 %v3534, 1.442695
  %v3868 = vpow.pop %v3867
  %v3869 = vmul.f32 %v3535, 1.442695
  %v3870 = vpow.pop %v3869
  %v3871 = vmul.f32 %v3536, 1.442695
  %v3872 = vpow.pop %v3871
  %v3873 = vmul.f32 %v3537, 1.442695
  %v3874 = vpow.pop %v3873
  %v3875 = vmul.f32 %v3538, 1.442695
  %v3876 = vpow.pop %v3875
  %v3877 = vmul.f32 %v3539, 1.442695
  %v3878 = vpow.pop %v3877
  %v3879 = vmul.f32 %v3540, 1.442695
  %v3880 = vpow.pop %v3879
  %v3881 = vmul.f32 %v3541, 1.442695
  %v3882 = vpow.pop %v3881
  %v3883 = vmul.f32 %v3542, 1.442695
  %v3884 = vpow.pop %v3883
  %v3885 = vmul.f32 %v3543, 1.442695
  %v3886 = vpow.pop %v3885
  %v3887 = vmul.f32 %v3544, 1.442695
  %v3888 = vpow.pop %v3887
  %v3889 = vmul.f32 %v3545, 1.442695
  %v3890 = vpow.pop %v3889
  %v3891 = vmul.f32 %v3546, 1.442695
  %v3892 = vpow.pop %v3891
  %v3893 = vmul.f32 %v3547, 1.442695
  %v3894 = vpow.pop %v3893
  %v3895 = vmul.f32 %v3548, 1.442695
  %v3896 = vpow.pop %v3895
  %v3897 = vmul.f32 %v3549, 1.442695
  %v3898 = vpow.pop %v3897
  %v3899 = vmul.f32 %v3550, 1.442695
  %v3900 = vpow.pop %v3899
  %v3901 = vmul.f32 %v3551, 1.442695
  %v3902 = vpow.pop %v3901
  %v3903 = vmul.f32 %v3552, 1.442695
  %v3904 = vpow.pop %v3903
  %v3905 = vmul.f32 %v3553, 1.442695
  %v3906 = vpow.pop %v3905
  %v3907 = vmul.f32 %v3554, 1.442695
  %v3908 = vpow.pop %v3907
  %v3909 = vmul.f32 %v3555, 1.442695
  %v3910 = vpow.pop %v3909
  %v3911 = vmul.f32 %v3556, 1.442695
  %v3912 = vpow.pop %v3911
  %v3913 = vmul.f32 %v3557, 1.442695
  %v3914 = vpow.pop %v3913
  %v3915 = vmul.f32 %v3558, 1.442695
  %v3916 = vpow.pop %v3915
  %v3917 = vmul.f32 %v3559, 1.442695
  %v3918 = vpow.pop %v3917
  %v3919 = vmul.f32 %v3560, 1.442695
  %v3920 = vpow.pop %v3919
  %v3921 = vmul.f32 %v3561, 1.442695
  %v3922 = vpow.pop %v3921
  %v3923 = vmul.f32 %v3562, 1.442695
  %v3924 = vpow.pop %v3923
  %v3925 = vmul.f32 %v3563, 1.442695
  %v3926 = vpow.pop %v3925
  %v3927 = vmul.f32 %v3564, 1.442695
  %v3928 = vpow.pop %v3927
  %v3929 = vmul.f32 %v3565, 1.442695
  %v3930 = vpow.pop %v3929
  %v3931 = vmul.f32 %v3566, 1.442695
  %v3932 = vpow.pop %v3931
  %v3933 = vmul.f32 %v3567, 1.442695
  %v3934 = vpow.pop %v3933
  %v3935 = vmul.f32 %v3568, 1.442695
  %v3936 = vpow.pop %v3935
  %v3937 = vmul.f32 %v3569, 1.442695
  %v3938 = vpow.pop %v3937
  %v3939 = vmul.f32 %v3570, 1.442695
  %v3940 = vpow.pop %v3939
  %v3941 = vmul.f32 %v3571, 1.442695
  %v3942 = vpow.pop %v3941
  %v3943 = vmul.f32 %v3572, 1.442695
  %v3944 = vpow.pop %v3943
  %v3945 = vmul.f32 %v3573, 1.442695
  %v3946 = vpow.pop %v3945
  %v3947 = vmul.f32 %v3574, 1.442695
  %v3948 = vpow.pop %v3947
  %v3949 = vmul.f32 %v3575, 1.442695
  %v3950 = vpow.pop %v3949
  %v3951 = vmul.f32 %v3576, 1.442695
  %v3952 = vpow.pop %v3951
  %v3953 = vmul.f32 %v3577, 1.442695
  %v3954 = vpow.pop %v3953
  %v3955 = vmul.f32 %v3578, 1.442695
  %v3956 = vpow.pop %v3955
  %v3957 = vmul.f32 %v3579, 1.442695
  %v3958 = vpow.pop %v3957
  %v3959 = vmul.f32 %v3580, 1.442695
  %v3960 = vpow.pop %v3959
  %v3961 = vmul.f32 %v3581, 1.442695
  %v3962 = vpow.pop %v3961
  %v3963 = vmul.f32 %v3582, 1.442695
  %v3964 = vpow.pop %v3963
  %v3965 = vmul.f32 %v3583, 1.442695
  %v3966 = vpow.pop %v3965
  %v3967 = vmul.f32 %v3584, 1.442695
  %v3968 = vpow.pop %v3967
  %v3969 = vmul.f32 %v3585, 1.442695
  %v3970 = vpow.pop %v3969
  %v3971 = vmul.f32 %v3586, 1.442695
  %v3972 = vpow.pop %v3971
  %v3973 = vmul.f32 %v3587, 1.442695
  %v3974 = vpow.pop %v3973
  %v3975 = vmul.f32 %v3588, 1.442695
  %v3976 = vpow.pop %v3975
  %v3977 = vmul.f32 %v3589, 1.442695
  %v3978 = vpow.pop %v3977
  %v3979 = vmul.f32 %v3590, 1.442695
  %v3980 = vpow.pop %v3979
  %v3981 = vmul.f32 %v3591, 1.442695
  %v3982 = vpow.pop %v3981
  %v3983 = vmul.f32 %v3592, 1.442695
  %v3984 = vpow.pop %v3983
  %v3985 = vmul.f32 %v3593, 1.442695
  %v3986 = vpow.pop %v3985
  %v3987 = vmul.f32 %v3594, 1.442695
  %v3988 = vpow.pop %v3987
  %v3989 = vmul.f32 %v3595, 1.442695
  %v3990 = vpow.pop %v3989
  %v3991 = vmul.f32 %v3596, 1.442695
  %v3992 = vpow.pop %v3991
  %v3993 = vmul.f32 %v3597, 1.442695
  %v3994 = vpow.pop %v3993
  %v3995 = vmul.f32 %v3598, 1.442695
  %v3996 = vpow.pop %v3995
  %v3997 = vmul.f32 %v3599, 1.442695
  %v3998 = vpow.pop %v3997
  %v3999 = vmul.f32 %v3600, 1.442695
  %v4000 = vpow.pop %v3999
  %v4001 = vmul.f32 %v3601, 1.442695
  %v4002 = vpow.pop %v4001
  %v4003 = vmul.f32 %v3602, 1.442695
  %v4004 = vpow.pop %v4003
  %v4005 = vmul.f32 %v3603, 1.442695
  %v4006 = vpow.pop %v4005
  %v4007 = vmul.f32 %v3604, 1.442695
  %v4008 = vpow.pop %v4007
  %v4009 = vmul.f32 %v3605, 1.442695
  %v4010 = vpow.pop %v4009
  %v4011 = vmul.f32 %v3606, 1.442695
  %v4012 = vpow.pop %v4011
  %v4013 = vmul.f32 %v3607, 1.442695
  %v4014 = vpow.pop %v4013
  %v4015 = vmul.f32 %v3608, 1.442695
  %v4016 = vpow.pop %v4015
  %v4017 = vmul.f32 %v3609, 1.442695
  %v4018 = vpow.pop %v4017
  %v4019 = vmul.f32 %v3610, 1.442695
  %v4020 = vpow.pop %v4019
  %v4021 = vmul.f32 %v3611, 1.442695
  %v4022 = vpow.pop %v4021
  %v4023 = vmul.f32 %v3612, 1.442695
  %v4024 = vpow.pop %v4023
  %v4025 = vmul.f32 %v3613, 1.442695
  %v4026 = vpow.pop %v4025
  %v4027 = vmul.f32 %v3614, 1.442695
  %v4028 = vpow.pop %v4027
  %v4029 = vmul.f32 %v3615, 1.442695
  %v4030 = vpow.pop %v4029
  %v4031 = vmul.f32 %v3616, 1.442695
  %v4032 = vpow.pop %v4031
  %v4033 = vmul.f32 %v3617, 1.442695
  %v4034 = vpow.pop %v4033
  %v4035 = vmul.f32 %v3618, 1.442695
  %v4036 = vpow.pop %v4035
  %v4037 = vmul.f32 %v3619, 1.442695
  %v4038 = vpow.pop %v4037
  %v4039 = vmul.f32 %v3620, 1.442695
  %v4040 = vpow.pop %v4039
  %v4041 = vmul.f32 %v3621, 1.442695
  %v4042 = vpow.pop %v4041
  %v4043 = vmul.f32 %v3622, 1.442695
  %v4044 = vpow.pop %v4043
  %v4045 = vmul.f32 %v3623, 1.442695
  %v4046 = vpow.pop %v4045
  %v4047 = vmul.f32 %v3624, 1.442695
  %v4048 = vpow.pop %v4047
  %v4049 = vmul.f32 %v3625, 1.442695
  %v4050 = vpow.pop %v4049
  %v4051 = vmul.f32 %v3626, 1.442695
  %v4052 = vpow.pop %v4051
  %v4053 = vmul.f32 %v3627, 1.442695
  %v4054 = vpow.pop %v4053
  %v4055 = vmul.f32 %v3628, 1.442695
  %v4056 = vpow.pop %v4055
  %v4057 = vmul.f32 %v3629, 1.442695
  %v4058 = vpow.pop %v4057
  %v4059 = vmul.f32 %v3630, 1.442695
  %v4060 = vpow.pop %v4059
  %v4061 = vmul.f32 %v3631, 1.442695
  %v4062 = vpow.pop %v4061
  %v4063 = vmul.f32 %v3632, 1.442695
  %v4064 = vpow.pop %v4063
  %v4065 = vmul.f32 %v3633, 1.442695
  %v4066 = vpow.pop %v4065
  %v4067 = vmul.f32 %v3634, 1.442695
  %v4068 = vpow.pop %v4067
  %v4069 = vmul.f32 %v3635, 1.442695
  %v4070 = vpow.pop %v4069
  %v4071 = vmul.f32 %v3636, 1.442695
  %v4072 = vpow.pop %v4071
  %v4073 = vmul.f32 %v3637, 1.442695
  %v4074 = vpow.pop %v4073
  %v4075 = vmul.f32 %v3638, 1.442695
  %v4076 = vpow.pop %v4075
  %v4077 = vmul.f32 %v3639, 1.442695
  %v4078 = vpow.pop %v4077
  %v4079 = vmul.f32 %v3640, 1.442695
  %v4080 = vpow.pop %v4079
  %v4081 = vmul.f32 %v3641, 1.442695
  %v4082 = vpow.pop %v4081
  %v4083 = vmul.f32 %v3642, 1.442695
  %v4084 = vpow.pop %v4083
  %v4085 = vmul.f32 %v3643, 1.442695
  %v4086 = vpow.pop %v4085
  %v4087 = vmul.f32 %v3644, 1.442695
  %v4088 = vpow.pop %v4087
  %v4089 = vmul.f32 %v3645, 1.442695
  %v4090 = vpow.pop %v4089
  %v4091 = vmul.f32 %v3646, 1.442695
  %v4092 = vpow.pop %v4091
  %v4093 = vmul.f32 %v3647, 1.442695
  %v4094 = vpow.pop %v4093
  %v4095 = vmul.f32 %v3648, 1.442695
  %v4096 = vpow.pop %v4095
  %v4097 = vmul.f32 %v3649, 1.442695
  %v4098 = vpow.pop %v4097
  %v4099 = vmul.f32 %v3650, 1.442695
  %v4100 = vpow.pop %v4099
  %v4101 = vmul.f32 %v3651, 1.442695
  %v4102 = vpow.pop %v4101
  %v4103 = vmul.f32 %v3652, 1.442695
  %v4104 = vpow.pop %v4103
  %v4105 = vmul.f32 %v3653, 1.442695
  %v4106 = vpow.pop %v4105
  %v4107 = vmul.f32 %v3654, 1.442695
  %v4108 = vpow.pop %v4107
  %v4109 = vmul.f32 %v3655, 1.442695
  %v4110 = vpow.pop %v4109
  %v4111 = vmul.f32 %v3656, 1.442695
  %v4112 = vpow.pop %v4111
  %v4113 = vmul.f32 %v3657, 1.442695
  %v4114 = vpow.pop %v4113
  %v4115 = vmul.f32 %v3658, 1.442695
  %v4116 = vpow.pop %v4115
  %v4117 = vmul.f32 %v3659, 1.442695
  %v4118 = vpow.pop %v4117
  %v4119 = vmul.f32 %v3660, 1.442695
  %v4120 = vpow.pop %v4119
  %v4121 = vmul.f32 %v3661, 1.442695
  %v4122 = vpow.pop %v4121
  %v4123 = vmul.f32 %v3662, 1.442695
  %v4124 = vpow.pop %v4123
  %v4125 = vmul.f32 %v3663, 1.442695
  %v4126 = vpow.pop %v4125
  %v4127 = vmul.f32 %v3664, 1.442695
  %v4128 = vpow.pop %v4127
  %v4129 = vmul.f32 %v3665, 1.442695
  %v4130 = vpow.pop %v4129
  %v4131 = vmul.f32 %v3666, 1.442695
  %v4132 = vpow.pop %v4131
  %v4133 = vmul.f32 %v3667, 1.442695
  %v4134 = vpow.pop %v4133
  %v4135 = vmul.f32 %v3668, 1.442695
  %v4136 = vpow.pop %v4135
  %v4137 = vmul.f32 %v3669, 1.442695
  %v4138 = vpow.pop %v4137
  %v4139 = vmul.f32 %v3670, 1.442695
  %v4140 = vpow.pop %v4139
  %v4141 = vmul.f32 %v3671, 1.442695
  %v4142 = vpow.pop %v4141
  %v4143 = vmul.f32 %v3672, 1.442695
  %v4144 = vpow.pop %v4143
  %v4145 = vmul.f32 %v3673, 1.442695
  %v4146 = vpow.pop %v4145
  %v4147 = vmul.f32 %v3674, 1.442695
  %v4148 = vpow.pop %v4147
  %v4149 = vmul.f32 %v3675, 1.442695
  %v4150 = vpow.pop %v4149
  %v4151 = vmul.f32 %v3676, 1.442695
  %v4152 = vpow.pop %v4151
  %v4153 = vmul.f32 %v3677, 1.442695
  %v4154 = vpow.pop %v4153
  %v4155 = vmul.f32 %v3678, 1.442695
  %v4156 = vpow.pop %v4155
  %v4157 = vmul.f32 %v3679, 1.442695
  %v4158 = vpow.pop %v4157
  %v4159 = vmul.f32 %v3680, 1.442695
  %v4160 = vpow.pop %v4159
  %v4161 = vmul.f32 %v3681, 1.442695
  %v4162 = vpow.pop %v4161
  %v4163 = vmul.f32 %v3682, 1.442695
  %v4164 = vpow.pop %v4163
  %v4165 = vmul.f32 %v3683, 1.442695
  %v4166 = vpow.pop %v4165
  %v4167 = vmul.f32 %v3684, 1.442695
  %v4168 = vpow.pop %v4167
  %v4169 = vmul.f32 %v3685, 1.442695
  %v4170 = vpow.pop %v4169
  %v4171 = vmul.f32 %v3686, 1.442695
  %v4172 = vpow.pop %v4171
  %v4173 = vmul.f32 %v3687, 1.442695
  %v4174 = vpow.pop %v4173
  %v4175 = vmul.f32 %v3688, 1.442695
  %v4176 = vpow.pop %v4175
  %v4177 = vmul.f32 %v3689, 1.442695
  %v4178 = vpow.pop %v4177
  %v4179 = vmul.f32 %v3690, 1.442695
  %v4180 = vpow.pop %v4179
  %v4181 = vmul.f32 %v3691, 1.442695
  %v4182 = vpow.pop %v4181
  %v4183 = vmul.f32 %v3692, 1.442695
  %v4184 = vpow.pop %v4183
  %v4185 = vmul.f32 %v3693, 1.442695
  %v4186 = vpow.pop %v4185
  %v4187 = vmul.f32 %v3694, 1.442695
  %v4188 = vpow.pop %v4187
  %v4189 = vmul.f32 %v3695, 1.442695
  %v4190 = vpow.pop %v4189
  %v4191 = vmul.f32 %v3696, 1.442695
  %v4192 = vpow.pop %v4191
  %v4193 = vmul.f32 %v3697, 1.442695
  %v4194 = vpow.pop %v4193
  %v4195 = vmul.f32 %v3698, 1.442695
  %v4196 = vpow.pop %v4195
  %v4197 = vmul.f32 %v3699, 1.442695
  %v4198 = vpow.pop %v4197
  %v4199 = vmul.f32 %v3700, 1.442695
  %v4200 = vpow.pop %v4199
  %v4201 = vmul.f32 %v3701, 1.442695
  %v4202 = vpow.pop %v4201
  %v4203 = vmul.f32 %v3702, 1.442695
  %v4204 = vpow.pop %v4203
  %v4205 = vmul.f32 %v3703, 1.442695
  %v4206 = vpow.pop %v4205
  %v4207 = vmul.f32 %v3704, 1.442695
  %v4208 = vpow.pop %v4207
  %v4209 = vmul.f32 %v3705, 1.442695
  %v4210 = vpow.pop %v4209
  %v4211 = vmul.f32 %v3706, 1.442695
  %v4212 = vpow.pop %v4211
  %v4213 = vmul.f32 %v3707, 1.442695
  %v4214 = vpow.pop %v4213
  %v4215 = vmul.f32 %v3708, 1.442695
  %v4216 = vpow.pop %v4215
  %v4217 = vmul.f32 %v3709, 1.442695
  %v4218 = vpow.pop %v4217
  %v4219 = vmul.f32 %v3710, 1.442695
  %v4220 = vpow.pop %v4219
  %v4221 = vmul.f32 %v3711, 1.442695
  %v4222 = vpow.pop %v4221
  %v4223 = vmul.f32 %v3712, 1.442695
  %v4224 = vpow.pop %v4223
  %v4225 = vpack.c.bf16 %v3722, %v3714
  %v4226 = vpack.c.bf16 %v3724, %v3716
  %v4227 = vpack.c.bf16 %v3726, %v3718
  %v4228 = vpack.c.bf16 %v3728, %v3720
  %v4229 = vpack.c.bf16 %v3738, %v3730
  %v4230 = vpack.c.bf16 %v3740, %v3732
  %v4231 = vpack.c.bf16 %v3742, %v3734
  %v4232 = vpack.c.bf16 %v3744, %v3736
  %v4233 = vpack.c.bf16 %v3754, %v3746
  %v4234 = vpack.c.bf16 %v3756, %v3748
  %v4235 = vpack.c.bf16 %v3758, %v3750
  %v4236 = vpack.c.bf16 %v3760, %v3752
  %v4237 = vpack.c.bf16 %v3770, %v3762
  %v4238 = vpack.c.bf16 %v3772, %v3764
  %v4239 = vpack.c.bf16 %v3774, %v3766
  %v4240 = vpack.c.bf16 %v3776, %v3768
  %v4241 = vpack.c.bf16 %v3786, %v3778
  %v4242 = vpack.c.bf16 %v3788, %v3780
  %v4243 = vpack.c.bf16 %v3790, %v3782
  %v4244 = vpack.c.bf16 %v3792, %v3784
  %v4245 = vpack.c.bf16 %v3802, %v3794
  %v4246 = vpack.c.bf16 %v3804, %v3796
  %v4247 = vpack.c.bf16 %v3806, %v3798
  %v4248 = vpack.c.bf16 %v3808, %v3800
  %v4249 = vpack.c.bf16 %v3818, %v3810
  %v4250 = vpack.c.bf16 %v3820, %v3812
  %v4251 = vpack.c.bf16 %v3822, %v3814
  %v4252 = vpack.c.bf16 %v3824, %v3816
  %v4253 = vpack.c.bf16 %v3834, %v3826
  %v4254 = vpack.c.bf16 %v3836, %v3828
  %v4255 = vpack.c.bf16 %v3838, %v3830
  %v4256 = vpack.c.bf16 %v3840, %v3832
  %v4257 = vpack.c.bf16 %v3850, %v3842
  %v4258 = vpack.c.bf16 %v3852, %v3844
  %v4259 = vpack.c.bf16 %v3854, %v3846
  %v4260 = vpack.c.bf16 %v3856, %v3848
  %v4261 = vpack.c.bf16 %v3866, %v3858
  %v4262 = vpack.c.bf16 %v3868, %v3860
  %v4263 = vpack.c.bf16 %v3870, %v3862
  %v4264 = vpack.c.bf16 %v3872, %v3864
  %v4265 = vpack.c.bf16 %v3882, %v3874
  %v4266 = vpack.c.bf16 %v3884, %v3876
  %v4267 = vpack.c.bf16 %v3886, %v3878
  %v4268 = vpack.c.bf16 %v3888, %v3880
  %v4269 = vpack.c.bf16 %v3898, %v3890
  %v4270 = vpack.c.bf16 %v3900, %v3892
  %v4271 = vpack.c.bf16 %v3902, %v3894
  %v4272 = vpack.c.bf16 %v3904, %v3896
  %v4273 = vpack.c.bf16 %v3914, %v3906
  %v4274 = vpack.c.bf16 %v3916, %v3908
  %v4275 = vpack.c.bf16 %v3918, %v3910
  %v4276 = vpack.c.bf16 %v3920, %v3912
  %v4277 = vpack.c.bf16 %v3930, %v3922
  %v4278 = vpack.c.bf16 %v3932, %v3924
  %v4279 = vpack.c.bf16 %v3934, %v3926
  %v4280 = vpack.c.bf16 %v3936, %v3928
  %v4281 = vpack.c.bf16 %v3946, %v3938
  %v4282 = vpack.c.bf16 %v3948, %v3940
  %v4283 = vpack.c.bf16 %v3950, %v3942
  %v4284 = vpack.c.bf16 %v3952, %v3944
  %v4285 = vpack.c.bf16 %v3962, %v3954
  %v4286 = vpack.c.bf16 %v3964, %v3956
  %v4287 = vpack.c.bf16 %v3966, %v3958
  %v4288 = vpack.c.bf16 %v3968, %v3960
  %v4289 = vpack.c.bf16 %v3978, %v3970
  %v4290 = vpack.c.bf16 %v3980, %v3972
  %v4291 = vpack.c.bf16 %v3982, %v3974
  %v4292 = vpack.c.bf16 %v3984, %v3976
  %v4293 = vpack.c.bf16 %v3994, %v3986
  %v4294 = vpack.c.bf16 %v3996, %v3988
  %v4295 = vpack.c.bf16 %v3998, %v3990
  %v4296 = vpack.c.bf16 %v4000, %v3992
  %v4297 = vpack.c.bf16 %v4010, %v4002
  %v4298 = vpack.c.bf16 %v4012, %v4004
  %v4299 = vpack.c.bf16 %v4014, %v4006
  %v4300 = vpack.c.bf16 %v4016, %v4008
  %v4301 = vpack.c.bf16 %v4026, %v4018
  %v4302 = vpack.c.bf16 %v4028, %v4020
  %v4303 = vpack.c.bf16 %v4030, %v4022
  %v4304 = vpack.c.bf16 %v4032, %v4024
  %v4305 = vpack.c.bf16 %v4042, %v4034
  %v4306 = vpack.c.bf16 %v4044, %v4036
  %v4307 = vpack.c.bf16 %v4046, %v4038
  %v4308 = vpack.c.bf16 %v4048, %v4040
  %v4309 = vpack.c.bf16 %v4058, %v4050
  %v4310 = vpack.c.bf16 %v4060, %v4052
  %v4311 = vpack.c.bf16 %v4062, %v4054
  %v4312 = vpack.c.bf16 %v4064, %v4056
  %v4313 = vpack.c.bf16 %v4074, %v4066
  %v4314 = vpack.c.bf16 %v4076, %v4068
  %v4315 = vpack.c.bf16 %v4078, %v4070
  %v4316 = vpack.c.bf16 %v4080, %v4072
  %v4317 = vpack.c.bf16 %v4090, %v4082
  %v4318 = vpack.c.bf16 %v4092, %v4084
  %v4319 = vpack.c.bf16 %v4094, %v4086
  %v4320 = vpack.c.bf16 %v4096, %v4088
  %v4321 = vpack.c.bf16 %v4106, %v4098
  %v4322 = vpack.c.bf16 %v4108, %v4100
  %v4323 = vpack.c.bf16 %v4110, %v4102
  %v4324 = vpack.c.bf16 %v4112, %v4104
  %v4325 = vpack.c.bf16 %v4122, %v4114
  %v4326 = vpack.c.bf16 %v4124, %v4116
  %v4327 = vpack.c.bf16 %v4126, %v4118
  %v4328 = vpack.c.bf16 %v4128, %v4120
  %v4329 = vpack.c.bf16 %v4138, %v4130
  %v4330 = vpack.c.bf16 %v4140, %v4132
  %v4331 = vpack.c.bf16 %v4142, %v4134
  %v4332 = vpack.c.bf16 %v4144, %v4136
  %v4333 = vpack.c.bf16 %v4154, %v4146
  %v4334 = vpack.c.bf16 %v4156, %v4148
  %v4335 = vpack.c.bf16 %v4158, %v4150
  %v4336 = vpack.c.bf16 %v4160, %v4152
  %v4337 = vpack.c.bf16 %v4170, %v4162
  %v4338 = vpack.c.bf16 %v4172, %v4164
  %v4339 = vpack.c.bf16 %v4174, %v4166
  %v4340 = vpack.c.bf16 %v4176, %v4168
  %v4341 = vpack.c.bf16 %v4186, %v4178
  %v4342 = vpack.c.bf16 %v4188, %v4180
  %v4343 = vpack.c.bf16 %v4190, %v4182
  %v4344 = vpack.c.bf16 %v4192, %v4184
  %v4345 = vpack.c.bf16 %v4202, %v4194
  %v4346 = vpack.c.bf16 %v4204, %v4196
  %v4347 = vpack.c.bf16 %v4206, %v4198
  %v4348 = vpack.c.bf16 %v4208, %v4200
  %v4349 = vpack.c.bf16 %v4218, %v4210
  %v4350 = vpack.c.bf16 %v4220, %v4212
  %v4351 = vpack.c.bf16 %v4222, %v4214
  %v4352 = vpack.c.bf16 %v4224, %v4216
  %v4353 = vpack.c.bf16 %v1860, %v1857
  %v4354 = vpack.c.bf16 %v1868, %v1865
  %v4355 = vpack.c.bf16 %v1876, %v1873
  %v4356 = vpack.c.bf16 %v1884, %v1881
  %v4357 = vpack.c.bf16 %v1892, %v1889
  %v4358 = vpack.c.bf16 %v1900, %v1897
  %v4359 = vpack.c.bf16 %v1908, %v1905
  %v4360 = vpack.c.bf16 %v1916, %v1913
  %v4361 = vpack.c.bf16 %v1924, %v1921
  %v4362 = vpack.c.bf16 %v1932, %v1929
  %v4363 = vpack.c.bf16 %v1940, %v1937
  %v4364 = vpack.c.bf16 %v1948, %v1945
  %v4365 = vpack.c.bf16 %v1956, %v1953
  %v4366 = vpack.c.bf16 %v1964, %v1961
  %v4367 = vpack.c.bf16 %v1972, %v1969
  %v4368 = vpack.c.bf16 %v1980, %v1977
  %v4369 = vpack.c.bf16 %v1988, %v1985
  %v4370 = vpack.c.bf16 %v1996, %v1993
  %v4371 = vpack.c.bf16 %v2004, %v2001
  %v4372 = vpack.c.bf16 %v2012, %v2009
  %v4373 = vpack.c.bf16 %v2020, %v2017
  %v4374 = vpack.c.bf16 %v2028, %v2025
  %v4375 = vpack.c.bf16 %v2036, %v2033
  %v4376 = vpack.c.bf16 %v2044, %v2041
  %v4377 = vpack.c.bf16 %v2052, %v2049
  %v4378 = vpack.c.bf16 %v2060, %v2057
  %v4379 = vpack.c.bf16 %v2068, %v2065
  %v4380 = vpack.c.bf16 %v2076, %v2073
  %v4381 = vpack.c.bf16 %v2084, %v2081
  %v4382 = vpack.c.bf16 %v2092, %v2089
  %v4383 = vpack.c.bf16 %v2100, %v2097
  %v4384 = vpack.c.bf16 %v2108, %v2105
  %4385 = vmatprep.subr.bf16.mxu0 0
  %4386 = vmatpush1.bf16.msra.mxu0 %v4360
  %4387 = vmatprep.subr.bf16.mxu0 0
  %4388 = vmatpush1.bf16.msra.mxu0 %v4359
  %4389 = vmatprep.subr.bf16.mxu0 0
  %4390 = vmatpush1.bf16.msra.mxu0 %v4358
  %4391 = vmatprep.subr.bf16.mxu0 0
  %4392 = vmatpush1.bf16.msra.mxu0 %v4357
  %4393 = vmatprep.subr.bf16.mxu0 0
  %4394 = vmatpush1.bf16.msra.mxu0 %v4356
  %4395 = vmatprep.subr.bf16.mxu0 0
  %4396 = vmatpush1.bf16.msra.mxu0 %v4355
  %4397 = vmatprep.subr.bf16.mxu0 0
  %4398 = vmatpush1.bf16.msra.mxu0 %v4354
  %4399 = vmatprep.subr.bf16.mxu0 0
  %4400 = vmatpush1.bf16.msra.mxu0 %v4353
  %4401 = vmatprep.subr.bf16.mxu0 0
  %4402 = vmatpush2.bf16.msra.mxu0 %v4368
  %4403 = vmatprep.subr.bf16.mxu0 0
  %4404 = vmatpush2.bf16.msra.mxu0 %v4367
  %4405 = vmatprep.subr.bf16.mxu0 0
  %4406 = vmatpush2.bf16.msra.mxu0 %v4366
  %4407 = vmatprep.subr.bf16.mxu0 0
  %4408 = vmatpush2.bf16.msra.mxu0 %v4365
  %4409 = vmatprep.subr.bf16.mxu0 0
  %4410 = vmatpush2.bf16.msra.mxu0 %v4364
  %4411 = vmatprep.subr.bf16.mxu0 0
  %4412 = vmatpush2.bf16.msra.mxu0 %v4363
  %4413 = vmatprep.subr.bf16.mxu0 0
  %4414 = vmatpush2.bf16.msra.mxu0 %v4362
  %4415 = vmatprep.subr.bf16.mxu0 0
  %4416 = vmatpush2.bf16.msra.mxu0 %v4361
  %4417 = vmatprep.mubr.bf16.mxu0 %v4226
  %4418 = vmatmul.mubr.bf16.gmra.mxu0 %v4225
  %v4419 = vpop.f32.mrf.mxu0
  %v4420 = vadd.f32 0.0, %v4419
  %v4421 = vpop.f32.mrf.mxu0
  %v4422 = vpop.f32.mrf.mxu0
  %v4423 = vadd.f32 0.0, %v4422
  %v4424 = vpop.f32.mrf.mxu0
  %4425 = vmatprep.mubr.bf16.mxu0 %v4230
  %4426 = vmatmul.mubr.bf16.gmra.mxu0 %v4229
  %v4427 = vpop.f32.mrf.mxu0
  %v4428 = vadd.f32 0.0, %v4427
  %v4429 = vpop.f32.mrf.mxu0
  %v4430 = vpop.f32.mrf.mxu0
  %v4431 = vadd.f32 0.0, %v4430
  %v4432 = vpop.f32.mrf.mxu0
  %4433 = vmatprep.mubr.bf16.mxu0 %v4234
  %4434 = vmatmul.mubr.bf16.gmra.mxu0 %v4233
  %v4435 = vpop.f32.mrf.mxu0
  %v4436 = vadd.f32 0.0, %v4435
  %v4437 = vpop.f32.mrf.mxu0
  %v4438 = vpop.f32.mrf.mxu0
  %v4439 = vadd.f32 0.0, %v4438
  %v4440 = vpop.f32.mrf.mxu0
  %4441 = vmatprep.mubr.bf16.mxu0 %v4238
  %4442 = vmatmul.mubr.bf16.gmra.mxu0 %v4237
  %v4443 = vpop.f32.mrf.mxu0
  %v4444 = vadd.f32 0.0, %v4443
  %v4445 = vpop.f32.mrf.mxu0
  %v4446 = vpop.f32.mrf.mxu0
  %v4447 = vadd.f32 0.0, %v4446
  %v4448 = vpop.f32.mrf.mxu0
  %4449 = vmatprep.mubr.bf16.mxu0 %v4242
  %4450 = vmatmul.mubr.bf16.gmra.mxu0 %v4241
  %v4451 = vpop.f32.mrf.mxu0
  %v4452 = vadd.f32 0.0, %v4451
  %v4453 = vpop.f32.mrf.mxu0
  %v4454 = vpop.f32.mrf.mxu0
  %v4455 = vadd.f32 0.0, %v4454
  %v4456 = vpop.f32.mrf.mxu0
  %4457 = vmatprep.mubr.bf16.mxu0 %v4246
  %4458 = vmatmul.mubr.bf16.gmra.mxu0 %v4245
  %v4459 = vpop.f32.mrf.mxu0
  %v4460 = vadd.f32 0.0, %v4459
  %v4461 = vpop.f32.mrf.mxu0
  %v4462 = vpop.f32.mrf.mxu0
  %v4463 = vadd.f32 0.0, %v4462
  %v4464 = vpop.f32.mrf.mxu0
  %4465 = vmatprep.mubr.bf16.mxu0 %v4250
  %4466 = vmatmul.mubr.bf16.gmra.mxu0 %v4249
  %v4467 = vpop.f32.mrf.mxu0
  %v4468 = vadd.f32 0.0, %v4467
  %v4469 = vpop.f32.mrf.mxu0
  %v4470 = vpop.f32.mrf.mxu0
  %v4471 = vadd.f32 0.0, %v4470
  %v4472 = vpop.f32.mrf.mxu0
  %4473 = vmatprep.mubr.bf16.mxu0 %v4254
  %4474 = vmatmul.mubr.bf16.gmra.mxu0 %v4253
  %v4475 = vpop.f32.mrf.mxu0
  %v4476 = vadd.f32 0.0, %v4475
  %v4477 = vpop.f32.mrf.mxu0
  %v4478 = vpop.f32.mrf.mxu0
  %v4479 = vadd.f32 0.0, %v4478
  %v4480 = vpop.f32.mrf.mxu0
  %4481 = vmatprep.mubr.bf16.mxu0 %v4258
  %4482 = vmatmul.mubr.bf16.gmra.mxu0 %v4257
  %v4483 = vpop.f32.mrf.mxu0
  %v4484 = vadd.f32 0.0, %v4483
  %v4485 = vpop.f32.mrf.mxu0
  %v4486 = vpop.f32.mrf.mxu0
  %v4487 = vadd.f32 0.0, %v4486
  %v4488 = vpop.f32.mrf.mxu0
  %4489 = vmatprep.mubr.bf16.mxu0 %v4262
  %4490 = vmatmul.mubr.bf16.gmra.mxu0 %v4261
  %v4491 = vpop.f32.mrf.mxu0
  %v4492 = vadd.f32 0.0, %v4491
  %v4493 = vpop.f32.mrf.mxu0
  %v4494 = vpop.f32.mrf.mxu0
  %v4495 = vadd.f32 0.0, %v4494
  %v4496 = vpop.f32.mrf.mxu0
  %4497 = vmatprep.mubr.bf16.mxu0 %v4266
  %4498 = vmatmul.mubr.bf16.gmra.mxu0 %v4265
  %v4499 = vpop.f32.mrf.mxu0
  %v4500 = vadd.f32 0.0, %v4499
  %v4501 = vpop.f32.mrf.mxu0
  %v4502 = vpop.f32.mrf.mxu0
  %v4503 = vadd.f32 0.0, %v4502
  %v4504 = vpop.f32.mrf.mxu0
  %4505 = vmatprep.mubr.bf16.mxu0 %v4270
  %4506 = vmatmul.mubr.bf16.gmra.mxu0 %v4269
  %v4507 = vpop.f32.mrf.mxu0
  %v4508 = vadd.f32 0.0, %v4507
  %v4509 = vpop.f32.mrf.mxu0
  %v4510 = vpop.f32.mrf.mxu0
  %v4511 = vadd.f32 0.0, %v4510
  %v4512 = vpop.f32.mrf.mxu0
  %4513 = vmatprep.mubr.bf16.mxu0 %v4274
  %4514 = vmatmul.mubr.bf16.gmra.mxu0 %v4273
  %v4515 = vpop.f32.mrf.mxu0
  %v4516 = vadd.f32 0.0, %v4515
  %v4517 = vpop.f32.mrf.mxu0
  %v4518 = vpop.f32.mrf.mxu0
  %v4519 = vadd.f32 0.0, %v4518
  %v4520 = vpop.f32.mrf.mxu0
  %4521 = vmatprep.mubr.bf16.mxu0 %v4278
  %4522 = vmatmul.mubr.bf16.gmra.mxu0 %v4277
  %v4523 = vpop.f32.mrf.mxu0
  %v4524 = vadd.f32 0.0, %v4523
  %v4525 = vpop.f32.mrf.mxu0
  %v4526 = vpop.f32.mrf.mxu0
  %v4527 = vadd.f32 0.0, %v4526
  %v4528 = vpop.f32.mrf.mxu0
  %4529 = vmatprep.mubr.bf16.mxu0 %v4282
  %4530 = vmatmul.mubr.bf16.gmra.mxu0 %v4281
  %v4531 = vpop.f32.mrf.mxu0
  %v4532 = vadd.f32 0.0, %v4531
  %v4533 = vpop.f32.mrf.mxu0
  %v4534 = vpop.f32.mrf.mxu0
  %v4535 = vadd.f32 0.0, %v4534
  %v4536 = vpop.f32.mrf.mxu0
  %4537 = vmatprep.mubr.bf16.mxu0 %v4286
  %4538 = vmatmul.mubr.bf16.gmra.mxu0 %v4285
  %v4539 = vpop.f32.mrf.mxu0
  %v4540 = vadd.f32 0.0, %v4539
  %v4541 = vpop.f32.mrf.mxu0
  %v4542 = vpop.f32.mrf.mxu0
  %v4543 = vadd.f32 0.0, %v4542
  %v4544 = vpop.f32.mrf.mxu0
  %4545 = vmatprep.mubr.bf16.mxu0 %v4290
  %4546 = vmatmul.mubr.bf16.gmra.mxu0 %v4289
  %v4547 = vpop.f32.mrf.mxu0
  %v4548 = vadd.f32 0.0, %v4547
  %v4549 = vpop.f32.mrf.mxu0
  %v4550 = vpop.f32.mrf.mxu0
  %v4551 = vadd.f32 0.0, %v4550
  %v4552 = vpop.f32.mrf.mxu0
  %4553 = vmatprep.mubr.bf16.mxu0 %v4294
  %4554 = vmatmul.mubr.bf16.gmra.mxu0 %v4293
  %v4555 = vpop.f32.mrf.mxu0
  %v4556 = vadd.f32 0.0, %v4555
  %v4557 = vpop.f32.mrf.mxu0
  %v4558 = vpop.f32.mrf.mxu0
  %v4559 = vadd.f32 0.0, %v4558
  %v4560 = vpop.f32.mrf.mxu0
  %4561 = vmatprep.mubr.bf16.mxu0 %v4298
  %4562 = vmatmul.mubr.bf16.gmra.mxu0 %v4297
  %v4563 = vpop.f32.mrf.mxu0
  %v4564 = vadd.f32 0.0, %v4563
  %v4565 = vpop.f32.mrf.mxu0
  %v4566 = vpop.f32.mrf.mxu0
  %v4567 = vadd.f32 0.0, %v4566
  %v4568 = vpop.f32.mrf.mxu0
  %4569 = vmatprep.mubr.bf16.mxu0 %v4302
  %4570 = vmatmul.mubr.bf16.gmra.mxu0 %v4301
  %v4571 = vpop.f32.mrf.mxu0
  %v4572 = vadd.f32 0.0, %v4571
  %v4573 = vpop.f32.mrf.mxu0
  %v4574 = vpop.f32.mrf.mxu0
  %v4575 = vadd.f32 0.0, %v4574
  %v4576 = vpop.f32.mrf.mxu0
  %4577 = vmatprep.mubr.bf16.mxu0 %v4306
  %4578 = vmatmul.mubr.bf16.gmra.mxu0 %v4305
  %v4579 = vpop.f32.mrf.mxu0
  %v4580 = vadd.f32 0.0, %v4579
  %v4581 = vpop.f32.mrf.mxu0
  %v4582 = vpop.f32.mrf.mxu0
  %v4583 = vadd.f32 0.0, %v4582
  %v4584 = vpop.f32.mrf.mxu0
  %4585 = vmatprep.mubr.bf16.mxu0 %v4310
  %4586 = vmatmul.mubr.bf16.gmra.mxu0 %v4309
  %v4587 = vpop.f32.mrf.mxu0
  %v4588 = vadd.f32 0.0, %v4587
  %v4589 = vpop.f32.mrf.mxu0
  %v4590 = vpop.f32.mrf.mxu0
  %v4591 = vadd.f32 0.0, %v4590
  %v4592 = vpop.f32.mrf.mxu0
  %4593 = vmatprep.mubr.bf16.mxu0 %v4314
  %4594 = vmatmul.mubr.bf16.gmra.mxu0 %v4313
  %v4595 = vpop.f32.mrf.mxu0
  %v4596 = vadd.f32 0.0, %v4595
  %v4597 = vpop.f32.mrf.mxu0
  %v4598 = vpop.f32.mrf.mxu0
  %v4599 = vadd.f32 0.0, %v4598
  %v4600 = vpop.f32.mrf.mxu0
  %4601 = vmatprep.mubr.bf16.mxu0 %v4318
  %4602 = vmatmul.mubr.bf16.gmra.mxu0 %v4317
  %v4603 = vpop.f32.mrf.mxu0
  %v4604 = vadd.f32 0.0, %v4603
  %v4605 = vpop.f32.mrf.mxu0
  %v4606 = vpop.f32.mrf.mxu0
  %v4607 = vadd.f32 0.0, %v4606
  %v4608 = vpop.f32.mrf.mxu0
  %4609 = vmatprep.mubr.bf16.mxu0 %v4322
  %4610 = vmatmul.mubr.bf16.gmra.mxu0 %v4321
  %v4611 = vpop.f32.mrf.mxu0
  %v4612 = vadd.f32 0.0, %v4611
  %v4613 = vpop.f32.mrf.mxu0
  %v4614 = vpop.f32.mrf.mxu0
  %v4615 = vadd.f32 0.0, %v4614
  %v4616 = vpop.f32.mrf.mxu0
  %4617 = vmatprep.mubr.bf16.mxu0 %v4326
  %4618 = vmatmul.mubr.bf16.gmra.mxu0 %v4325
  %v4619 = vpop.f32.mrf.mxu0
  %v4620 = vadd.f32 0.0, %v4619
  %v4621 = vpop.f32.mrf.mxu0
  %v4622 = vpop.f32.mrf.mxu0
  %v4623 = vadd.f32 0.0, %v4622
  %v4624 = vpop.f32.mrf.mxu0
  %4625 = vmatprep.mubr.bf16.mxu0 %v4330
  %4626 = vmatmul.mubr.bf16.gmra.mxu0 %v4329
  %v4627 = vpop.f32.mrf.mxu0
  %v4628 = vadd.f32 0.0, %v4627
  %v4629 = vpop.f32.mrf.mxu0
  %v4630 = vpop.f32.mrf.mxu0
  %v4631 = vadd.f32 0.0, %v4630
  %v4632 = vpop.f32.mrf.mxu0
  %4633 = vmatprep.mubr.bf16.mxu0 %v4334
  %4634 = vmatmul.mubr.bf16.gmra.mxu0 %v4333
  %v4635 = vpop.f32.mrf.mxu0
  %v4636 = vadd.f32 0.0, %v4635
  %v4637 = vpop.f32.mrf.mxu0
  %v4638 = vpop.f32.mrf.mxu0
  %v4639 = vadd.f32 0.0, %v4638
  %v4640 = vpop.f32.mrf.mxu0
  %4641 = vmatprep.mubr.bf16.mxu0 %v4338
  %4642 = vmatmul.mubr.bf16.gmra.mxu0 %v4337
  %v4643 = vpop.f32.mrf.mxu0
  %v4644 = vadd.f32 0.0, %v4643
  %v4645 = vpop.f32.mrf.mxu0
  %v4646 = vpop.f32.mrf.mxu0
  %v4647 = vadd.f32 0.0, %v4646
  %v4648 = vpop.f32.mrf.mxu0
  %4649 = vmatprep.mubr.bf16.mxu0 %v4342
  %4650 = vmatmul.mubr.bf16.gmra.mxu0 %v4341
  %v4651 = vpop.f32.mrf.mxu0
  %v4652 = vadd.f32 0.0, %v4651
  %v4653 = vpop.f32.mrf.mxu0
  %v4654 = vpop.f32.mrf.mxu0
  %v4655 = vadd.f32 0.0, %v4654
  %v4656 = vpop.f32.mrf.mxu0
  %4657 = vmatprep.mubr.bf16.mxu0 %v4346
  %4658 = vmatmul.mubr.bf16.gmra.mxu0 %v4345
  %v4659 = vpop.f32.mrf.mxu0
  %v4660 = vadd.f32 0.0, %v4659
  %v4661 = vpop.f32.mrf.mxu0
  %v4662 = vpop.f32.mrf.mxu0
  %v4663 = vadd.f32 0.0, %v4662
  %v4664 = vpop.f32.mrf.mxu0
  %4665 = vmatprep.mubr.bf16.mxu0 %v4350
  %4666 = vmatmul.mubr.bf16.gmra.mxu0 %v4349
  %v4667 = vpop.f32.mrf.mxu0
  %v4668 = vadd.f32 0.0, %v4667
  %v4669 = vpop.f32.mrf.mxu0
  %v4670 = vpop.f32.mrf.mxu0
  %v4671 = vadd.f32 0.0, %v4670
  %v4672 = vpop.f32.mrf.mxu0
  %4673 = vdwg.mxu0
  %4674 = vmatprep.subr.bf16.mxu0 0
  %4675 = vmatpush1.bf16.msra.mxu0 %v4376
  %4676 = vmatprep.subr.bf16.mxu0 0
  %4677 = vmatpush1.bf16.msra.mxu0 %v4375
  %4678 = vmatprep.subr.bf16.mxu0 0
  %4679 = vmatpush1.bf16.msra.mxu0 %v4374
  %4680 = vmatprep.subr.bf16.mxu0 0
  %4681 = vmatpush1.bf16.msra.mxu0 %v4373
  %4682 = vmatprep.subr.bf16.mxu0 0
  %4683 = vmatpush1.bf16.msra.mxu0 %v4372
  %4684 = vmatprep.subr.bf16.mxu0 0
  %4685 = vmatpush1.bf16.msra.mxu0 %v4371
  %4686 = vmatprep.subr.bf16.mxu0 0
  %4687 = vmatpush1.bf16.msra.mxu0 %v4370
  %4688 = vmatprep.subr.bf16.mxu0 0
  %4689 = vmatpush1.bf16.msra.mxu0 %v4369
  %4690 = vmatprep.subr.bf16.mxu0 0
  %4691 = vmatpush2.bf16.msra.mxu0 %v4384
  %4692 = vmatprep.subr.bf16.mxu0 0
  %4693 = vmatpush2.bf16.msra.mxu0 %v4383
  %4694 = vmatprep.subr.bf16.mxu0 0
  %4695 = vmatpush2.bf16.msra.mxu0 %v4382
  %4696 = vmatprep.subr.bf16.mxu0 0
  %4697 = vmatpush2.bf16.msra.mxu0 %v4381
  %4698 = vmatprep.subr.bf16.mxu0 0
  %4699 = vmatpush2.bf16.msra.mxu0 %v4380
  %4700 = vmatprep.subr.bf16.mxu0 0
  %4701 = vmatpush2.bf16.msra.mxu0 %v4379
  %4702 = vmatprep.subr.bf16.mxu0 0
  %4703 = vmatpush2.bf16.msra.mxu0 %v4378
  %4704 = vmatprep.subr.bf16.mxu0 0
  %4705 = vmatpush2.bf16.msra.mxu0 %v4377
  %4706 = vmatprep.mubr.bf16.mxu0 %v4228
  %4707 = vmatmul.mubr.bf16.gmra.mxu0 %v4227
  %v4708 = vpop.f32.mrf.mxu0
  %v4709 = vadd.f32 %v4420, %v4708
  %v4710 = vpop.f32.mrf.mxu0
  %v4711 = vpop.f32.mrf.mxu0
  %v4712 = vadd.f32 %v4423, %v4711
  %v4713 = vpop.f32.mrf.mxu0
  %4714 = vmatprep.mubr.bf16.mxu0 %v4232
  %4715 = vmatmul.mubr.bf16.gmra.mxu0 %v4231
  %v4716 = vpop.f32.mrf.mxu0
  %v4717 = vadd.f32 %v4428, %v4716
  %v4718 = vpop.f32.mrf.mxu0
  %v4719 = vpop.f32.mrf.mxu0
  %v4720 = vadd.f32 %v4431, %v4719
  %v4721 = vpop.f32.mrf.mxu0
  %4722 = vmatprep.mubr.bf16.mxu0 %v4236
  %4723 = vmatmul.mubr.bf16.gmra.mxu0 %v4235
  %v4724 = vpop.f32.mrf.mxu0
  %v4725 = vadd.f32 %v4436, %v4724
  %v4726 = vpop.f32.mrf.mxu0
  %v4727 = vpop.f32.mrf.mxu0
  %v4728 = vadd.f32 %v4439, %v4727
  %v4729 = vpop.f32.mrf.mxu0
  %4730 = vmatprep.mubr.bf16.mxu0 %v4240
  %4731 = vmatmul.mubr.bf16.gmra.mxu0 %v4239
  %v4732 = vpop.f32.mrf.mxu0
  %v4733 = vadd.f32 %v4444, %v4732
  %v4734 = vpop.f32.mrf.mxu0
  %v4735 = vpop.f32.mrf.mxu0
  %v4736 = vadd.f32 %v4447, %v4735
  %v4737 = vpop.f32.mrf.mxu0
  %4738 = vmatprep.mubr.bf16.mxu0 %v4244
  %4739 = vmatmul.mubr.bf16.gmra.mxu0 %v4243
  %v4740 = vpop.f32.mrf.mxu0
  %v4741 = vadd.f32 %v4452, %v4740
  %v4742 = vpop.f32.mrf.mxu0
  %v4743 = vpop.f32.mrf.mxu0
  %v4744 = vadd.f32 %v4455, %v4743
  %v4745 = vpop.f32.mrf.mxu0
  %4746 = vmatprep.mubr.bf16.mxu0 %v4248
  %4747 = vmatmul.mubr.bf16.gmra.mxu0 %v4247
  %v4748 = vpop.f32.mrf.mxu0
  %v4749 = vadd.f32 %v4460, %v4748
  %v4750 = vpop.f32.mrf.mxu0
  %v4751 = vpop.f32.mrf.mxu0
  %v4752 = vadd.f32 %v4463, %v4751
  %v4753 = vpop.f32.mrf.mxu0
  %4754 = vmatprep.mubr.bf16.mxu0 %v4252
  %4755 = vmatmul.mubr.bf16.gmra.mxu0 %v4251
  %v4756 = vpop.f32.mrf.mxu0
  %v4757 = vadd.f32 %v4468, %v4756
  %v4758 = vpop.f32.mrf.mxu0
  %v4759 = vpop.f32.mrf.mxu0
  %v4760 = vadd.f32 %v4471, %v4759
  %v4761 = vpop.f32.mrf.mxu0
  %4762 = vmatprep.mubr.bf16.mxu0 %v4256
  %4763 = vmatmul.mubr.bf16.gmra.mxu0 %v4255
  %v4764 = vpop.f32.mrf.mxu0
  %v4765 = vadd.f32 %v4476, %v4764
  %v4766 = vpop.f32.mrf.mxu0
  %v4767 = vpop.f32.mrf.mxu0
  %v4768 = vadd.f32 %v4479, %v4767
  %v4769 = vpop.f32.mrf.mxu0
  %4770 = vmatprep.mubr.bf16.mxu0 %v4260
  %4771 = vmatmul.mubr.bf16.gmra.mxu0 %v4259
  %v4772 = vpop.f32.mrf.mxu0
  %v4773 = vadd.f32 %v4484, %v4772
  %v4774 = vpop.f32.mrf.mxu0
  %v4775 = vpop.f32.mrf.mxu0
  %v4776 = vadd.f32 %v4487, %v4775
  %v4777 = vpop.f32.mrf.mxu0
  %4778 = vmatprep.mubr.bf16.mxu0 %v4264
  %4779 = vmatmul.mubr.bf16.gmra.mxu0 %v4263
  %v4780 = vpop.f32.mrf.mxu0
  %v4781 = vadd.f32 %v4492, %v4780
  %v4782 = vpop.f32.mrf.mxu0
  %v4783 = vpop.f32.mrf.mxu0
  %v4784 = vadd.f32 %v4495, %v4783
  %v4785 = vpop.f32.mrf.mxu0
  %4786 = vmatprep.mubr.bf16.mxu0 %v4268
  %4787 = vmatmul.mubr.bf16.gmra.mxu0 %v4267
  %v4788 = vpop.f32.mrf.mxu0
  %v4789 = vadd.f32 %v4500, %v4788
  %v4790 = vpop.f32.mrf.mxu0
  %v4791 = vpop.f32.mrf.mxu0
  %v4792 = vadd.f32 %v4503, %v4791
  %v4793 = vpop.f32.mrf.mxu0
  %4794 = vmatprep.mubr.bf16.mxu0 %v4272
  %4795 = vmatmul.mubr.bf16.gmra.mxu0 %v4271
  %v4796 = vpop.f32.mrf.mxu0
  %v4797 = vadd.f32 %v4508, %v4796
  %v4798 = vpop.f32.mrf.mxu0
  %v4799 = vpop.f32.mrf.mxu0
  %v4800 = vadd.f32 %v4511, %v4799
  %v4801 = vpop.f32.mrf.mxu0
  %4802 = vmatprep.mubr.bf16.mxu0 %v4276
  %4803 = vmatmul.mubr.bf16.gmra.mxu0 %v4275
  %v4804 = vpop.f32.mrf.mxu0
  %v4805 = vadd.f32 %v4516, %v4804
  %v4806 = vpop.f32.mrf.mxu0
  %v4807 = vpop.f32.mrf.mxu0
  %v4808 = vadd.f32 %v4519, %v4807
  %v4809 = vpop.f32.mrf.mxu0
  %4810 = vmatprep.mubr.bf16.mxu0 %v4280
  %4811 = vmatmul.mubr.bf16.gmra.mxu0 %v4279
  %v4812 = vpop.f32.mrf.mxu0
  %v4813 = vadd.f32 %v4524, %v4812
  %v4814 = vpop.f32.mrf.mxu0
  %v4815 = vpop.f32.mrf.mxu0
  %v4816 = vadd.f32 %v4527, %v4815
  %v4817 = vpop.f32.mrf.mxu0
  %4818 = vmatprep.mubr.bf16.mxu0 %v4284
  %4819 = vmatmul.mubr.bf16.gmra.mxu0 %v4283
  %v4820 = vpop.f32.mrf.mxu0
  %v4821 = vadd.f32 %v4532, %v4820
  %v4822 = vpop.f32.mrf.mxu0
  %v4823 = vpop.f32.mrf.mxu0
  %v4824 = vadd.f32 %v4535, %v4823
  %v4825 = vpop.f32.mrf.mxu0
  %4826 = vmatprep.mubr.bf16.mxu0 %v4288
  %4827 = vmatmul.mubr.bf16.gmra.mxu0 %v4287
  %v4828 = vpop.f32.mrf.mxu0
  %v4829 = vadd.f32 %v4540, %v4828
  %v4830 = vpop.f32.mrf.mxu0
  %v4831 = vpop.f32.mrf.mxu0
  %v4832 = vadd.f32 %v4543, %v4831
  %v4833 = vpop.f32.mrf.mxu0
  %4834 = vmatprep.mubr.bf16.mxu0 %v4292
  %4835 = vmatmul.mubr.bf16.gmra.mxu0 %v4291
  %v4836 = vpop.f32.mrf.mxu0
  %v4837 = vadd.f32 %v4548, %v4836
  %v4838 = vpop.f32.mrf.mxu0
  %v4839 = vpop.f32.mrf.mxu0
  %v4840 = vadd.f32 %v4551, %v4839
  %v4841 = vpop.f32.mrf.mxu0
  %4842 = vmatprep.mubr.bf16.mxu0 %v4296
  %4843 = vmatmul.mubr.bf16.gmra.mxu0 %v4295
  %v4844 = vpop.f32.mrf.mxu0
  %v4845 = vadd.f32 %v4556, %v4844
  %v4846 = vpop.f32.mrf.mxu0
  %v4847 = vpop.f32.mrf.mxu0
  %v4848 = vadd.f32 %v4559, %v4847
  %v4849 = vpop.f32.mrf.mxu0
  %4850 = vmatprep.mubr.bf16.mxu0 %v4300
  %4851 = vmatmul.mubr.bf16.gmra.mxu0 %v4299
  %v4852 = vpop.f32.mrf.mxu0
  %v4853 = vadd.f32 %v4564, %v4852
  %v4854 = vpop.f32.mrf.mxu0
  %v4855 = vpop.f32.mrf.mxu0
  %v4856 = vadd.f32 %v4567, %v4855
  %v4857 = vpop.f32.mrf.mxu0
  %4858 = vmatprep.mubr.bf16.mxu0 %v4304
  %4859 = vmatmul.mubr.bf16.gmra.mxu0 %v4303
  %v4860 = vpop.f32.mrf.mxu0
  %v4861 = vadd.f32 %v4572, %v4860
  %v4862 = vpop.f32.mrf.mxu0
  %v4863 = vpop.f32.mrf.mxu0
  %v4864 = vadd.f32 %v4575, %v4863
  %v4865 = vpop.f32.mrf.mxu0
  %4866 = vmatprep.mubr.bf16.mxu0 %v4308
  %4867 = vmatmul.mubr.bf16.gmra.mxu0 %v4307
  %v4868 = vpop.f32.mrf.mxu0
  %v4869 = vadd.f32 %v4580, %v4868
  %v4870 = vpop.f32.mrf.mxu0
  %v4871 = vpop.f32.mrf.mxu0
  %v4872 = vadd.f32 %v4583, %v4871
  %v4873 = vpop.f32.mrf.mxu0
  %4874 = vmatprep.mubr.bf16.mxu0 %v4312
  %4875 = vmatmul.mubr.bf16.gmra.mxu0 %v4311
  %v4876 = vpop.f32.mrf.mxu0
  %v4877 = vadd.f32 %v4588, %v4876
  %v4878 = vpop.f32.mrf.mxu0
  %v4879 = vpop.f32.mrf.mxu0
  %v4880 = vadd.f32 %v4591, %v4879
  %v4881 = vpop.f32.mrf.mxu0
  %4882 = vmatprep.mubr.bf16.mxu0 %v4316
  %4883 = vmatmul.mubr.bf16.gmra.mxu0 %v4315
  %v4884 = vpop.f32.mrf.mxu0
  %v4885 = vadd.f32 %v4596, %v4884
  %v4886 = vpop.f32.mrf.mxu0
  %v4887 = vpop.f32.mrf.mxu0
  %v4888 = vadd.f32 %v4599, %v4887
  %v4889 = vpop.f32.mrf.mxu0
  %4890 = vmatprep.mubr.bf16.mxu0 %v4320
  %4891 = vmatmul.mubr.bf16.gmra.mxu0 %v4319
  %v4892 = vpop.f32.mrf.mxu0
  %v4893 = vadd.f32 %v4604, %v4892
  %v4894 = vpop.f32.mrf.mxu0
  %v4895 = vpop.f32.mrf.mxu0
  %v4896 = vadd.f32 %v4607, %v4895
  %v4897 = vpop.f32.mrf.mxu0
  %4898 = vmatprep.mubr.bf16.mxu0 %v4324
  %4899 = vmatmul.mubr.bf16.gmra.mxu0 %v4323
  %v4900 = vpop.f32.mrf.mxu0
  %v4901 = vadd.f32 %v4612, %v4900
  %v4902 = vpop.f32.mrf.mxu0
  %v4903 = vpop.f32.mrf.mxu0
  %v4904 = vadd.f32 %v4615, %v4903
  %v4905 = vpop.f32.mrf.mxu0
  %4906 = vmatprep.mubr.bf16.mxu0 %v4328
  %4907 = vmatmul.mubr.bf16.gmra.mxu0 %v4327
  %v4908 = vpop.f32.mrf.mxu0
  %v4909 = vadd.f32 %v4620, %v4908
  %v4910 = vpop.f32.mrf.mxu0
  %v4911 = vpop.f32.mrf.mxu0
  %v4912 = vadd.f32 %v4623, %v4911
  %v4913 = vpop.f32.mrf.mxu0
  %4914 = vmatprep.mubr.bf16.mxu0 %v4332
  %4915 = vmatmul.mubr.bf16.gmra.mxu0 %v4331
  %v4916 = vpop.f32.mrf.mxu0
  %v4917 = vadd.f32 %v4628, %v4916
  %v4918 = vpop.f32.mrf.mxu0
  %v4919 = vpop.f32.mrf.mxu0
  %v4920 = vadd.f32 %v4631, %v4919
  %v4921 = vpop.f32.mrf.mxu0
  %4922 = vmatprep.mubr.bf16.mxu0 %v4336
  %4923 = vmatmul.mubr.bf16.gmra.mxu0 %v4335
  %v4924 = vpop.f32.mrf.mxu0
  %v4925 = vadd.f32 %v4636, %v4924
  %v4926 = vpop.f32.mrf.mxu0
  %v4927 = vpop.f32.mrf.mxu0
  %v4928 = vadd.f32 %v4639, %v4927
  %v4929 = vpop.f32.mrf.mxu0
  %4930 = vmatprep.mubr.bf16.mxu0 %v4340
  %4931 = vmatmul.mubr.bf16.gmra.mxu0 %v4339
  %v4932 = vpop.f32.mrf.mxu0
  %v4933 = vadd.f32 %v4644, %v4932
  %v4934 = vpop.f32.mrf.mxu0
  %v4935 = vpop.f32.mrf.mxu0
  %v4936 = vadd.f32 %v4647, %v4935
  %v4937 = vpop.f32.mrf.mxu0
  %4938 = vmatprep.mubr.bf16.mxu0 %v4344
  %4939 = vmatmul.mubr.bf16.gmra.mxu0 %v4343
  %v4940 = vpop.f32.mrf.mxu0
  %v4941 = vadd.f32 %v4652, %v4940
  %v4942 = vpop.f32.mrf.mxu0
  %v4943 = vpop.f32.mrf.mxu0
  %v4944 = vadd.f32 %v4655, %v4943
  %v4945 = vpop.f32.mrf.mxu0
  %4946 = vmatprep.mubr.bf16.mxu0 %v4348
  %4947 = vmatmul.mubr.bf16.gmra.mxu0 %v4347
  %v4948 = vpop.f32.mrf.mxu0
  %v4949 = vadd.f32 %v4660, %v4948
  %v4950 = vpop.f32.mrf.mxu0
  %v4951 = vpop.f32.mrf.mxu0
  %v4952 = vadd.f32 %v4663, %v4951
  %v4953 = vpop.f32.mrf.mxu0
  %4954 = vmatprep.mubr.bf16.mxu0 %v4352
  %4955 = vmatmul.mubr.bf16.gmra.mxu0 %v4351
  %v4956 = vpop.f32.mrf.mxu0
  %v4957 = vadd.f32 %v4668, %v4956
  %v4958 = vpop.f32.mrf.mxu0
  %v4959 = vpop.f32.mrf.mxu0
  %v4960 = vadd.f32 %v4671, %v4959
  %v4961 = vpop.f32.mrf.mxu0
  %4962 = vdwg.mxu0
  %v4963 = vadd.f32 %v3714, %v3716
  %v4964 = vadd.f32 %v4963, %v3718
  %v4965 = vadd.f32 %v4964, %v3720
  %4966 = vadd.xlane.f32.xlu0 %v4965
  %v4967 = vpop.xlane.xlu0 %4966
  %v4968 = vadd.f32 %v3722, %v3724
  %v4969 = vadd.f32 %v4968, %v3726
  %v4970 = vadd.f32 %v4969, %v3728
  %4971 = vadd.xlane.f32.xlu0 %v4970
  %v4972 = vpop.xlane.xlu0 %4971
  %v4973 = vadd.f32 %v3730, %v3732
  %v4974 = vadd.f32 %v4973, %v3734
  %v4975 = vadd.f32 %v4974, %v3736
  %4976 = vadd.xlane.f32.xlu0 %v4975
  %v4977 = vpop.xlane.xlu0 %4976
  %v4978 = vadd.f32 %v3738, %v3740
  %v4979 = vadd.f32 %v4978, %v3742
  %v4980 = vadd.f32 %v4979, %v3744
  %4981 = vadd.xlane.f32.xlu0 %v4980
  %v4982 = vpop.xlane.xlu0 %4981
  %v4983 = vadd.f32 %v3746, %v3748
  %v4984 = vadd.f32 %v4983, %v3750
  %v4985 = vadd.f32 %v4984, %v3752
  %4986 = vadd.xlane.f32.xlu0 %v4985
  %v4987 = vpop.xlane.xlu0 %4986
  %v4988 = vadd.f32 %v3754, %v3756
  %v4989 = vadd.f32 %v4988, %v3758
  %v4990 = vadd.f32 %v4989, %v3760
  %4991 = vadd.xlane.f32.xlu0 %v4990
  %v4992 = vpop.xlane.xlu0 %4991
  %v4993 = vadd.f32 %v3762, %v3764
  %v4994 = vadd.f32 %v4993, %v3766
  %v4995 = vadd.f32 %v4994, %v3768
  %4996 = vadd.xlane.f32.xlu0 %v4995
  %v4997 = vpop.xlane.xlu0 %4996
  %v4998 = vadd.f32 %v3770, %v3772
  %v4999 = vadd.f32 %v4998, %v3774
  %v5000 = vadd.f32 %v4999, %v3776
  %5001 = vadd.xlane.f32.xlu0 %v5000
  %v5002 = vpop.xlane.xlu0 %5001
  %v5003 = vadd.f32 %v3778, %v3780
  %v5004 = vadd.f32 %v5003, %v3782
  %v5005 = vadd.f32 %v5004, %v3784
  %5006 = vadd.xlane.f32.xlu0 %v5005
  %v5007 = vpop.xlane.xlu0 %5006
  %v5008 = vadd.f32 %v3786, %v3788
  %v5009 = vadd.f32 %v5008, %v3790
  %v5010 = vadd.f32 %v5009, %v3792
  %5011 = vadd.xlane.f32.xlu0 %v5010
  %v5012 = vpop.xlane.xlu0 %5011
  %v5013 = vadd.f32 %v3794, %v3796
  %v5014 = vadd.f32 %v5013, %v3798
  %v5015 = vadd.f32 %v5014, %v3800
  %5016 = vadd.xlane.f32.xlu0 %v5015
  %v5017 = vpop.xlane.xlu0 %5016
  %v5018 = vadd.f32 %v3802, %v3804
  %v5019 = vadd.f32 %v5018, %v3806
  %v5020 = vadd.f32 %v5019, %v3808
  %5021 = vadd.xlane.f32.xlu0 %v5020
  %v5022 = vpop.xlane.xlu0 %5021
  %v5023 = vadd.f32 %v3810, %v3812
  %v5024 = vadd.f32 %v5023, %v3814
  %v5025 = vadd.f32 %v5024, %v3816
  %5026 = vadd.xlane.f32.xlu0 %v5025
  %v5027 = vpop.xlane.xlu0 %5026
  %v5028 = vadd.f32 %v3818, %v3820
  %v5029 = vadd.f32 %v5028, %v3822
  %v5030 = vadd.f32 %v5029, %v3824
  %5031 = vadd.xlane.f32.xlu0 %v5030
  %v5032 = vpop.xlane.xlu0 %5031
  %v5033 = vadd.f32 %v3826, %v3828
  %v5034 = vadd.f32 %v5033, %v3830
  %v5035 = vadd.f32 %v5034, %v3832
  %5036 = vadd.xlane.f32.xlu0 %v5035
  %v5037 = vpop.xlane.xlu0 %5036
  %v5038 = vadd.f32 %v3834, %v3836
  %v5039 = vadd.f32 %v5038, %v3838
  %v5040 = vadd.f32 %v5039, %v3840
  %5041 = vadd.xlane.f32.xlu0 %v5040
  %v5042 = vpop.xlane.xlu0 %5041
  %v5043 = vadd.f32 %v3842, %v3844
  %v5044 = vadd.f32 %v5043, %v3846
  %v5045 = vadd.f32 %v5044, %v3848
  %5046 = vadd.xlane.f32.xlu0 %v5045
  %v5047 = vpop.xlane.xlu0 %5046
  %v5048 = vadd.f32 %v3850, %v3852
  %v5049 = vadd.f32 %v5048, %v3854
  %v5050 = vadd.f32 %v5049, %v3856
  %5051 = vadd.xlane.f32.xlu0 %v5050
  %v5052 = vpop.xlane.xlu0 %5051
  %v5053 = vadd.f32 %v3858, %v3860
  %v5054 = vadd.f32 %v5053, %v3862
  %v5055 = vadd.f32 %v5054, %v3864
  %5056 = vadd.xlane.f32.xlu0 %v5055
  %v5057 = vpop.xlane.xlu0 %5056
  %v5058 = vadd.f32 %v3866, %v3868
  %v5059 = vadd.f32 %v5058, %v3870
  %v5060 = vadd.f32 %v5059, %v3872
  %5061 = vadd.xlane.f32.xlu0 %v5060
  %v5062 = vpop.xlane.xlu0 %5061
  %v5063 = vadd.f32 %v3874, %v3876
  %v5064 = vadd.f32 %v5063, %v3878
  %v5065 = vadd.f32 %v5064, %v3880
  %5066 = vadd.xlane.f32.xlu0 %v5065
  %v5067 = vpop.xlane.xlu0 %5066
  %v5068 = vadd.f32 %v3882, %v3884
  %v5069 = vadd.f32 %v5068, %v3886
  %v5070 = vadd.f32 %v5069, %v3888
  %5071 = vadd.xlane.f32.xlu0 %v5070
  %v5072 = vpop.xlane.xlu0 %5071
  %v5073 = vadd.f32 %v3890, %v3892
  %v5074 = vadd.f32 %v5073, %v3894
  %v5075 = vadd.f32 %v5074, %v3896
  %5076 = vadd.xlane.f32.xlu0 %v5075
  %v5077 = vpop.xlane.xlu0 %5076
  %v5078 = vadd.f32 %v3898, %v3900
  %v5079 = vadd.f32 %v5078, %v3902
  %v5080 = vadd.f32 %v5079, %v3904
  %5081 = vadd.xlane.f32.xlu0 %v5080
  %v5082 = vpop.xlane.xlu0 %5081
  %v5083 = vadd.f32 %v3906, %v3908
  %v5084 = vadd.f32 %v5083, %v3910
  %v5085 = vadd.f32 %v5084, %v3912
  %5086 = vadd.xlane.f32.xlu0 %v5085
  %v5087 = vpop.xlane.xlu0 %5086
  %v5088 = vadd.f32 %v3914, %v3916
  %v5089 = vadd.f32 %v5088, %v3918
  %v5090 = vadd.f32 %v5089, %v3920
  %5091 = vadd.xlane.f32.xlu0 %v5090
  %v5092 = vpop.xlane.xlu0 %5091
  %v5093 = vadd.f32 %v3922, %v3924
  %v5094 = vadd.f32 %v5093, %v3926
  %v5095 = vadd.f32 %v5094, %v3928
  %5096 = vadd.xlane.f32.xlu0 %v5095
  %v5097 = vpop.xlane.xlu0 %5096
  %v5098 = vadd.f32 %v3930, %v3932
  %v5099 = vadd.f32 %v5098, %v3934
  %v5100 = vadd.f32 %v5099, %v3936
  %5101 = vadd.xlane.f32.xlu0 %v5100
  %v5102 = vpop.xlane.xlu0 %5101
  %v5103 = vadd.f32 %v3938, %v3940
  %v5104 = vadd.f32 %v5103, %v3942
  %v5105 = vadd.f32 %v5104, %v3944
  %5106 = vadd.xlane.f32.xlu0 %v5105
  %v5107 = vpop.xlane.xlu0 %5106
  %v5108 = vadd.f32 %v3946, %v3948
  %v5109 = vadd.f32 %v5108, %v3950
  %v5110 = vadd.f32 %v5109, %v3952
  %5111 = vadd.xlane.f32.xlu0 %v5110
  %v5112 = vpop.xlane.xlu0 %5111
  %v5113 = vadd.f32 %v3954, %v3956
  %v5114 = vadd.f32 %v5113, %v3958
  %v5115 = vadd.f32 %v5114, %v3960
  %5116 = vadd.xlane.f32.xlu0 %v5115
  %v5117 = vpop.xlane.xlu0 %5116
  %v5118 = vadd.f32 %v3962, %v3964
  %v5119 = vadd.f32 %v5118, %v3966
  %v5120 = vadd.f32 %v5119, %v3968
  %5121 = vadd.xlane.f32.xlu0 %v5120
  %v5122 = vpop.xlane.xlu0 %5121
  %v5123 = vadd.f32 %v3970, %v3972
  %v5124 = vadd.f32 %v5123, %v3974
  %v5125 = vadd.f32 %v5124, %v3976
  %5126 = vadd.xlane.f32.xlu0 %v5125
  %v5127 = vpop.xlane.xlu0 %5126
  %v5128 = vadd.f32 %v3978, %v3980
  %v5129 = vadd.f32 %v5128, %v3982
  %v5130 = vadd.f32 %v5129, %v3984
  %5131 = vadd.xlane.f32.xlu0 %v5130
  %v5132 = vpop.xlane.xlu0 %5131
  %v5133 = vadd.f32 %v3986, %v3988
  %v5134 = vadd.f32 %v5133, %v3990
  %v5135 = vadd.f32 %v5134, %v3992
  %5136 = vadd.xlane.f32.xlu0 %v5135
  %v5137 = vpop.xlane.xlu0 %5136
  %v5138 = vadd.f32 %v3994, %v3996
  %v5139 = vadd.f32 %v5138, %v3998
  %v5140 = vadd.f32 %v5139, %v4000
  %5141 = vadd.xlane.f32.xlu0 %v5140
  %v5142 = vpop.xlane.xlu0 %5141
  %v5143 = vadd.f32 %v4002, %v4004
  %v5144 = vadd.f32 %v5143, %v4006
  %v5145 = vadd.f32 %v5144, %v4008
  %5146 = vadd.xlane.f32.xlu0 %v5145
  %v5147 = vpop.xlane.xlu0 %5146
  %v5148 = vadd.f32 %v4010, %v4012
  %v5149 = vadd.f32 %v5148, %v4014
  %v5150 = vadd.f32 %v5149, %v4016
  %5151 = vadd.xlane.f32.xlu0 %v5150
  %v5152 = vpop.xlane.xlu0 %5151
  %v5153 = vadd.f32 %v4018, %v4020
  %v5154 = vadd.f32 %v5153, %v4022
  %v5155 = vadd.f32 %v5154, %v4024
  %5156 = vadd.xlane.f32.xlu0 %v5155
  %v5157 = vpop.xlane.xlu0 %5156
  %v5158 = vadd.f32 %v4026, %v4028
  %v5159 = vadd.f32 %v5158, %v4030
  %v5160 = vadd.f32 %v5159, %v4032
  %5161 = vadd.xlane.f32.xlu0 %v5160
  %v5162 = vpop.xlane.xlu0 %5161
  %v5163 = vadd.f32 %v4034, %v4036
  %v5164 = vadd.f32 %v5163, %v4038
  %v5165 = vadd.f32 %v5164, %v4040
  %5166 = vadd.xlane.f32.xlu0 %v5165
  %v5167 = vpop.xlane.xlu0 %5166
  %v5168 = vadd.f32 %v4042, %v4044
  %v5169 = vadd.f32 %v5168, %v4046
  %v5170 = vadd.f32 %v5169, %v4048
  %5171 = vadd.xlane.f32.xlu0 %v5170
  %v5172 = vpop.xlane.xlu0 %5171
  %v5173 = vadd.f32 %v4050, %v4052
  %v5174 = vadd.f32 %v5173, %v4054
  %v5175 = vadd.f32 %v5174, %v4056
  %5176 = vadd.xlane.f32.xlu0 %v5175
  %v5177 = vpop.xlane.xlu0 %5176
  %v5178 = vadd.f32 %v4058, %v4060
  %v5179 = vadd.f32 %v5178, %v4062
  %v5180 = vadd.f32 %v5179, %v4064
  %5181 = vadd.xlane.f32.xlu0 %v5180
  %v5182 = vpop.xlane.xlu0 %5181
  %v5183 = vadd.f32 %v4066, %v4068
  %v5184 = vadd.f32 %v5183, %v4070
  %v5185 = vadd.f32 %v5184, %v4072
  %5186 = vadd.xlane.f32.xlu0 %v5185
  %v5187 = vpop.xlane.xlu0 %5186
  %v5188 = vadd.f32 %v4074, %v4076
  %v5189 = vadd.f32 %v5188, %v4078
  %v5190 = vadd.f32 %v5189, %v4080
  %5191 = vadd.xlane.f32.xlu0 %v5190
  %v5192 = vpop.xlane.xlu0 %5191
  %v5193 = vadd.f32 %v4082, %v4084
  %v5194 = vadd.f32 %v5193, %v4086
  %v5195 = vadd.f32 %v5194, %v4088
  %5196 = vadd.xlane.f32.xlu0 %v5195
  %v5197 = vpop.xlane.xlu0 %5196
  %v5198 = vadd.f32 %v4090, %v4092
  %v5199 = vadd.f32 %v5198, %v4094
  %v5200 = vadd.f32 %v5199, %v4096
  %5201 = vadd.xlane.f32.xlu0 %v5200
  %v5202 = vpop.xlane.xlu0 %5201
  %v5203 = vadd.f32 %v4098, %v4100
  %v5204 = vadd.f32 %v5203, %v4102
  %v5205 = vadd.f32 %v5204, %v4104
  %5206 = vadd.xlane.f32.xlu0 %v5205
  %v5207 = vpop.xlane.xlu0 %5206
  %v5208 = vadd.f32 %v4106, %v4108
  %v5209 = vadd.f32 %v5208, %v4110
  %v5210 = vadd.f32 %v5209, %v4112
  %5211 = vadd.xlane.f32.xlu0 %v5210
  %v5212 = vpop.xlane.xlu0 %5211
  %v5213 = vadd.f32 %v4114, %v4116
  %v5214 = vadd.f32 %v5213, %v4118
  %v5215 = vadd.f32 %v5214, %v4120
  %5216 = vadd.xlane.f32.xlu0 %v5215
  %v5217 = vpop.xlane.xlu0 %5216
  %v5218 = vadd.f32 %v4122, %v4124
  %v5219 = vadd.f32 %v5218, %v4126
  %v5220 = vadd.f32 %v5219, %v4128
  %5221 = vadd.xlane.f32.xlu0 %v5220
  %v5222 = vpop.xlane.xlu0 %5221
  %v5223 = vadd.f32 %v4130, %v4132
  %v5224 = vadd.f32 %v5223, %v4134
  %v5225 = vadd.f32 %v5224, %v4136
  %5226 = vadd.xlane.f32.xlu0 %v5225
  %v5227 = vpop.xlane.xlu0 %5226
  %v5228 = vadd.f32 %v4138, %v4140
  %v5229 = vadd.f32 %v5228, %v4142
  %v5230 = vadd.f32 %v5229, %v4144
  %5231 = vadd.xlane.f32.xlu0 %v5230
  %v5232 = vpop.xlane.xlu0 %5231
  %v5233 = vadd.f32 %v4146, %v4148
  %v5234 = vadd.f32 %v5233, %v4150
  %v5235 = vadd.f32 %v5234, %v4152
  %5236 = vadd.xlane.f32.xlu0 %v5235
  %v5237 = vpop.xlane.xlu0 %5236
  %v5238 = vadd.f32 %v4154, %v4156
  %v5239 = vadd.f32 %v5238, %v4158
  %v5240 = vadd.f32 %v5239, %v4160
  %5241 = vadd.xlane.f32.xlu0 %v5240
  %v5242 = vpop.xlane.xlu0 %5241
  %v5243 = vadd.f32 %v4162, %v4164
  %v5244 = vadd.f32 %v5243, %v4166
  %v5245 = vadd.f32 %v5244, %v4168
  %5246 = vadd.xlane.f32.xlu0 %v5245
  %v5247 = vpop.xlane.xlu0 %5246
  %v5248 = vadd.f32 %v4170, %v4172
  %v5249 = vadd.f32 %v5248, %v4174
  %v5250 = vadd.f32 %v5249, %v4176
  %5251 = vadd.xlane.f32.xlu0 %v5250
  %v5252 = vpop.xlane.xlu0 %5251
  %v5253 = vadd.f32 %v4178, %v4180
  %v5254 = vadd.f32 %v5253, %v4182
  %v5255 = vadd.f32 %v5254, %v4184
  %5256 = vadd.xlane.f32.xlu0 %v5255
  %v5257 = vpop.xlane.xlu0 %5256
  %v5258 = vadd.f32 %v4186, %v4188
  %v5259 = vadd.f32 %v5258, %v4190
  %v5260 = vadd.f32 %v5259, %v4192
  %5261 = vadd.xlane.f32.xlu0 %v5260
  %v5262 = vpop.xlane.xlu0 %5261
  %v5263 = vadd.f32 %v4194, %v4196
  %v5264 = vadd.f32 %v5263, %v4198
  %v5265 = vadd.f32 %v5264, %v4200
  %5266 = vadd.xlane.f32.xlu0 %v5265
  %v5267 = vpop.xlane.xlu0 %5266
  %v5268 = vadd.f32 %v4202, %v4204
  %v5269 = vadd.f32 %v5268, %v4206
  %v5270 = vadd.f32 %v5269, %v4208
  %5271 = vadd.xlane.f32.xlu0 %v5270
  %v5272 = vpop.xlane.xlu0 %5271
  %v5273 = vadd.f32 %v4210, %v4212
  %v5274 = vadd.f32 %v5273, %v4214
  %v5275 = vadd.f32 %v5274, %v4216
  %5276 = vadd.xlane.f32.xlu0 %v5275
  %v5277 = vpop.xlane.xlu0 %5276
  %v5278 = vadd.f32 %v4218, %v4220
  %v5279 = vadd.f32 %v5278, %v4222
  %v5280 = vadd.f32 %v5279, %v4224
  %5281 = vadd.xlane.f32.xlu0 %v5280
  %v5282 = vpop.xlane.xlu0 %5281
  %v5283 = vrcp.pop %v4967
  %v5284 = vrcp.pop %v4972
  %v5285 = vrcp.pop %v4977
  %v5286 = vrcp.pop %v4982
  %v5287 = vrcp.pop %v4987
  %v5288 = vrcp.pop %v4992
  %v5289 = vrcp.pop %v4997
  %v5290 = vrcp.pop %v5002
  %v5291 = vrcp.pop %v5007
  %v5292 = vrcp.pop %v5012
  %v5293 = vrcp.pop %v5017
  %v5294 = vrcp.pop %v5022
  %v5295 = vrcp.pop %v5027
  %v5296 = vrcp.pop %v5032
  %v5297 = vrcp.pop %v5037
  %v5298 = vrcp.pop %v5042
  %v5299 = vrcp.pop %v5047
  %v5300 = vrcp.pop %v5052
  %v5301 = vrcp.pop %v5057
  %v5302 = vrcp.pop %v5062
  %v5303 = vrcp.pop %v5067
  %v5304 = vrcp.pop %v5072
  %v5305 = vrcp.pop %v5077
  %v5306 = vrcp.pop %v5082
  %v5307 = vrcp.pop %v5087
  %v5308 = vrcp.pop %v5092
  %v5309 = vrcp.pop %v5097
  %v5310 = vrcp.pop %v5102
  %v5311 = vrcp.pop %v5107
  %v5312 = vrcp.pop %v5112
  %v5313 = vrcp.pop %v5117
  %v5314 = vrcp.pop %v5122
  %v5315 = vrcp.pop %v5127
  %v5316 = vrcp.pop %v5132
  %v5317 = vrcp.pop %v5137
  %v5318 = vrcp.pop %v5142
  %v5319 = vrcp.pop %v5147
  %v5320 = vrcp.pop %v5152
  %v5321 = vrcp.pop %v5157
  %v5322 = vrcp.pop %v5162
  %v5323 = vrcp.pop %v5167
  %v5324 = vrcp.pop %v5172
  %v5325 = vrcp.pop %v5177
  %v5326 = vrcp.pop %v5182
  %v5327 = vrcp.pop %v5187
  %v5328 = vrcp.pop %v5192
  %v5329 = vrcp.pop %v5197
  %v5330 = vrcp.pop %v5202
  %v5331 = vrcp.pop %v5207
  %v5332 = vrcp.pop %v5212
  %v5333 = vrcp.pop %v5217
  %v5334 = vrcp.pop %v5222
  %v5335 = vrcp.pop %v5227
  %v5336 = vrcp.pop %v5232
  %v5337 = vrcp.pop %v5237
  %v5338 = vrcp.pop %v5242
  %v5339 = vrcp.pop %v5247
  %v5340 = vrcp.pop %v5252
  %v5341 = vrcp.pop %v5257
  %v5342 = vrcp.pop %v5262
  %v5343 = vrcp.pop %v5267
  %v5344 = vrcp.pop %v5272
  %v5345 = vrcp.pop %v5277
  %v5346 = vrcp.pop %v5282
  %v5347 = vmul.f32 %v4709, %v5283
  %v5348 = vmul.f32 %v4712, %v5284
  %v5349 = vmul.f32 %v4717, %v5285
  %v5350 = vmul.f32 %v4720, %v5286
  %v5351 = vmul.f32 %v4725, %v5287
  %v5352 = vmul.f32 %v4728, %v5288
  %v5353 = vmul.f32 %v4733, %v5289
  %v5354 = vmul.f32 %v4736, %v5290
  %v5355 = vmul.f32 %v4741, %v5291
  %v5356 = vmul.f32 %v4744, %v5292
  %v5357 = vmul.f32 %v4749, %v5293
  %v5358 = vmul.f32 %v4752, %v5294
  %v5359 = vmul.f32 %v4757, %v5295
  %v5360 = vmul.f32 %v4760, %v5296
  %v5361 = vmul.f32 %v4765, %v5297
  %v5362 = vmul.f32 %v4768, %v5298
  %v5363 = vmul.f32 %v4773, %v5299
  %v5364 = vmul.f32 %v4776, %v5300
  %v5365 = vmul.f32 %v4781, %v5301
  %v5366 = vmul.f32 %v4784, %v5302
  %v5367 = vmul.f32 %v4789, %v5303
  %v5368 = vmul.f32 %v4792, %v5304
  %v5369 = vmul.f32 %v4797, %v5305
  %v5370 = vmul.f32 %v4800, %v5306
  %v5371 = vmul.f32 %v4805, %v5307
  %v5372 = vmul.f32 %v4808, %v5308
  %v5373 = vmul.f32 %v4813, %v5309
  %v5374 = vmul.f32 %v4816, %v5310
  %v5375 = vmul.f32 %v4821, %v5311
  %v5376 = vmul.f32 %v4824, %v5312
  %v5377 = vmul.f32 %v4829, %v5313
  %v5378 = vmul.f32 %v4832, %v5314
  %v5379 = vmul.f32 %v4837, %v5315
  %v5380 = vmul.f32 %v4840, %v5316
  %v5381 = vmul.f32 %v4845, %v5317
  %v5382 = vmul.f32 %v4848, %v5318
  %v5383 = vmul.f32 %v4853, %v5319
  %v5384 = vmul.f32 %v4856, %v5320
  %v5385 = vmul.f32 %v4861, %v5321
  %v5386 = vmul.f32 %v4864, %v5322
  %v5387 = vmul.f32 %v4869, %v5323
  %v5388 = vmul.f32 %v4872, %v5324
  %v5389 = vmul.f32 %v4877, %v5325
  %v5390 = vmul.f32 %v4880, %v5326
  %v5391 = vmul.f32 %v4885, %v5327
  %v5392 = vmul.f32 %v4888, %v5328
  %v5393 = vmul.f32 %v4893, %v5329
  %v5394 = vmul.f32 %v4896, %v5330
  %v5395 = vmul.f32 %v4901, %v5331
  %v5396 = vmul.f32 %v4904, %v5332
  %v5397 = vmul.f32 %v4909, %v5333
  %v5398 = vmul.f32 %v4912, %v5334
  %v5399 = vmul.f32 %v4917, %v5335
  %v5400 = vmul.f32 %v4920, %v5336
  %v5401 = vmul.f32 %v4925, %v5337
  %v5402 = vmul.f32 %v4928, %v5338
  %v5403 = vmul.f32 %v4933, %v5339
  %v5404 = vmul.f32 %v4936, %v5340
  %v5405 = vmul.f32 %v4941, %v5341
  %v5406 = vmul.f32 %v4944, %v5342
  %v5407 = vmul.f32 %v4949, %v5343
  %v5408 = vmul.f32 %v4952, %v5344
  %v5409 = vmul.f32 %v4957, %v5345
  %v5410 = vmul.f32 %v4960, %v5346
  %v5411 = vld [vmem:[%s5] sm:$0xf]
  %v5412 = vld [vmem:[%s5 + $0x4] sm:$0xf]
  %v5413 = vld [vmem:[%s5 + $0x8] sm:$0xf]
  %v5414 = vld [vmem:[%s5 + $0xc] sm:$0xf]
  %v5415 = vld [vmem:[%s5 + $0x10] sm:$0xf]
  %v5416 = vld [vmem:[%s5 + $0x14] sm:$0xf]
  %v5417 = vld [vmem:[%s5 + $0x18] sm:$0xf]
  %v5418 = vld [vmem:[%s5 + $0x1c] sm:$0xf]
  %v5419 = vld [vmem:[%s5 + $0x20] sm:$0xf]
  %v5420 = vld [vmem:[%s5 + $0x24] sm:$0xf]
  %v5421 = vld [vmem:[%s5 + $0x28] sm:$0xf]
  %v5422 = vld [vmem:[%s5 + $0x2c] sm:$0xf]
  %v5423 = vld [vmem:[%s5 + $0x30] sm:$0xf]
  %v5424 = vld [vmem:[%s5 + $0x34] sm:$0xf]
  %v5425 = vld [vmem:[%s5 + $0x38] sm:$0xf]
  %v5426 = vld [vmem:[%s5 + $0x3c] sm:$0xf]
  %v5427 = vpack.c.bf16 %v5348, %v5347
  %v5428 = vpack.c.bf16 %v5350, %v5349
  %v5429 = vpack.c.bf16 %v5352, %v5351
  %v5430 = vpack.c.bf16 %v5354, %v5353
  %v5431 = vpack.c.bf16 %v5356, %v5355
  %v5432 = vpack.c.bf16 %v5358, %v5357
  %v5433 = vpack.c.bf16 %v5360, %v5359
  %v5434 = vpack.c.bf16 %v5362, %v5361
  %v5435 = vpack.c.bf16 %v5364, %v5363
  %v5436 = vpack.c.bf16 %v5366, %v5365
  %v5437 = vpack.c.bf16 %v5368, %v5367
  %v5438 = vpack.c.bf16 %v5370, %v5369
  %v5439 = vpack.c.bf16 %v5372, %v5371
  %v5440 = vpack.c.bf16 %v5374, %v5373
  %v5441 = vpack.c.bf16 %v5376, %v5375
  %v5442 = vpack.c.bf16 %v5378, %v5377
  %v5443 = vpack.c.bf16 %v5380, %v5379
  %v5444 = vpack.c.bf16 %v5382, %v5381
  %v5445 = vpack.c.bf16 %v5384, %v5383
  %v5446 = vpack.c.bf16 %v5386, %v5385
  %v5447 = vpack.c.bf16 %v5388, %v5387
  %v5448 = vpack.c.bf16 %v5390, %v5389
  %v5449 = vpack.c.bf16 %v5392, %v5391
  %v5450 = vpack.c.bf16 %v5394, %v5393
  %v5451 = vpack.c.bf16 %v5396, %v5395
  %v5452 = vpack.c.bf16 %v5398, %v5397
  %v5453 = vpack.c.bf16 %v5400, %v5399
  %v5454 = vpack.c.bf16 %v5402, %v5401
  %v5455 = vpack.c.bf16 %v5404, %v5403
  %v5456 = vpack.c.bf16 %v5406, %v5405
  %v5457 = vpack.c.bf16 %v5408, %v5407
  %v5458 = vpack.c.bf16 %v5410, %v5409
  %v5475 = vunpack.c.l.b16 %v5411
  %v5476 = vunpack.c.l.b16 %v5412
  %v5477 = vunpack.c.l.b16 %v5413
  %v5478 = vunpack.c.l.b16 %v5414
  %v5479 = vunpack.c.l.b16 %v5415
  %v5480 = vunpack.c.l.b16 %v5416
  %v5481 = vunpack.c.l.b16 %v5417
  %v5482 = vunpack.c.l.b16 %v5418
  %v5483 = vunpack.c.l.b16 %v5419
  %v5484 = vunpack.c.l.b16 %v5420
  %v5485 = vunpack.c.l.b16 %v5421
  %v5486 = vunpack.c.l.b16 %v5422
  %v5487 = vunpack.c.l.b16 %v5423
  %v5488 = vunpack.c.l.b16 %v5424
  %v5489 = vunpack.c.l.b16 %v5425
  %v5490 = vunpack.c.l.b16 %v5426
  %v5491 = vpack.c.b16 %v5476, %v5475
  %v5492 = vpack.c.b16 %v5478, %v5477
  %v5493 = vpack.c.b16 %v5480, %v5479
  %v5494 = vpack.c.b16 %v5482, %v5481
  %v5495 = vpack.c.b16 %v5484, %v5483
  %v5496 = vpack.c.b16 %v5486, %v5485
  %v5497 = vpack.c.b16 %v5488, %v5487
  %v5498 = vpack.c.b16 %v5490, %v5489
  %5507 = vmatprep.subr.bf16.mxu0 0
  %5508 = vmatpush1.bf16.msra.mxu0 %v5498
  %5509 = vmatprep.subr.bf16.mxu0 0
  %5510 = vmatpush1.bf16.msra.mxu0 %v5497
  %5511 = vmatprep.subr.bf16.mxu0 0
  %5512 = vmatpush1.bf16.msra.mxu0 %v5496
  %5513 = vmatprep.subr.bf16.mxu0 0
  %5514 = vmatpush1.bf16.msra.mxu0 %v5495
  %5515 = vmatprep.subr.bf16.mxu0 0
  %5516 = vmatpush1.bf16.msra.mxu0 %v5494
  %5517 = vmatprep.subr.bf16.mxu0 0
  %5518 = vmatpush1.bf16.msra.mxu0 %v5493
  %5519 = vmatprep.subr.bf16.mxu0 0
  %5520 = vmatpush1.bf16.msra.mxu0 %v5492
  %5521 = vmatprep.subr.bf16.mxu0 0
  %5522 = vmatpush1.bf16.msra.mxu0 %v5491
  %5523 = vmatprep.subr.bf16.mxu0 0
  %5524 = vmatpush2.bf16.msra.mxu0 0
  %5525 = vmatprep.subr.bf16.mxu0 0
  %5526 = vmatpush2.bf16.msra.mxu0 0
  %5527 = vmatprep.subr.bf16.mxu0 0
  %5528 = vmatpush2.bf16.msra.mxu0 0
  %5529 = vmatprep.subr.bf16.mxu0 0
  %5530 = vmatpush2.bf16.msra.mxu0 0
  %5531 = vmatprep.subr.bf16.mxu0 0
  %5532 = vmatpush2.bf16.msra.mxu0 0
  %5533 = vmatprep.subr.bf16.mxu0 0
  %5534 = vmatpush2.bf16.msra.mxu0 0
  %5535 = vmatprep.subr.bf16.mxu0 0
  %5536 = vmatpush2.bf16.msra.mxu0 0
  %5537 = vmatprep.subr.bf16.mxu0 0
  %5538 = vmatpush2.bf16.msra.mxu0 0
  %5539 = vmatprep.mubr.bf16.mxu0 0
  %5540 = vmatmul.mubr.bf16.gmra.mxu0 %v5427
  %v5541 = vpop.f32.mrf.mxu0
  %v5542 = vadd.f32 0.0, %v5541
  %v5543 = vpop.f32.mrf.mxu0
  %v5544 = vpop.f32.mrf.mxu0
  %v5545 = vadd.f32 0.0, %v5544
  %v5546 = vpop.f32.mrf.mxu0
  %5547 = vmatprep.mubr.bf16.mxu0 0
  %5548 = vmatmul.mubr.bf16.gmra.mxu0 %v5428
  %v5549 = vpop.f32.mrf.mxu0
  %v5550 = vadd.f32 0.0, %v5549
  %v5551 = vpop.f32.mrf.mxu0
  %v5552 = vpop.f32.mrf.mxu0
  %v5553 = vadd.f32 0.0, %v5552
  %v5554 = vpop.f32.mrf.mxu0
  %5555 = vmatprep.mubr.bf16.mxu0 0
  %5556 = vmatmul.mubr.bf16.gmra.mxu0 %v5429
  %v5557 = vpop.f32.mrf.mxu0
  %v5558 = vadd.f32 0.0, %v5557
  %v5559 = vpop.f32.mrf.mxu0
  %v5560 = vpop.f32.mrf.mxu0
  %v5561 = vadd.f32 0.0, %v5560
  %v5562 = vpop.f32.mrf.mxu0
  %5563 = vmatprep.mubr.bf16.mxu0 0
  %5564 = vmatmul.mubr.bf16.gmra.mxu0 %v5430
  %v5565 = vpop.f32.mrf.mxu0
  %v5566 = vadd.f32 0.0, %v5565
  %v5567 = vpop.f32.mrf.mxu0
  %v5568 = vpop.f32.mrf.mxu0
  %v5569 = vadd.f32 0.0, %v5568
  %v5570 = vpop.f32.mrf.mxu0
  %5571 = vmatprep.mubr.bf16.mxu0 0
  %5572 = vmatmul.mubr.bf16.gmra.mxu0 %v5431
  %v5573 = vpop.f32.mrf.mxu0
  %v5574 = vadd.f32 0.0, %v5573
  %v5575 = vpop.f32.mrf.mxu0
  %v5576 = vpop.f32.mrf.mxu0
  %v5577 = vadd.f32 0.0, %v5576
  %v5578 = vpop.f32.mrf.mxu0
  %5579 = vmatprep.mubr.bf16.mxu0 0
  %5580 = vmatmul.mubr.bf16.gmra.mxu0 %v5432
  %v5581 = vpop.f32.mrf.mxu0
  %v5582 = vadd.f32 0.0, %v5581
  %v5583 = vpop.f32.mrf.mxu0
  %v5584 = vpop.f32.mrf.mxu0
  %v5585 = vadd.f32 0.0, %v5584
  %v5586 = vpop.f32.mrf.mxu0
  %5587 = vmatprep.mubr.bf16.mxu0 0
  %5588 = vmatmul.mubr.bf16.gmra.mxu0 %v5433
  %v5589 = vpop.f32.mrf.mxu0
  %v5590 = vadd.f32 0.0, %v5589
  %v5591 = vpop.f32.mrf.mxu0
  %v5592 = vpop.f32.mrf.mxu0
  %v5593 = vadd.f32 0.0, %v5592
  %v5594 = vpop.f32.mrf.mxu0
  %5595 = vmatprep.mubr.bf16.mxu0 0
  %5596 = vmatmul.mubr.bf16.gmra.mxu0 %v5434
  %v5597 = vpop.f32.mrf.mxu0
  %v5598 = vadd.f32 0.0, %v5597
  %v5599 = vpop.f32.mrf.mxu0
  %v5600 = vpop.f32.mrf.mxu0
  %v5601 = vadd.f32 0.0, %v5600
  %v5602 = vpop.f32.mrf.mxu0
  %5603 = vmatprep.mubr.bf16.mxu0 0
  %5604 = vmatmul.mubr.bf16.gmra.mxu0 %v5435
  %v5605 = vpop.f32.mrf.mxu0
  %v5606 = vadd.f32 0.0, %v5605
  %v5607 = vpop.f32.mrf.mxu0
  %v5608 = vpop.f32.mrf.mxu0
  %v5609 = vadd.f32 0.0, %v5608
  %v5610 = vpop.f32.mrf.mxu0
  %5611 = vmatprep.mubr.bf16.mxu0 0
  %5612 = vmatmul.mubr.bf16.gmra.mxu0 %v5436
  %v5613 = vpop.f32.mrf.mxu0
  %v5614 = vadd.f32 0.0, %v5613
  %v5615 = vpop.f32.mrf.mxu0
  %v5616 = vpop.f32.mrf.mxu0
  %v5617 = vadd.f32 0.0, %v5616
  %v5618 = vpop.f32.mrf.mxu0
  %5619 = vmatprep.mubr.bf16.mxu0 0
  %5620 = vmatmul.mubr.bf16.gmra.mxu0 %v5437
  %v5621 = vpop.f32.mrf.mxu0
  %v5622 = vadd.f32 0.0, %v5621
  %v5623 = vpop.f32.mrf.mxu0
  %v5624 = vpop.f32.mrf.mxu0
  %v5625 = vadd.f32 0.0, %v5624
  %v5626 = vpop.f32.mrf.mxu0
  %5627 = vmatprep.mubr.bf16.mxu0 0
  %5628 = vmatmul.mubr.bf16.gmra.mxu0 %v5438
  %v5629 = vpop.f32.mrf.mxu0
  %v5630 = vadd.f32 0.0, %v5629
  %v5631 = vpop.f32.mrf.mxu0
  %v5632 = vpop.f32.mrf.mxu0
  %v5633 = vadd.f32 0.0, %v5632
  %v5634 = vpop.f32.mrf.mxu0
  %5635 = vmatprep.mubr.bf16.mxu0 0
  %5636 = vmatmul.mubr.bf16.gmra.mxu0 %v5439
  %v5637 = vpop.f32.mrf.mxu0
  %v5638 = vadd.f32 0.0, %v5637
  %v5639 = vpop.f32.mrf.mxu0
  %v5640 = vpop.f32.mrf.mxu0
  %v5641 = vadd.f32 0.0, %v5640
  %v5642 = vpop.f32.mrf.mxu0
  %5643 = vmatprep.mubr.bf16.mxu0 0
  %5644 = vmatmul.mubr.bf16.gmra.mxu0 %v5440
  %v5645 = vpop.f32.mrf.mxu0
  %v5646 = vadd.f32 0.0, %v5645
  %v5647 = vpop.f32.mrf.mxu0
  %v5648 = vpop.f32.mrf.mxu0
  %v5649 = vadd.f32 0.0, %v5648
  %v5650 = vpop.f32.mrf.mxu0
  %5651 = vmatprep.mubr.bf16.mxu0 0
  %5652 = vmatmul.mubr.bf16.gmra.mxu0 %v5441
  %v5653 = vpop.f32.mrf.mxu0
  %v5654 = vadd.f32 0.0, %v5653
  %v5655 = vpop.f32.mrf.mxu0
  %v5656 = vpop.f32.mrf.mxu0
  %v5657 = vadd.f32 0.0, %v5656
  %v5658 = vpop.f32.mrf.mxu0
  %5659 = vmatprep.mubr.bf16.mxu0 0
  %5660 = vmatmul.mubr.bf16.gmra.mxu0 %v5442
  %v5661 = vpop.f32.mrf.mxu0
  %v5662 = vadd.f32 0.0, %v5661
  %v5663 = vpop.f32.mrf.mxu0
  %v5664 = vpop.f32.mrf.mxu0
  %v5665 = vadd.f32 0.0, %v5664
  %v5666 = vpop.f32.mrf.mxu0
  %5667 = vmatprep.mubr.bf16.mxu0 0
  %5668 = vmatmul.mubr.bf16.gmra.mxu0 %v5443
  %v5669 = vpop.f32.mrf.mxu0
  %v5670 = vadd.f32 0.0, %v5669
  %v5671 = vpop.f32.mrf.mxu0
  %v5672 = vpop.f32.mrf.mxu0
  %v5673 = vadd.f32 0.0, %v5672
  %v5674 = vpop.f32.mrf.mxu0
  %5675 = vmatprep.mubr.bf16.mxu0 0
  %5676 = vmatmul.mubr.bf16.gmra.mxu0 %v5444
  %v5677 = vpop.f32.mrf.mxu0
  %v5678 = vadd.f32 0.0, %v5677
  %v5679 = vpop.f32.mrf.mxu0
  %v5680 = vpop.f32.mrf.mxu0
  %v5681 = vadd.f32 0.0, %v5680
  %v5682 = vpop.f32.mrf.mxu0
  %5683 = vmatprep.mubr.bf16.mxu0 0
  %5684 = vmatmul.mubr.bf16.gmra.mxu0 %v5445
  %v5685 = vpop.f32.mrf.mxu0
  %v5686 = vadd.f32 0.0, %v5685
  %v5687 = vpop.f32.mrf.mxu0
  %v5688 = vpop.f32.mrf.mxu0
  %v5689 = vadd.f32 0.0, %v5688
  %v5690 = vpop.f32.mrf.mxu0
  %5691 = vmatprep.mubr.bf16.mxu0 0
  %5692 = vmatmul.mubr.bf16.gmra.mxu0 %v5446
  %v5693 = vpop.f32.mrf.mxu0
  %v5694 = vadd.f32 0.0, %v5693
  %v5695 = vpop.f32.mrf.mxu0
  %v5696 = vpop.f32.mrf.mxu0
  %v5697 = vadd.f32 0.0, %v5696
  %v5698 = vpop.f32.mrf.mxu0
  %5699 = vmatprep.mubr.bf16.mxu0 0
  %5700 = vmatmul.mubr.bf16.gmra.mxu0 %v5447
  %v5701 = vpop.f32.mrf.mxu0
  %v5702 = vadd.f32 0.0, %v5701
  %v5703 = vpop.f32.mrf.mxu0
  %v5704 = vpop.f32.mrf.mxu0
  %v5705 = vadd.f32 0.0, %v5704
  %v5706 = vpop.f32.mrf.mxu0
  %5707 = vmatprep.mubr.bf16.mxu0 0
  %5708 = vmatmul.mubr.bf16.gmra.mxu0 %v5448
  %v5709 = vpop.f32.mrf.mxu0
  %v5710 = vadd.f32 0.0, %v5709
  %v5711 = vpop.f32.mrf.mxu0
  %v5712 = vpop.f32.mrf.mxu0
  %v5713 = vadd.f32 0.0, %v5712
  %v5714 = vpop.f32.mrf.mxu0
  %5715 = vmatprep.mubr.bf16.mxu0 0
  %5716 = vmatmul.mubr.bf16.gmra.mxu0 %v5449
  %v5717 = vpop.f32.mrf.mxu0
  %v5718 = vadd.f32 0.0, %v5717
  %v5719 = vpop.f32.mrf.mxu0
  %v5720 = vpop.f32.mrf.mxu0
  %v5721 = vadd.f32 0.0, %v5720
  %v5722 = vpop.f32.mrf.mxu0
  %5723 = vmatprep.mubr.bf16.mxu0 0
  %5724 = vmatmul.mubr.bf16.gmra.mxu0 %v5450
  %v5725 = vpop.f32.mrf.mxu0
  %v5726 = vadd.f32 0.0, %v5725
  %v5727 = vpop.f32.mrf.mxu0
  %v5728 = vpop.f32.mrf.mxu0
  %v5729 = vadd.f32 0.0, %v5728
  %v5730 = vpop.f32.mrf.mxu0
  %5731 = vmatprep.mubr.bf16.mxu0 0
  %5732 = vmatmul.mubr.bf16.gmra.mxu0 %v5451
  %v5733 = vpop.f32.mrf.mxu0
  %v5734 = vadd.f32 0.0, %v5733
  %v5735 = vpop.f32.mrf.mxu0
  %v5736 = vpop.f32.mrf.mxu0
  %v5737 = vadd.f32 0.0, %v5736
  %v5738 = vpop.f32.mrf.mxu0
  %5739 = vmatprep.mubr.bf16.mxu0 0
  %5740 = vmatmul.mubr.bf16.gmra.mxu0 %v5452
  %v5741 = vpop.f32.mrf.mxu0
  %v5742 = vadd.f32 0.0, %v5741
  %v5743 = vpop.f32.mrf.mxu0
  %v5744 = vpop.f32.mrf.mxu0
  %v5745 = vadd.f32 0.0, %v5744
  %v5746 = vpop.f32.mrf.mxu0
  %5747 = vmatprep.mubr.bf16.mxu0 0
  %5748 = vmatmul.mubr.bf16.gmra.mxu0 %v5453
  %v5749 = vpop.f32.mrf.mxu0
  %v5750 = vadd.f32 0.0, %v5749
  %v5751 = vpop.f32.mrf.mxu0
  %v5752 = vpop.f32.mrf.mxu0
  %v5753 = vadd.f32 0.0, %v5752
  %v5754 = vpop.f32.mrf.mxu0
  %5755 = vmatprep.mubr.bf16.mxu0 0
  %5756 = vmatmul.mubr.bf16.gmra.mxu0 %v5454
  %v5757 = vpop.f32.mrf.mxu0
  %v5758 = vadd.f32 0.0, %v5757
  %v5759 = vpop.f32.mrf.mxu0
  %v5760 = vpop.f32.mrf.mxu0
  %v5761 = vadd.f32 0.0, %v5760
  %v5762 = vpop.f32.mrf.mxu0
  %5763 = vmatprep.mubr.bf16.mxu0 0
  %5764 = vmatmul.mubr.bf16.gmra.mxu0 %v5455
  %v5765 = vpop.f32.mrf.mxu0
  %v5766 = vadd.f32 0.0, %v5765
  %v5767 = vpop.f32.mrf.mxu0
  %v5768 = vpop.f32.mrf.mxu0
  %v5769 = vadd.f32 0.0, %v5768
  %v5770 = vpop.f32.mrf.mxu0
  %5771 = vmatprep.mubr.bf16.mxu0 0
  %5772 = vmatmul.mubr.bf16.gmra.mxu0 %v5456
  %v5773 = vpop.f32.mrf.mxu0
  %v5774 = vadd.f32 0.0, %v5773
  %v5775 = vpop.f32.mrf.mxu0
  %v5776 = vpop.f32.mrf.mxu0
  %v5777 = vadd.f32 0.0, %v5776
  %v5778 = vpop.f32.mrf.mxu0
  %5779 = vmatprep.mubr.bf16.mxu0 0
  %5780 = vmatmul.mubr.bf16.gmra.mxu0 %v5457
  %v5781 = vpop.f32.mrf.mxu0
  %v5782 = vadd.f32 0.0, %v5781
  %v5783 = vpop.f32.mrf.mxu0
  %v5784 = vpop.f32.mrf.mxu0
  %v5785 = vadd.f32 0.0, %v5784
  %v5786 = vpop.f32.mrf.mxu0
  %5787 = vmatprep.mubr.bf16.mxu0 0
  %5788 = vmatmul.mubr.bf16.gmra.mxu0 %v5458
  %v5789 = vpop.f32.mrf.mxu0
  %v5790 = vadd.f32 0.0, %v5789
  %v5791 = vpop.f32.mrf.mxu0
  %v5792 = vpop.f32.mrf.mxu0
  %v5793 = vadd.f32 0.0, %v5792
  %v5794 = vpop.f32.mrf.mxu0
  %5795 = vdwg.mxu0
  %v5796 = vadd.f32 %v301, %v5542
  %v5797 = vadd.f32 %v304, %v5545
  %v5798 = vadd.f32 %v309, %v5550
  %v5799 = vadd.f32 %v312, %v5553
  %v5800 = vadd.f32 %v317, %v5558
  %v5801 = vadd.f32 %v320, %v5561
  %v5802 = vadd.f32 %v325, %v5566
  %v5803 = vadd.f32 %v328, %v5569
  %v5804 = vadd.f32 %v333, %v5574
  %v5805 = vadd.f32 %v336, %v5577
  %v5806 = vadd.f32 %v341, %v5582
  %v5807 = vadd.f32 %v344, %v5585
  %v5808 = vadd.f32 %v349, %v5590
  %v5809 = vadd.f32 %v352, %v5593
  %v5810 = vadd.f32 %v357, %v5598
  %v5811 = vadd.f32 %v360, %v5601
  %v5812 = vadd.f32 %v365, %v5606
  %v5813 = vadd.f32 %v368, %v5609
  %v5814 = vadd.f32 %v373, %v5614
  %v5815 = vadd.f32 %v376, %v5617
  %v5816 = vadd.f32 %v381, %v5622
  %v5817 = vadd.f32 %v384, %v5625
  %v5818 = vadd.f32 %v389, %v5630
  %v5819 = vadd.f32 %v392, %v5633
  %v5820 = vadd.f32 %v397, %v5638
  %v5821 = vadd.f32 %v400, %v5641
  %v5822 = vadd.f32 %v405, %v5646
  %v5823 = vadd.f32 %v408, %v5649
  %v5824 = vadd.f32 %v413, %v5654
  %v5825 = vadd.f32 %v416, %v5657
  %v5826 = vadd.f32 %v421, %v5662
  %v5827 = vadd.f32 %v424, %v5665
  %v5828 = vadd.f32 %v429, %v5670
  %v5829 = vadd.f32 %v432, %v5673
  %v5830 = vadd.f32 %v437, %v5678
  %v5831 = vadd.f32 %v440, %v5681
  %v5832 = vadd.f32 %v445, %v5686
  %v5833 = vadd.f32 %v448, %v5689
  %v5834 = vadd.f32 %v453, %v5694
  %v5835 = vadd.f32 %v456, %v5697
  %v5836 = vadd.f32 %v461, %v5702
  %v5837 = vadd.f32 %v464, %v5705
  %v5838 = vadd.f32 %v469, %v5710
  %v5839 = vadd.f32 %v472, %v5713
  %v5840 = vadd.f32 %v477, %v5718
  %v5841 = vadd.f32 %v480, %v5721
  %v5842 = vadd.f32 %v485, %v5726
  %v5843 = vadd.f32 %v488, %v5729
  %v5844 = vadd.f32 %v493, %v5734
  %v5845 = vadd.f32 %v496, %v5737
  %v5846 = vadd.f32 %v501, %v5742
  %v5847 = vadd.f32 %v504, %v5745
  %v5848 = vadd.f32 %v509, %v5750
  %v5849 = vadd.f32 %v512, %v5753
  %v5850 = vadd.f32 %v517, %v5758
  %v5851 = vadd.f32 %v520, %v5761
  %v5852 = vadd.f32 %v525, %v5766
  %v5853 = vadd.f32 %v528, %v5769
  %v5854 = vadd.f32 %v533, %v5774
  %v5855 = vadd.f32 %v536, %v5777
  %v5856 = vadd.f32 %v541, %v5782
  %v5857 = vadd.f32 %v544, %v5785
  %v5858 = vadd.f32 %v549, %v5790
  %v5859 = vadd.f32 %v552, %v5793
  %v5860 = vld [vmem:[%s6] sm:$0x1]
  %v5862 = vlaneseq
  %v5863 = vshrl.u32 %v5862, 7
  %v5864 = vsub.s32 0, %v5863
  %v5865 = vrot.slane %v5860, %v5864
  %v5867 = vadd.f32 %v5796, %v5865
  %v5868 = vadd.f32 %v5797, %v5865
  %v5869 = vadd.f32 %v5798, %v5865
  %v5870 = vadd.f32 %v5799, %v5865
  %v5871 = vadd.f32 %v5800, %v5865
  %v5872 = vadd.f32 %v5801, %v5865
  %v5873 = vadd.f32 %v5802, %v5865
  %v5874 = vadd.f32 %v5803, %v5865
  %v5875 = vadd.f32 %v5804, %v5865
  %v5876 = vadd.f32 %v5805, %v5865
  %v5877 = vadd.f32 %v5806, %v5865
  %v5878 = vadd.f32 %v5807, %v5865
  %v5879 = vadd.f32 %v5808, %v5865
  %v5880 = vadd.f32 %v5809, %v5865
  %v5881 = vadd.f32 %v5810, %v5865
  %v5882 = vadd.f32 %v5811, %v5865
  %v5883 = vadd.f32 %v5812, %v5865
  %v5884 = vadd.f32 %v5813, %v5865
  %v5885 = vadd.f32 %v5814, %v5865
  %v5886 = vadd.f32 %v5815, %v5865
  %v5887 = vadd.f32 %v5816, %v5865
  %v5888 = vadd.f32 %v5817, %v5865
  %v5889 = vadd.f32 %v5818, %v5865
  %v5890 = vadd.f32 %v5819, %v5865
  %v5891 = vadd.f32 %v5820, %v5865
  %v5892 = vadd.f32 %v5821, %v5865
  %v5893 = vadd.f32 %v5822, %v5865
  %v5894 = vadd.f32 %v5823, %v5865
  %v5895 = vadd.f32 %v5824, %v5865
  %v5896 = vadd.f32 %v5825, %v5865
  %v5897 = vadd.f32 %v5826, %v5865
  %v5898 = vadd.f32 %v5827, %v5865
  %v5899 = vadd.f32 %v5828, %v5865
  %v5900 = vadd.f32 %v5829, %v5865
  %v5901 = vadd.f32 %v5830, %v5865
  %v5902 = vadd.f32 %v5831, %v5865
  %v5903 = vadd.f32 %v5832, %v5865
  %v5904 = vadd.f32 %v5833, %v5865
  %v5905 = vadd.f32 %v5834, %v5865
  %v5906 = vadd.f32 %v5835, %v5865
  %v5907 = vadd.f32 %v5836, %v5865
  %v5908 = vadd.f32 %v5837, %v5865
  %v5909 = vadd.f32 %v5838, %v5865
  %v5910 = vadd.f32 %v5839, %v5865
  %v5911 = vadd.f32 %v5840, %v5865
  %v5912 = vadd.f32 %v5841, %v5865
  %v5913 = vadd.f32 %v5842, %v5865
  %v5914 = vadd.f32 %v5843, %v5865
  %v5915 = vadd.f32 %v5844, %v5865
  %v5916 = vadd.f32 %v5845, %v5865
  %v5917 = vadd.f32 %v5846, %v5865
  %v5918 = vadd.f32 %v5847, %v5865
  %v5919 = vadd.f32 %v5848, %v5865
  %v5920 = vadd.f32 %v5849, %v5865
  %v5921 = vadd.f32 %v5850, %v5865
  %v5922 = vadd.f32 %v5851, %v5865
  %v5923 = vadd.f32 %v5852, %v5865
  %v5924 = vadd.f32 %v5853, %v5865
  %v5925 = vadd.f32 %v5854, %v5865
  %v5926 = vadd.f32 %v5855, %v5865
  %v5927 = vadd.f32 %v5856, %v5865
  %v5928 = vadd.f32 %v5857, %v5865
  %v5929 = vadd.f32 %v5858, %v5865
  %v5930 = vadd.f32 %v5859, %v5865
  %5931 = vadd.xlane.f32.xlu0 %v5867
  %v5932 = vpop.xlane.xlu0 %5931
  %5933 = vadd.xlane.f32.xlu0 %v5868
  %v5934 = vpop.xlane.xlu0 %5933
  %5935 = vadd.xlane.f32.xlu0 %v5869
  %v5936 = vpop.xlane.xlu0 %5935
  %5937 = vadd.xlane.f32.xlu0 %v5870
  %v5938 = vpop.xlane.xlu0 %5937
  %5939 = vadd.xlane.f32.xlu0 %v5871
  %v5940 = vpop.xlane.xlu0 %5939
  %5941 = vadd.xlane.f32.xlu0 %v5872
  %v5942 = vpop.xlane.xlu0 %5941
  %5943 = vadd.xlane.f32.xlu0 %v5873
  %v5944 = vpop.xlane.xlu0 %5943
  %5945 = vadd.xlane.f32.xlu0 %v5874
  %v5946 = vpop.xlane.xlu0 %5945
  %5947 = vadd.xlane.f32.xlu0 %v5875
  %v5948 = vpop.xlane.xlu0 %5947
  %5949 = vadd.xlane.f32.xlu0 %v5876
  %v5950 = vpop.xlane.xlu0 %5949
  %5951 = vadd.xlane.f32.xlu0 %v5877
  %v5952 = vpop.xlane.xlu0 %5951
  %5953 = vadd.xlane.f32.xlu0 %v5878
  %v5954 = vpop.xlane.xlu0 %5953
  %5955 = vadd.xlane.f32.xlu0 %v5879
  %v5956 = vpop.xlane.xlu0 %5955
  %5957 = vadd.xlane.f32.xlu0 %v5880
  %v5958 = vpop.xlane.xlu0 %5957
  %5959 = vadd.xlane.f32.xlu0 %v5881
  %v5960 = vpop.xlane.xlu0 %5959
  %5961 = vadd.xlane.f32.xlu0 %v5882
  %v5962 = vpop.xlane.xlu0 %5961
  %5963 = vadd.xlane.f32.xlu0 %v5883
  %v5964 = vpop.xlane.xlu0 %5963
  %5965 = vadd.xlane.f32.xlu0 %v5884
  %v5966 = vpop.xlane.xlu0 %5965
  %5967 = vadd.xlane.f32.xlu0 %v5885
  %v5968 = vpop.xlane.xlu0 %5967
  %5969 = vadd.xlane.f32.xlu0 %v5886
  %v5970 = vpop.xlane.xlu0 %5969
  %5971 = vadd.xlane.f32.xlu0 %v5887
  %v5972 = vpop.xlane.xlu0 %5971
  %5973 = vadd.xlane.f32.xlu0 %v5888
  %v5974 = vpop.xlane.xlu0 %5973
  %5975 = vadd.xlane.f32.xlu0 %v5889
  %v5976 = vpop.xlane.xlu0 %5975
  %5977 = vadd.xlane.f32.xlu0 %v5890
  %v5978 = vpop.xlane.xlu0 %5977
  %5979 = vadd.xlane.f32.xlu0 %v5891
  %v5980 = vpop.xlane.xlu0 %5979
  %5981 = vadd.xlane.f32.xlu0 %v5892
  %v5982 = vpop.xlane.xlu0 %5981
  %5983 = vadd.xlane.f32.xlu0 %v5893
  %v5984 = vpop.xlane.xlu0 %5983
  %5985 = vadd.xlane.f32.xlu0 %v5894
  %v5986 = vpop.xlane.xlu0 %5985
  %5987 = vadd.xlane.f32.xlu0 %v5895
  %v5988 = vpop.xlane.xlu0 %5987
  %5989 = vadd.xlane.f32.xlu0 %v5896
  %v5990 = vpop.xlane.xlu0 %5989
  %5991 = vadd.xlane.f32.xlu0 %v5897
  %v5992 = vpop.xlane.xlu0 %5991
  %5993 = vadd.xlane.f32.xlu0 %v5898
  %v5994 = vpop.xlane.xlu0 %5993
  %5995 = vadd.xlane.f32.xlu0 %v5899
  %v5996 = vpop.xlane.xlu0 %5995
  %5997 = vadd.xlane.f32.xlu0 %v5900
  %v5998 = vpop.xlane.xlu0 %5997
  %5999 = vadd.xlane.f32.xlu0 %v5901
  %v6000 = vpop.xlane.xlu0 %5999
  %6001 = vadd.xlane.f32.xlu0 %v5902
  %v6002 = vpop.xlane.xlu0 %6001
  %6003 = vadd.xlane.f32.xlu0 %v5903
  %v6004 = vpop.xlane.xlu0 %6003
  %6005 = vadd.xlane.f32.xlu0 %v5904
  %v6006 = vpop.xlane.xlu0 %6005
  %6007 = vadd.xlane.f32.xlu0 %v5905
  %v6008 = vpop.xlane.xlu0 %6007
  %6009 = vadd.xlane.f32.xlu0 %v5906
  %v6010 = vpop.xlane.xlu0 %6009
  %6011 = vadd.xlane.f32.xlu0 %v5907
  %v6012 = vpop.xlane.xlu0 %6011
  %6013 = vadd.xlane.f32.xlu0 %v5908
  %v6014 = vpop.xlane.xlu0 %6013
  %6015 = vadd.xlane.f32.xlu0 %v5909
  %v6016 = vpop.xlane.xlu0 %6015
  %6017 = vadd.xlane.f32.xlu0 %v5910
  %v6018 = vpop.xlane.xlu0 %6017
  %6019 = vadd.xlane.f32.xlu0 %v5911
  %v6020 = vpop.xlane.xlu0 %6019
  %6021 = vadd.xlane.f32.xlu0 %v5912
  %v6022 = vpop.xlane.xlu0 %6021
  %6023 = vadd.xlane.f32.xlu0 %v5913
  %v6024 = vpop.xlane.xlu0 %6023
  %6025 = vadd.xlane.f32.xlu0 %v5914
  %v6026 = vpop.xlane.xlu0 %6025
  %6027 = vadd.xlane.f32.xlu0 %v5915
  %v6028 = vpop.xlane.xlu0 %6027
  %6029 = vadd.xlane.f32.xlu0 %v5916
  %v6030 = vpop.xlane.xlu0 %6029
  %6031 = vadd.xlane.f32.xlu0 %v5917
  %v6032 = vpop.xlane.xlu0 %6031
  %6033 = vadd.xlane.f32.xlu0 %v5918
  %v6034 = vpop.xlane.xlu0 %6033
  %6035 = vadd.xlane.f32.xlu0 %v5919
  %v6036 = vpop.xlane.xlu0 %6035
  %6037 = vadd.xlane.f32.xlu0 %v5920
  %v6038 = vpop.xlane.xlu0 %6037
  %6039 = vadd.xlane.f32.xlu0 %v5921
  %v6040 = vpop.xlane.xlu0 %6039
  %6041 = vadd.xlane.f32.xlu0 %v5922
  %v6042 = vpop.xlane.xlu0 %6041
  %6043 = vadd.xlane.f32.xlu0 %v5923
  %v6044 = vpop.xlane.xlu0 %6043
  %6045 = vadd.xlane.f32.xlu0 %v5924
  %v6046 = vpop.xlane.xlu0 %6045
  %6047 = vadd.xlane.f32.xlu0 %v5925
  %v6048 = vpop.xlane.xlu0 %6047
  %6049 = vadd.xlane.f32.xlu0 %v5926
  %v6050 = vpop.xlane.xlu0 %6049
  %6051 = vadd.xlane.f32.xlu0 %v5927
  %v6052 = vpop.xlane.xlu0 %6051
  %6053 = vadd.xlane.f32.xlu0 %v5928
  %v6054 = vpop.xlane.xlu0 %6053
  %6055 = vadd.xlane.f32.xlu0 %v5929
  %v6056 = vpop.xlane.xlu0 %6055
  %6057 = vadd.xlane.f32.xlu0 %v5930
  %v6058 = vpop.xlane.xlu0 %6057
  %v6059 = vmul.f32 %v5932, %v683
  %v6060 = vmul.f32 %v5934, %v683
  %v6061 = vmul.f32 %v5936, %v683
  %v6062 = vmul.f32 %v5938, %v683
  %v6063 = vmul.f32 %v5940, %v683
  %v6064 = vmul.f32 %v5942, %v683
  %v6065 = vmul.f32 %v5944, %v683
  %v6066 = vmul.f32 %v5946, %v683
  %v6067 = vmul.f32 %v5948, %v683
  %v6068 = vmul.f32 %v5950, %v683
  %v6069 = vmul.f32 %v5952, %v683
  %v6070 = vmul.f32 %v5954, %v683
  %v6071 = vmul.f32 %v5956, %v683
  %v6072 = vmul.f32 %v5958, %v683
  %v6073 = vmul.f32 %v5960, %v683
  %v6074 = vmul.f32 %v5962, %v683
  %v6075 = vmul.f32 %v5964, %v683
  %v6076 = vmul.f32 %v5966, %v683
  %v6077 = vmul.f32 %v5968, %v683
  %v6078 = vmul.f32 %v5970, %v683
  %v6079 = vmul.f32 %v5972, %v683
  %v6080 = vmul.f32 %v5974, %v683
  %v6081 = vmul.f32 %v5976, %v683
  %v6082 = vmul.f32 %v5978, %v683
  %v6083 = vmul.f32 %v5980, %v683
  %v6084 = vmul.f32 %v5982, %v683
  %v6085 = vmul.f32 %v5984, %v683
  %v6086 = vmul.f32 %v5986, %v683
  %v6087 = vmul.f32 %v5988, %v683
  %v6088 = vmul.f32 %v5990, %v683
  %v6089 = vmul.f32 %v5992, %v683
  %v6090 = vmul.f32 %v5994, %v683
  %v6091 = vmul.f32 %v5996, %v683
  %v6092 = vmul.f32 %v5998, %v683
  %v6093 = vmul.f32 %v6000, %v683
  %v6094 = vmul.f32 %v6002, %v683
  %v6095 = vmul.f32 %v6004, %v683
  %v6096 = vmul.f32 %v6006, %v683
  %v6097 = vmul.f32 %v6008, %v683
  %v6098 = vmul.f32 %v6010, %v683
  %v6099 = vmul.f32 %v6012, %v683
  %v6100 = vmul.f32 %v6014, %v683
  %v6101 = vmul.f32 %v6016, %v683
  %v6102 = vmul.f32 %v6018, %v683
  %v6103 = vmul.f32 %v6020, %v683
  %v6104 = vmul.f32 %v6022, %v683
  %v6105 = vmul.f32 %v6024, %v683
  %v6106 = vmul.f32 %v6026, %v683
  %v6107 = vmul.f32 %v6028, %v683
  %v6108 = vmul.f32 %v6030, %v683
  %v6109 = vmul.f32 %v6032, %v683
  %v6110 = vmul.f32 %v6034, %v683
  %v6111 = vmul.f32 %v6036, %v683
  %v6112 = vmul.f32 %v6038, %v683
  %v6113 = vmul.f32 %v6040, %v683
  %v6114 = vmul.f32 %v6042, %v683
  %v6115 = vmul.f32 %v6044, %v683
  %v6116 = vmul.f32 %v6046, %v683
  %v6117 = vmul.f32 %v6048, %v683
  %v6118 = vmul.f32 %v6050, %v683
  %v6119 = vmul.f32 %v6052, %v683
  %v6120 = vmul.f32 %v6054, %v683
  %v6121 = vmul.f32 %v6056, %v683
  %v6122 = vmul.f32 %v6058, %v683
  %v6123 = vsub.f32 %v5867, %v6059
  %v6124 = vsub.f32 %v5868, %v6060
  %v6125 = vsub.f32 %v5869, %v6061
  %v6126 = vsub.f32 %v5870, %v6062
  %v6127 = vsub.f32 %v5871, %v6063
  %v6128 = vsub.f32 %v5872, %v6064
  %v6129 = vsub.f32 %v5873, %v6065
  %v6130 = vsub.f32 %v5874, %v6066
  %v6131 = vsub.f32 %v5875, %v6067
  %v6132 = vsub.f32 %v5876, %v6068
  %v6133 = vsub.f32 %v5877, %v6069
  %v6134 = vsub.f32 %v5878, %v6070
  %v6135 = vsub.f32 %v5879, %v6071
  %v6136 = vsub.f32 %v5880, %v6072
  %v6137 = vsub.f32 %v5881, %v6073
  %v6138 = vsub.f32 %v5882, %v6074
  %v6139 = vsub.f32 %v5883, %v6075
  %v6140 = vsub.f32 %v5884, %v6076
  %v6141 = vsub.f32 %v5885, %v6077
  %v6142 = vsub.f32 %v5886, %v6078
  %v6143 = vsub.f32 %v5887, %v6079
  %v6144 = vsub.f32 %v5888, %v6080
  %v6145 = vsub.f32 %v5889, %v6081
  %v6146 = vsub.f32 %v5890, %v6082
  %v6147 = vsub.f32 %v5891, %v6083
  %v6148 = vsub.f32 %v5892, %v6084
  %v6149 = vsub.f32 %v5893, %v6085
  %v6150 = vsub.f32 %v5894, %v6086
  %v6151 = vsub.f32 %v5895, %v6087
  %v6152 = vsub.f32 %v5896, %v6088
  %v6153 = vsub.f32 %v5897, %v6089
  %v6154 = vsub.f32 %v5898, %v6090
  %v6155 = vsub.f32 %v5899, %v6091
  %v6156 = vsub.f32 %v5900, %v6092
  %v6157 = vsub.f32 %v5901, %v6093
  %v6158 = vsub.f32 %v5902, %v6094
  %v6159 = vsub.f32 %v5903, %v6095
  %v6160 = vsub.f32 %v5904, %v6096
  %v6161 = vsub.f32 %v5905, %v6097
  %v6162 = vsub.f32 %v5906, %v6098
  %v6163 = vsub.f32 %v5907, %v6099
  %v6164 = vsub.f32 %v5908, %v6100
  %v6165 = vsub.f32 %v5909, %v6101
  %v6166 = vsub.f32 %v5910, %v6102
  %v6167 = vsub.f32 %v5911, %v6103
  %v6168 = vsub.f32 %v5912, %v6104
  %v6169 = vsub.f32 %v5913, %v6105
  %v6170 = vsub.f32 %v5914, %v6106
  %v6171 = vsub.f32 %v5915, %v6107
  %v6172 = vsub.f32 %v5916, %v6108
  %v6173 = vsub.f32 %v5917, %v6109
  %v6174 = vsub.f32 %v5918, %v6110
  %v6175 = vsub.f32 %v5919, %v6111
  %v6176 = vsub.f32 %v5920, %v6112
  %v6177 = vsub.f32 %v5921, %v6113
  %v6178 = vsub.f32 %v5922, %v6114
  %v6179 = vsub.f32 %v5923, %v6115
  %v6180 = vsub.f32 %v5924, %v6116
  %v6181 = vsub.f32 %v5925, %v6117
  %v6182 = vsub.f32 %v5926, %v6118
  %v6183 = vsub.f32 %v5927, %v6119
  %v6184 = vsub.f32 %v5928, %v6120
  %v6185 = vsub.f32 %v5929, %v6121
  %v6186 = vsub.f32 %v5930, %v6122
  %v6187 = vmul.f32 %v6123, %v6123
  %v6188 = vmul.f32 %v6124, %v6124
  %v6189 = vmul.f32 %v6125, %v6125
  %v6190 = vmul.f32 %v6126, %v6126
  %v6191 = vmul.f32 %v6127, %v6127
  %v6192 = vmul.f32 %v6128, %v6128
  %v6193 = vmul.f32 %v6129, %v6129
  %v6194 = vmul.f32 %v6130, %v6130
  %v6195 = vmul.f32 %v6131, %v6131
  %v6196 = vmul.f32 %v6132, %v6132
  %v6197 = vmul.f32 %v6133, %v6133
  %v6198 = vmul.f32 %v6134, %v6134
  %v6199 = vmul.f32 %v6135, %v6135
  %v6200 = vmul.f32 %v6136, %v6136
  %v6201 = vmul.f32 %v6137, %v6137
  %v6202 = vmul.f32 %v6138, %v6138
  %v6203 = vmul.f32 %v6139, %v6139
  %v6204 = vmul.f32 %v6140, %v6140
  %v6205 = vmul.f32 %v6141, %v6141
  %v6206 = vmul.f32 %v6142, %v6142
  %v6207 = vmul.f32 %v6143, %v6143
  %v6208 = vmul.f32 %v6144, %v6144
  %v6209 = vmul.f32 %v6145, %v6145
  %v6210 = vmul.f32 %v6146, %v6146
  %v6211 = vmul.f32 %v6147, %v6147
  %v6212 = vmul.f32 %v6148, %v6148
  %v6213 = vmul.f32 %v6149, %v6149
  %v6214 = vmul.f32 %v6150, %v6150
  %v6215 = vmul.f32 %v6151, %v6151
  %v6216 = vmul.f32 %v6152, %v6152
  %v6217 = vmul.f32 %v6153, %v6153
  %v6218 = vmul.f32 %v6154, %v6154
  %v6219 = vmul.f32 %v6155, %v6155
  %v6220 = vmul.f32 %v6156, %v6156
  %v6221 = vmul.f32 %v6157, %v6157
  %v6222 = vmul.f32 %v6158, %v6158
  %v6223 = vmul.f32 %v6159, %v6159
  %v6224 = vmul.f32 %v6160, %v6160
  %v6225 = vmul.f32 %v6161, %v6161
  %v6226 = vmul.f32 %v6162, %v6162
  %v6227 = vmul.f32 %v6163, %v6163
  %v6228 = vmul.f32 %v6164, %v6164
  %v6229 = vmul.f32 %v6165, %v6165
  %v6230 = vmul.f32 %v6166, %v6166
  %v6231 = vmul.f32 %v6167, %v6167
  %v6232 = vmul.f32 %v6168, %v6168
  %v6233 = vmul.f32 %v6169, %v6169
  %v6234 = vmul.f32 %v6170, %v6170
  %v6235 = vmul.f32 %v6171, %v6171
  %v6236 = vmul.f32 %v6172, %v6172
  %v6237 = vmul.f32 %v6173, %v6173
  %v6238 = vmul.f32 %v6174, %v6174
  %v6239 = vmul.f32 %v6175, %v6175
  %v6240 = vmul.f32 %v6176, %v6176
  %v6241 = vmul.f32 %v6177, %v6177
  %v6242 = vmul.f32 %v6178, %v6178
  %v6243 = vmul.f32 %v6179, %v6179
  %v6244 = vmul.f32 %v6180, %v6180
  %v6245 = vmul.f32 %v6181, %v6181
  %v6246 = vmul.f32 %v6182, %v6182
  %v6247 = vmul.f32 %v6183, %v6183
  %v6248 = vmul.f32 %v6184, %v6184
  %v6249 = vmul.f32 %v6185, %v6185
  %v6250 = vmul.f32 %v6186, %v6186
  %6251 = vadd.xlane.f32.xlu0 %v6187
  %v6252 = vpop.xlane.xlu0 %6251
  %6253 = vadd.xlane.f32.xlu0 %v6188
  %v6254 = vpop.xlane.xlu0 %6253
  %6255 = vadd.xlane.f32.xlu0 %v6189
  %v6256 = vpop.xlane.xlu0 %6255
  %6257 = vadd.xlane.f32.xlu0 %v6190
  %v6258 = vpop.xlane.xlu0 %6257
  %6259 = vadd.xlane.f32.xlu0 %v6191
  %v6260 = vpop.xlane.xlu0 %6259
  %6261 = vadd.xlane.f32.xlu0 %v6192
  %v6262 = vpop.xlane.xlu0 %6261
  %6263 = vadd.xlane.f32.xlu0 %v6193
  %v6264 = vpop.xlane.xlu0 %6263
  %6265 = vadd.xlane.f32.xlu0 %v6194
  %v6266 = vpop.xlane.xlu0 %6265
  %6267 = vadd.xlane.f32.xlu0 %v6195
  %v6268 = vpop.xlane.xlu0 %6267
  %6269 = vadd.xlane.f32.xlu0 %v6196
  %v6270 = vpop.xlane.xlu0 %6269
  %6271 = vadd.xlane.f32.xlu0 %v6197
  %v6272 = vpop.xlane.xlu0 %6271
  %6273 = vadd.xlane.f32.xlu0 %v6198
  %v6274 = vpop.xlane.xlu0 %6273
  %6275 = vadd.xlane.f32.xlu0 %v6199
  %v6276 = vpop.xlane.xlu0 %6275
  %6277 = vadd.xlane.f32.xlu0 %v6200
  %v6278 = vpop.xlane.xlu0 %6277
  %6279 = vadd.xlane.f32.xlu0 %v6201
  %v6280 = vpop.xlane.xlu0 %6279
  %6281 = vadd.xlane.f32.xlu0 %v6202
  %v6282 = vpop.xlane.xlu0 %6281
  %6283 = vadd.xlane.f32.xlu0 %v6203
  %v6284 = vpop.xlane.xlu0 %6283
  %6285 = vadd.xlane.f32.xlu0 %v6204
  %v6286 = vpop.xlane.xlu0 %6285
  %6287 = vadd.xlane.f32.xlu0 %v6205
  %v6288 = vpop.xlane.xlu0 %6287
  %6289 = vadd.xlane.f32.xlu0 %v6206
  %v6290 = vpop.xlane.xlu0 %6289
  %6291 = vadd.xlane.f32.xlu0 %v6207
  %v6292 = vpop.xlane.xlu0 %6291
  %6293 = vadd.xlane.f32.xlu0 %v6208
  %v6294 = vpop.xlane.xlu0 %6293
  %6295 = vadd.xlane.f32.xlu0 %v6209
  %v6296 = vpop.xlane.xlu0 %6295
  %6297 = vadd.xlane.f32.xlu0 %v6210
  %v6298 = vpop.xlane.xlu0 %6297
  %6299 = vadd.xlane.f32.xlu0 %v6211
  %v6300 = vpop.xlane.xlu0 %6299
  %6301 = vadd.xlane.f32.xlu0 %v6212
  %v6302 = vpop.xlane.xlu0 %6301
  %6303 = vadd.xlane.f32.xlu0 %v6213
  %v6304 = vpop.xlane.xlu0 %6303
  %6305 = vadd.xlane.f32.xlu0 %v6214
  %v6306 = vpop.xlane.xlu0 %6305
  %6307 = vadd.xlane.f32.xlu0 %v6215
  %v6308 = vpop.xlane.xlu0 %6307
  %6309 = vadd.xlane.f32.xlu0 %v6216
  %v6310 = vpop.xlane.xlu0 %6309
  %6311 = vadd.xlane.f32.xlu0 %v6217
  %v6312 = vpop.xlane.xlu0 %6311
  %6313 = vadd.xlane.f32.xlu0 %v6218
  %v6314 = vpop.xlane.xlu0 %6313
  %6315 = vadd.xlane.f32.xlu0 %v6219
  %v6316 = vpop.xlane.xlu0 %6315
  %6317 = vadd.xlane.f32.xlu0 %v6220
  %v6318 = vpop.xlane.xlu0 %6317
  %6319 = vadd.xlane.f32.xlu0 %v6221
  %v6320 = vpop.xlane.xlu0 %6319
  %6321 = vadd.xlane.f32.xlu0 %v6222
  %v6322 = vpop.xlane.xlu0 %6321
  %6323 = vadd.xlane.f32.xlu0 %v6223
  %v6324 = vpop.xlane.xlu0 %6323
  %6325 = vadd.xlane.f32.xlu0 %v6224
  %v6326 = vpop.xlane.xlu0 %6325
  %6327 = vadd.xlane.f32.xlu0 %v6225
  %v6328 = vpop.xlane.xlu0 %6327
  %6329 = vadd.xlane.f32.xlu0 %v6226
  %v6330 = vpop.xlane.xlu0 %6329
  %6331 = vadd.xlane.f32.xlu0 %v6227
  %v6332 = vpop.xlane.xlu0 %6331
  %6333 = vadd.xlane.f32.xlu0 %v6228
  %v6334 = vpop.xlane.xlu0 %6333
  %6335 = vadd.xlane.f32.xlu0 %v6229
  %v6336 = vpop.xlane.xlu0 %6335
  %6337 = vadd.xlane.f32.xlu0 %v6230
  %v6338 = vpop.xlane.xlu0 %6337
  %6339 = vadd.xlane.f32.xlu0 %v6231
  %v6340 = vpop.xlane.xlu0 %6339
  %6341 = vadd.xlane.f32.xlu0 %v6232
  %v6342 = vpop.xlane.xlu0 %6341
  %6343 = vadd.xlane.f32.xlu0 %v6233
  %v6344 = vpop.xlane.xlu0 %6343
  %6345 = vadd.xlane.f32.xlu0 %v6234
  %v6346 = vpop.xlane.xlu0 %6345
  %6347 = vadd.xlane.f32.xlu0 %v6235
  %v6348 = vpop.xlane.xlu0 %6347
  %6349 = vadd.xlane.f32.xlu0 %v6236
  %v6350 = vpop.xlane.xlu0 %6349
  %6351 = vadd.xlane.f32.xlu0 %v6237
  %v6352 = vpop.xlane.xlu0 %6351
  %6353 = vadd.xlane.f32.xlu0 %v6238
  %v6354 = vpop.xlane.xlu0 %6353
  %6355 = vadd.xlane.f32.xlu0 %v6239
  %v6356 = vpop.xlane.xlu0 %6355
  %6357 = vadd.xlane.f32.xlu0 %v6240
  %v6358 = vpop.xlane.xlu0 %6357
  %6359 = vadd.xlane.f32.xlu0 %v6241
  %v6360 = vpop.xlane.xlu0 %6359
  %6361 = vadd.xlane.f32.xlu0 %v6242
  %v6362 = vpop.xlane.xlu0 %6361
  %6363 = vadd.xlane.f32.xlu0 %v6243
  %v6364 = vpop.xlane.xlu0 %6363
  %6365 = vadd.xlane.f32.xlu0 %v6244
  %v6366 = vpop.xlane.xlu0 %6365
  %6367 = vadd.xlane.f32.xlu0 %v6245
  %v6368 = vpop.xlane.xlu0 %6367
  %6369 = vadd.xlane.f32.xlu0 %v6246
  %v6370 = vpop.xlane.xlu0 %6369
  %6371 = vadd.xlane.f32.xlu0 %v6247
  %v6372 = vpop.xlane.xlu0 %6371
  %6373 = vadd.xlane.f32.xlu0 %v6248
  %v6374 = vpop.xlane.xlu0 %6373
  %6375 = vadd.xlane.f32.xlu0 %v6249
  %v6376 = vpop.xlane.xlu0 %6375
  %6377 = vadd.xlane.f32.xlu0 %v6250
  %v6378 = vpop.xlane.xlu0 %6377
  %v6379 = vmul.f32 %v6252, %v683
  %v6380 = vmul.f32 %v6254, %v683
  %v6381 = vmul.f32 %v6256, %v683
  %v6382 = vmul.f32 %v6258, %v683
  %v6383 = vmul.f32 %v6260, %v683
  %v6384 = vmul.f32 %v6262, %v683
  %v6385 = vmul.f32 %v6264, %v683
  %v6386 = vmul.f32 %v6266, %v683
  %v6387 = vmul.f32 %v6268, %v683
  %v6388 = vmul.f32 %v6270, %v683
  %v6389 = vmul.f32 %v6272, %v683
  %v6390 = vmul.f32 %v6274, %v683
  %v6391 = vmul.f32 %v6276, %v683
  %v6392 = vmul.f32 %v6278, %v683
  %v6393 = vmul.f32 %v6280, %v683
  %v6394 = vmul.f32 %v6282, %v683
  %v6395 = vmul.f32 %v6284, %v683
  %v6396 = vmul.f32 %v6286, %v683
  %v6397 = vmul.f32 %v6288, %v683
  %v6398 = vmul.f32 %v6290, %v683
  %v6399 = vmul.f32 %v6292, %v683
  %v6400 = vmul.f32 %v6294, %v683
  %v6401 = vmul.f32 %v6296, %v683
  %v6402 = vmul.f32 %v6298, %v683
  %v6403 = vmul.f32 %v6300, %v683
  %v6404 = vmul.f32 %v6302, %v683
  %v6405 = vmul.f32 %v6304, %v683
  %v6406 = vmul.f32 %v6306, %v683
  %v6407 = vmul.f32 %v6308, %v683
  %v6408 = vmul.f32 %v6310, %v683
  %v6409 = vmul.f32 %v6312, %v683
  %v6410 = vmul.f32 %v6314, %v683
  %v6411 = vmul.f32 %v6316, %v683
  %v6412 = vmul.f32 %v6318, %v683
  %v6413 = vmul.f32 %v6320, %v683
  %v6414 = vmul.f32 %v6322, %v683
  %v6415 = vmul.f32 %v6324, %v683
  %v6416 = vmul.f32 %v6326, %v683
  %v6417 = vmul.f32 %v6328, %v683
  %v6418 = vmul.f32 %v6330, %v683
  %v6419 = vmul.f32 %v6332, %v683
  %v6420 = vmul.f32 %v6334, %v683
  %v6421 = vmul.f32 %v6336, %v683
  %v6422 = vmul.f32 %v6338, %v683
  %v6423 = vmul.f32 %v6340, %v683
  %v6424 = vmul.f32 %v6342, %v683
  %v6425 = vmul.f32 %v6344, %v683
  %v6426 = vmul.f32 %v6346, %v683
  %v6427 = vmul.f32 %v6348, %v683
  %v6428 = vmul.f32 %v6350, %v683
  %v6429 = vmul.f32 %v6352, %v683
  %v6430 = vmul.f32 %v6354, %v683
  %v6431 = vmul.f32 %v6356, %v683
  %v6432 = vmul.f32 %v6358, %v683
  %v6433 = vmul.f32 %v6360, %v683
  %v6434 = vmul.f32 %v6362, %v683
  %v6435 = vmul.f32 %v6364, %v683
  %v6436 = vmul.f32 %v6366, %v683
  %v6437 = vmul.f32 %v6368, %v683
  %v6438 = vmul.f32 %v6370, %v683
  %v6439 = vmul.f32 %v6372, %v683
  %v6440 = vmul.f32 %v6374, %v683
  %v6441 = vmul.f32 %v6376, %v683
  %v6442 = vmul.f32 %v6378, %v683
  %v6443 = vadd.f32 %v6379, 1e-05
  %v6444 = vadd.f32 %v6380, 1e-05
  %v6445 = vadd.f32 %v6381, 1e-05
  %v6446 = vadd.f32 %v6382, 1e-05
  %v6447 = vadd.f32 %v6383, 1e-05
  %v6448 = vadd.f32 %v6384, 1e-05
  %v6449 = vadd.f32 %v6385, 1e-05
  %v6450 = vadd.f32 %v6386, 1e-05
  %v6451 = vadd.f32 %v6387, 1e-05
  %v6452 = vadd.f32 %v6388, 1e-05
  %v6453 = vadd.f32 %v6389, 1e-05
  %v6454 = vadd.f32 %v6390, 1e-05
  %v6455 = vadd.f32 %v6391, 1e-05
  %v6456 = vadd.f32 %v6392, 1e-05
  %v6457 = vadd.f32 %v6393, 1e-05
  %v6458 = vadd.f32 %v6394, 1e-05
  %v6459 = vadd.f32 %v6395, 1e-05
  %v6460 = vadd.f32 %v6396, 1e-05
  %v6461 = vadd.f32 %v6397, 1e-05
  %v6462 = vadd.f32 %v6398, 1e-05
  %v6463 = vadd.f32 %v6399, 1e-05
  %v6464 = vadd.f32 %v6400, 1e-05
  %v6465 = vadd.f32 %v6401, 1e-05
  %v6466 = vadd.f32 %v6402, 1e-05
  %v6467 = vadd.f32 %v6403, 1e-05
  %v6468 = vadd.f32 %v6404, 1e-05
  %v6469 = vadd.f32 %v6405, 1e-05
  %v6470 = vadd.f32 %v6406, 1e-05
  %v6471 = vadd.f32 %v6407, 1e-05
  %v6472 = vadd.f32 %v6408, 1e-05
  %v6473 = vadd.f32 %v6409, 1e-05
  %v6474 = vadd.f32 %v6410, 1e-05
  %v6475 = vadd.f32 %v6411, 1e-05
  %v6476 = vadd.f32 %v6412, 1e-05
  %v6477 = vadd.f32 %v6413, 1e-05
  %v6478 = vadd.f32 %v6414, 1e-05
  %v6479 = vadd.f32 %v6415, 1e-05
  %v6480 = vadd.f32 %v6416, 1e-05
  %v6481 = vadd.f32 %v6417, 1e-05
  %v6482 = vadd.f32 %v6418, 1e-05
  %v6483 = vadd.f32 %v6419, 1e-05
  %v6484 = vadd.f32 %v6420, 1e-05
  %v6485 = vadd.f32 %v6421, 1e-05
  %v6486 = vadd.f32 %v6422, 1e-05
  %v6487 = vadd.f32 %v6423, 1e-05
  %v6488 = vadd.f32 %v6424, 1e-05
  %v6489 = vadd.f32 %v6425, 1e-05
  %v6490 = vadd.f32 %v6426, 1e-05
  %v6491 = vadd.f32 %v6427, 1e-05
  %v6492 = vadd.f32 %v6428, 1e-05
  %v6493 = vadd.f32 %v6429, 1e-05
  %v6494 = vadd.f32 %v6430, 1e-05
  %v6495 = vadd.f32 %v6431, 1e-05
  %v6496 = vadd.f32 %v6432, 1e-05
  %v6497 = vadd.f32 %v6433, 1e-05
  %v6498 = vadd.f32 %v6434, 1e-05
  %v6499 = vadd.f32 %v6435, 1e-05
  %v6500 = vadd.f32 %v6436, 1e-05
  %v6501 = vadd.f32 %v6437, 1e-05
  %v6502 = vadd.f32 %v6438, 1e-05
  %v6503 = vadd.f32 %v6439, 1e-05
  %v6504 = vadd.f32 %v6440, 1e-05
  %v6505 = vadd.f32 %v6441, 1e-05
  %v6506 = vadd.f32 %v6442, 1e-05
  %v6507 = vrsqrt.pop %v6443
  %v6508 = vrsqrt.pop %v6444
  %v6509 = vrsqrt.pop %v6445
  %v6510 = vrsqrt.pop %v6446
  %v6511 = vrsqrt.pop %v6447
  %v6512 = vrsqrt.pop %v6448
  %v6513 = vrsqrt.pop %v6449
  %v6514 = vrsqrt.pop %v6450
  %v6515 = vrsqrt.pop %v6451
  %v6516 = vrsqrt.pop %v6452
  %v6517 = vrsqrt.pop %v6453
  %v6518 = vrsqrt.pop %v6454
  %v6519 = vrsqrt.pop %v6455
  %v6520 = vrsqrt.pop %v6456
  %v6521 = vrsqrt.pop %v6457
  %v6522 = vrsqrt.pop %v6458
  %v6523 = vrsqrt.pop %v6459
  %v6524 = vrsqrt.pop %v6460
  %v6525 = vrsqrt.pop %v6461
  %v6526 = vrsqrt.pop %v6462
  %v6527 = vrsqrt.pop %v6463
  %v6528 = vrsqrt.pop %v6464
  %v6529 = vrsqrt.pop %v6465
  %v6530 = vrsqrt.pop %v6466
  %v6531 = vrsqrt.pop %v6467
  %v6532 = vrsqrt.pop %v6468
  %v6533 = vrsqrt.pop %v6469
  %v6534 = vrsqrt.pop %v6470
  %v6535 = vrsqrt.pop %v6471
  %v6536 = vrsqrt.pop %v6472
  %v6537 = vrsqrt.pop %v6473
  %v6538 = vrsqrt.pop %v6474
  %v6539 = vrsqrt.pop %v6475
  %v6540 = vrsqrt.pop %v6476
  %v6541 = vrsqrt.pop %v6477
  %v6542 = vrsqrt.pop %v6478
  %v6543 = vrsqrt.pop %v6479
  %v6544 = vrsqrt.pop %v6480
  %v6545 = vrsqrt.pop %v6481
  %v6546 = vrsqrt.pop %v6482
  %v6547 = vrsqrt.pop %v6483
  %v6548 = vrsqrt.pop %v6484
  %v6549 = vrsqrt.pop %v6485
  %v6550 = vrsqrt.pop %v6486
  %v6551 = vrsqrt.pop %v6487
  %v6552 = vrsqrt.pop %v6488
  %v6553 = vrsqrt.pop %v6489
  %v6554 = vrsqrt.pop %v6490
  %v6555 = vrsqrt.pop %v6491
  %v6556 = vrsqrt.pop %v6492
  %v6557 = vrsqrt.pop %v6493
  %v6558 = vrsqrt.pop %v6494
  %v6559 = vrsqrt.pop %v6495
  %v6560 = vrsqrt.pop %v6496
  %v6561 = vrsqrt.pop %v6497
  %v6562 = vrsqrt.pop %v6498
  %v6563 = vrsqrt.pop %v6499
  %v6564 = vrsqrt.pop %v6500
  %v6565 = vrsqrt.pop %v6501
  %v6566 = vrsqrt.pop %v6502
  %v6567 = vrsqrt.pop %v6503
  %v6568 = vrsqrt.pop %v6504
  %v6569 = vrsqrt.pop %v6505
  %v6570 = vrsqrt.pop %v6506
  %v6571 = vmul.f32 %v6123, %v6507
  %v6572 = vmul.f32 %v6124, %v6508
  %v6573 = vmul.f32 %v6125, %v6509
  %v6574 = vmul.f32 %v6126, %v6510
  %v6575 = vmul.f32 %v6127, %v6511
  %v6576 = vmul.f32 %v6128, %v6512
  %v6577 = vmul.f32 %v6129, %v6513
  %v6578 = vmul.f32 %v6130, %v6514
  %v6579 = vmul.f32 %v6131, %v6515
  %v6580 = vmul.f32 %v6132, %v6516
  %v6581 = vmul.f32 %v6133, %v6517
  %v6582 = vmul.f32 %v6134, %v6518
  %v6583 = vmul.f32 %v6135, %v6519
  %v6584 = vmul.f32 %v6136, %v6520
  %v6585 = vmul.f32 %v6137, %v6521
  %v6586 = vmul.f32 %v6138, %v6522
  %v6587 = vmul.f32 %v6139, %v6523
  %v6588 = vmul.f32 %v6140, %v6524
  %v6589 = vmul.f32 %v6141, %v6525
  %v6590 = vmul.f32 %v6142, %v6526
  %v6591 = vmul.f32 %v6143, %v6527
  %v6592 = vmul.f32 %v6144, %v6528
  %v6593 = vmul.f32 %v6145, %v6529
  %v6594 = vmul.f32 %v6146, %v6530
  %v6595 = vmul.f32 %v6147, %v6531
  %v6596 = vmul.f32 %v6148, %v6532
  %v6597 = vmul.f32 %v6149, %v6533
  %v6598 = vmul.f32 %v6150, %v6534
  %v6599 = vmul.f32 %v6151, %v6535
  %v6600 = vmul.f32 %v6152, %v6536
  %v6601 = vmul.f32 %v6153, %v6537
  %v6602 = vmul.f32 %v6154, %v6538
  %v6603 = vmul.f32 %v6155, %v6539
  %v6604 = vmul.f32 %v6156, %v6540
  %v6605 = vmul.f32 %v6157, %v6541
  %v6606 = vmul.f32 %v6158, %v6542
  %v6607 = vmul.f32 %v6159, %v6543
  %v6608 = vmul.f32 %v6160, %v6544
  %v6609 = vmul.f32 %v6161, %v6545
  %v6610 = vmul.f32 %v6162, %v6546
  %v6611 = vmul.f32 %v6163, %v6547
  %v6612 = vmul.f32 %v6164, %v6548
  %v6613 = vmul.f32 %v6165, %v6549
  %v6614 = vmul.f32 %v6166, %v6550
  %v6615 = vmul.f32 %v6167, %v6551
  %v6616 = vmul.f32 %v6168, %v6552
  %v6617 = vmul.f32 %v6169, %v6553
  %v6618 = vmul.f32 %v6170, %v6554
  %v6619 = vmul.f32 %v6171, %v6555
  %v6620 = vmul.f32 %v6172, %v6556
  %v6621 = vmul.f32 %v6173, %v6557
  %v6622 = vmul.f32 %v6174, %v6558
  %v6623 = vmul.f32 %v6175, %v6559
  %v6624 = vmul.f32 %v6176, %v6560
  %v6625 = vmul.f32 %v6177, %v6561
  %v6626 = vmul.f32 %v6178, %v6562
  %v6627 = vmul.f32 %v6179, %v6563
  %v6628 = vmul.f32 %v6180, %v6564
  %v6629 = vmul.f32 %v6181, %v6565
  %v6630 = vmul.f32 %v6182, %v6566
  %v6631 = vmul.f32 %v6183, %v6567
  %v6632 = vmul.f32 %v6184, %v6568
  %v6633 = vmul.f32 %v6185, %v6569
  %v6634 = vmul.f32 %v6186, %v6570
  %v6635 = vld [vmem:[%s7] sm:$0xff]
  %v6636 = vld [vmem:[%s7 + $0x8] sm:$0xff]
  %v6637 = vld [vmem:[%s7 + $0x10] sm:$0xff]
  %v6638 = vld [vmem:[%s7 + $0x18] sm:$0xff]
  %v6639 = vld [vmem:[%s7 + $0x20] sm:$0xff]
  %v6640 = vld [vmem:[%s7 + $0x28] sm:$0xff]
  %v6641 = vld [vmem:[%s7 + $0x30] sm:$0xff]
  %v6642 = vld [vmem:[%s7 + $0x38] sm:$0xff]
  %v6643 = vld [vmem:[%s7 + $0x40] sm:$0xff]
  %v6644 = vld [vmem:[%s7 + $0x48] sm:$0xff]
  %v6645 = vld [vmem:[%s7 + $0x50] sm:$0xff]
  %v6646 = vld [vmem:[%s7 + $0x58] sm:$0xff]
  %v6647 = vld [vmem:[%s7 + $0x60] sm:$0xff]
  %v6648 = vld [vmem:[%s7 + $0x68] sm:$0xff]
  %v6649 = vld [vmem:[%s7 + $0x70] sm:$0xff]
  %v6650 = vld [vmem:[%s7 + $0x78] sm:$0xff]
  %v6651 = vpack.c.bf16 %v6572, %v6571
  %v6652 = vpack.c.bf16 %v6574, %v6573
  %v6653 = vpack.c.bf16 %v6576, %v6575
  %v6654 = vpack.c.bf16 %v6578, %v6577
  %v6655 = vpack.c.bf16 %v6580, %v6579
  %v6656 = vpack.c.bf16 %v6582, %v6581
  %v6657 = vpack.c.bf16 %v6584, %v6583
  %v6658 = vpack.c.bf16 %v6586, %v6585
  %v6659 = vpack.c.bf16 %v6588, %v6587
  %v6660 = vpack.c.bf16 %v6590, %v6589
  %v6661 = vpack.c.bf16 %v6592, %v6591
  %v6662 = vpack.c.bf16 %v6594, %v6593
  %v6663 = vpack.c.bf16 %v6596, %v6595
  %v6664 = vpack.c.bf16 %v6598, %v6597
  %v6665 = vpack.c.bf16 %v6600, %v6599
  %v6666 = vpack.c.bf16 %v6602, %v6601
  %v6667 = vpack.c.bf16 %v6604, %v6603
  %v6668 = vpack.c.bf16 %v6606, %v6605
  %v6669 = vpack.c.bf16 %v6608, %v6607
  %v6670 = vpack.c.bf16 %v6610, %v6609
  %v6671 = vpack.c.bf16 %v6612, %v6611
  %v6672 = vpack.c.bf16 %v6614, %v6613
  %v6673 = vpack.c.bf16 %v6616, %v6615
  %v6674 = vpack.c.bf16 %v6618, %v6617
  %v6675 = vpack.c.bf16 %v6620, %v6619
  %v6676 = vpack.c.bf16 %v6622, %v6621
  %v6677 = vpack.c.bf16 %v6624, %v6623
  %v6678 = vpack.c.bf16 %v6626, %v6625
  %v6679 = vpack.c.bf16 %v6628, %v6627
  %v6680 = vpack.c.bf16 %v6630, %v6629
  %v6681 = vpack.c.bf16 %v6632, %v6631
  %v6682 = vpack.c.bf16 %v6634, %v6633
  %v6683 = vld [vmem:[%s8] sm:$0x3]
  %v6685 = vlaneseq
  %v6686 = vshrl.u32 %v6685, 7
  %v6687 = vsub.s32 0, %v6686
  %v6688 = vrot.slane %v6683, %v6687
  %v6689 = vlaneseq
  %v6690 = vshrl.u32 %v6689, 7
  %v6691 = vsub.s32 1, %v6690
  %v6692 = vrot.slane %v6683, %v6691
  %v6711 = vunpack.c.l.b16 %v6635
  %v6712 = vunpack.c.h.b16 %v6635
  %v6713 = vunpack.c.l.b16 %v6636
  %v6714 = vunpack.c.h.b16 %v6636
  %v6715 = vunpack.c.l.b16 %v6637
  %v6716 = vunpack.c.h.b16 %v6637
  %v6717 = vunpack.c.l.b16 %v6638
  %v6718 = vunpack.c.h.b16 %v6638
  %v6719 = vunpack.c.l.b16 %v6639
  %v6720 = vunpack.c.h.b16 %v6639
  %v6721 = vunpack.c.l.b16 %v6640
  %v6722 = vunpack.c.h.b16 %v6640
  %v6723 = vunpack.c.l.b16 %v6641
  %v6724 = vunpack.c.h.b16 %v6641
  %v6725 = vunpack.c.l.b16 %v6642
  %v6726 = vunpack.c.h.b16 %v6642
  %v6727 = vunpack.c.l.b16 %v6643
  %v6728 = vunpack.c.h.b16 %v6643
  %v6729 = vunpack.c.l.b16 %v6644
  %v6730 = vunpack.c.h.b16 %v6644
  %v6731 = vunpack.c.l.b16 %v6645
  %v6732 = vunpack.c.h.b16 %v6645
  %v6733 = vunpack.c.l.b16 %v6646
  %v6734 = vunpack.c.h.b16 %v6646
  %v6735 = vunpack.c.l.b16 %v6647
  %v6736 = vunpack.c.h.b16 %v6647
  %v6737 = vunpack.c.l.b16 %v6648
  %v6738 = vunpack.c.h.b16 %v6648
  %v6739 = vunpack.c.l.b16 %v6649
  %v6740 = vunpack.c.h.b16 %v6649
  %v6741 = vunpack.c.l.b16 %v6650
  %v6742 = vunpack.c.h.b16 %v6650
  %v6743 = vpack.c.b16 %v6713, %v6711
  %v6744 = vpack.c.b16 %v6714, %v6712
  %v6745 = vpack.c.b16 %v6717, %v6715
  %v6746 = vpack.c.b16 %v6718, %v6716
  %v6747 = vpack.c.b16 %v6721, %v6719
  %v6748 = vpack.c.b16 %v6722, %v6720
  %v6749 = vpack.c.b16 %v6725, %v6723
  %v6750 = vpack.c.b16 %v6726, %v6724
  %v6751 = vpack.c.b16 %v6729, %v6727
  %v6752 = vpack.c.b16 %v6730, %v6728
  %v6753 = vpack.c.b16 %v6733, %v6731
  %v6754 = vpack.c.b16 %v6734, %v6732
  %v6755 = vpack.c.b16 %v6737, %v6735
  %v6756 = vpack.c.b16 %v6738, %v6736
  %v6757 = vpack.c.b16 %v6741, %v6739
  %v6758 = vpack.c.b16 %v6742, %v6740
  %6775 = vmatprep.subr.bf16.mxu0 %v6758
  %6776 = vmatpush1.bf16.msra.mxu0 %v6757
  %6777 = vmatprep.subr.bf16.mxu0 %v6756
  %6778 = vmatpush1.bf16.msra.mxu0 %v6755
  %6779 = vmatprep.subr.bf16.mxu0 %v6754
  %6780 = vmatpush1.bf16.msra.mxu0 %v6753
  %6781 = vmatprep.subr.bf16.mxu0 %v6752
  %6782 = vmatpush1.bf16.msra.mxu0 %v6751
  %6783 = vmatprep.subr.bf16.mxu0 %v6750
  %6784 = vmatpush1.bf16.msra.mxu0 %v6749
  %6785 = vmatprep.subr.bf16.mxu0 %v6748
  %6786 = vmatpush1.bf16.msra.mxu0 %v6747
  %6787 = vmatprep.subr.bf16.mxu0 %v6746
  %6788 = vmatpush1.bf16.msra.mxu0 %v6745
  %6789 = vmatprep.subr.bf16.mxu0 %v6744
  %6790 = vmatpush1.bf16.msra.mxu0 %v6743
  %6791 = vmatprep.subr.bf16.mxu0 0
  %6792 = vmatpush2.bf16.msra.mxu0 0
  %6793 = vmatprep.subr.bf16.mxu0 0
  %6794 = vmatpush2.bf16.msra.mxu0 0
  %6795 = vmatprep.subr.bf16.mxu0 0
  %6796 = vmatpush2.bf16.msra.mxu0 0
  %6797 = vmatprep.subr.bf16.mxu0 0
  %6798 = vmatpush2.bf16.msra.mxu0 0
  %6799 = vmatprep.subr.bf16.mxu0 0
  %6800 = vmatpush2.bf16.msra.mxu0 0
  %6801 = vmatprep.subr.bf16.mxu0 0
  %6802 = vmatpush2.bf16.msra.mxu0 0
  %6803 = vmatprep.subr.bf16.mxu0 0
  %6804 = vmatpush2.bf16.msra.mxu0 0
  %6805 = vmatprep.subr.bf16.mxu0 0
  %6806 = vmatpush2.bf16.msra.mxu0 0
  %6807 = vmatprep.mubr.bf16.mxu0 0
  %6808 = vmatmul.mubr.bf16.gmra.mxu0 %v6651
  %v6809 = vpop.f32.mrf.mxu0
  %v6810 = vadd.f32 %v6688, %v6809
  %v6811 = vpop.f32.mrf.mxu0
  %v6812 = vadd.f32 %v6692, %v6811
  %v6813 = vpop.f32.mrf.mxu0
  %v6814 = vadd.f32 %v6688, %v6813
  %v6815 = vpop.f32.mrf.mxu0
  %v6816 = vadd.f32 %v6692, %v6815
  %6817 = vmatprep.mubr.bf16.mxu0 0
  %6818 = vmatmul.mubr.bf16.gmra.mxu0 %v6652
  %v6819 = vpop.f32.mrf.mxu0
  %v6820 = vadd.f32 %v6688, %v6819
  %v6821 = vpop.f32.mrf.mxu0
  %v6822 = vadd.f32 %v6692, %v6821
  %v6823 = vpop.f32.mrf.mxu0
  %v6824 = vadd.f32 %v6688, %v6823
  %v6825 = vpop.f32.mrf.mxu0
  %v6826 = vadd.f32 %v6692, %v6825
  %6827 = vmatprep.mubr.bf16.mxu0 0
  %6828 = vmatmul.mubr.bf16.gmra.mxu0 %v6653
  %v6829 = vpop.f32.mrf.mxu0
  %v6830 = vadd.f32 %v6688, %v6829
  %v6831 = vpop.f32.mrf.mxu0
  %v6832 = vadd.f32 %v6692, %v6831
  %v6833 = vpop.f32.mrf.mxu0
  %v6834 = vadd.f32 %v6688, %v6833
  %v6835 = vpop.f32.mrf.mxu0
  %v6836 = vadd.f32 %v6692, %v6835
  %6837 = vmatprep.mubr.bf16.mxu0 0
  %6838 = vmatmul.mubr.bf16.gmra.mxu0 %v6654
  %v6839 = vpop.f32.mrf.mxu0
  %v6840 = vadd.f32 %v6688, %v6839
  %v6841 = vpop.f32.mrf.mxu0
  %v6842 = vadd.f32 %v6692, %v6841
  %v6843 = vpop.f32.mrf.mxu0
  %v6844 = vadd.f32 %v6688, %v6843
  %v6845 = vpop.f32.mrf.mxu0
  %v6846 = vadd.f32 %v6692, %v6845
  %6847 = vmatprep.mubr.bf16.mxu0 0
  %6848 = vmatmul.mubr.bf16.gmra.mxu0 %v6655
  %v6849 = vpop.f32.mrf.mxu0
  %v6850 = vadd.f32 %v6688, %v6849
  %v6851 = vpop.f32.mrf.mxu0
  %v6852 = vadd.f32 %v6692, %v6851
  %v6853 = vpop.f32.mrf.mxu0
  %v6854 = vadd.f32 %v6688, %v6853
  %v6855 = vpop.f32.mrf.mxu0
  %v6856 = vadd.f32 %v6692, %v6855
  %6857 = vmatprep.mubr.bf16.mxu0 0
  %6858 = vmatmul.mubr.bf16.gmra.mxu0 %v6656
  %v6859 = vpop.f32.mrf.mxu0
  %v6860 = vadd.f32 %v6688, %v6859
  %v6861 = vpop.f32.mrf.mxu0
  %v6862 = vadd.f32 %v6692, %v6861
  %v6863 = vpop.f32.mrf.mxu0
  %v6864 = vadd.f32 %v6688, %v6863
  %v6865 = vpop.f32.mrf.mxu0
  %v6866 = vadd.f32 %v6692, %v6865
  %6867 = vmatprep.mubr.bf16.mxu0 0
  %6868 = vmatmul.mubr.bf16.gmra.mxu0 %v6657
  %v6869 = vpop.f32.mrf.mxu0
  %v6870 = vadd.f32 %v6688, %v6869
  %v6871 = vpop.f32.mrf.mxu0
  %v6872 = vadd.f32 %v6692, %v6871
  %v6873 = vpop.f32.mrf.mxu0
  %v6874 = vadd.f32 %v6688, %v6873
  %v6875 = vpop.f32.mrf.mxu0
  %v6876 = vadd.f32 %v6692, %v6875
  %6877 = vmatprep.mubr.bf16.mxu0 0
  %6878 = vmatmul.mubr.bf16.gmra.mxu0 %v6658
  %v6879 = vpop.f32.mrf.mxu0
  %v6880 = vadd.f32 %v6688, %v6879
  %v6881 = vpop.f32.mrf.mxu0
  %v6882 = vadd.f32 %v6692, %v6881
  %v6883 = vpop.f32.mrf.mxu0
  %v6884 = vadd.f32 %v6688, %v6883
  %v6885 = vpop.f32.mrf.mxu0
  %v6886 = vadd.f32 %v6692, %v6885
  %6887 = vmatprep.mubr.bf16.mxu0 0
  %6888 = vmatmul.mubr.bf16.gmra.mxu0 %v6659
  %v6889 = vpop.f32.mrf.mxu0
  %v6890 = vadd.f32 %v6688, %v6889
  %v6891 = vpop.f32.mrf.mxu0
  %v6892 = vadd.f32 %v6692, %v6891
  %v6893 = vpop.f32.mrf.mxu0
  %v6894 = vadd.f32 %v6688, %v6893
  %v6895 = vpop.f32.mrf.mxu0
  %v6896 = vadd.f32 %v6692, %v6895
  %6897 = vmatprep.mubr.bf16.mxu0 0
  %6898 = vmatmul.mubr.bf16.gmra.mxu0 %v6660
  %v6899 = vpop.f32.mrf.mxu0
  %v6900 = vadd.f32 %v6688, %v6899
  %v6901 = vpop.f32.mrf.mxu0
  %v6902 = vadd.f32 %v6692, %v6901
  %v6903 = vpop.f32.mrf.mxu0
  %v6904 = vadd.f32 %v6688, %v6903
  %v6905 = vpop.f32.mrf.mxu0
  %v6906 = vadd.f32 %v6692, %v6905
  %6907 = vmatprep.mubr.bf16.mxu0 0
  %6908 = vmatmul.mubr.bf16.gmra.mxu0 %v6661
  %v6909 = vpop.f32.mrf.mxu0
  %v6910 = vadd.f32 %v6688, %v6909
  %v6911 = vpop.f32.mrf.mxu0
  %v6912 = vadd.f32 %v6692, %v6911
  %v6913 = vpop.f32.mrf.mxu0
  %v6914 = vadd.f32 %v6688, %v6913
  %v6915 = vpop.f32.mrf.mxu0
  %v6916 = vadd.f32 %v6692, %v6915
  %6917 = vmatprep.mubr.bf16.mxu0 0
  %6918 = vmatmul.mubr.bf16.gmra.mxu0 %v6662
  %v6919 = vpop.f32.mrf.mxu0
  %v6920 = vadd.f32 %v6688, %v6919
  %v6921 = vpop.f32.mrf.mxu0
  %v6922 = vadd.f32 %v6692, %v6921
  %v6923 = vpop.f32.mrf.mxu0
  %v6924 = vadd.f32 %v6688, %v6923
  %v6925 = vpop.f32.mrf.mxu0
  %v6926 = vadd.f32 %v6692, %v6925
  %6927 = vmatprep.mubr.bf16.mxu0 0
  %6928 = vmatmul.mubr.bf16.gmra.mxu0 %v6663
  %v6929 = vpop.f32.mrf.mxu0
  %v6930 = vadd.f32 %v6688, %v6929
  %v6931 = vpop.f32.mrf.mxu0
  %v6932 = vadd.f32 %v6692, %v6931
  %v6933 = vpop.f32.mrf.mxu0
  %v6934 = vadd.f32 %v6688, %v6933
  %v6935 = vpop.f32.mrf.mxu0
  %v6936 = vadd.f32 %v6692, %v6935
  %6937 = vmatprep.mubr.bf16.mxu0 0
  %6938 = vmatmul.mubr.bf16.gmra.mxu0 %v6664
  %v6939 = vpop.f32.mrf.mxu0
  %v6940 = vadd.f32 %v6688, %v6939
  %v6941 = vpop.f32.mrf.mxu0
  %v6942 = vadd.f32 %v6692, %v6941
  %v6943 = vpop.f32.mrf.mxu0
  %v6944 = vadd.f32 %v6688, %v6943
  %v6945 = vpop.f32.mrf.mxu0
  %v6946 = vadd.f32 %v6692, %v6945
  %6947 = vmatprep.mubr.bf16.mxu0 0
  %6948 = vmatmul.mubr.bf16.gmra.mxu0 %v6665
  %v6949 = vpop.f32.mrf.mxu0
  %v6950 = vadd.f32 %v6688, %v6949
  %v6951 = vpop.f32.mrf.mxu0
  %v6952 = vadd.f32 %v6692, %v6951
  %v6953 = vpop.f32.mrf.mxu0
  %v6954 = vadd.f32 %v6688, %v6953
  %v6955 = vpop.f32.mrf.mxu0
  %v6956 = vadd.f32 %v6692, %v6955
  %6957 = vmatprep.mubr.bf16.mxu0 0
  %6958 = vmatmul.mubr.bf16.gmra.mxu0 %v6666
  %v6959 = vpop.f32.mrf.mxu0
  %v6960 = vadd.f32 %v6688, %v6959
  %v6961 = vpop.f32.mrf.mxu0
  %v6962 = vadd.f32 %v6692, %v6961
  %v6963 = vpop.f32.mrf.mxu0
  %v6964 = vadd.f32 %v6688, %v6963
  %v6965 = vpop.f32.mrf.mxu0
  %v6966 = vadd.f32 %v6692, %v6965
  %6967 = vmatprep.mubr.bf16.mxu0 0
  %6968 = vmatmul.mubr.bf16.gmra.mxu0 %v6667
  %v6969 = vpop.f32.mrf.mxu0
  %v6970 = vadd.f32 %v6688, %v6969
  %v6971 = vpop.f32.mrf.mxu0
  %v6972 = vadd.f32 %v6692, %v6971
  %v6973 = vpop.f32.mrf.mxu0
  %v6974 = vadd.f32 %v6688, %v6973
  %v6975 = vpop.f32.mrf.mxu0
  %v6976 = vadd.f32 %v6692, %v6975
  %6977 = vmatprep.mubr.bf16.mxu0 0
  %6978 = vmatmul.mubr.bf16.gmra.mxu0 %v6668
  %v6979 = vpop.f32.mrf.mxu0
  %v6980 = vadd.f32 %v6688, %v6979
  %v6981 = vpop.f32.mrf.mxu0
  %v6982 = vadd.f32 %v6692, %v6981
  %v6983 = vpop.f32.mrf.mxu0
  %v6984 = vadd.f32 %v6688, %v6983
  %v6985 = vpop.f32.mrf.mxu0
  %v6986 = vadd.f32 %v6692, %v6985
  %6987 = vmatprep.mubr.bf16.mxu0 0
  %6988 = vmatmul.mubr.bf16.gmra.mxu0 %v6669
  %v6989 = vpop.f32.mrf.mxu0
  %v6990 = vadd.f32 %v6688, %v6989
  %v6991 = vpop.f32.mrf.mxu0
  %v6992 = vadd.f32 %v6692, %v6991
  %v6993 = vpop.f32.mrf.mxu0
  %v6994 = vadd.f32 %v6688, %v6993
  %v6995 = vpop.f32.mrf.mxu0
  %v6996 = vadd.f32 %v6692, %v6995
  %6997 = vmatprep.mubr.bf16.mxu0 0
  %6998 = vmatmul.mubr.bf16.gmra.mxu0 %v6670
  %v6999 = vpop.f32.mrf.mxu0
  %v7000 = vadd.f32 %v6688, %v6999
  %v7001 = vpop.f32.mrf.mxu0
  %v7002 = vadd.f32 %v6692, %v7001
  %v7003 = vpop.f32.mrf.mxu0
  %v7004 = vadd.f32 %v6688, %v7003
  %v7005 = vpop.f32.mrf.mxu0
  %v7006 = vadd.f32 %v6692, %v7005
  %7007 = vmatprep.mubr.bf16.mxu0 0
  %7008 = vmatmul.mubr.bf16.gmra.mxu0 %v6671
  %v7009 = vpop.f32.mrf.mxu0
  %v7010 = vadd.f32 %v6688, %v7009
  %v7011 = vpop.f32.mrf.mxu0
  %v7012 = vadd.f32 %v6692, %v7011
  %v7013 = vpop.f32.mrf.mxu0
  %v7014 = vadd.f32 %v6688, %v7013
  %v7015 = vpop.f32.mrf.mxu0
  %v7016 = vadd.f32 %v6692, %v7015
  %7017 = vmatprep.mubr.bf16.mxu0 0
  %7018 = vmatmul.mubr.bf16.gmra.mxu0 %v6672
  %v7019 = vpop.f32.mrf.mxu0
  %v7020 = vadd.f32 %v6688, %v7019
  %v7021 = vpop.f32.mrf.mxu0
  %v7022 = vadd.f32 %v6692, %v7021
  %v7023 = vpop.f32.mrf.mxu0
  %v7024 = vadd.f32 %v6688, %v7023
  %v7025 = vpop.f32.mrf.mxu0
  %v7026 = vadd.f32 %v6692, %v7025
  %7027 = vmatprep.mubr.bf16.mxu0 0
  %7028 = vmatmul.mubr.bf16.gmra.mxu0 %v6673
  %v7029 = vpop.f32.mrf.mxu0
  %v7030 = vadd.f32 %v6688, %v7029
  %v7031 = vpop.f32.mrf.mxu0
  %v7032 = vadd.f32 %v6692, %v7031
  %v7033 = vpop.f32.mrf.mxu0
  %v7034 = vadd.f32 %v6688, %v7033
  %v7035 = vpop.f32.mrf.mxu0
  %v7036 = vadd.f32 %v6692, %v7035
  %7037 = vmatprep.mubr.bf16.mxu0 0
  %7038 = vmatmul.mubr.bf16.gmra.mxu0 %v6674
  %v7039 = vpop.f32.mrf.mxu0
  %v7040 = vadd.f32 %v6688, %v7039
  %v7041 = vpop.f32.mrf.mxu0
  %v7042 = vadd.f32 %v6692, %v7041
  %v7043 = vpop.f32.mrf.mxu0
  %v7044 = vadd.f32 %v6688, %v7043
  %v7045 = vpop.f32.mrf.mxu0
  %v7046 = vadd.f32 %v6692, %v7045
  %7047 = vmatprep.mubr.bf16.mxu0 0
  %7048 = vmatmul.mubr.bf16.gmra.mxu0 %v6675
  %v7049 = vpop.f32.mrf.mxu0
  %v7050 = vadd.f32 %v6688, %v7049
  %v7051 = vpop.f32.mrf.mxu0
  %v7052 = vadd.f32 %v6692, %v7051
  %v7053 = vpop.f32.mrf.mxu0
  %v7054 = vadd.f32 %v6688, %v7053
  %v7055 = vpop.f32.mrf.mxu0
  %v7056 = vadd.f32 %v6692, %v7055
  %7057 = vmatprep.mubr.bf16.mxu0 0
  %7058 = vmatmul.mubr.bf16.gmra.mxu0 %v6676
  %v7059 = vpop.f32.mrf.mxu0
  %v7060 = vadd.f32 %v6688, %v7059
  %v7061 = vpop.f32.mrf.mxu0
  %v7062 = vadd.f32 %v6692, %v7061
  %v7063 = vpop.f32.mrf.mxu0
  %v7064 = vadd.f32 %v6688, %v7063
  %v7065 = vpop.f32.mrf.mxu0
  %v7066 = vadd.f32 %v6692, %v7065
  %7067 = vmatprep.mubr.bf16.mxu0 0
  %7068 = vmatmul.mubr.bf16.gmra.mxu0 %v6677
  %v7069 = vpop.f32.mrf.mxu0
  %v7070 = vadd.f32 %v6688, %v7069
  %v7071 = vpop.f32.mrf.mxu0
  %v7072 = vadd.f32 %v6692, %v7071
  %v7073 = vpop.f32.mrf.mxu0
  %v7074 = vadd.f32 %v6688, %v7073
  %v7075 = vpop.f32.mrf.mxu0
  %v7076 = vadd.f32 %v6692, %v7075
  %7077 = vmatprep.mubr.bf16.mxu0 0
  %7078 = vmatmul.mubr.bf16.gmra.mxu0 %v6678
  %v7079 = vpop.f32.mrf.mxu0
  %v7080 = vadd.f32 %v6688, %v7079
  %v7081 = vpop.f32.mrf.mxu0
  %v7082 = vadd.f32 %v6692, %v7081
  %v7083 = vpop.f32.mrf.mxu0
  %v7084 = vadd.f32 %v6688, %v7083
  %v7085 = vpop.f32.mrf.mxu0
  %v7086 = vadd.f32 %v6692, %v7085
  %7087 = vmatprep.mubr.bf16.mxu0 0
  %7088 = vmatmul.mubr.bf16.gmra.mxu0 %v6679
  %v7089 = vpop.f32.mrf.mxu0
  %v7090 = vadd.f32 %v6688, %v7089
  %v7091 = vpop.f32.mrf.mxu0
  %v7092 = vadd.f32 %v6692, %v7091
  %v7093 = vpop.f32.mrf.mxu0
  %v7094 = vadd.f32 %v6688, %v7093
  %v7095 = vpop.f32.mrf.mxu0
  %v7096 = vadd.f32 %v6692, %v7095
  %7097 = vmatprep.mubr.bf16.mxu0 0
  %7098 = vmatmul.mubr.bf16.gmra.mxu0 %v6680
  %v7099 = vpop.f32.mrf.mxu0
  %v7100 = vadd.f32 %v6688, %v7099
  %v7101 = vpop.f32.mrf.mxu0
  %v7102 = vadd.f32 %v6692, %v7101
  %v7103 = vpop.f32.mrf.mxu0
  %v7104 = vadd.f32 %v6688, %v7103
  %v7105 = vpop.f32.mrf.mxu0
  %v7106 = vadd.f32 %v6692, %v7105
  %7107 = vmatprep.mubr.bf16.mxu0 0
  %7108 = vmatmul.mubr.bf16.gmra.mxu0 %v6681
  %v7109 = vpop.f32.mrf.mxu0
  %v7110 = vadd.f32 %v6688, %v7109
  %v7111 = vpop.f32.mrf.mxu0
  %v7112 = vadd.f32 %v6692, %v7111
  %v7113 = vpop.f32.mrf.mxu0
  %v7114 = vadd.f32 %v6688, %v7113
  %v7115 = vpop.f32.mrf.mxu0
  %v7116 = vadd.f32 %v6692, %v7115
  %7117 = vmatprep.mubr.bf16.mxu0 0
  %7118 = vmatmul.mubr.bf16.gmra.mxu0 %v6682
  %v7119 = vpop.f32.mrf.mxu0
  %v7120 = vadd.f32 %v6688, %v7119
  %v7121 = vpop.f32.mrf.mxu0
  %v7122 = vadd.f32 %v6692, %v7121
  %v7123 = vpop.f32.mrf.mxu0
  %v7124 = vadd.f32 %v6688, %v7123
  %v7125 = vpop.f32.mrf.mxu0
  %v7126 = vadd.f32 %v6692, %v7125
  %7127 = vdwg.mxu0
  %v7128 = vmul.f32 %v6810, %v6810
  %v7129 = vmul.f32 %v6812, %v6812
  %v7130 = vmul.f32 %v6814, %v6814
  %v7131 = vmul.f32 %v6816, %v6816
  %v7132 = vmul.f32 %v6820, %v6820
  %v7133 = vmul.f32 %v6822, %v6822
  %v7134 = vmul.f32 %v6824, %v6824
  %v7135 = vmul.f32 %v6826, %v6826
  %v7136 = vmul.f32 %v6830, %v6830
  %v7137 = vmul.f32 %v6832, %v6832
  %v7138 = vmul.f32 %v6834, %v6834
  %v7139 = vmul.f32 %v6836, %v6836
  %v7140 = vmul.f32 %v6840, %v6840
  %v7141 = vmul.f32 %v6842, %v6842
  %v7142 = vmul.f32 %v6844, %v6844
  %v7143 = vmul.f32 %v6846, %v6846
  %v7144 = vmul.f32 %v6850, %v6850
  %v7145 = vmul.f32 %v6852, %v6852
  %v7146 = vmul.f32 %v6854, %v6854
  %v7147 = vmul.f32 %v6856, %v6856
  %v7148 = vmul.f32 %v6860, %v6860
  %v7149 = vmul.f32 %v6862, %v6862
  %v7150 = vmul.f32 %v6864, %v6864
  %v7151 = vmul.f32 %v6866, %v6866
  %v7152 = vmul.f32 %v6870, %v6870
  %v7153 = vmul.f32 %v6872, %v6872
  %v7154 = vmul.f32 %v6874, %v6874
  %v7155 = vmul.f32 %v6876, %v6876
  %v7156 = vmul.f32 %v6880, %v6880
  %v7157 = vmul.f32 %v6882, %v6882
  %v7158 = vmul.f32 %v6884, %v6884
  %v7159 = vmul.f32 %v6886, %v6886
  %v7160 = vmul.f32 %v6890, %v6890
  %v7161 = vmul.f32 %v6892, %v6892
  %v7162 = vmul.f32 %v6894, %v6894
  %v7163 = vmul.f32 %v6896, %v6896
  %v7164 = vmul.f32 %v6900, %v6900
  %v7165 = vmul.f32 %v6902, %v6902
  %v7166 = vmul.f32 %v6904, %v6904
  %v7167 = vmul.f32 %v6906, %v6906
  %v7168 = vmul.f32 %v6910, %v6910
  %v7169 = vmul.f32 %v6912, %v6912
  %v7170 = vmul.f32 %v6914, %v6914
  %v7171 = vmul.f32 %v6916, %v6916
  %v7172 = vmul.f32 %v6920, %v6920
  %v7173 = vmul.f32 %v6922, %v6922
  %v7174 = vmul.f32 %v6924, %v6924
  %v7175 = vmul.f32 %v6926, %v6926
  %v7176 = vmul.f32 %v6930, %v6930
  %v7177 = vmul.f32 %v6932, %v6932
  %v7178 = vmul.f32 %v6934, %v6934
  %v7179 = vmul.f32 %v6936, %v6936
  %v7180 = vmul.f32 %v6940, %v6940
  %v7181 = vmul.f32 %v6942, %v6942
  %v7182 = vmul.f32 %v6944, %v6944
  %v7183 = vmul.f32 %v6946, %v6946
  %v7184 = vmul.f32 %v6950, %v6950
  %v7185 = vmul.f32 %v6952, %v6952
  %v7186 = vmul.f32 %v6954, %v6954
  %v7187 = vmul.f32 %v6956, %v6956
  %v7188 = vmul.f32 %v6960, %v6960
  %v7189 = vmul.f32 %v6962, %v6962
  %v7190 = vmul.f32 %v6964, %v6964
  %v7191 = vmul.f32 %v6966, %v6966
  %v7192 = vmul.f32 %v6970, %v6970
  %v7193 = vmul.f32 %v6972, %v6972
  %v7194 = vmul.f32 %v6974, %v6974
  %v7195 = vmul.f32 %v6976, %v6976
  %v7196 = vmul.f32 %v6980, %v6980
  %v7197 = vmul.f32 %v6982, %v6982
  %v7198 = vmul.f32 %v6984, %v6984
  %v7199 = vmul.f32 %v6986, %v6986
  %v7200 = vmul.f32 %v6990, %v6990
  %v7201 = vmul.f32 %v6992, %v6992
  %v7202 = vmul.f32 %v6994, %v6994
  %v7203 = vmul.f32 %v6996, %v6996
  %v7204 = vmul.f32 %v7000, %v7000
  %v7205 = vmul.f32 %v7002, %v7002
  %v7206 = vmul.f32 %v7004, %v7004
  %v7207 = vmul.f32 %v7006, %v7006
  %v7208 = vmul.f32 %v7010, %v7010
  %v7209 = vmul.f32 %v7012, %v7012
  %v7210 = vmul.f32 %v7014, %v7014
  %v7211 = vmul.f32 %v7016, %v7016
  %v7212 = vmul.f32 %v7020, %v7020
  %v7213 = vmul.f32 %v7022, %v7022
  %v7214 = vmul.f32 %v7024, %v7024
  %v7215 = vmul.f32 %v7026, %v7026
  %v7216 = vmul.f32 %v7030, %v7030
  %v7217 = vmul.f32 %v7032, %v7032
  %v7218 = vmul.f32 %v7034, %v7034
  %v7219 = vmul.f32 %v7036, %v7036
  %v7220 = vmul.f32 %v7040, %v7040
  %v7221 = vmul.f32 %v7042, %v7042
  %v7222 = vmul.f32 %v7044, %v7044
  %v7223 = vmul.f32 %v7046, %v7046
  %v7224 = vmul.f32 %v7050, %v7050
  %v7225 = vmul.f32 %v7052, %v7052
  %v7226 = vmul.f32 %v7054, %v7054
  %v7227 = vmul.f32 %v7056, %v7056
  %v7228 = vmul.f32 %v7060, %v7060
  %v7229 = vmul.f32 %v7062, %v7062
  %v7230 = vmul.f32 %v7064, %v7064
  %v7231 = vmul.f32 %v7066, %v7066
  %v7232 = vmul.f32 %v7070, %v7070
  %v7233 = vmul.f32 %v7072, %v7072
  %v7234 = vmul.f32 %v7074, %v7074
  %v7235 = vmul.f32 %v7076, %v7076
  %v7236 = vmul.f32 %v7080, %v7080
  %v7237 = vmul.f32 %v7082, %v7082
  %v7238 = vmul.f32 %v7084, %v7084
  %v7239 = vmul.f32 %v7086, %v7086
  %v7240 = vmul.f32 %v7090, %v7090
  %v7241 = vmul.f32 %v7092, %v7092
  %v7242 = vmul.f32 %v7094, %v7094
  %v7243 = vmul.f32 %v7096, %v7096
  %v7244 = vmul.f32 %v7100, %v7100
  %v7245 = vmul.f32 %v7102, %v7102
  %v7246 = vmul.f32 %v7104, %v7104
  %v7247 = vmul.f32 %v7106, %v7106
  %v7248 = vmul.f32 %v7110, %v7110
  %v7249 = vmul.f32 %v7112, %v7112
  %v7250 = vmul.f32 %v7114, %v7114
  %v7251 = vmul.f32 %v7116, %v7116
  %v7252 = vmul.f32 %v7120, %v7120
  %v7253 = vmul.f32 %v7122, %v7122
  %v7254 = vmul.f32 %v7124, %v7124
  %v7255 = vmul.f32 %v7126, %v7126
  %v7256 = vmul.f32 %v6810, %v7128
  %v7257 = vmul.f32 %v6812, %v7129
  %v7258 = vmul.f32 %v6814, %v7130
  %v7259 = vmul.f32 %v6816, %v7131
  %v7260 = vmul.f32 %v6820, %v7132
  %v7261 = vmul.f32 %v6822, %v7133
  %v7262 = vmul.f32 %v6824, %v7134
  %v7263 = vmul.f32 %v6826, %v7135
  %v7264 = vmul.f32 %v6830, %v7136
  %v7265 = vmul.f32 %v6832, %v7137
  %v7266 = vmul.f32 %v6834, %v7138
  %v7267 = vmul.f32 %v6836, %v7139
  %v7268 = vmul.f32 %v6840, %v7140
  %v7269 = vmul.f32 %v6842, %v7141
  %v7270 = vmul.f32 %v6844, %v7142
  %v7271 = vmul.f32 %v6846, %v7143
  %v7272 = vmul.f32 %v6850, %v7144
  %v7273 = vmul.f32 %v6852, %v7145
  %v7274 = vmul.f32 %v6854, %v7146
  %v7275 = vmul.f32 %v6856, %v7147
  %v7276 = vmul.f32 %v6860, %v7148
  %v7277 = vmul.f32 %v6862, %v7149
  %v7278 = vmul.f32 %v6864, %v7150
  %v7279 = vmul.f32 %v6866, %v7151
  %v7280 = vmul.f32 %v6870, %v7152
  %v7281 = vmul.f32 %v6872, %v7153
  %v7282 = vmul.f32 %v6874, %v7154
  %v7283 = vmul.f32 %v6876, %v7155
  %v7284 = vmul.f32 %v6880, %v7156
  %v7285 = vmul.f32 %v6882, %v7157
  %v7286 = vmul.f32 %v6884, %v7158
  %v7287 = vmul.f32 %v6886, %v7159
  %v7288 = vmul.f32 %v6890, %v7160
  %v7289 = vmul.f32 %v6892, %v7161
  %v7290 = vmul.f32 %v6894, %v7162
  %v7291 = vmul.f32 %v6896, %v7163
  %v7292 = vmul.f32 %v6900, %v7164
  %v7293 = vmul.f32 %v6902, %v7165
  %v7294 = vmul.f32 %v6904, %v7166
  %v7295 = vmul.f32 %v6906, %v7167
  %v7296 = vmul.f32 %v6910, %v7168
  %v7297 = vmul.f32 %v6912, %v7169
  %v7298 = vmul.f32 %v6914, %v7170
  %v7299 = vmul.f32 %v6916, %v7171
  %v7300 = vmul.f32 %v6920, %v7172
  %v7301 = vmul.f32 %v6922, %v7173
  %v7302 = vmul.f32 %v6924, %v7174
  %v7303 = vmul.f32 %v6926, %v7175
  %v7304 = vmul.f32 %v6930, %v7176
  %v7305 = vmul.f32 %v6932, %v7177
  %v7306 = vmul.f32 %v6934, %v7178
  %v7307 = vmul.f32 %v6936, %v7179
  %v7308 = vmul.f32 %v6940, %v7180
  %v7309 = vmul.f32 %v6942, %v7181
  %v7310 = vmul.f32 %v6944, %v7182
  %v7311 = vmul.f32 %v6946, %v7183
  %v7312 = vmul.f32 %v6950, %v7184
  %v7313 = vmul.f32 %v6952, %v7185
  %v7314 = vmul.f32 %v6954, %v7186
  %v7315 = vmul.f32 %v6956, %v7187
  %v7316 = vmul.f32 %v6960, %v7188
  %v7317 = vmul.f32 %v6962, %v7189
  %v7318 = vmul.f32 %v6964, %v7190
  %v7319 = vmul.f32 %v6966, %v7191
  %v7320 = vmul.f32 %v6970, %v7192
  %v7321 = vmul.f32 %v6972, %v7193
  %v7322 = vmul.f32 %v6974, %v7194
  %v7323 = vmul.f32 %v6976, %v7195
  %v7324 = vmul.f32 %v6980, %v7196
  %v7325 = vmul.f32 %v6982, %v7197
  %v7326 = vmul.f32 %v6984, %v7198
  %v7327 = vmul.f32 %v6986, %v7199
  %v7328 = vmul.f32 %v6990, %v7200
  %v7329 = vmul.f32 %v6992, %v7201
  %v7330 = vmul.f32 %v6994, %v7202
  %v7331 = vmul.f32 %v6996, %v7203
  %v7332 = vmul.f32 %v7000, %v7204
  %v7333 = vmul.f32 %v7002, %v7205
  %v7334 = vmul.f32 %v7004, %v7206
  %v7335 = vmul.f32 %v7006, %v7207
  %v7336 = vmul.f32 %v7010, %v7208
  %v7337 = vmul.f32 %v7012, %v7209
  %v7338 = vmul.f32 %v7014, %v7210
  %v7339 = vmul.f32 %v7016, %v7211
  %v7340 = vmul.f32 %v7020, %v7212
  %v7341 = vmul.f32 %v7022, %v7213
  %v7342 = vmul.f32 %v7024, %v7214
  %v7343 = vmul.f32 %v7026, %v7215
  %v7344 = vmul.f32 %v7030, %v7216
  %v7345 = vmul.f32 %v7032, %v7217
  %v7346 = vmul.f32 %v7034, %v7218
  %v7347 = vmul.f32 %v7036, %v7219
  %v7348 = vmul.f32 %v7040, %v7220
  %v7349 = vmul.f32 %v7042, %v7221
  %v7350 = vmul.f32 %v7044, %v7222
  %v7351 = vmul.f32 %v7046, %v7223
  %v7352 = vmul.f32 %v7050, %v7224
  %v7353 = vmul.f32 %v7052, %v7225
  %v7354 = vmul.f32 %v7054, %v7226
  %v7355 = vmul.f32 %v7056, %v7227
  %v7356 = vmul.f32 %v7060, %v7228
  %v7357 = vmul.f32 %v7062, %v7229
  %v7358 = vmul.f32 %v7064, %v7230
  %v7359 = vmul.f32 %v7066, %v7231
  %v7360 = vmul.f32 %v7070, %v7232
  %v7361 = vmul.f32 %v7072, %v7233
  %v7362 = vmul.f32 %v7074, %v7234
  %v7363 = vmul.f32 %v7076, %v7235
  %v7364 = vmul.f32 %v7080, %v7236
  %v7365 = vmul.f32 %v7082, %v7237
  %v7366 = vmul.f32 %v7084, %v7238
  %v7367 = vmul.f32 %v7086, %v7239
  %v7368 = vmul.f32 %v7090, %v7240
  %v7369 = vmul.f32 %v7092, %v7241
  %v7370 = vmul.f32 %v7094, %v7242
  %v7371 = vmul.f32 %v7096, %v7243
  %v7372 = vmul.f32 %v7100, %v7244
  %v7373 = vmul.f32 %v7102, %v7245
  %v7374 = vmul.f32 %v7104, %v7246
  %v7375 = vmul.f32 %v7106, %v7247
  %v7376 = vmul.f32 %v7110, %v7248
  %v7377 = vmul.f32 %v7112, %v7249
  %v7378 = vmul.f32 %v7114, %v7250
  %v7379 = vmul.f32 %v7116, %v7251
  %v7380 = vmul.f32 %v7120, %v7252
  %v7381 = vmul.f32 %v7122, %v7253
  %v7382 = vmul.f32 %v7124, %v7254
  %v7383 = vmul.f32 %v7126, %v7255
  %v7384 = vmul.f32 %v7256, 0.044715
  %v7385 = vmul.f32 %v7257, 0.044715
  %v7386 = vmul.f32 %v7258, 0.044715
  %v7387 = vmul.f32 %v7259, 0.044715
  %v7388 = vmul.f32 %v7260, 0.044715
  %v7389 = vmul.f32 %v7261, 0.044715
  %v7390 = vmul.f32 %v7262, 0.044715
  %v7391 = vmul.f32 %v7263, 0.044715
  %v7392 = vmul.f32 %v7264, 0.044715
  %v7393 = vmul.f32 %v7265, 0.044715
  %v7394 = vmul.f32 %v7266, 0.044715
  %v7395 = vmul.f32 %v7267, 0.044715
  %v7396 = vmul.f32 %v7268, 0.044715
  %v7397 = vmul.f32 %v7269, 0.044715
  %v7398 = vmul.f32 %v7270, 0.044715
  %v7399 = vmul.f32 %v7271, 0.044715
  %v7400 = vmul.f32 %v7272, 0.044715
  %v7401 = vmul.f32 %v7273, 0.044715
  %v7402 = vmul.f32 %v7274, 0.044715
  %v7403 = vmul.f32 %v7275, 0.044715
  %v7404 = vmul.f32 %v7276, 0.044715
  %v7405 = vmul.f32 %v7277, 0.044715
  %v7406 = vmul.f32 %v7278, 0.044715
  %v7407 = vmul.f32 %v7279, 0.044715
  %v7408 = vmul.f32 %v7280, 0.044715
  %v7409 = vmul.f32 %v7281, 0.044715
  %v7410 = vmul.f32 %v7282, 0.044715
  %v7411 = vmul.f32 %v7283, 0.044715
  %v7412 = vmul.f32 %v7284, 0.044715
  %v7413 = vmul.f32 %v7285, 0.044715
  %v7414 = vmul.f32 %v7286, 0.044715
  %v7415 = vmul.f32 %v7287, 0.044715
  %v7416 = vmul.f32 %v7288, 0.044715
  %v7417 = vmul.f32 %v7289, 0.044715
  %v7418 = vmul.f32 %v7290, 0.044715
  %v7419 = vmul.f32 %v7291, 0.044715
  %v7420 = vmul.f32 %v7292, 0.044715
  %v7421 = vmul.f32 %v7293, 0.044715
  %v7422 = vmul.f32 %v7294, 0.044715
  %v7423 = vmul.f32 %v7295, 0.044715
  %v7424 = vmul.f32 %v7296, 0.044715
  %v7425 = vmul.f32 %v7297, 0.044715
  %v7426 = vmul.f32 %v7298, 0.044715
  %v7427 = vmul.f32 %v7299, 0.044715
  %v7428 = vmul.f32 %v7300, 0.044715
  %v7429 = vmul.f32 %v7301, 0.044715
  %v7430 = vmul.f32 %v7302, 0.044715
  %v7431 = vmul.f32 %v7303, 0.044715
  %v7432 = vmul.f32 %v7304, 0.044715
  %v7433 = vmul.f32 %v7305, 0.044715
  %v7434 = vmul.f32 %v7306, 0.044715
  %v7435 = vmul.f32 %v7307, 0.044715
  %v7436 = vmul.f32 %v7308, 0.044715
  %v7437 = vmul.f32 %v7309, 0.044715
  %v7438 = vmul.f32 %v7310, 0.044715
  %v7439 = vmul.f32 %v7311, 0.044715
  %v7440 = vmul.f32 %v7312, 0.044715
  %v7441 = vmul.f32 %v7313, 0.044715
  %v7442 = vmul.f32 %v7314, 0.044715
  %v7443 = vmul.f32 %v7315, 0.044715
  %v7444 = vmul.f32 %v7316, 0.044715
  %v7445 = vmul.f32 %v7317, 0.044715
  %v7446 = vmul.f32 %v7318, 0.044715
  %v7447 = vmul.f32 %v7319, 0.044715
  %v7448 = vmul.f32 %v7320, 0.044715
  %v7449 = vmul.f32 %v7321, 0.044715
  %v7450 = vmul.f32 %v7322, 0.044715
  %v7451 = vmul.f32 %v7323, 0.044715
  %v7452 = vmul.f32 %v7324, 0.044715
  %v7453 = vmul.f32 %v7325, 0.044715
  %v7454 = vmul.f32 %v7326, 0.044715
  %v7455 = vmul.f32 %v7327, 0.044715
  %v7456 = vmul.f32 %v7328, 0.044715
  %v7457 = vmul.f32 %v7329, 0.044715
  %v7458 = vmul.f32 %v7330, 0.044715
  %v7459 = vmul.f32 %v7331, 0.044715
  %v7460 = vmul.f32 %v7332, 0.044715
  %v7461 = vmul.f32 %v7333, 0.044715
  %v7462 = vmul.f32 %v7334, 0.044715
  %v7463 = vmul.f32 %v7335, 0.044715
  %v7464 = vmul.f32 %v7336, 0.044715
  %v7465 = vmul.f32 %v7337, 0.044715
  %v7466 = vmul.f32 %v7338, 0.044715
  %v7467 = vmul.f32 %v7339, 0.044715
  %v7468 = vmul.f32 %v7340, 0.044715
  %v7469 = vmul.f32 %v7341, 0.044715
  %v7470 = vmul.f32 %v7342, 0.044715
  %v7471 = vmul.f32 %v7343, 0.044715
  %v7472 = vmul.f32 %v7344, 0.044715
  %v7473 = vmul.f32 %v7345, 0.044715
  %v7474 = vmul.f32 %v7346, 0.044715
  %v7475 = vmul.f32 %v7347, 0.044715
  %v7476 = vmul.f32 %v7348, 0.044715
  %v7477 = vmul.f32 %v7349, 0.044715
  %v7478 = vmul.f32 %v7350, 0.044715
  %v7479 = vmul.f32 %v7351, 0.044715
  %v7480 = vmul.f32 %v7352, 0.044715
  %v7481 = vmul.f32 %v7353, 0.044715
  %v7482 = vmul.f32 %v7354, 0.044715
  %v7483 = vmul.f32 %v7355, 0.044715
  %v7484 = vmul.f32 %v7356, 0.044715
  %v7485 = vmul.f32 %v7357, 0.044715
  %v7486 = vmul.f32 %v7358, 0.044715
  %v7487 = vmul.f32 %v7359, 0.044715
  %v7488 = vmul.f32 %v7360, 0.044715
  %v7489 = vmul.f32 %v7361, 0.044715
  %v7490 = vmul.f32 %v7362, 0.044715
  %v7491 = vmul.f32 %v7363, 0.044715
  %v7492 = vmul.f32 %v7364, 0.044715
  %v7493 = vmul.f32 %v7365, 0.044715
  %v7494 = vmul.f32 %v7366, 0.044715
  %v7495 = vmul.f32 %v7367, 0.044715
  %v7496 = vmul.f32 %v7368, 0.044715
  %v7497 = vmul.f32 %v7369, 0.044715
  %v7498 = vmul.f32 %v7370, 0.044715
  %v7499 = vmul.f32 %v7371, 0.044715
  %v7500 = vmul.f32 %v7372, 0.044715
  %v7501 = vmul.f32 %v7373, 0.044715
  %v7502 = vmul.f32 %v7374, 0.044715
  %v7503 = vmul.f32 %v7375, 0.044715
  %v7504 = vmul.f32 %v7376, 0.044715
  %v7505 = vmul.f32 %v7377, 0.044715
  %v7506 = vmul.f32 %v7378, 0.044715
  %v7507 = vmul.f32 %v7379, 0.044715
  %v7508 = vmul.f32 %v7380, 0.044715
  %v7509 = vmul.f32 %v7381, 0.044715
  %v7510 = vmul.f32 %v7382, 0.044715
  %v7511 = vmul.f32 %v7383, 0.044715
  %v7512 = vadd.f32 %v6810, %v7384
  %v7513 = vadd.f32 %v6812, %v7385
  %v7514 = vadd.f32 %v6814, %v7386
  %v7515 = vadd.f32 %v6816, %v7387
  %v7516 = vadd.f32 %v6820, %v7388
  %v7517 = vadd.f32 %v6822, %v7389
  %v7518 = vadd.f32 %v6824, %v7390
  %v7519 = vadd.f32 %v6826, %v7391
  %v7520 = vadd.f32 %v6830, %v7392
  %v7521 = vadd.f32 %v6832, %v7393
  %v7522 = vadd.f32 %v6834, %v7394
  %v7523 = vadd.f32 %v6836, %v7395
  %v7524 = vadd.f32 %v6840, %v7396
  %v7525 = vadd.f32 %v6842, %v7397
  %v7526 = vadd.f32 %v6844, %v7398
  %v7527 = vadd.f32 %v6846, %v7399
  %v7528 = vadd.f32 %v6850, %v7400
  %v7529 = vadd.f32 %v6852, %v7401
  %v7530 = vadd.f32 %v6854, %v7402
  %v7531 = vadd.f32 %v6856, %v7403
  %v7532 = vadd.f32 %v6860, %v7404
  %v7533 = vadd.f32 %v6862, %v7405
  %v7534 = vadd.f32 %v6864, %v7406
  %v7535 = vadd.f32 %v6866, %v7407
  %v7536 = vadd.f32 %v6870, %v7408
  %v7537 = vadd.f32 %v6872, %v7409
  %v7538 = vadd.f32 %v6874, %v7410
  %v7539 = vadd.f32 %v6876, %v7411
  %v7540 = vadd.f32 %v6880, %v7412
  %v7541 = vadd.f32 %v6882, %v7413
  %v7542 = vadd.f32 %v6884, %v7414
  %v7543 = vadd.f32 %v6886, %v7415
  %v7544 = vadd.f32 %v6890, %v7416
  %v7545 = vadd.f32 %v6892, %v7417
  %v7546 = vadd.f32 %v6894, %v7418
  %v7547 = vadd.f32 %v6896, %v7419
  %v7548 = vadd.f32 %v6900, %v7420
  %v7549 = vadd.f32 %v6902, %v7421
  %v7550 = vadd.f32 %v6904, %v7422
  %v7551 = vadd.f32 %v6906, %v7423
  %v7552 = vadd.f32 %v6910, %v7424
  %v7553 = vadd.f32 %v6912, %v7425
  %v7554 = vadd.f32 %v6914, %v7426
  %v7555 = vadd.f32 %v6916, %v7427
  %v7556 = vadd.f32 %v6920, %v7428
  %v7557 = vadd.f32 %v6922, %v7429
  %v7558 = vadd.f32 %v6924, %v7430
  %v7559 = vadd.f32 %v6926, %v7431
  %v7560 = vadd.f32 %v6930, %v7432
  %v7561 = vadd.f32 %v6932, %v7433
  %v7562 = vadd.f32 %v6934, %v7434
  %v7563 = vadd.f32 %v6936, %v7435
  %v7564 = vadd.f32 %v6940, %v7436
  %v7565 = vadd.f32 %v6942, %v7437
  %v7566 = vadd.f32 %v6944, %v7438
  %v7567 = vadd.f32 %v6946, %v7439
  %v7568 = vadd.f32 %v6950, %v7440
  %v7569 = vadd.f32 %v6952, %v7441
  %v7570 = vadd.f32 %v6954, %v7442
  %v7571 = vadd.f32 %v6956, %v7443
  %v7572 = vadd.f32 %v6960, %v7444
  %v7573 = vadd.f32 %v6962, %v7445
  %v7574 = vadd.f32 %v6964, %v7446
  %v7575 = vadd.f32 %v6966, %v7447
  %v7576 = vadd.f32 %v6970, %v7448
  %v7577 = vadd.f32 %v6972, %v7449
  %v7578 = vadd.f32 %v6974, %v7450
  %v7579 = vadd.f32 %v6976, %v7451
  %v7580 = vadd.f32 %v6980, %v7452
  %v7581 = vadd.f32 %v6982, %v7453
  %v7582 = vadd.f32 %v6984, %v7454
  %v7583 = vadd.f32 %v6986, %v7455
  %v7584 = vadd.f32 %v6990, %v7456
  %v7585 = vadd.f32 %v6992, %v7457
  %v7586 = vadd.f32 %v6994, %v7458
  %v7587 = vadd.f32 %v6996, %v7459
  %v7588 = vadd.f32 %v7000, %v7460
  %v7589 = vadd.f32 %v7002, %v7461
  %v7590 = vadd.f32 %v7004, %v7462
  %v7591 = vadd.f32 %v7006, %v7463
  %v7592 = vadd.f32 %v7010, %v7464
  %v7593 = vadd.f32 %v7012, %v7465
  %v7594 = vadd.f32 %v7014, %v7466
  %v7595 = vadd.f32 %v7016, %v7467
  %v7596 = vadd.f32 %v7020, %v7468
  %v7597 = vadd.f32 %v7022, %v7469
  %v7598 = vadd.f32 %v7024, %v7470
  %v7599 = vadd.f32 %v7026, %v7471
  %v7600 = vadd.f32 %v7030, %v7472
  %v7601 = vadd.f32 %v7032, %v7473
  %v7602 = vadd.f32 %v7034, %v7474
  %v7603 = vadd.f32 %v7036, %v7475
  %v7604 = vadd.f32 %v7040, %v7476
  %v7605 = vadd.f32 %v7042, %v7477
  %v7606 = vadd.f32 %v7044, %v7478
  %v7607 = vadd.f32 %v7046, %v7479
  %v7608 = vadd.f32 %v7050, %v7480
  %v7609 = vadd.f32 %v7052, %v7481
  %v7610 = vadd.f32 %v7054, %v7482
  %v7611 = vadd.f32 %v7056, %v7483
  %v7612 = vadd.f32 %v7060, %v7484
  %v7613 = vadd.f32 %v7062, %v7485
  %v7614 = vadd.f32 %v7064, %v7486
  %v7615 = vadd.f32 %v7066, %v7487
  %v7616 = vadd.f32 %v7070, %v7488
  %v7617 = vadd.f32 %v7072, %v7489
  %v7618 = vadd.f32 %v7074, %v7490
  %v7619 = vadd.f32 %v7076, %v7491
  %v7620 = vadd.f32 %v7080, %v7492
  %v7621 = vadd.f32 %v7082, %v7493
  %v7622 = vadd.f32 %v7084, %v7494
  %v7623 = vadd.f32 %v7086, %v7495
  %v7624 = vadd.f32 %v7090, %v7496
  %v7625 = vadd.f32 %v7092, %v7497
  %v7626 = vadd.f32 %v7094, %v7498
  %v7627 = vadd.f32 %v7096, %v7499
  %v7628 = vadd.f32 %v7100, %v7500
  %v7629 = vadd.f32 %v7102, %v7501
  %v7630 = vadd.f32 %v7104, %v7502
  %v7631 = vadd.f32 %v7106, %v7503
  %v7632 = vadd.f32 %v7110, %v7504
  %v7633 = vadd.f32 %v7112, %v7505
  %v7634 = vadd.f32 %v7114, %v7506
  %v7635 = vadd.f32 %v7116, %v7507
  %v7636 = vadd.f32 %v7120, %v7508
  %v7637 = vadd.f32 %v7122, %v7509
  %v7638 = vadd.f32 %v7124, %v7510
  %v7639 = vadd.f32 %v7126, %v7511
  %v7640 = vmul.f32 %v7512, 0.7978846
  %v7641 = vmul.f32 %v7513, 0.7978846
  %v7642 = vmul.f32 %v7514, 0.7978846
  %v7643 = vmul.f32 %v7515, 0.7978846
  %v7644 = vmul.f32 %v7516, 0.7978846
  %v7645 = vmul.f32 %v7517, 0.7978846
  %v7646 = vmul.f32 %v7518, 0.7978846
  %v7647 = vmul.f32 %v7519, 0.7978846
  %v7648 = vmul.f32 %v7520, 0.7978846
  %v7649 = vmul.f32 %v7521, 0.7978846
  %v7650 = vmul.f32 %v7522, 0.7978846
  %v7651 = vmul.f32 %v7523, 0.7978846
  %v7652 = vmul.f32 %v7524, 0.7978846
  %v7653 = vmul.f32 %v7525, 0.7978846
  %v7654 = vmul.f32 %v7526, 0.7978846
  %v7655 = vmul.f32 %v7527, 0.7978846
  %v7656 = vmul.f32 %v7528, 0.7978846
  %v7657 = vmul.f32 %v7529, 0.7978846
  %v7658 = vmul.f32 %v7530, 0.7978846
  %v7659 = vmul.f32 %v7531, 0.7978846
  %v7660 = vmul.f32 %v7532, 0.7978846
  %v7661 = vmul.f32 %v7533, 0.7978846
  %v7662 = vmul.f32 %v7534, 0.7978846
  %v7663 = vmul.f32 %v7535, 0.7978846
  %v7664 = vmul.f32 %v7536, 0.7978846
  %v7665 = vmul.f32 %v7537, 0.7978846
  %v7666 = vmul.f32 %v7538, 0.7978846
  %v7667 = vmul.f32 %v7539, 0.7978846
  %v7668 = vmul.f32 %v7540, 0.7978846
  %v7669 = vmul.f32 %v7541, 0.7978846
  %v7670 = vmul.f32 %v7542, 0.7978846
  %v7671 = vmul.f32 %v7543, 0.7978846
  %v7672 = vmul.f32 %v7544, 0.7978846
  %v7673 = vmul.f32 %v7545, 0.7978846
  %v7674 = vmul.f32 %v7546, 0.7978846
  %v7675 = vmul.f32 %v7547, 0.7978846
  %v7676 = vmul.f32 %v7548, 0.7978846
  %v7677 = vmul.f32 %v7549, 0.7978846
  %v7678 = vmul.f32 %v7550, 0.7978846
  %v7679 = vmul.f32 %v7551, 0.7978846
  %v7680 = vmul.f32 %v7552, 0.7978846
  %v7681 = vmul.f32 %v7553, 0.7978846
  %v7682 = vmul.f32 %v7554, 0.7978846
  %v7683 = vmul.f32 %v7555, 0.7978846
  %v7684 = vmul.f32 %v7556, 0.7978846
  %v7685 = vmul.f32 %v7557, 0.7978846
  %v7686 = vmul.f32 %v7558, 0.7978846
  %v7687 = vmul.f32 %v7559, 0.7978846
  %v7688 = vmul.f32 %v7560, 0.7978846
  %v7689 = vmul.f32 %v7561, 0.7978846
  %v7690 = vmul.f32 %v7562, 0.7978846
  %v7691 = vmul.f32 %v7563, 0.7978846
  %v7692 = vmul.f32 %v7564, 0.7978846
  %v7693 = vmul.f32 %v7565, 0.7978846
  %v7694 = vmul.f32 %v7566, 0.7978846
  %v7695 = vmul.f32 %v7567, 0.7978846
  %v7696 = vmul.f32 %v7568, 0.7978846
  %v7697 = vmul.f32 %v7569, 0.7978846
  %v7698 = vmul.f32 %v7570, 0.7978846
  %v7699 = vmul.f32 %v7571, 0.7978846
  %v7700 = vmul.f32 %v7572, 0.7978846
  %v7701 = vmul.f32 %v7573, 0.7978846
  %v7702 = vmul.f32 %v7574, 0.7978846
  %v7703 = vmul.f32 %v7575, 0.7978846
  %v7704 = vmul.f32 %v7576, 0.7978846
  %v7705 = vmul.f32 %v7577, 0.7978846
  %v7706 = vmul.f32 %v7578, 0.7978846
  %v7707 = vmul.f32 %v7579, 0.7978846
  %v7708 = vmul.f32 %v7580, 0.7978846
  %v7709 = vmul.f32 %v7581, 0.7978846
  %v7710 = vmul.f32 %v7582, 0.7978846
  %v7711 = vmul.f32 %v7583, 0.7978846
  %v7712 = vmul.f32 %v7584, 0.7978846
  %v7713 = vmul.f32 %v7585, 0.7978846
  %v7714 = vmul.f32 %v7586, 0.7978846
  %v7715 = vmul.f32 %v7587, 0.7978846
  %v7716 = vmul.f32 %v7588, 0.7978846
  %v7717 = vmul.f32 %v7589, 0.7978846
  %v7718 = vmul.f32 %v7590, 0.7978846
  %v7719 = vmul.f32 %v7591, 0.7978846
  %v7720 = vmul.f32 %v7592, 0.7978846
  %v7721 = vmul.f32 %v7593, 0.7978846
  %v7722 = vmul.f32 %v7594, 0.7978846
  %v7723 = vmul.f32 %v7595, 0.7978846
  %v7724 = vmul.f32 %v7596, 0.7978846
  %v7725 = vmul.f32 %v7597, 0.7978846
  %v7726 = vmul.f32 %v7598, 0.7978846
  %v7727 = vmul.f32 %v7599, 0.7978846
  %v7728 = vmul.f32 %v7600, 0.7978846
  %v7729 = vmul.f32 %v7601, 0.7978846
  %v7730 = vmul.f32 %v7602, 0.7978846
  %v7731 = vmul.f32 %v7603, 0.7978846
  %v7732 = vmul.f32 %v7604, 0.7978846
  %v7733 = vmul.f32 %v7605, 0.7978846
  %v7734 = vmul.f32 %v7606, 0.7978846
  %v7735 = vmul.f32 %v7607, 0.7978846
  %v7736 = vmul.f32 %v7608, 0.7978846
  %v7737 = vmul.f32 %v7609, 0.7978846
  %v7738 = vmul.f32 %v7610, 0.7978846
  %v7739 = vmul.f32 %v7611, 0.7978846
  %v7740 = vmul.f32 %v7612, 0.7978846
  %v7741 = vmul.f32 %v7613, 0.7978846
  %v7742 = vmul.f32 %v7614, 0.7978846
  %v7743 = vmul.f32 %v7615, 0.7978846
  %v7744 = vmul.f32 %v7616, 0.7978846
  %v7745 = vmul.f32 %v7617, 0.7978846
  %v7746 = vmul.f32 %v7618, 0.7978846
  %v7747 = vmul.f32 %v7619, 0.7978846
  %v7748 = vmul.f32 %v7620, 0.7978846
  %v7749 = vmul.f32 %v7621, 0.7978846
  %v7750 = vmul.f32 %v7622, 0.7978846
  %v7751 = vmul.f32 %v7623, 0.7978846
  %v7752 = vmul.f32 %v7624, 0.7978846
  %v7753 = vmul.f32 %v7625, 0.7978846
  %v7754 = vmul.f32 %v7626, 0.7978846
  %v7755 = vmul.f32 %v7627, 0.7978846
  %v7756 = vmul.f32 %v7628, 0.7978846
  %v7757 = vmul.f32 %v7629, 0.7978846
  %v7758 = vmul.f32 %v7630, 0.7978846
  %v7759 = vmul.f32 %v7631, 0.7978846
  %v7760 = vmul.f32 %v7632, 0.7978846
  %v7761 = vmul.f32 %v7633, 0.7978846
  %v7762 = vmul.f32 %v7634, 0.7978846
  %v7763 = vmul.f32 %v7635, 0.7978846
  %v7764 = vmul.f32 %v7636, 0.7978846
  %v7765 = vmul.f32 %v7637, 0.7978846
  %v7766 = vmul.f32 %v7638, 0.7978846
  %v7767 = vmul.f32 %v7639, 0.7978846
  %v7768 = vtanh.pop %v7640
  %v7769 = vtanh.pop %v7641
  %v7770 = vtanh.pop %v7642
  %v7771 = vtanh.pop %v7643
  %v7772 = vtanh.pop %v7644
  %v7773 = vtanh.pop %v7645
  %v7774 = vtanh.pop %v7646
  %v7775 = vtanh.pop %v7647
  %v7776 = vtanh.pop %v7648
  %v7777 = vtanh.pop %v7649
  %v7778 = vtanh.pop %v7650
  %v7779 = vtanh.pop %v7651
  %v7780 = vtanh.pop %v7652
  %v7781 = vtanh.pop %v7653
  %v7782 = vtanh.pop %v7654
  %v7783 = vtanh.pop %v7655
  %v7784 = vtanh.pop %v7656
  %v7785 = vtanh.pop %v7657
  %v7786 = vtanh.pop %v7658
  %v7787 = vtanh.pop %v7659
  %v7788 = vtanh.pop %v7660
  %v7789 = vtanh.pop %v7661
  %v7790 = vtanh.pop %v7662
  %v7791 = vtanh.pop %v7663
  %v7792 = vtanh.pop %v7664
  %v7793 = vtanh.pop %v7665
  %v7794 = vtanh.pop %v7666
  %v7795 = vtanh.pop %v7667
  %v7796 = vtanh.pop %v7668
  %v7797 = vtanh.pop %v7669
  %v7798 = vtanh.pop %v7670
  %v7799 = vtanh.pop %v7671
  %v7800 = vtanh.pop %v7672
  %v7801 = vtanh.pop %v7673
  %v7802 = vtanh.pop %v7674
  %v7803 = vtanh.pop %v7675
  %v7804 = vtanh.pop %v7676
  %v7805 = vtanh.pop %v7677
  %v7806 = vtanh.pop %v7678
  %v7807 = vtanh.pop %v7679
  %v7808 = vtanh.pop %v7680
  %v7809 = vtanh.pop %v7681
  %v7810 = vtanh.pop %v7682
  %v7811 = vtanh.pop %v7683
  %v7812 = vtanh.pop %v7684
  %v7813 = vtanh.pop %v7685
  %v7814 = vtanh.pop %v7686
  %v7815 = vtanh.pop %v7687
  %v7816 = vtanh.pop %v7688
  %v7817 = vtanh.pop %v7689
  %v7818 = vtanh.pop %v7690
  %v7819 = vtanh.pop %v7691
  %v7820 = vtanh.pop %v7692
  %v7821 = vtanh.pop %v7693
  %v7822 = vtanh.pop %v7694
  %v7823 = vtanh.pop %v7695
  %v7824 = vtanh.pop %v7696
  %v7825 = vtanh.pop %v7697
  %v7826 = vtanh.pop %v7698
  %v7827 = vtanh.pop %v7699
  %v7828 = vtanh.pop %v7700
  %v7829 = vtanh.pop %v7701
  %v7830 = vtanh.pop %v7702
  %v7831 = vtanh.pop %v7703
  %v7832 = vtanh.pop %v7704
  %v7833 = vtanh.pop %v7705
  %v7834 = vtanh.pop %v7706
  %v7835 = vtanh.pop %v7707
  %v7836 = vtanh.pop %v7708
  %v7837 = vtanh.pop %v7709
  %v7838 = vtanh.pop %v7710
  %v7839 = vtanh.pop %v7711
  %v7840 = vtanh.pop %v7712
  %v7841 = vtanh.pop %v7713
  %v7842 = vtanh.pop %v7714
  %v7843 = vtanh.pop %v7715
  %v7844 = vtanh.pop %v7716
  %v7845 = vtanh.pop %v7717
  %v7846 = vtanh.pop %v7718
  %v7847 = vtanh.pop %v7719
  %v7848 = vtanh.pop %v7720
  %v7849 = vtanh.pop %v7721
  %v7850 = vtanh.pop %v7722
  %v7851 = vtanh.pop %v7723
  %v7852 = vtanh.pop %v7724
  %v7853 = vtanh.pop %v7725
  %v7854 = vtanh.pop %v7726
  %v7855 = vtanh.pop %v7727
  %v7856 = vtanh.pop %v7728
  %v7857 = vtanh.pop %v7729
  %v7858 = vtanh.pop %v7730
  %v7859 = vtanh.pop %v7731
  %v7860 = vtanh.pop %v7732
  %v7861 = vtanh.pop %v7733
  %v7862 = vtanh.pop %v7734
  %v7863 = vtanh.pop %v7735
  %v7864 = vtanh.pop %v7736
  %v7865 = vtanh.pop %v7737
  %v7866 = vtanh.pop %v7738
  %v7867 = vtanh.pop %v7739
  %v7868 = vtanh.pop %v7740
  %v7869 = vtanh.pop %v7741
  %v7870 = vtanh.pop %v7742
  %v7871 = vtanh.pop %v7743
  %v7872 = vtanh.pop %v7744
  %v7873 = vtanh.pop %v7745
  %v7874 = vtanh.pop %v7746
  %v7875 = vtanh.pop %v7747
  %v7876 = vtanh.pop %v7748
  %v7877 = vtanh.pop %v7749
  %v7878 = vtanh.pop %v7750
  %v7879 = vtanh.pop %v7751
  %v7880 = vtanh.pop %v7752
  %v7881 = vtanh.pop %v7753
  %v7882 = vtanh.pop %v7754
  %v7883 = vtanh.pop %v7755
  %v7884 = vtanh.pop %v7756
  %v7885 = vtanh.pop %v7757
  %v7886 = vtanh.pop %v7758
  %v7887 = vtanh.pop %v7759
  %v7888 = vtanh.pop %v7760
  %v7889 = vtanh.pop %v7761
  %v7890 = vtanh.pop %v7762
  %v7891 = vtanh.pop %v7763
  %v7892 = vtanh.pop %v7764
  %v7893 = vtanh.pop %v7765
  %v7894 = vtanh.pop %v7766
  %v7895 = vtanh.pop %v7767
  %v7896 = vadd.f32 %v7768, 1.0
  %v7897 = vadd.f32 %v7769, 1.0
  %v7898 = vadd.f32 %v7770, 1.0
  %v7899 = vadd.f32 %v7771, 1.0
  %v7900 = vadd.f32 %v7772, 1.0
  %v7901 = vadd.f32 %v7773, 1.0
  %v7902 = vadd.f32 %v7774, 1.0
  %v7903 = vadd.f32 %v7775, 1.0
  %v7904 = vadd.f32 %v7776, 1.0
  %v7905 = vadd.f32 %v7777, 1.0
  %v7906 = vadd.f32 %v7778, 1.0
  %v7907 = vadd.f32 %v7779, 1.0
  %v7908 = vadd.f32 %v7780, 1.0
  %v7909 = vadd.f32 %v7781, 1.0
  %v7910 = vadd.f32 %v7782, 1.0
  %v7911 = vadd.f32 %v7783, 1.0
  %v7912 = vadd.f32 %v7784, 1.0
  %v7913 = vadd.f32 %v7785, 1.0
  %v7914 = vadd.f32 %v7786, 1.0
  %v7915 = vadd.f32 %v7787, 1.0
  %v7916 = vadd.f32 %v7788, 1.0
  %v7917 = vadd.f32 %v7789, 1.0
  %v7918 = vadd.f32 %v7790, 1.0
  %v7919 = vadd.f32 %v7791, 1.0
  %v7920 = vadd.f32 %v7792, 1.0
  %v7921 = vadd.f32 %v7793, 1.0
  %v7922 = vadd.f32 %v7794, 1.0
  %v7923 = vadd.f32 %v7795, 1.0
  %v7924 = vadd.f32 %v7796, 1.0
  %v7925 = vadd.f32 %v7797, 1.0
  %v7926 = vadd.f32 %v7798, 1.0
  %v7927 = vadd.f32 %v7799, 1.0
  %v7928 = vadd.f32 %v7800, 1.0
  %v7929 = vadd.f32 %v7801, 1.0
  %v7930 = vadd.f32 %v7802, 1.0
  %v7931 = vadd.f32 %v7803, 1.0
  %v7932 = vadd.f32 %v7804, 1.0
  %v7933 = vadd.f32 %v7805, 1.0
  %v7934 = vadd.f32 %v7806, 1.0
  %v7935 = vadd.f32 %v7807, 1.0
  %v7936 = vadd.f32 %v7808, 1.0
  %v7937 = vadd.f32 %v7809, 1.0
  %v7938 = vadd.f32 %v7810, 1.0
  %v7939 = vadd.f32 %v7811, 1.0
  %v7940 = vadd.f32 %v7812, 1.0
  %v7941 = vadd.f32 %v7813, 1.0
  %v7942 = vadd.f32 %v7814, 1.0
  %v7943 = vadd.f32 %v7815, 1.0
  %v7944 = vadd.f32 %v7816, 1.0
  %v7945 = vadd.f32 %v7817, 1.0
  %v7946 = vadd.f32 %v7818, 1.0
  %v7947 = vadd.f32 %v7819, 1.0
  %v7948 = vadd.f32 %v7820, 1.0
  %v7949 = vadd.f32 %v7821, 1.0
  %v7950 = vadd.f32 %v7822, 1.0
  %v7951 = vadd.f32 %v7823, 1.0
  %v7952 = vadd.f32 %v7824, 1.0
  %v7953 = vadd.f32 %v7825, 1.0
  %v7954 = vadd.f32 %v7826, 1.0
  %v7955 = vadd.f32 %v7827, 1.0
  %v7956 = vadd.f32 %v7828, 1.0
  %v7957 = vadd.f32 %v7829, 1.0
  %v7958 = vadd.f32 %v7830, 1.0
  %v7959 = vadd.f32 %v7831, 1.0
  %v7960 = vadd.f32 %v7832, 1.0
  %v7961 = vadd.f32 %v7833, 1.0
  %v7962 = vadd.f32 %v7834, 1.0
  %v7963 = vadd.f32 %v7835, 1.0
  %v7964 = vadd.f32 %v7836, 1.0
  %v7965 = vadd.f32 %v7837, 1.0
  %v7966 = vadd.f32 %v7838, 1.0
  %v7967 = vadd.f32 %v7839, 1.0
  %v7968 = vadd.f32 %v7840, 1.0
  %v7969 = vadd.f32 %v7841, 1.0
  %v7970 = vadd.f32 %v7842, 1.0
  %v7971 = vadd.f32 %v7843, 1.0
  %v7972 = vadd.f32 %v7844, 1.0
  %v7973 = vadd.f32 %v7845, 1.0
  %v7974 = vadd.f32 %v7846, 1.0
  %v7975 = vadd.f32 %v7847, 1.0
  %v7976 = vadd.f32 %v7848, 1.0
  %v7977 = vadd.f32 %v7849, 1.0
  %v7978 = vadd.f32 %v7850, 1.0
  %v7979 = vadd.f32 %v7851, 1.0
  %v7980 = vadd.f32 %v7852, 1.0
  %v7981 = vadd.f32 %v7853, 1.0
  %v7982 = vadd.f32 %v7854, 1.0
  %v7983 = vadd.f32 %v7855, 1.0
  %v7984 = vadd.f32 %v7856, 1.0
  %v7985 = vadd.f32 %v7857, 1.0
  %v7986 = vadd.f32 %v7858, 1.0
  %v7987 = vadd.f32 %v7859, 1.0
  %v7988 = vadd.f32 %v7860, 1.0
  %v7989 = vadd.f32 %v7861, 1.0
  %v7990 = vadd.f32 %v7862, 1.0
  %v7991 = vadd.f32 %v7863, 1.0
  %v7992 = vadd.f32 %v7864, 1.0
  %v7993 = vadd.f32 %v7865, 1.0
  %v7994 = vadd.f32 %v7866, 1.0
  %v7995 = vadd.f32 %v7867, 1.0
  %v7996 = vadd.f32 %v7868, 1.0
  %v7997 = vadd.f32 %v7869, 1.0
  %v7998 = vadd.f32 %v7870, 1.0
  %v7999 = vadd.f32 %v7871, 1.0
  %v8000 = vadd.f32 %v7872, 1.0
  %v8001 = vadd.f32 %v7873, 1.0
  %v8002 = vadd.f32 %v7874, 1.0
  %v8003 = vadd.f32 %v7875, 1.0
  %v8004 = vadd.f32 %v7876, 1.0
  %v8005 = vadd.f32 %v7877, 1.0
  %v8006 = vadd.f32 %v7878, 1.0
  %v8007 = vadd.f32 %v7879, 1.0
  %v8008 = vadd.f32 %v7880, 1.0
  %v8009 = vadd.f32 %v7881, 1.0
  %v8010 = vadd.f32 %v7882, 1.0
  %v8011 = vadd.f32 %v7883, 1.0
  %v8012 = vadd.f32 %v7884, 1.0
  %v8013 = vadd.f32 %v7885, 1.0
  %v8014 = vadd.f32 %v7886, 1.0
  %v8015 = vadd.f32 %v7887, 1.0
  %v8016 = vadd.f32 %v7888, 1.0
  %v8017 = vadd.f32 %v7889, 1.0
  %v8018 = vadd.f32 %v7890, 1.0
  %v8019 = vadd.f32 %v7891, 1.0
  %v8020 = vadd.f32 %v7892, 1.0
  %v8021 = vadd.f32 %v7893, 1.0
  %v8022 = vadd.f32 %v7894, 1.0
  %v8023 = vadd.f32 %v7895, 1.0
  %v8024 = vmul.f32 %v7896, 0.5
  %v8025 = vmul.f32 %v7897, 0.5
  %v8026 = vmul.f32 %v7898, 0.5
  %v8027 = vmul.f32 %v7899, 0.5
  %v8028 = vmul.f32 %v7900, 0.5
  %v8029 = vmul.f32 %v7901, 0.5
  %v8030 = vmul.f32 %v7902, 0.5
  %v8031 = vmul.f32 %v7903, 0.5
  %v8032 = vmul.f32 %v7904, 0.5
  %v8033 = vmul.f32 %v7905, 0.5
  %v8034 = vmul.f32 %v7906, 0.5
  %v8035 = vmul.f32 %v7907, 0.5
  %v8036 = vmul.f32 %v7908, 0.5
  %v8037 = vmul.f32 %v7909, 0.5
  %v8038 = vmul.f32 %v7910, 0.5
  %v8039 = vmul.f32 %v7911, 0.5
  %v8040 = vmul.f32 %v7912, 0.5
  %v8041 = vmul.f32 %v7913, 0.5
  %v8042 = vmul.f32 %v7914, 0.5
  %v8043 = vmul.f32 %v7915, 0.5
  %v8044 = vmul.f32 %v7916, 0.5
  %v8045 = vmul.f32 %v7917, 0.5
  %v8046 = vmul.f32 %v7918, 0.5
  %v8047 = vmul.f32 %v7919, 0.5
  %v8048 = vmul.f32 %v7920, 0.5
  %v8049 = vmul.f32 %v7921, 0.5
  %v8050 = vmul.f32 %v7922, 0.5
  %v8051 = vmul.f32 %v7923, 0.5
  %v8052 = vmul.f32 %v7924, 0.5
  %v8053 = vmul.f32 %v7925, 0.5
  %v8054 = vmul.f32 %v7926, 0.5
  %v8055 = vmul.f32 %v7927, 0.5
  %v8056 = vmul.f32 %v7928, 0.5
  %v8057 = vmul.f32 %v7929, 0.5
  %v8058 = vmul.f32 %v7930, 0.5
  %v8059 = vmul.f32 %v7931, 0.5
  %v8060 = vmul.f32 %v7932, 0.5
  %v8061 = vmul.f32 %v7933, 0.5
  %v8062 = vmul.f32 %v7934, 0.5
  %v8063 = vmul.f32 %v7935, 0.5
  %v8064 = vmul.f32 %v7936, 0.5
  %v8065 = vmul.f32 %v7937, 0.5
  %v8066 = vmul.f32 %v7938, 0.5
  %v8067 = vmul.f32 %v7939, 0.5
  %v8068 = vmul.f32 %v7940, 0.5
  %v8069 = vmul.f32 %v7941, 0.5
  %v8070 = vmul.f32 %v7942, 0.5
  %v8071 = vmul.f32 %v7943, 0.5
  %v8072 = vmul.f32 %v7944, 0.5
  %v8073 = vmul.f32 %v7945, 0.5
  %v8074 = vmul.f32 %v7946, 0.5
  %v8075 = vmul.f32 %v7947, 0.5
  %v8076 = vmul.f32 %v7948, 0.5
  %v8077 = vmul.f32 %v7949, 0.5
  %v8078 = vmul.f32 %v7950, 0.5
  %v8079 = vmul.f32 %v7951, 0.5
  %v8080 = vmul.f32 %v7952, 0.5
  %v8081 = vmul.f32 %v7953, 0.5
  %v8082 = vmul.f32 %v7954, 0.5
  %v8083 = vmul.f32 %v7955, 0.5
  %v8084 = vmul.f32 %v7956, 0.5
  %v8085 = vmul.f32 %v7957, 0.5
  %v8086 = vmul.f32 %v7958, 0.5
  %v8087 = vmul.f32 %v7959, 0.5
  %v8088 = vmul.f32 %v7960, 0.5
  %v8089 = vmul.f32 %v7961, 0.5
  %v8090 = vmul.f32 %v7962, 0.5
  %v8091 = vmul.f32 %v7963, 0.5
  %v8092 = vmul.f32 %v7964, 0.5
  %v8093 = vmul.f32 %v7965, 0.5
  %v8094 = vmul.f32 %v7966, 0.5
  %v8095 = vmul.f32 %v7967, 0.5
  %v8096 = vmul.f32 %v7968, 0.5
  %v8097 = vmul.f32 %v7969, 0.5
  %v8098 = vmul.f32 %v7970, 0.5
  %v8099 = vmul.f32 %v7971, 0.5
  %v8100 = vmul.f32 %v7972, 0.5
  %v8101 = vmul.f32 %v7973, 0.5
  %v8102 = vmul.f32 %v7974, 0.5
  %v8103 = vmul.f32 %v7975, 0.5
  %v8104 = vmul.f32 %v7976, 0.5
  %v8105 = vmul.f32 %v7977, 0.5
  %v8106 = vmul.f32 %v7978, 0.5
  %v8107 = vmul.f32 %v7979, 0.5
  %v8108 = vmul.f32 %v7980, 0.5
  %v8109 = vmul.f32 %v7981, 0.5
  %v8110 = vmul.f32 %v7982, 0.5
  %v8111 = vmul.f32 %v7983, 0.5
  %v8112 = vmul.f32 %v7984, 0.5
  %v8113 = vmul.f32 %v7985, 0.5
  %v8114 = vmul.f32 %v7986, 0.5
  %v8115 = vmul.f32 %v7987, 0.5
  %v8116 = vmul.f32 %v7988, 0.5
  %v8117 = vmul.f32 %v7989, 0.5
  %v8118 = vmul.f32 %v7990, 0.5
  %v8119 = vmul.f32 %v7991, 0.5
  %v8120 = vmul.f32 %v7992, 0.5
  %v8121 = vmul.f32 %v7993, 0.5
  %v8122 = vmul.f32 %v7994, 0.5
  %v8123 = vmul.f32 %v7995, 0.5
  %v8124 = vmul.f32 %v7996, 0.5
  %v8125 = vmul.f32 %v7997, 0.5
  %v8126 = vmul.f32 %v7998, 0.5
  %v8127 = vmul.f32 %v7999, 0.5
  %v8128 = vmul.f32 %v8000, 0.5
  %v8129 = vmul.f32 %v8001, 0.5
  %v8130 = vmul.f32 %v8002, 0.5
  %v8131 = vmul.f32 %v8003, 0.5
  %v8132 = vmul.f32 %v8004, 0.5
  %v8133 = vmul.f32 %v8005, 0.5
  %v8134 = vmul.f32 %v8006, 0.5
  %v8135 = vmul.f32 %v8007, 0.5
  %v8136 = vmul.f32 %v8008, 0.5
  %v8137 = vmul.f32 %v8009, 0.5
  %v8138 = vmul.f32 %v8010, 0.5
  %v8139 = vmul.f32 %v8011, 0.5
  %v8140 = vmul.f32 %v8012, 0.5
  %v8141 = vmul.f32 %v8013, 0.5
  %v8142 = vmul.f32 %v8014, 0.5
  %v8143 = vmul.f32 %v8015, 0.5
  %v8144 = vmul.f32 %v8016, 0.5
  %v8145 = vmul.f32 %v8017, 0.5
  %v8146 = vmul.f32 %v8018, 0.5
  %v8147 = vmul.f32 %v8019, 0.5
  %v8148 = vmul.f32 %v8020, 0.5
  %v8149 = vmul.f32 %v8021, 0.5
  %v8150 = vmul.f32 %v8022, 0.5
  %v8151 = vmul.f32 %v8023, 0.5
  %v8152 = vmul.f32 %v6810, %v8024
  %v8153 = vmul.f32 %v6812, %v8025
  %v8154 = vmul.f32 %v6814, %v8026
  %v8155 = vmul.f32 %v6816, %v8027
  %v8156 = vmul.f32 %v6820, %v8028
  %v8157 = vmul.f32 %v6822, %v8029
  %v8158 = vmul.f32 %v6824, %v8030
  %v8159 = vmul.f32 %v6826, %v8031
  %v8160 = vmul.f32 %v6830, %v8032
  %v8161 = vmul.f32 %v6832, %v8033
  %v8162 = vmul.f32 %v6834, %v8034
  %v8163 = vmul.f32 %v6836, %v8035
  %v8164 = vmul.f32 %v6840, %v8036
  %v8165 = vmul.f32 %v6842, %v8037
  %v8166 = vmul.f32 %v6844, %v8038
  %v8167 = vmul.f32 %v6846, %v8039
  %v8168 = vmul.f32 %v6850, %v8040
  %v8169 = vmul.f32 %v6852, %v8041
  %v8170 = vmul.f32 %v6854, %v8042
  %v8171 = vmul.f32 %v6856, %v8043
  %v8172 = vmul.f32 %v6860, %v8044
  %v8173 = vmul.f32 %v6862, %v8045
  %v8174 = vmul.f32 %v6864, %v8046
  %v8175 = vmul.f32 %v6866, %v8047
  %v8176 = vmul.f32 %v6870, %v8048
  %v8177 = vmul.f32 %v6872, %v8049
  %v8178 = vmul.f32 %v6874, %v8050
  %v8179 = vmul.f32 %v6876, %v8051
  %v8180 = vmul.f32 %v6880, %v8052
  %v8181 = vmul.f32 %v6882, %v8053
  %v8182 = vmul.f32 %v6884, %v8054
  %v8183 = vmul.f32 %v6886, %v8055
  %v8184 = vmul.f32 %v6890, %v8056
  %v8185 = vmul.f32 %v6892, %v8057
  %v8186 = vmul.f32 %v6894, %v8058
  %v8187 = vmul.f32 %v6896, %v8059
  %v8188 = vmul.f32 %v6900, %v8060
  %v8189 = vmul.f32 %v6902, %v8061
  %v8190 = vmul.f32 %v6904, %v8062
  %v8191 = vmul.f32 %v6906, %v8063
  %v8192 = vmul.f32 %v6910, %v8064
  %v8193 = vmul.f32 %v6912, %v8065
  %v8194 = vmul.f32 %v6914, %v8066
  %v8195 = vmul.f32 %v6916, %v8067
  %v8196 = vmul.f32 %v6920, %v8068
  %v8197 = vmul.f32 %v6922, %v8069
  %v8198 = vmul.f32 %v6924, %v8070
  %v8199 = vmul.f32 %v6926, %v8071
  %v8200 = vmul.f32 %v6930, %v8072
  %v8201 = vmul.f32 %v6932, %v8073
  %v8202 = vmul.f32 %v6934, %v8074
  %v8203 = vmul.f32 %v6936, %v8075
  %v8204 = vmul.f32 %v6940, %v8076
  %v8205 = vmul.f32 %v6942, %v8077
  %v8206 = vmul.f32 %v6944, %v8078
  %v8207 = vmul.f32 %v6946, %v8079
  %v8208 = vmul.f32 %v6950, %v8080
  %v8209 = vmul.f32 %v6952, %v8081
  %v8210 = vmul.f32 %v6954, %v8082
  %v8211 = vmul.f32 %v6956, %v8083
  %v8212 = vmul.f32 %v6960, %v8084
  %v8213 = vmul.f32 %v6962, %v8085
  %v8214 = vmul.f32 %v6964, %v8086
  %v8215 = vmul.f32 %v6966, %v8087
  %v8216 = vmul.f32 %v6970, %v8088
  %v8217 = vmul.f32 %v6972, %v8089
  %v8218 = vmul.f32 %v6974, %v8090
  %v8219 = vmul.f32 %v6976, %v8091
  %v8220 = vmul.f32 %v6980, %v8092
  %v8221 = vmul.f32 %v6982, %v8093
  %v8222 = vmul.f32 %v6984, %v8094
  %v8223 = vmul.f32 %v6986, %v8095
  %v8224 = vmul.f32 %v6990, %v8096
  %v8225 = vmul.f32 %v6992, %v8097
  %v8226 = vmul.f32 %v6994, %v8098
  %v8227 = vmul.f32 %v6996, %v8099
  %v8228 = vmul.f32 %v7000, %v8100
  %v8229 = vmul.f32 %v7002, %v8101
  %v8230 = vmul.f32 %v7004, %v8102
  %v8231 = vmul.f32 %v7006, %v8103
  %v8232 = vmul.f32 %v7010, %v8104
  %v8233 = vmul.f32 %v7012, %v8105
  %v8234 = vmul.f32 %v7014, %v8106
  %v8235 = vmul.f32 %v7016, %v8107
  %v8236 = vmul.f32 %v7020, %v8108
  %v8237 = vmul.f32 %v7022, %v8109
  %v8238 = vmul.f32 %v7024, %v8110
  %v8239 = vmul.f32 %v7026, %v8111
  %v8240 = vmul.f32 %v7030, %v8112
  %v8241 = vmul.f32 %v7032, %v8113
  %v8242 = vmul.f32 %v7034, %v8114
  %v8243 = vmul.f32 %v7036, %v8115
  %v8244 = vmul.f32 %v7040, %v8116
  %v8245 = vmul.f32 %v7042, %v8117
  %v8246 = vmul.f32 %v7044, %v8118
  %v8247 = vmul.f32 %v7046, %v8119
  %v8248 = vmul.f32 %v7050, %v8120
  %v8249 = vmul.f32 %v7052, %v8121
  %v8250 = vmul.f32 %v7054, %v8122
  %v8251 = vmul.f32 %v7056, %v8123
  %v8252 = vmul.f32 %v7060, %v8124
  %v8253 = vmul.f32 %v7062, %v8125
  %v8254 = vmul.f32 %v7064, %v8126
  %v8255 = vmul.f32 %v7066, %v8127
  %v8256 = vmul.f32 %v7070, %v8128
  %v8257 = vmul.f32 %v7072, %v8129
  %v8258 = vmul.f32 %v7074, %v8130
  %v8259 = vmul.f32 %v7076, %v8131
  %v8260 = vmul.f32 %v7080, %v8132
  %v8261 = vmul.f32 %v7082, %v8133
  %v8262 = vmul.f32 %v7084, %v8134
  %v8263 = vmul.f32 %v7086, %v8135
  %v8264 = vmul.f32 %v7090, %v8136
  %v8265 = vmul.f32 %v7092, %v8137
  %v8266 = vmul.f32 %v7094, %v8138
  %v8267 = vmul.f32 %v7096, %v8139
  %v8268 = vmul.f32 %v7100, %v8140
  %v8269 = vmul.f32 %v7102, %v8141
  %v8270 = vmul.f32 %v7104, %v8142
  %v8271 = vmul.f32 %v7106, %v8143
  %v8272 = vmul.f32 %v7110, %v8144
  %v8273 = vmul.f32 %v7112, %v8145
  %v8274 = vmul.f32 %v7114, %v8146
  %v8275 = vmul.f32 %v7116, %v8147
  %v8276 = vmul.f32 %v7120, %v8148
  %v8277 = vmul.f32 %v7122, %v8149
  %v8278 = vmul.f32 %v7124, %v8150
  %v8279 = vmul.f32 %v7126, %v8151
  %v8280 = vld [vmem:[%s9] sm:$0xf]
  %v8281 = vld [vmem:[%s9 + $0x4] sm:$0xf]
  %v8282 = vld [vmem:[%s9 + $0x8] sm:$0xf]
  %v8283 = vld [vmem:[%s9 + $0xc] sm:$0xf]
  %v8284 = vld [vmem:[%s9 + $0x10] sm:$0xf]
  %v8285 = vld [vmem:[%s9 + $0x14] sm:$0xf]
  %v8286 = vld [vmem:[%s9 + $0x18] sm:$0xf]
  %v8287 = vld [vmem:[%s9 + $0x1c] sm:$0xf]
  %v8288 = vld [vmem:[%s9 + $0x20] sm:$0xf]
  %v8289 = vld [vmem:[%s9 + $0x24] sm:$0xf]
  %v8290 = vld [vmem:[%s9 + $0x28] sm:$0xf]
  %v8291 = vld [vmem:[%s9 + $0x2c] sm:$0xf]
  %v8292 = vld [vmem:[%s9 + $0x30] sm:$0xf]
  %v8293 = vld [vmem:[%s9 + $0x34] sm:$0xf]
  %v8294 = vld [vmem:[%s9 + $0x38] sm:$0xf]
  %v8295 = vld [vmem:[%s9 + $0x3c] sm:$0xf]
  %v8296 = vld [vmem:[%s9 + $0x40] sm:$0xf]
  %v8297 = vld [vmem:[%s9 + $0x44] sm:$0xf]
  %v8298 = vld [vmem:[%s9 + $0x48] sm:$0xf]
  %v8299 = vld [vmem:[%s9 + $0x4c] sm:$0xf]
  %v8300 = vld [vmem:[%s9 + $0x50] sm:$0xf]
  %v8301 = vld [vmem:[%s9 + $0x54] sm:$0xf]
  %v8302 = vld [vmem:[%s9 + $0x58] sm:$0xf]
  %v8303 = vld [vmem:[%s9 + $0x5c] sm:$0xf]
  %v8304 = vld [vmem:[%s9 + $0x60] sm:$0xf]
  %v8305 = vld [vmem:[%s9 + $0x64] sm:$0xf]
  %v8306 = vld [vmem:[%s9 + $0x68] sm:$0xf]
  %v8307 = vld [vmem:[%s9 + $0x6c] sm:$0xf]
  %v8308 = vld [vmem:[%s9 + $0x70] sm:$0xf]
  %v8309 = vld [vmem:[%s9 + $0x74] sm:$0xf]
  %v8310 = vld [vmem:[%s9 + $0x78] sm:$0xf]
  %v8311 = vld [vmem:[%s9 + $0x7c] sm:$0xf]
  %v8312 = vpack.c.bf16 %v8154, %v8152
  %v8313 = vpack.c.bf16 %v8155, %v8153
  %v8314 = vpack.c.bf16 %v8158, %v8156
  %v8315 = vpack.c.bf16 %v8159, %v8157
  %v8316 = vpack.c.bf16 %v8162, %v8160
  %v8317 = vpack.c.bf16 %v8163, %v8161
  %v8318 = vpack.c.bf16 %v8166, %v8164
  %v8319 = vpack.c.bf16 %v8167, %v8165
  %v8320 = vpack.c.bf16 %v8170, %v8168
  %v8321 = vpack.c.bf16 %v8171, %v8169
  %v8322 = vpack.c.bf16 %v8174, %v8172
  %v8323 = vpack.c.bf16 %v8175, %v8173
  %v8324 = vpack.c.bf16 %v8178, %v8176
  %v8325 = vpack.c.bf16 %v8179, %v8177
  %v8326 = vpack.c.bf16 %v8182, %v8180
  %v8327 = vpack.c.bf16 %v8183, %v8181
  %v8328 = vpack.c.bf16 %v8186, %v8184
  %v8329 = vpack.c.bf16 %v8187, %v8185
  %v8330 = vpack.c.bf16 %v8190, %v8188
  %v8331 = vpack.c.bf16 %v8191, %v8189
  %v8332 = vpack.c.bf16 %v8194, %v8192
  %v8333 = vpack.c.bf16 %v8195, %v8193
  %v8334 = vpack.c.bf16 %v8198, %v8196
  %v8335 = vpack.c.bf16 %v8199, %v8197
  %v8336 = vpack.c.bf16 %v8202, %v8200
  %v8337 = vpack.c.bf16 %v8203, %v8201
  %v8338 = vpack.c.bf16 %v8206, %v8204
  %v8339 = vpack.c.bf16 %v8207, %v8205
  %v8340 = vpack.c.bf16 %v8210, %v8208
  %v8341 = vpack.c.bf16 %v8211, %v8209
  %v8342 = vpack.c.bf16 %v8214, %v8212
  %v8343 = vpack.c.bf16 %v8215, %v8213
  %v8344 = vpack.c.bf16 %v8218, %v8216
  %v8345 = vpack.c.bf16 %v8219, %v8217
  %v8346 = vpack.c.bf16 %v8222, %v8220
  %v8347 = vpack.c.bf16 %v8223, %v8221
  %v8348 = vpack.c.bf16 %v8226, %v8224
  %v8349 = vpack.c.bf16 %v8227, %v8225
  %v8350 = vpack.c.bf16 %v8230, %v8228
  %v8351 = vpack.c.bf16 %v8231, %v8229
  %v8352 = vpack.c.bf16 %v8234, %v8232
  %v8353 = vpack.c.bf16 %v8235, %v8233
  %v8354 = vpack.c.bf16 %v8238, %v8236
  %v8355 = vpack.c.bf16 %v8239, %v8237
  %v8356 = vpack.c.bf16 %v8242, %v8240
  %v8357 = vpack.c.bf16 %v8243, %v8241
  %v8358 = vpack.c.bf16 %v8246, %v8244
  %v8359 = vpack.c.bf16 %v8247, %v8245
  %v8360 = vpack.c.bf16 %v8250, %v8248
  %v8361 = vpack.c.bf16 %v8251, %v8249
  %v8362 = vpack.c.bf16 %v8254, %v8252
  %v8363 = vpack.c.bf16 %v8255, %v8253
  %v8364 = vpack.c.bf16 %v8258, %v8256
  %v8365 = vpack.c.bf16 %v8259, %v8257
  %v8366 = vpack.c.bf16 %v8262, %v8260
  %v8367 = vpack.c.bf16 %v8263, %v8261
  %v8368 = vpack.c.bf16 %v8266, %v8264
  %v8369 = vpack.c.bf16 %v8267, %v8265
  %v8370 = vpack.c.bf16 %v8270, %v8268
  %v8371 = vpack.c.bf16 %v8271, %v8269
  %v8372 = vpack.c.bf16 %v8274, %v8272
  %v8373 = vpack.c.bf16 %v8275, %v8273
  %v8374 = vpack.c.bf16 %v8278, %v8276
  %v8375 = vpack.c.bf16 %v8279, %v8277
  %v8408 = vunpack.c.l.b16 %v8280
  %v8409 = vunpack.c.l.b16 %v8281
  %v8410 = vunpack.c.l.b16 %v8282
  %v8411 = vunpack.c.l.b16 %v8283
  %v8412 = vunpack.c.l.b16 %v8284
  %v8413 = vunpack.c.l.b16 %v8285
  %v8414 = vunpack.c.l.b16 %v8286
  %v8415 = vunpack.c.l.b16 %v8287
  %v8416 = vunpack.c.l.b16 %v8288
  %v8417 = vunpack.c.l.b16 %v8289
  %v8418 = vunpack.c.l.b16 %v8290
  %v8419 = vunpack.c.l.b16 %v8291
  %v8420 = vunpack.c.l.b16 %v8292
  %v8421 = vunpack.c.l.b16 %v8293
  %v8422 = vunpack.c.l.b16 %v8294
  %v8423 = vunpack.c.l.b16 %v8295
  %v8424 = vunpack.c.l.b16 %v8296
  %v8425 = vunpack.c.l.b16 %v8297
  %v8426 = vunpack.c.l.b16 %v8298
  %v8427 = vunpack.c.l.b16 %v8299
  %v8428 = vunpack.c.l.b16 %v8300
  %v8429 = vunpack.c.l.b16 %v8301
  %v8430 = vunpack.c.l.b16 %v8302
  %v8431 = vunpack.c.l.b16 %v8303
  %v8432 = vunpack.c.l.b16 %v8304
  %v8433 = vunpack.c.l.b16 %v8305
  %v8434 = vunpack.c.l.b16 %v8306
  %v8435 = vunpack.c.l.b16 %v8307
  %v8436 = vunpack.c.l.b16 %v8308
  %v8437 = vunpack.c.l.b16 %v8309
  %v8438 = vunpack.c.l.b16 %v8310
  %v8439 = vunpack.c.l.b16 %v8311
  %v8440 = vpack.c.b16 %v8409, %v8408
  %v8441 = vpack.c.b16 %v8411, %v8410
  %v8442 = vpack.c.b16 %v8413, %v8412
  %v8443 = vpack.c.b16 %v8415, %v8414
  %v8444 = vpack.c.b16 %v8417, %v8416
  %v8445 = vpack.c.b16 %v8419, %v8418
  %v8446 = vpack.c.b16 %v8421, %v8420
  %v8447 = vpack.c.b16 %v8423, %v8422
  %v8448 = vpack.c.b16 %v8425, %v8424
  %v8449 = vpack.c.b16 %v8427, %v8426
  %v8450 = vpack.c.b16 %v8429, %v8428
  %v8451 = vpack.c.b16 %v8431, %v8430
  %v8452 = vpack.c.b16 %v8433, %v8432
  %v8453 = vpack.c.b16 %v8435, %v8434
  %v8454 = vpack.c.b16 %v8437, %v8436
  %v8455 = vpack.c.b16 %v8439, %v8438
  %8472 = vmatprep.subr.bf16.mxu0 0
  %8473 = vmatpush1.bf16.msra.mxu0 %v8447
  %8474 = vmatprep.subr.bf16.mxu0 0
  %8475 = vmatpush1.bf16.msra.mxu0 %v8446
  %8476 = vmatprep.subr.bf16.mxu0 0
  %8477 = vmatpush1.bf16.msra.mxu0 %v8445
  %8478 = vmatprep.subr.bf16.mxu0 0
  %8479 = vmatpush1.bf16.msra.mxu0 %v8444
  %8480 = vmatprep.subr.bf16.mxu0 0
  %8481 = vmatpush1.bf16.msra.mxu0 %v8443
  %8482 = vmatprep.subr.bf16.mxu0 0
  %8483 = vmatpush1.bf16.msra.mxu0 %v8442
  %8484 = vmatprep.subr.bf16.mxu0 0
  %8485 = vmatpush1.bf16.msra.mxu0 %v8441
  %8486 = vmatprep.subr.bf16.mxu0 0
  %8487 = vmatpush1.bf16.msra.mxu0 %v8440
  %8488 = vmatprep.subr.bf16.mxu0 0
  %8489 = vmatpush2.bf16.msra.mxu0 %v8455
  %8490 = vmatprep.subr.bf16.mxu0 0
  %8491 = vmatpush2.bf16.msra.mxu0 %v8454
  %8492 = vmatprep.subr.bf16.mxu0 0
  %8493 = vmatpush2.bf16.msra.mxu0 %v8453
  %8494 = vmatprep.subr.bf16.mxu0 0
  %8495 = vmatpush2.bf16.msra.mxu0 %v8452
  %8496 = vmatprep.subr.bf16.mxu0 0
  %8497 = vmatpush2.bf16.msra.mxu0 %v8451
  %8498 = vmatprep.subr.bf16.mxu0 0
  %8499 = vmatpush2.bf16.msra.mxu0 %v8450
  %8500 = vmatprep.subr.bf16.mxu0 0
  %8501 = vmatpush2.bf16.msra.mxu0 %v8449
  %8502 = vmatprep.subr.bf16.mxu0 0
  %8503 = vmatpush2.bf16.msra.mxu0 %v8448
  %8504 = vmatprep.mubr.bf16.mxu0 %v8313
  %8505 = vmatmul.mubr.bf16.gmra.mxu0 %v8312
  %v8506 = vpop.f32.mrf.mxu0
  %v8507 = vadd.f32 0.0, %v8506
  %v8508 = vpop.f32.mrf.mxu0
  %v8509 = vpop.f32.mrf.mxu0
  %v8510 = vadd.f32 0.0, %v8509
  %v8511 = vpop.f32.mrf.mxu0
  %8512 = vmatprep.mubr.bf16.mxu0 %v8315
  %8513 = vmatmul.mubr.bf16.gmra.mxu0 %v8314
  %v8514 = vpop.f32.mrf.mxu0
  %v8515 = vadd.f32 0.0, %v8514
  %v8516 = vpop.f32.mrf.mxu0
  %v8517 = vpop.f32.mrf.mxu0
  %v8518 = vadd.f32 0.0, %v8517
  %v8519 = vpop.f32.mrf.mxu0
  %8520 = vmatprep.mubr.bf16.mxu0 %v8317
  %8521 = vmatmul.mubr.bf16.gmra.mxu0 %v8316
  %v8522 = vpop.f32.mrf.mxu0
  %v8523 = vadd.f32 0.0, %v8522
  %v8524 = vpop.f32.mrf.mxu0
  %v8525 = vpop.f32.mrf.mxu0
  %v8526 = vadd.f32 0.0, %v8525
  %v8527 = vpop.f32.mrf.mxu0
  %8528 = vmatprep.mubr.bf16.mxu0 %v8319
  %8529 = vmatmul.mubr.bf16.gmra.mxu0 %v8318
  %v8530 = vpop.f32.mrf.mxu0
  %v8531 = vadd.f32 0.0, %v8530
  %v8532 = vpop.f32.mrf.mxu0
  %v8533 = vpop.f32.mrf.mxu0
  %v8534 = vadd.f32 0.0, %v8533
  %v8535 = vpop.f32.mrf.mxu0
  %8536 = vmatprep.mubr.bf16.mxu0 %v8321
  %8537 = vmatmul.mubr.bf16.gmra.mxu0 %v8320
  %v8538 = vpop.f32.mrf.mxu0
  %v8539 = vadd.f32 0.0, %v8538
  %v8540 = vpop.f32.mrf.mxu0
  %v8541 = vpop.f32.mrf.mxu0
  %v8542 = vadd.f32 0.0, %v8541
  %v8543 = vpop.f32.mrf.mxu0
  %8544 = vmatprep.mubr.bf16.mxu0 %v8323
  %8545 = vmatmul.mubr.bf16.gmra.mxu0 %v8322
  %v8546 = vpop.f32.mrf.mxu0
  %v8547 = vadd.f32 0.0, %v8546
  %v8548 = vpop.f32.mrf.mxu0
  %v8549 = vpop.f32.mrf.mxu0
  %v8550 = vadd.f32 0.0, %v8549
  %v8551 = vpop.f32.mrf.mxu0
  %8552 = vmatprep.mubr.bf16.mxu0 %v8325
  %8553 = vmatmul.mubr.bf16.gmra.mxu0 %v8324
  %v8554 = vpop.f32.mrf.mxu0
  %v8555 = vadd.f32 0.0, %v8554
  %v8556 = vpop.f32.mrf.mxu0
  %v8557 = vpop.f32.mrf.mxu0
  %v8558 = vadd.f32 0.0, %v8557
  %v8559 = vpop.f32.mrf.mxu0
  %8560 = vmatprep.mubr.bf16.mxu0 %v8327
  %8561 = vmatmul.mubr.bf16.gmra.mxu0 %v8326
  %v8562 = vpop.f32.mrf.mxu0
  %v8563 = vadd.f32 0.0, %v8562
  %v8564 = vpop.f32.mrf.mxu0
  %v8565 = vpop.f32.mrf.mxu0
  %v8566 = vadd.f32 0.0, %v8565
  %v8567 = vpop.f32.mrf.mxu0
  %8568 = vmatprep.mubr.bf16.mxu0 %v8329
  %8569 = vmatmul.mubr.bf16.gmra.mxu0 %v8328
  %v8570 = vpop.f32.mrf.mxu0
  %v8571 = vadd.f32 0.0, %v8570
  %v8572 = vpop.f32.mrf.mxu0
  %v8573 = vpop.f32.mrf.mxu0
  %v8574 = vadd.f32 0.0, %v8573
  %v8575 = vpop.f32.mrf.mxu0
  %8576 = vmatprep.mubr.bf16.mxu0 %v8331
  %8577 = vmatmul.mubr.bf16.gmra.mxu0 %v8330
  %v8578 = vpop.f32.mrf.mxu0
  %v8579 = vadd.f32 0.0, %v8578
  %v8580 = vpop.f32.mrf.mxu0
  %v8581 = vpop.f32.mrf.mxu0
  %v8582 = vadd.f32 0.0, %v8581
  %v8583 = vpop.f32.mrf.mxu0
  %8584 = vmatprep.mubr.bf16.mxu0 %v8333
  %8585 = vmatmul.mubr.bf16.gmra.mxu0 %v8332
  %v8586 = vpop.f32.mrf.mxu0
  %v8587 = vadd.f32 0.0, %v8586
  %v8588 = vpop.f32.mrf.mxu0
  %v8589 = vpop.f32.mrf.mxu0
  %v8590 = vadd.f32 0.0, %v8589
  %v8591 = vpop.f32.mrf.mxu0
  %8592 = vmatprep.mubr.bf16.mxu0 %v8335
  %8593 = vmatmul.mubr.bf16.gmra.mxu0 %v8334
  %v8594 = vpop.f32.mrf.mxu0
  %v8595 = vadd.f32 0.0, %v8594
  %v8596 = vpop.f32.mrf.mxu0
  %v8597 = vpop.f32.mrf.mxu0
  %v8598 = vadd.f32 0.0, %v8597
  %v8599 = vpop.f32.mrf.mxu0
  %8600 = vmatprep.mubr.bf16.mxu0 %v8337
  %8601 = vmatmul.mubr.bf16.gmra.mxu0 %v8336
  %v8602 = vpop.f32.mrf.mxu0
  %v8603 = vadd.f32 0.0, %v8602
  %v8604 = vpop.f32.mrf.mxu0
  %v8605 = vpop.f32.mrf.mxu0
  %v8606 = vadd.f32 0.0, %v8605
  %v8607 = vpop.f32.mrf.mxu0
  %8608 = vmatprep.mubr.bf16.mxu0 %v8339
  %8609 = vmatmul.mubr.bf16.gmra.mxu0 %v8338
  %v8610 = vpop.f32.mrf.mxu0
  %v8611 = vadd.f32 0.0, %v8610
  %v8612 = vpop.f32.mrf.mxu0
  %v8613 = vpop.f32.mrf.mxu0
  %v8614 = vadd.f32 0.0, %v8613
  %v8615 = vpop.f32.mrf.mxu0
  %8616 = vmatprep.mubr.bf16.mxu0 %v8341
  %8617 = vmatmul.mubr.bf16.gmra.mxu0 %v8340
  %v8618 = vpop.f32.mrf.mxu0
  %v8619 = vadd.f32 0.0, %v8618
  %v8620 = vpop.f32.mrf.mxu0
  %v8621 = vpop.f32.mrf.mxu0
  %v8622 = vadd.f32 0.0, %v8621
  %v8623 = vpop.f32.mrf.mxu0
  %8624 = vmatprep.mubr.bf16.mxu0 %v8343
  %8625 = vmatmul.mubr.bf16.gmra.mxu0 %v8342
  %v8626 = vpop.f32.mrf.mxu0
  %v8627 = vadd.f32 0.0, %v8626
  %v8628 = vpop.f32.mrf.mxu0
  %v8629 = vpop.f32.mrf.mxu0
  %v8630 = vadd.f32 0.0, %v8629
  %v8631 = vpop.f32.mrf.mxu0
  %8632 = vmatprep.mubr.bf16.mxu0 %v8345
  %8633 = vmatmul.mubr.bf16.gmra.mxu0 %v8344
  %v8634 = vpop.f32.mrf.mxu0
  %v8635 = vadd.f32 0.0, %v8634
  %v8636 = vpop.f32.mrf.mxu0
  %v8637 = vpop.f32.mrf.mxu0
  %v8638 = vadd.f32 0.0, %v8637
  %v8639 = vpop.f32.mrf.mxu0
  %8640 = vmatprep.mubr.bf16.mxu0 %v8347
  %8641 = vmatmul.mubr.bf16.gmra.mxu0 %v8346
  %v8642 = vpop.f32.mrf.mxu0
  %v8643 = vadd.f32 0.0, %v8642
  %v8644 = vpop.f32.mrf.mxu0
  %v8645 = vpop.f32.mrf.mxu0
  %v8646 = vadd.f32 0.0, %v8645
  %v8647 = vpop.f32.mrf.mxu0
  %8648 = vmatprep.mubr.bf16.mxu0 %v8349
  %8649 = vmatmul.mubr.bf16.gmra.mxu0 %v8348
  %v8650 = vpop.f32.mrf.mxu0
  %v8651 = vadd.f32 0.0, %v8650
  %v8652 = vpop.f32.mrf.mxu0
  %v8653 = vpop.f32.mrf.mxu0
  %v8654 = vadd.f32 0.0, %v8653
  %v8655 = vpop.f32.mrf.mxu0
  %8656 = vmatprep.mubr.bf16.mxu0 %v8351
  %8657 = vmatmul.mubr.bf16.gmra.mxu0 %v8350
  %v8658 = vpop.f32.mrf.mxu0
  %v8659 = vadd.f32 0.0, %v8658
  %v8660 = vpop.f32.mrf.mxu0
  %v8661 = vpop.f32.mrf.mxu0
  %v8662 = vadd.f32 0.0, %v8661
  %v8663 = vpop.f32.mrf.mxu0
  %8664 = vmatprep.mubr.bf16.mxu0 %v8353
  %8665 = vmatmul.mubr.bf16.gmra.mxu0 %v8352
  %v8666 = vpop.f32.mrf.mxu0
  %v8667 = vadd.f32 0.0, %v8666
  %v8668 = vpop.f32.mrf.mxu0
  %v8669 = vpop.f32.mrf.mxu0
  %v8670 = vadd.f32 0.0, %v8669
  %v8671 = vpop.f32.mrf.mxu0
  %8672 = vmatprep.mubr.bf16.mxu0 %v8355
  %8673 = vmatmul.mubr.bf16.gmra.mxu0 %v8354
  %v8674 = vpop.f32.mrf.mxu0
  %v8675 = vadd.f32 0.0, %v8674
  %v8676 = vpop.f32.mrf.mxu0
  %v8677 = vpop.f32.mrf.mxu0
  %v8678 = vadd.f32 0.0, %v8677
  %v8679 = vpop.f32.mrf.mxu0
  %8680 = vmatprep.mubr.bf16.mxu0 %v8357
  %8681 = vmatmul.mubr.bf16.gmra.mxu0 %v8356
  %v8682 = vpop.f32.mrf.mxu0
  %v8683 = vadd.f32 0.0, %v8682
  %v8684 = vpop.f32.mrf.mxu0
  %v8685 = vpop.f32.mrf.mxu0
  %v8686 = vadd.f32 0.0, %v8685
  %v8687 = vpop.f32.mrf.mxu0
  %8688 = vmatprep.mubr.bf16.mxu0 %v8359
  %8689 = vmatmul.mubr.bf16.gmra.mxu0 %v8358
  %v8690 = vpop.f32.mrf.mxu0
  %v8691 = vadd.f32 0.0, %v8690
  %v8692 = vpop.f32.mrf.mxu0
  %v8693 = vpop.f32.mrf.mxu0
  %v8694 = vadd.f32 0.0, %v8693
  %v8695 = vpop.f32.mrf.mxu0
  %8696 = vmatprep.mubr.bf16.mxu0 %v8361
  %8697 = vmatmul.mubr.bf16.gmra.mxu0 %v8360
  %v8698 = vpop.f32.mrf.mxu0
  %v8699 = vadd.f32 0.0, %v8698
  %v8700 = vpop.f32.mrf.mxu0
  %v8701 = vpop.f32.mrf.mxu0
  %v8702 = vadd.f32 0.0, %v8701
  %v8703 = vpop.f32.mrf.mxu0
  %8704 = vmatprep.mubr.bf16.mxu0 %v8363
  %8705 = vmatmul.mubr.bf16.gmra.mxu0 %v8362
  %v8706 = vpop.f32.mrf.mxu0
  %v8707 = vadd.f32 0.0, %v8706
  %v8708 = vpop.f32.mrf.mxu0
  %v8709 = vpop.f32.mrf.mxu0
  %v8710 = vadd.f32 0.0, %v8709
  %v8711 = vpop.f32.mrf.mxu0
  %8712 = vmatprep.mubr.bf16.mxu0 %v8365
  %8713 = vmatmul.mubr.bf16.gmra.mxu0 %v8364
  %v8714 = vpop.f32.mrf.mxu0
  %v8715 = vadd.f32 0.0, %v8714
  %v8716 = vpop.f32.mrf.mxu0
  %v8717 = vpop.f32.mrf.mxu0
  %v8718 = vadd.f32 0.0, %v8717
  %v8719 = vpop.f32.mrf.mxu0
  %8720 = vmatprep.mubr.bf16.mxu0 %v8367
  %8721 = vmatmul.mubr.bf16.gmra.mxu0 %v8366
  %v8722 = vpop.f32.mrf.mxu0
  %v8723 = vadd.f32 0.0, %v8722
  %v8724 = vpop.f32.mrf.mxu0
  %v8725 = vpop.f32.mrf.mxu0
  %v8726 = vadd.f32 0.0, %v8725
  %v8727 = vpop.f32.mrf.mxu0
  %8728 = vmatprep.mubr.bf16.mxu0 %v8369
  %8729 = vmatmul.mubr.bf16.gmra.mxu0 %v8368
  %v8730 = vpop.f32.mrf.mxu0
  %v8731 = vadd.f32 0.0, %v8730
  %v8732 = vpop.f32.mrf.mxu0
  %v8733 = vpop.f32.mrf.mxu0
  %v8734 = vadd.f32 0.0, %v8733
  %v8735 = vpop.f32.mrf.mxu0
  %8736 = vmatprep.mubr.bf16.mxu0 %v8371
  %8737 = vmatmul.mubr.bf16.gmra.mxu0 %v8370
  %v8738 = vpop.f32.mrf.mxu0
  %v8739 = vadd.f32 0.0, %v8738
  %v8740 = vpop.f32.mrf.mxu0
  %v8741 = vpop.f32.mrf.mxu0
  %v8742 = vadd.f32 0.0, %v8741
  %v8743 = vpop.f32.mrf.mxu0
  %8744 = vmatprep.mubr.bf16.mxu0 %v8373
  %8745 = vmatmul.mubr.bf16.gmra.mxu0 %v8372
  %v8746 = vpop.f32.mrf.mxu0
  %v8747 = vadd.f32 0.0, %v8746
  %v8748 = vpop.f32.mrf.mxu0
  %v8749 = vpop.f32.mrf.mxu0
  %v8750 = vadd.f32 0.0, %v8749
  %v8751 = vpop.f32.mrf.mxu0
  %8752 = vmatprep.mubr.bf16.mxu0 %v8375
  %8753 = vmatmul.mubr.bf16.gmra.mxu0 %v8374
  %v8754 = vpop.f32.mrf.mxu0
  %v8755 = vadd.f32 0.0, %v8754
  %v8756 = vpop.f32.mrf.mxu0
  %v8757 = vpop.f32.mrf.mxu0
  %v8758 = vadd.f32 0.0, %v8757
  %v8759 = vpop.f32.mrf.mxu0
  %8760 = vdwg.mxu0
  %v8761 = vadd.f32 %v5867, %v8507
  %v8762 = vadd.f32 %v5868, %v8510
  %v8763 = vadd.f32 %v5869, %v8515
  %v8764 = vadd.f32 %v5870, %v8518
  %v8765 = vadd.f32 %v5871, %v8523
  %v8766 = vadd.f32 %v5872, %v8526
  %v8767 = vadd.f32 %v5873, %v8531
  %v8768 = vadd.f32 %v5874, %v8534
  %v8769 = vadd.f32 %v5875, %v8539
  %v8770 = vadd.f32 %v5876, %v8542
  %v8771 = vadd.f32 %v5877, %v8547
  %v8772 = vadd.f32 %v5878, %v8550
  %v8773 = vadd.f32 %v5879, %v8555
  %v8774 = vadd.f32 %v5880, %v8558
  %v8775 = vadd.f32 %v5881, %v8563
  %v8776 = vadd.f32 %v5882, %v8566
  %v8777 = vadd.f32 %v5883, %v8571
  %v8778 = vadd.f32 %v5884, %v8574
  %v8779 = vadd.f32 %v5885, %v8579
  %v8780 = vadd.f32 %v5886, %v8582
  %v8781 = vadd.f32 %v5887, %v8587
  %v8782 = vadd.f32 %v5888, %v8590
  %v8783 = vadd.f32 %v5889, %v8595
  %v8784 = vadd.f32 %v5890, %v8598
  %v8785 = vadd.f32 %v5891, %v8603
  %v8786 = vadd.f32 %v5892, %v8606
  %v8787 = vadd.f32 %v5893, %v8611
  %v8788 = vadd.f32 %v5894, %v8614
  %v8789 = vadd.f32 %v5895, %v8619
  %v8790 = vadd.f32 %v5896, %v8622
  %v8791 = vadd.f32 %v5897, %v8627
  %v8792 = vadd.f32 %v5898, %v8630
  %v8793 = vadd.f32 %v5899, %v8635
  %v8794 = vadd.f32 %v5900, %v8638
  %v8795 = vadd.f32 %v5901, %v8643
  %v8796 = vadd.f32 %v5902, %v8646
  %v8797 = vadd.f32 %v5903, %v8651
  %v8798 = vadd.f32 %v5904, %v8654
  %v8799 = vadd.f32 %v5905, %v8659
  %v8800 = vadd.f32 %v5906, %v8662
  %v8801 = vadd.f32 %v5907, %v8667
  %v8802 = vadd.f32 %v5908, %v8670
  %v8803 = vadd.f32 %v5909, %v8675
  %v8804 = vadd.f32 %v5910, %v8678
  %v8805 = vadd.f32 %v5911, %v8683
  %v8806 = vadd.f32 %v5912, %v8686
  %v8807 = vadd.f32 %v5913, %v8691
  %v8808 = vadd.f32 %v5914, %v8694
  %v8809 = vadd.f32 %v5915, %v8699
  %v8810 = vadd.f32 %v5916, %v8702
  %v8811 = vadd.f32 %v5917, %v8707
  %v8812 = vadd.f32 %v5918, %v8710
  %v8813 = vadd.f32 %v5919, %v8715
  %v8814 = vadd.f32 %v5920, %v8718
  %v8815 = vadd.f32 %v5921, %v8723
  %v8816 = vadd.f32 %v5922, %v8726
  %v8817 = vadd.f32 %v5923, %v8731
  %v8818 = vadd.f32 %v5924, %v8734
  %v8819 = vadd.f32 %v5925, %v8739
  %v8820 = vadd.f32 %v5926, %v8742
  %v8821 = vadd.f32 %v5927, %v8747
  %v8822 = vadd.f32 %v5928, %v8750
  %v8823 = vadd.f32 %v5929, %v8755
  %v8824 = vadd.f32 %v5930, %v8758
  %v8825 = vld [vmem:[%s10] sm:$0x1]
  %v8827 = vlaneseq
  %v8828 = vshrl.u32 %v8827, 7
  %v8829 = vsub.s32 0, %v8828
  %v8830 = vrot.slane %v8825, %v8829
  %v8832 = vadd.f32 %v8761, %v8830
  %v8833 = vadd.f32 %v8762, %v8830
  %v8834 = vadd.f32 %v8763, %v8830
  %v8835 = vadd.f32 %v8764, %v8830
  %v8836 = vadd.f32 %v8765, %v8830
  %v8837 = vadd.f32 %v8766, %v8830
  %v8838 = vadd.f32 %v8767, %v8830
  %v8839 = vadd.f32 %v8768, %v8830
  %v8840 = vadd.f32 %v8769, %v8830
  %v8841 = vadd.f32 %v8770, %v8830
  %v8842 = vadd.f32 %v8771, %v8830
  %v8843 = vadd.f32 %v8772, %v8830
  %v8844 = vadd.f32 %v8773, %v8830
  %v8845 = vadd.f32 %v8774, %v8830
  %v8846 = vadd.f32 %v8775, %v8830
  %v8847 = vadd.f32 %v8776, %v8830
  %v8848 = vadd.f32 %v8777, %v8830
  %v8849 = vadd.f32 %v8778, %v8830
  %v8850 = vadd.f32 %v8779, %v8830
  %v8851 = vadd.f32 %v8780, %v8830
  %v8852 = vadd.f32 %v8781, %v8830
  %v8853 = vadd.f32 %v8782, %v8830
  %v8854 = vadd.f32 %v8783, %v8830
  %v8855 = vadd.f32 %v8784, %v8830
  %v8856 = vadd.f32 %v8785, %v8830
  %v8857 = vadd.f32 %v8786, %v8830
  %v8858 = vadd.f32 %v8787, %v8830
  %v8859 = vadd.f32 %v8788, %v8830
  %v8860 = vadd.f32 %v8789, %v8830
  %v8861 = vadd.f32 %v8790, %v8830
  %v8862 = vadd.f32 %v8791, %v8830
  %v8863 = vadd.f32 %v8792, %v8830
  %v8864 = vadd.f32 %v8793, %v8830
  %v8865 = vadd.f32 %v8794, %v8830
  %v8866 = vadd.f32 %v8795, %v8830
  %v8867 = vadd.f32 %v8796, %v8830
  %v8868 = vadd.f32 %v8797, %v8830
  %v8869 = vadd.f32 %v8798, %v8830
  %v8870 = vadd.f32 %v8799, %v8830
  %v8871 = vadd.f32 %v8800, %v8830
  %v8872 = vadd.f32 %v8801, %v8830
  %v8873 = vadd.f32 %v8802, %v8830
  %v8874 = vadd.f32 %v8803, %v8830
  %v8875 = vadd.f32 %v8804, %v8830
  %v8876 = vadd.f32 %v8805, %v8830
  %v8877 = vadd.f32 %v8806, %v8830
  %v8878 = vadd.f32 %v8807, %v8830
  %v8879 = vadd.f32 %v8808, %v8830
  %v8880 = vadd.f32 %v8809, %v8830
  %v8881 = vadd.f32 %v8810, %v8830
  %v8882 = vadd.f32 %v8811, %v8830
  %v8883 = vadd.f32 %v8812, %v8830
  %v8884 = vadd.f32 %v8813, %v8830
  %v8885 = vadd.f32 %v8814, %v8830
  %v8886 = vadd.f32 %v8815, %v8830
  %v8887 = vadd.f32 %v8816, %v8830
  %v8888 = vadd.f32 %v8817, %v8830
  %v8889 = vadd.f32 %v8818, %v8830
  %v8890 = vadd.f32 %v8819, %v8830
  %v8891 = vadd.f32 %v8820, %v8830
  %v8892 = vadd.f32 %v8821, %v8830
  %v8893 = vadd.f32 %v8822, %v8830
  %v8894 = vadd.f32 %v8823, %v8830
  %v8895 = vadd.f32 %v8824, %v8830
  %8896 = vst [vmem:[%s11] sm:$0xff] %v8832
  %8897 = vst [vmem:[%s11 + $0x8] sm:$0xff] %v8833
  %8898 = vst [vmem:[%s11 + $0x10] sm:$0xff] %v8834
  %8899 = vst [vmem:[%s11 + $0x18] sm:$0xff] %v8835
  %8900 = vst [vmem:[%s11 + $0x20] sm:$0xff] %v8836
  %8901 = vst [vmem:[%s11 + $0x28] sm:$0xff] %v8837
  %8902 = vst [vmem:[%s11 + $0x30] sm:$0xff] %v8838
  %8903 = vst [vmem:[%s11 + $0x38] sm:$0xff] %v8839
  %8904 = vst [vmem:[%s11 + $0x40] sm:$0xff] %v8840
  %8905 = vst [vmem:[%s11 + $0x48] sm:$0xff] %v8841
  %8906 = vst [vmem:[%s11 + $0x50] sm:$0xff] %v8842
  %8907 = vst [vmem:[%s11 + $0x58] sm:$0xff] %v8843
  %8908 = vst [vmem:[%s11 + $0x60] sm:$0xff] %v8844
  %8909 = vst [vmem:[%s11 + $0x68] sm:$0xff] %v8845
  %8910 = vst [vmem:[%s11 + $0x70] sm:$0xff] %v8846
  %8911 = vst [vmem:[%s11 + $0x78] sm:$0xff] %v8847
  %8912 = vst [vmem:[%s11 + $0x80] sm:$0xff] %v8848
  %8913 = vst [vmem:[%s11 + $0x88] sm:$0xff] %v8849
  %8914 = vst [vmem:[%s11 + $0x90] sm:$0xff] %v8850
  %8915 = vst [vmem:[%s11 + $0x98] sm:$0xff] %v8851
  %8916 = vst [vmem:[%s11 + $0xa0] sm:$0xff] %v8852
  %8917 = vst [vmem:[%s11 + $0xa8] sm:$0xff] %v8853
  %8918 = vst [vmem:[%s11 + $0xb0] sm:$0xff] %v8854
  %8919 = vst [vmem:[%s11 + $0xb8] sm:$0xff] %v8855
  %8920 = vst [vmem:[%s11 + $0xc0] sm:$0xff] %v8856
  %8921 = vst [vmem:[%s11 + $0xc8] sm:$0xff] %v8857
  %8922 = vst [vmem:[%s11 + $0xd0] sm:$0xff] %v8858
  %8923 = vst [vmem:[%s11 + $0xd8] sm:$0xff] %v8859
  %8924 = vst [vmem:[%s11 + $0xe0] sm:$0xff] %v8860
  %8925 = vst [vmem:[%s11 + $0xe8] sm:$0xff] %v8861
  %8926 = vst [vmem:[%s11 + $0xf0] sm:$0xff] %v8862
  %8927 = vst [vmem:[%s11 + $0xf8] sm:$0xff] %v8863
  %8928 = vst [vmem:[%s11 + $0x100] sm:$0xff] %v8864
  %8929 = vst [vmem:[%s11 + $0x108] sm:$0xff] %v8865
  %8930 = vst [vmem:[%s11 + $0x110] sm:$0xff] %v8866
  %8931 = vst [vmem:[%s11 + $0x118] sm:$0xff] %v8867
  %8932 = vst [vmem:[%s11 + $0x120] sm:$0xff] %v8868
  %8933 = vst [vmem:[%s11 + $0x128] sm:$0xff] %v8869
  %8934 = vst [vmem:[%s11 + $0x130] sm:$0xff] %v8870
  %8935 = vst [vmem:[%s11 + $0x138] sm:$0xff] %v8871
  %8936 = vst [vmem:[%s11 + $0x140] sm:$0xff] %v8872
  %8937 = vst [vmem:[%s11 + $0x148] sm:$0xff] %v8873
  %8938 = vst [vmem:[%s11 + $0x150] sm:$0xff] %v8874
  %8939 = vst [vmem:[%s11 + $0x158] sm:$0xff] %v8875
  %8940 = vst [vmem:[%s11 + $0x160] sm:$0xff] %v8876
  %8941 = vst [vmem:[%s11 + $0x168] sm:$0xff] %v8877
  %8942 = vst [vmem:[%s11 + $0x170] sm:$0xff] %v8878
  %8943 = vst [vmem:[%s11 + $0x178] sm:$0xff] %v8879
  %8944 = vst [vmem:[%s11 + $0x180] sm:$0xff] %v8880
  %8945 = vst [vmem:[%s11 + $0x188] sm:$0xff] %v8881
  %8946 = vst [vmem:[%s11 + $0x190] sm:$0xff] %v8882
  %8947 = vst [vmem:[%s11 + $0x198] sm:$0xff] %v8883
  %8948 = vst [vmem:[%s11 + $0x1a0] sm:$0xff] %v8884
  %8949 = vst [vmem:[%s11 + $0x1a8] sm:$0xff] %v8885
  %8950 = vst [vmem:[%s11 + $0x1b0] sm:$0xff] %v8886
  %8951 = vst [vmem:[%s11 + $0x1b8] sm:$0xff] %v8887
  %8952 = vst [vmem:[%s11 + $0x1c0] sm:$0xff] %v8888
  %8953 = vst [vmem:[%s11 + $0x1c8] sm:$0xff] %v8889
  %8954 = vst [vmem:[%s11 + $0x1d0] sm:$0xff] %v8890
  %8955 = vst [vmem:[%s11 + $0x1d8] sm:$0xff] %v8891
  %8956 = vst [vmem:[%s11 + $0x1e0] sm:$0xff] %v8892
  %8957 = vst [vmem:[%s11 + $0x1e8] sm:$0xff] %v8893
  %8958 = vst [vmem:[%s11 + $0x1f0] sm:$0xff] %v8894
  %8959 = vst [vmem:[%s11 + $0x1f8] sm:$0xff] %v8895
  // Predicated region
  $region46: #{locate3d_forward.2} parent=0 // pred_check
    _
  $region47: #{locate3d_forward.2} parent=0 // pred_check_branch
    %8961 = sbr.rel (0) target = $region49
  $region48: #{locate3d_forward.2} parent=0 // pred_region
    _
  $region49: #{locate3d_forward.2} parent=0 // pred_fallthru
    _
  // Predicated region
  $region50: #{locate3d_forward.2} parent=0 // pred_check
    _
  $region51: #{locate3d_forward.2} parent=0 // pred_check_branch
    %8963 = sbr.rel (0) target = $region53
  $region52: #{locate3d_forward.2} parent=0 // pred_region
    _
  $region53: #{locate3d_forward.2} parent=0 // pred_fallthru
    _

</llo_original>
